<compile_context>
chip_gen: v7x
topology: tpu7x:2x2x1
jax: 0.10.0
libtpu: 0.0.40
codegen_flags: <defaults>
</compile_context>

<pallas_src>
import functools

import numpy as np

import jax
import jax.numpy as jnp
from jax import lax
from jax.experimental import pallas as pl
from jax.experimental.pallas import tpu as pltpu


# ----------------------------------------------------------------------------
# In-kernel helpers
# ----------------------------------------------------------------------------
def _branch_body(x_ref, w_ref, s_ref, b_ref, m_ref, buf_ref, *, n_blocks, C, W):
    """Runs n_blocks BasicBlocks (2 conv3x3 each) on a (C, M) slab.

    x_ref : (C, M)              activations, flat over (n, y, x), M on lanes
    w_ref : (n_convs*9*C, C)    per conv, per tap (dy,dx) a (Cout, Cin) block
    s_ref : (n_convs*C, 1)      folded BN scale
    b_ref : (n_convs*C, 1)      folded BN bias
    m_ref : (9, M)              per-tap border masks (zero-padding semantics)
    buf_ref: (C, M + 2*(W+1))   VMEM halo scratch (replaces HBM im2col)
    """
    M = x_ref.shape[1]
    pad = W + 1

    # Zero once: the halo strips stay zero, the middle is rewritten per conv.
    buf_ref[...] = jnp.zeros_like(buf_ref)
    masks = [m_ref[t:t + 1, :] for t in range(9)]            # (1, M) each

    def conv3x3(vin, idx, relu, residual=None):
        buf_ref[:, pad:pad + M] = vin
        acc = None
        t = 0
        for dr in (-1, 0, 1):
            for dc in (-1, 0, 1):
                k = dr * W + dc
                if k == 0:
                    tap = vin                                 # center tap
                else:
                    tap = buf_ref[:, pad + k:pad + k + M] * masks[t]
                r0 = (idx * 9 + t) * C
                wt = w_ref[r0:r0 + C, :]                      # (Cout, Cin)
                contrib = jnp.dot(wt, tap,
                                  preferred_element_type=jnp.float32)
                acc = contrib if acc is None else acc + contrib
                t += 1
        y = acc * s_ref[idx * C:(idx + 1) * C, :] + b_ref[idx * C:(idx + 1) * C, :]
        if residual is not None:
            y = y + residual
        return jnp.maximum(y, 0.0) if relu else y

    v = x_ref[...]
    idx = 0
    for _ in range(n_blocks):
        h = conv3x3(v, idx, relu=True)                        # conv1-bn1-relu
        v = conv3x3(h, idx + 1, relu=True, residual=v)        # conv2-bn2 (+x) relu
        idx += 2
    return v


def _branch_kernel(x_ref, w_ref, s_ref, b_ref, m_ref, o_ref, buf_ref,
                   *, n_blocks, C, W):
    o_ref[...] = _branch_body(x_ref, w_ref, s_ref, b_ref, m_ref, buf_ref,
                              n_blocks=n_blocks, C=C, W=W)


def _branch_fuse01_kernel(x_ref, w_ref, s_ref, b_ref, m_ref,
                          w01_ref, s01_ref, b01_ref, o_ref, t01_ref, buf_ref,
                          *, n_blocks, C, W):
    # Branch-1 blocks, plus the fuse_layers[0][1] 1x1 conv + BN fused on top
    # (its input is already resident in VMEM/vregs).
    v = _branch_body(x_ref, w_ref, s_ref, b_ref, m_ref, buf_ref,
                     n_blocks=n_blocks, C=C, W=W)
    o_ref[...] = v
    t01 = jnp.dot(w01_ref[...], v, preferred_element_type=jnp.float32)
    t01_ref[...] = t01 * s01_ref[...] + b01_ref[...]


def _add_relu_kernel(a_ref, b_ref, o_ref):
    o_ref[...] = jnp.maximum(a_ref[...] + b_ref[...], 0.0)


def _fuse_down_kernel(w_ref, slab_ref, s_ref, b_ref, x_ref, o_ref):
    # fuse_layers[1][0]: conv3x3 stride2 (as a single 36-deep matmul over
    # pre-gathered taps) + BN + residual-add + ReLU, lane-dense (C1, M1) output.
    y = jnp.dot(w_ref[...], slab_ref[...], preferred_element_type=jnp.float32)
    o_ref[...] = jnp.maximum(y * s_ref[...] + b_ref[...] + x_ref[...], 0.0)


_WHOLE_VMEM = pl.BlockSpec(memory_space=pltpu.MemorySpace.VMEM)


# ----------------------------------------------------------------------------
# pallas_call wrappers
# ----------------------------------------------------------------------------
def build_tap_masks(n_img, H, W):
    """Per-tap validity masks (zero-padding) for flat (n, y, x) lane order."""
    yy, xx = np.meshgrid(np.arange(H), np.arange(W), indexing="ij")
    rows = []
    for dr in (-1, 0, 1):
        for dc in (-1, 0, 1):
            ok = ((yy + dr >= 0) & (yy + dr < H) &
                  (xx + dc >= 0) & (xx + dc < W))
            rows.append(np.tile(ok.reshape(-1), n_img))
    return jnp.asarray(np.stack(rows, axis=0), dtype=jnp.float32)   # (9, n*H*W)


def run_branch(x_cm, bp, *, N, C, H, W, n_blocks=2, fuse01=None):
    """One fused pallas_call for an entire branch (optionally + fuse01 head)."""
    HW = H * W
    # Grid over images when each image is a lane-aligned block; otherwise fold
    # the (tiny) batch into one block.  (At real HRNet sizes you would tile M
    # with a (W+1)-lane halo per block instead.)
    imgs_per_block = 1 if HW % 128 == 0 else N
    grid_n = N // imgs_per_block
    M_blk = imgs_per_block * HW
    halo = W + 1
    n_convs = 2 * n_blocks
    masks = build_tap_masks(imgs_per_block, H, W)

    data_spec = pl.BlockSpec((C, M_blk), lambda i: (0, i))
    const2 = lambda i: (0, 0)
    w_spec = pl.BlockSpec((n_convs * 9 * C, C), const2)
    sb_spec = pl.BlockSpec((n_convs * C, 1), const2)
    m_spec = pl.BlockSpec((9, M_blk), const2)
    scratch = [pltpu.VMEM((C, M_blk + 2 * halo), jnp.float32)]
    cparams = pltpu.CompilerParams(dimension_semantics=("parallel",))

    if fuse01 is None:
        return pl.pallas_call(
            functools.partial(_branch_kernel, n_blocks=n_blocks, C=C, W=W),
            out_shape=jax.ShapeDtypeStruct((C, N * HW), jnp.float32),
            grid=(grid_n,),
            in_specs=[data_spec, w_spec, sb_spec, sb_spec, m_spec],
            out_specs=data_spec,
            scratch_shapes=scratch,
            compiler_params=cparams,
        )(x_cm, bp["w"], bp["s"], bp["b"], masks)

    c01 = fuse01["w"].shape[0]
    t01_spec = pl.BlockSpec((c01, M_blk), lambda i: (0, i))
    w01_spec = pl.BlockSpec((c01, C), const2)
    sb01_spec = pl.BlockSpec((c01, 1), const2)
    return pl.pallas_call(
        functools.partial(_branch_fuse01_kernel, n_blocks=n_blocks, C=C, W=W),
        out_shape=(jax.ShapeDtypeStruct((C, N * HW), jnp.float32),
                   jax.ShapeDtypeStruct((c01, N * HW), jnp.float32)),
        grid=(grid_n,),
        in_specs=[data_spec, w_spec, sb_spec, sb_spec, m_spec,
                  w01_spec, sb01_spec, sb01_spec],
        out_specs=(data_spec, t01_spec),
        scratch_shapes=scratch,
        compiler_params=cparams,
    )(x_cm, bp["w"], bp["s"], bp["b"], masks, fuse01["w"], fuse01["s"], fuse01["b"])


def fused_add_relu(a_cm, b_cm, *, lane_block=256):
    C, M = a_cm.shape
    if M % lane_block != 0:
        lane_block = M
    spec = pl.BlockSpec((C, lane_block), lambda i: (0, i))
    return pl.pallas_call(
        _add_relu_kernel,
        out_shape=jax.ShapeDtypeStruct((C, M), jnp.float32),
        grid=(M // lane_block,),
        in_specs=[spec, spec],
        out_specs=spec,
        compiler_params=pltpu.CompilerParams(dimension_semantics=("parallel",)),
    )(a_cm, b_cm)


def fuse_down_add_relu(slabs, fp, x1_cm):
    C1, M1 = x1_cm.shape
    return pl.pallas_call(
        _fuse_down_kernel,
        out_shape=jax.ShapeDtypeStruct((C1, M1), jnp.float32),
        in_specs=[_WHOLE_VMEM] * 5,
        out_specs=_WHOLE_VMEM,
    )(fp["w"], slabs, fp["s"], fp["b"], x1_cm)


# ----------------------------------------------------------------------------
# HighResolutionModule forward (NCHW in / NCHW out, channel-major inside)
# ----------------------------------------------------------------------------
def hr_module_forward(x0_nchw, x1_nchw, kparams):
    n, c0, h0, w0 = x0_nchw.shape
    _, c1, h1, w1 = x1_nchw.shape

    # NCHW -> (C, N*H*W): channels on sublanes, spatial flat on lanes.
    x0 = jnp.transpose(x0_nchw, (1, 0, 2, 3)).reshape(c0, n * h0 * w0).astype(jnp.float32)
    x1 = jnp.transpose(x1_nchw, (1, 0, 2, 3)).reshape(c1, n * h1 * w1).astype(jnp.float32)

    # Branches (fused: one pallas_call each; branch1 also emits fuse01 output).
    x0 = run_branch(x0, kparams["branch0"], N=n, C=c0, H=h0, W=w0, n_blocks=2)
    x1, t01 = run_branch(x1, kparams["branch1"], N=n, C=c1, H=h1, W=w1,
                         n_blocks=2, fuse01=kparams["fuse01"])

    # Fuse i=0: y0 = relu(x0 + upsample2(bn(conv1x1(x1)))).
    # TODO(synk): fold the 2x nearest upsample lane-gather into the add/relu
    # kernel (coarse-block index_map) once spatial blocks are >=128 lanes; here
    # it is a tiny (4, 512) XLA broadcast.
    t = t01.reshape(c0, n, h1, w1)
    t_up = jnp.broadcast_to(t[:, :, :, None, :, None],
                            (c0, n, h1, 2, w1, 2)).reshape(c0, n * h0 * w0)
    y0 = fused_add_relu(x0, t_up)

    # Fuse i=1: y1 = relu(bn(conv3x3_s2(x0)) + x1).
    # TODO(synk): the stride-2 tap gather (9 tiny strided slices, ~18 KB) stays
    # in XLA; at real sizes it would move in-kernel via a halo BlockSpec.
    x0f = x0.reshape(c0, n, h0, w0)
    xp = jnp.pad(x0f, ((0, 0), (0, 0), (1, 1), (1, 1)))
    slabs = jnp.concatenate(
        [xp[:, :, dy:dy + h0:2, dx:dx + w0:2].reshape(c0, n * h1 * w1)
         for dy in range(3) for dx in range(3)], axis=0)        # (9*C0, N*H1*W1)
    y1 = fuse_down_add_relu(slabs, kparams["fuse10"], x1)

    # (C, N*H*W) -> NCHW at the PyTorch-facing boundary.
    y0 = jnp.transpose(y0.reshape(c0, n, h0, w0), (1, 0, 2, 3))
    y1 = jnp.transpose(y1.reshape(c1, n, h1, w1), (1, 0, 2, 3))
    return [y0, y1]


# ----------------------------------------------------------------------------
# Deterministic parameters (eval-mode BN folded into scale/bias)
# ----------------------------------------------------------------------------
def _fold_bn(key, c, eps=1e-5):
    k1, k2, k3, k4 = jax.random.split(key, 4)
    gamma = jax.random.uniform(k1, (c,), minval=0.5, maxval=1.5)
    beta = 0.1 * jax.random.normal(k2, (c,))
    mean = 0.1 * jax.random.normal(k3, (c,))
    var = jax.random.uniform(k4, (c,), minval=0.5, maxval=1.5)
    scale = gamma / jnp.sqrt(var + eps)
    bias = beta - mean * scale
    return scale.astype(jnp.float32), bias.astype(jnp.float32)


def _conv_w(key, cout, cin, k):
    return (0.05 * jax.random.normal(key, (cout, cin, k, k))).astype(jnp.float32)


def make_params(key, channels=(4, 8), num_blocks=(2, 2)):
    params = {"branch0": [], "branch1": []}
    for bi, (c, nb) in enumerate(zip(channels, num_blocks)):
        for _ in range(nb):
            key, k1, k2, k3, k4 = jax.random.split(key, 5)
            s1, b1 = _fold_bn(k2, c)
            s2, b2 = _fold_bn(k4, c)
            params[f"branch{bi}"].append({
                "w1": _conv_w(k1, c, c, 3), "s1": s1, "b1": b1,
                "w2": _conv_w(k3, c, c, 3), "s2": s2, "b2": b2,
            })
    key, k1, k2 = jax.random.split(key, 3)
    s, b = _fold_bn(k2, channels[0])
    params["fuse01"] = {"w": _conv_w(k1, channels[0], channels[1], 1), "s": s, "b": b}
    key, k1, k2 = jax.random.split(key, 3)
    s, b = _fold_bn(k2, channels[1])
    params["fuse10"] = {"w": _conv_w(k1, channels[1], channels[0], 3), "s": s, "b": b}
    return params


def prepare_kernel_params(params):
    """Repack PyTorch-layout weights into the lane-dense kernel layouts."""
    def pack3x3(w):                       # (O, I, 3, 3) -> rows (t*O + o, I)
        o, i = w.shape[0], w.shape[1]
        return jnp.transpose(w, (2, 3, 0, 1)).reshape(9 * o, i)

    kp = {}
    for bname in ("branch0", "branch1"):
        ws, ss, bs = [], [], []
        for blk in params[bname]:
            for w, s, b in ((blk["w1"], blk["s1"], blk["b1"]),
                            (blk["w2"], blk["s2"], blk["b2"])):
                ws.append(pack3x3(w))
                ss.append(s.reshape(-1, 1))
                bs.append(b.reshape(-1, 1))
        kp[bname] = {"w": jnp.concatenate(ws, 0),
                     "s": jnp.concatenate(ss, 0),
                     "b": jnp.concatenate(bs, 0)}

    f01 = params["fuse01"]
    kp["fuse01"] = {"w": f01["w"].reshape(f01["w"].shape[0], f01["w"].shape[1]),
                    "s": f01["s"].reshape(-1, 1), "b": f01["b"].reshape(-1, 1)}

    f10 = params["fuse10"]
    c1, c0 = f10["w"].shape[0], f10["w"].shape[1]
    w10 = jnp.transpose(f10["w"], (2, 3, 1, 0)).reshape(9 * c0, c1).T   # (C1, 9*C0)
    kp["fuse10"] = {"w": w10, "s": f10["s"].reshape(-1, 1), "b": f10["b"].reshape(-1, 1)}
    return kp


# ----------------------------------------------------------------------------
# Pure-JAX reference (mirrors the PyTorch module)
# ----------------------------------------------------------------------------
def _conv2d_ref(x, w, stride, pad):
    return lax.conv_general_dilated(
        x, w, window_strides=(stride, stride),
        padding=((pad, pad), (pad, pad)),
        dimension_numbers=("NCHW", "OIHW", "NCHW"))


def _bn_ref(x, s, b):
    return x * s[None, :, None, None] + b[None, :, None, None]


def _block_ref(x, p):
    h = jnp.maximum(_bn_ref(_conv2d_ref(x, p["w1"], 1, 1), p["s1"], p["b1"]), 0.0)
    return jnp.maximum(_bn_ref(_conv2d_ref(h, p["w2"], 1, 1), p["s2"], p["b2"]) + x, 0.0)


def module_reference(x0, x1, params):
    for blk in params["branch0"]:
        x0 = _block_ref(x0, blk)
    for blk in params["branch1"]:
        x1 = _block_ref(x1, blk)
    f01, f10 = params["fuse01"], params["fuse10"]
    t01 = _bn_ref(_conv2d_ref(x1, f01["w"], 1, 0), f01["s"], f01["b"])
    t01 = jnp.repeat(jnp.repeat(t01, 2, axis=2), 2, axis=3)
    y0 = jnp.maximum(x0 + t01, 0.0)
    t10 = _bn_ref(_conv2d_ref(x0, f10["w"], 2, 1), f10["s"], f10["b"])
    y1 = jnp.maximum(t10 + x1, 0.0)
    return y0, y1


# ----------------------------------------------------------------------------
if __name__ == "__main__":
    key = jax.random.PRNGKey(0)
    kx0, kx1, kp = jax.random.split(key, 3)

    # Inputs (NCHW, as PyTorch): branch0 high-res, branch1 low-res.
    x0 = jax.random.normal(kx0, (2, 4, 16, 16), dtype=jnp.float32)
    x1 = jax.random.normal(kx1, (2, 8, 8, 8), dtype=jnp.float32)

    params = make_params(kp)
    kparams = prepare_kernel_params(params)

    fwd = jax.jit(hr_module_forward)
    y0, y1 = fwd(x0, x1, kparams)
    jax.block_until_ready(y0)
    jax.block_until_ready(y1)

    assert y0.shape == (2, 4, 16, 16), y0.shape
    assert y1.shape == (2, 8, 8, 8), y1.shape

    # Numerical check against a plain-JAX reference (tolerance allows for the
    # MXU's default bf16-pass f32 matmul precision).
    r0, r1 = jax.jit(module_reference)(x0, x1, params)
    e0 = float(jnp.max(jnp.abs(y0 - r0)))
    e1 = float(jnp.max(jnp.abs(y1 - r1)))
    assert jnp.allclose(y0, r0, rtol=1e-2, atol=5e-2), f"y0 max abs err {e0}"
    assert jnp.allclose(y1, r1, rtol=1e-2, atol=5e-2), f"y1 max abs err {e1}"

    print("KERNEL_OK")
</pallas_src>

<mosaic_0001>
module attributes {stable_mosaic.version = 11 : i64} {
  func.func @_branch_kernel(%arg0: i32, %arg1: memref<4x256xf32, #tpu.memory_space<vmem>>, %arg2: memref<144x4xf32, #tpu.memory_space<vmem>>, %arg3: memref<16x1xf32, #tpu.memory_space<vmem>>, %arg4: memref<16x1xf32, #tpu.memory_space<vmem>>, %arg5: memref<9x256xf32, #tpu.memory_space<vmem>>, %arg6: memref<4x256xf32, #tpu.memory_space<vmem>>, %arg7: memref<4x290xf32, #tpu.memory_space<vmem>>) attributes {dimension_semantics = [#tpu.dimension_semantics<parallel>], iteration_bounds = array<i64: 2>, scalar_prefetch = 0 : i64, scratch_operands = 1 : i64, tpu.core_type = #tpu.core_type<tc>, window_params = [{transform_indices = @transform_0, window_bounds = array<i64: 4, 256>}, {pipeline_mode = #tpu.pipeline_mode<synchronous>, transform_indices = @transform_1, window_bounds = array<i64: 144, 4>}, {pipeline_mode = #tpu.pipeline_mode<synchronous>, transform_indices = @transform_2, window_bounds = array<i64: 16, 1>}, {pipeline_mode = #tpu.pipeline_mode<synchronous>, transform_indices = @transform_3, window_bounds = array<i64: 16, 1>}, {pipeline_mode = #tpu.pipeline_mode<synchronous>, transform_indices = @transform_4, window_bounds = array<i64: 9, 256>}, {transform_indices = @transform_5, window_bounds = array<i64: 4, 256>}]} {
    %cst = arith.constant 0.000000e+00 : f32
    %0 = vector.broadcast %cst : f32 to vector<4x290xf32>
    %c0 = arith.constant 0 : index
    %c0_0 = arith.constant 0 : index
    %1 = vector.load %arg7[%c0, %c0_0] : memref<4x290xf32, #tpu.memory_space<vmem>>, vector<4x290xf32>
    tpu.vector_store %arg7[%c0, %c0_0], %0 {strides = array<i32>} : memref<4x290xf32, #tpu.memory_space<vmem>>, vector<4x290xf32>,
    %c0_1 = arith.constant 0 : index
    %c0_2 = arith.constant 0 : index
    %2 = vector.load %arg5[%c0_1, %c0_2] : memref<9x256xf32, #tpu.memory_space<vmem>>, vector<1x256xf32>
    %c1 = arith.constant 1 : index
    %c0_3 = arith.constant 0 : index
    %3 = vector.load %arg5[%c1, %c0_3] : memref<9x256xf32, #tpu.memory_space<vmem>>, vector<1x256xf32>
    %c2 = arith.constant 2 : index
    %c0_4 = arith.constant 0 : index
    %4 = vector.load %arg5[%c2, %c0_4] : memref<9x256xf32, #tpu.memory_space<vmem>>, vector<1x256xf32>
    %c3 = arith.constant 3 : index
    %c0_5 = arith.constant 0 : index
    %5 = vector.load %arg5[%c3, %c0_5] : memref<9x256xf32, #tpu.memory_space<vmem>>, vector<1x256xf32>
    %c5 = arith.constant 5 : index
    %c0_6 = arith.constant 0 : index
    %6 = vector.load %arg5[%c5, %c0_6] : memref<9x256xf32, #tpu.memory_space<vmem>>, vector<1x256xf32>
    %c6 = arith.constant 6 : index
    %c0_7 = arith.constant 0 : index
    %7 = vector.load %arg5[%c6, %c0_7] : memref<9x256xf32, #tpu.memory_space<vmem>>, vector<1x256xf32>
    %c7 = arith.constant 7 : index
    %c0_8 = arith.constant 0 : index
    %8 = vector.load %arg5[%c7, %c0_8] : memref<9x256xf32, #tpu.memory_space<vmem>>, vector<1x256xf32>
    %c8 = arith.constant 8 : index
    %c0_9 = arith.constant 0 : index
    %9 = vector.load %arg5[%c8, %c0_9] : memref<9x256xf32, #tpu.memory_space<vmem>>, vector<1x256xf32>
    %c0_10 = arith.constant 0 : index
    %c0_11 = arith.constant 0 : index
    %10 = vector.load %arg1[%c0_10, %c0_11] : memref<4x256xf32, #tpu.memory_space<vmem>>, vector<4x256xf32>
    %c0_12 = arith.constant 0 : index
    %c17 = arith.constant 17 : index
    %11 = vector.load %arg7[%c0_12, %c17] : memref<4x290xf32, #tpu.memory_space<vmem>>, vector<4x256xf32>
    tpu.vector_store %arg7[%c0_12, %c17], %10 {strides = array<i32>} : memref<4x290xf32, #tpu.memory_space<vmem>>, vector<4x256xf32>,
    %c0_13 = arith.constant 0 : index
    %c0_14 = arith.constant 0 : index
    %12 = vector.load %arg7[%c0_13, %c0_14] : memref<4x290xf32, #tpu.memory_space<vmem>>, vector<4x256xf32>
    %13 = vector.broadcast %2 : vector<1x256xf32> to vector<4x256xf32>
    %14 = arith.mulf %12, %13 : vector<4x256xf32>
    %c0_15 = arith.constant 0 : index
    %c0_16 = arith.constant 0 : index
    %15 = vector.load %arg2[%c0_15, %c0_16] : memref<144x4xf32, #tpu.memory_space<vmem>>, vector<4x4xf32>
    %cst_17 = arith.constant dense<0.000000e+00> : vector<4x256xf32>
    %16 = tpu.matmul %15, %14, %cst_17 {dimension_numbers = #tpu.dot_dimension_numbers<[1], [0], [0], [1], [0, 0, 1, 1], [], []>} : vector<4x4xf32>, vector<4x256xf32>, vector<4x256xf32> -> vector<4x256xf32>
    %c0_18 = arith.constant 0 : index
    %c1_19 = arith.constant 1 : index
    %17 = vector.load %arg7[%c0_18, %c1_19] : memref<4x290xf32, #tpu.memory_space<vmem>>, vector<4x256xf32>
    %18 = vector.broadcast %3 : vector<1x256xf32> to vector<4x256xf32>
    %19 = arith.mulf %17, %18 : vector<4x256xf32>
    %c4 = arith.constant 4 : index
    %c0_20 = arith.constant 0 : index
    %20 = vector.load %arg2[%c4, %c0_20] : memref<144x4xf32, #tpu.memory_space<vmem>>, vector<4x4xf32>
    %cst_21 = arith.constant dense<0.000000e+00> : vector<4x256xf32>
    %21 = tpu.matmul %20, %19, %cst_21 {dimension_numbers = #tpu.dot_dimension_numbers<[1], [0], [0], [1], [0, 0, 1, 1], [], []>} : vector<4x4xf32>, vector<4x256xf32>, vector<4x256xf32> -> vector<4x256xf32>
    %22 = arith.addf %16, %21 : vector<4x256xf32>
    %c0_22 = arith.constant 0 : index
    %c2_23 = arith.constant 2 : index
    %23 = vector.load %arg7[%c0_22, %c2_23] : memref<4x290xf32, #tpu.memory_space<vmem>>, vector<4x256xf32>
    %24 = vector.broadcast %4 : vector<1x256xf32> to vector<4x256xf32>
    %25 = arith.mulf %23, %24 : vector<4x256xf32>
    %c8_24 = arith.constant 8 : index
    %c0_25 = arith.constant 0 : index
    %26 = vector.load %arg2[%c8_24, %c0_25] : memref<144x4xf32, #tpu.memory_space<vmem>>, vector<4x4xf32>
    %cst_26 = arith.constant dense<0.000000e+00> : vector<4x256xf32>
    %27 = tpu.matmul %26, %25, %cst_26 {dimension_numbers = #tpu.dot_dimension_numbers<[1], [0], [0], [1], [0, 0, 1, 1], [], []>} : vector<4x4xf32>, vector<4x256xf32>, vector<4x256xf32> -> vector<4x256xf32>
    %28 = arith.addf %22, %27 : vector<4x256xf32>
    %c0_27 = arith.constant 0 : index
    %c16 = arith.constant 16 : index
    %29 = vector.load %arg7[%c0_27, %c16] : memref<4x290xf32, #tpu.memory_space<vmem>>, vector<4x256xf32>
    %30 = vector.broadcast %5 : vector<1x256xf32> to vector<4x256xf32>
    %31 = arith.mulf %29, %30 : vector<4x256xf32>
    %c12 = arith.constant 12 : index
    %c0_28 = arith.constant 0 : index
    %32 = vector.load %arg2[%c12, %c0_28] : memref<144x4xf32, #tpu.memory_space<vmem>>, vector<4x4xf32>
    %cst_29 = arith.constant dense<0.000000e+00> : vector<4x256xf32>
    %33 = tpu.matmul %32, %31, %cst_29 {dimension_numbers = #tpu.dot_dimension_numbers<[1], [0], [0], [1], [0, 0, 1, 1], [], []>} : vector<4x4xf32>, vector<4x256xf32>, vector<4x256xf32> -> vector<4x256xf32>
    %34 = arith.addf %28, %33 : vector<4x256xf32>
    %c16_30 = arith.constant 16 : index
    %c0_31 = arith.constant 0 : index
    %35 = vector.load %arg2[%c16_30, %c0_31] : memref<144x4xf32, #tpu.memory_space<vmem>>, vector<4x4xf32>
    %cst_32 = arith.constant dense<0.000000e+00> : vector<4x256xf32>
    %36 = tpu.matmul %35, %10, %cst_32 {dimension_numbers = #tpu.dot_dimension_numbers<[1], [0], [0], [1], [0, 0, 1, 1], [], []>} : vector<4x4xf32>, vector<4x256xf32>, vector<4x256xf32> -> vector<4x256xf32>
    %37 = arith.addf %34, %36 : vector<4x256xf32>
    %c0_33 = arith.constant 0 : index
    %c18 = arith.constant 18 : index
    %38 = vector.load %arg7[%c0_33, %c18] : memref<4x290xf32, #tpu.memory_space<vmem>>, vector<4x256xf32>
    %39 = vector.broadcast %6 : vector<1x256xf32> to vector<4x256xf32>
    %40 = arith.mulf %38, %39 : vector<4x256xf32>
    %c20 = arith.constant 20 : index
    %c0_34 = arith.constant 0 : index
    %41 = vector.load %arg2[%c20, %c0_34] : memref<144x4xf32, #tpu.memory_space<vmem>>, vector<4x4xf32>
    %cst_35 = arith.constant dense<0.000000e+00> : vector<4x256xf32>
    %42 = tpu.matmul %41, %40, %cst_35 {dimension_numbers = #tpu.dot_dimension_numbers<[1], [0], [0], [1], [0, 0, 1, 1], [], []>} : vector<4x4xf32>, vector<4x256xf32>, vector<4x256xf32> -> vector<4x256xf32>
    %43 = arith.addf %37, %42 : vector<4x256xf32>
    %c0_36 = arith.constant 0 : index
    %c32 = arith.constant 32 : index
    %44 = vector.load %arg7[%c0_36, %c32] : memref<4x290xf32, #tpu.memory_space<vmem>>, vector<4x256xf32>
    %45 = vector.broadcast %7 : vector<1x256xf32> to vector<4x256xf32>
    %46 = arith.mulf %44, %45 : vector<4x256xf32>
    %c24 = arith.constant 24 : index
    %c0_37 = arith.constant 0 : index
    %47 = vector.load %arg2[%c24, %c0_37] : memref<144x4xf32, #tpu.memory_space<vmem>>, vector<4x4xf32>
    %cst_38 = arith.constant dense<0.000000e+00> : vector<4x256xf32>
    %48 = tpu.matmul %47, %46, %cst_38 {dimension_numbers = #tpu.dot_dimension_numbers<[1], [0], [0], [1], [0, 0, 1, 1], [], []>} : vector<4x4xf32>, vector<4x256xf32>, vector<4x256xf32> -> vector<4x256xf32>
    %49 = arith.addf %43, %48 : vector<4x256xf32>
    %c0_39 = arith.constant 0 : index
    %c33 = arith.constant 33 : index
    %50 = vector.load %arg7[%c0_39, %c33] : memref<4x290xf32, #tpu.memory_space<vmem>>, vector<4x256xf32>
    %51 = vector.broadcast %8 : vector<1x256xf32> to vector<4x256xf32>
    %52 = arith.mulf %50, %51 : vector<4x256xf32>
    %c28 = arith.constant 28 : index
    %c0_40 = arith.constant 0 : index
    %53 = vector.load %arg2[%c28, %c0_40] : memref<144x4xf32, #tpu.memory_space<vmem>>, vector<4x4xf32>
    %cst_41 = arith.constant dense<0.000000e+00> : vector<4x256xf32>
    %54 = tpu.matmul %53, %52, %cst_41 {dimension_numbers = #tpu.dot_dimension_numbers<[1], [0], [0], [1], [0, 0, 1, 1], [], []>} : vector<4x4xf32>, vector<4x256xf32>, vector<4x256xf32> -> vector<4x256xf32>
    %55 = arith.addf %49, %54 : vector<4x256xf32>
    %c0_42 = arith.constant 0 : index
    %c34 = arith.constant 34 : index
    %56 = vector.load %arg7[%c0_42, %c34] : memref<4x290xf32, #tpu.memory_space<vmem>>, vector<4x256xf32>
    %57 = vector.broadcast %9 : vector<1x256xf32> to vector<4x256xf32>
    %58 = arith.mulf %56, %57 : vector<4x256xf32>
    %c32_43 = arith.constant 32 : index
    %c0_44 = arith.constant 0 : index
    %59 = vector.load %arg2[%c32_43, %c0_44] : memref<144x4xf32, #tpu.memory_space<vmem>>, vector<4x4xf32>
    %cst_45 = arith.constant dense<0.000000e+00> : vector<4x256xf32>
    %60 = tpu.matmul %59, %58, %cst_45 {dimension_numbers = #tpu.dot_dimension_numbers<[1], [0], [0], [1], [0, 0, 1, 1], [], []>} : vector<4x4xf32>, vector<4x256xf32>, vector<4x256xf32> -> vector<4x256xf32>
    %61 = arith.addf %55, %60 : vector<4x256xf32>
    %c0_46 = arith.constant 0 : index
    %c0_47 = arith.constant 0 : index
    %62 = vector.load %arg3[%c0_46, %c0_47] : memref<16x1xf32, #tpu.memory_space<vmem>>, vector<4x1xf32>
    %63 = vector.broadcast %62 : vector<4x1xf32> to vector<4x256xf32>
    %64 = arith.mulf %61, %63 : vector<4x256xf32>
    %c0_48 = arith.constant 0 : index
    %c0_49 = arith.constant 0 : index
    %65 = vector.load %arg4[%c0_48, %c0_49] : memref<16x1xf32, #tpu.memory_space<vmem>>, vector<4x1xf32>
    %66 = vector.broadcast %65 : vector<4x1xf32> to vector<4x256xf32>
    %67 = arith.addf %64, %66 : vector<4x256xf32>
    %cst_50 = arith.constant 0.000000e+00 : f32
    %68 = vector.broadcast %cst_50 : f32 to vector<4x256xf32>
    %69 = arith.maximumf %67, %68 : vector<4x256xf32>
    %c0_51 = arith.constant 0 : index
    %c17_52 = arith.constant 17 : index
    %70 = vector.load %arg7[%c0_51, %c17_52] : memref<4x290xf32, #tpu.memory_space<vmem>>, vector<4x256xf32>
    tpu.vector_store %arg7[%c0_51, %c17_52], %69 {strides = array<i32>} : memref<4x290xf32, #tpu.memory_space<vmem>>, vector<4x256xf32>,
    %c0_53 = arith.constant 0 : index
    %c0_54 = arith.constant 0 : index
    %71 = vector.load %arg7[%c0_53, %c0_54] : memref<4x290xf32, #tpu.memory_space<vmem>>, vector<4x256xf32>
    %72 = vector.broadcast %2 : vector<1x256xf32> to vector<4x256xf32>
    %73 = arith.mulf %71, %72 : vector<4x256xf32>
    %c36 = arith.constant 36 : index
    %c0_55 = arith.constant 0 : index
    %74 = vector.load %arg2[%c36, %c0_55] : memref<144x4xf32, #tpu.memory_space<vmem>>, vector<4x4xf32>
    %cst_56 = arith.constant dense<0.000000e+00> : vector<4x256xf32>
    %75 = tpu.matmul %74, %73, %cst_56 {dimension_numbers = #tpu.dot_dimension_numbers<[1], [0], [0], [1], [0, 0, 1, 1], [], []>} : vector<4x4xf32>, vector<4x256xf32>, vector<4x256xf32> -> vector<4x256xf32>
    %c0_57 = arith.constant 0 : index
    %c1_58 = arith.constant 1 : index
    %76 = vector.load %arg7[%c0_57, %c1_58] : memref<4x290xf32, #tpu.memory_space<vmem>>, vector<4x256xf32>
    %77 = vector.broadcast %3 : vector<1x256xf32> to vector<4x256xf32>
    %78 = arith.mulf %76, %77 : vector<4x256xf32>
    %c40 = arith.constant 40 : index
    %c0_59 = arith.constant 0 : index
    %79 = vector.load %arg2[%c40, %c0_59] : memref<144x4xf32, #tpu.memory_space<vmem>>, vector<4x4xf32>
    %cst_60 = arith.constant dense<0.000000e+00> : vector<4x256xf32>
    %80 = tpu.matmul %79, %78, %cst_60 {dimension_numbers = #tpu.dot_dimension_numbers<[1], [0], [0], [1], [0, 0, 1, 1], [], []>} : vector<4x4xf32>, vector<4x256xf32>, vector<4x256xf32> -> vector<4x256xf32>
    %81 = arith.addf %75, %80 : vector<4x256xf32>
    %c0_61 = arith.constant 0 : index
    %c2_62 = arith.constant 2 : index
    %82 = vector.load %arg7[%c0_61, %c2_62] : memref<4x290xf32, #tpu.memory_space<vmem>>, vector<4x256xf32>
    %83 = vector.broadcast %4 : vector<1x256xf32> to vector<4x256xf32>
    %84 = arith.mulf %82, %83 : vector<4x256xf32>
    %c44 = arith.constant 44 : index
    %c0_63 = arith.constant 0 : index
    %85 = vector.load %arg2[%c44, %c0_63] : memref<144x4xf32, #tpu.memory_space<vmem>>, vector<4x4xf32>
    %cst_64 = arith.constant dense<0.000000e+00> : vector<4x256xf32>
    %86 = tpu.matmul %85, %84, %cst_64 {dimension_numbers = #tpu.dot_dimension_numbers<[1], [0], [0], [1], [0, 0, 1, 1], [], []>} : vector<4x4xf32>, vector<4x256xf32>, vector<4x256xf32> -> vector<4x256xf32>
    %87 = arith.addf %81, %86 : vector<4x256xf32>
    %c0_65 = arith.constant 0 : index
    %c16_66 = arith.constant 16 : index
    %88 = vector.load %arg7[%c0_65, %c16_66] : memref<4x290xf32, #tpu.memory_space<vmem>>, vector<4x256xf32>
    %89 = vector.broadcast %5 : vector<1x256xf32> to vector<4x256xf32>
    %90 = arith.mulf %88, %89 : vector<4x256xf32>
    %c48 = arith.constant 48 : index
    %c0_67 = arith.constant 0 : index
    %91 = vector.load %arg2[%c48, %c0_67] : memref<144x4xf32, #tpu.memory_space<vmem>>, vector<4x4xf32>
    %cst_68 = arith.constant dense<0.000000e+00> : vector<4x256xf32>
    %92 = tpu.matmul %91, %90, %cst_68 {dimension_numbers = #tpu.dot_dimension_numbers<[1], [0], [0], [1], [0, 0, 1, 1], [], []>} : vector<4x4xf32>, vector<4x256xf32>, vector<4x256xf32> -> vector<4x256xf32>
    %93 = arith.addf %87, %92 : vector<4x256xf32>
    %c52 = arith.constant 52 : index
    %c0_69 = arith.constant 0 : index
    %94 = vector.load %arg2[%c52, %c0_69] : memref<144x4xf32, #tpu.memory_space<vmem>>, vector<4x4xf32>
    %cst_70 = arith.constant dense<0.000000e+00> : vector<4x256xf32>
    %95 = tpu.matmul %94, %69, %cst_70 {dimension_numbers = #tpu.dot_dimension_numbers<[1], [0], [0], [1], [0, 0, 1, 1], [], []>} : vector<4x4xf32>, vector<4x256xf32>, vector<4x256xf32> -> vector<4x256xf32>
    %96 = arith.addf %93, %95 : vector<4x256xf32>
    %c0_71 = arith.constant 0 : index
    %c18_72 = arith.constant 18 : index
    %97 = vector.load %arg7[%c0_71, %c18_72] : memref<4x290xf32, #tpu.memory_space<vmem>>, vector<4x256xf32>
    %98 = vector.broadcast %6 : vector<1x256xf32> to vector<4x256xf32>
    %99 = arith.mulf %97, %98 : vector<4x256xf32>
    %c56 = arith.constant 56 : index
    %c0_73 = arith.constant 0 : index
    %100 = vector.load %arg2[%c56, %c0_73] : memref<144x4xf32, #tpu.memory_space<vmem>>, vector<4x4xf32>
    %cst_74 = arith.constant dense<0.000000e+00> : vector<4x256xf32>
    %101 = tpu.matmul %100, %99, %cst_74 {dimension_numbers = #tpu.dot_dimension_numbers<[1], [0], [0], [1], [0, 0, 1, 1], [], []>} : vector<4x4xf32>, vector<4x256xf32>, vector<4x256xf32> -> vector<4x256xf32>
    %102 = arith.addf %96, %101 : vector<4x256xf32>
    %c0_75 = arith.constant 0 : index
    %c32_76 = arith.constant 32 : index
    %103 = vector.load %arg7[%c0_75, %c32_76] : memref<4x290xf32, #tpu.memory_space<vmem>>, vector<4x256xf32>
    %104 = vector.broadcast %7 : vector<1x256xf32> to vector<4x256xf32>
    %105 = arith.mulf %103, %104 : vector<4x256xf32>
    %c60 = arith.constant 60 : index
    %c0_77 = arith.constant 0 : index
    %106 = vector.load %arg2[%c60, %c0_77] : memref<144x4xf32, #tpu.memory_space<vmem>>, vector<4x4xf32>
    %cst_78 = arith.constant dense<0.000000e+00> : vector<4x256xf32>
    %107 = tpu.matmul %106, %105, %cst_78 {dimension_numbers = #tpu.dot_dimension_numbers<[1], [0], [0], [1], [0, 0, 1, 1], [], []>} : vector<4x4xf32>, vector<4x256xf32>, vector<4x256xf32> -> vector<4x256xf32>
    %108 = arith.addf %102, %107 : vector<4x256xf32>
    %c0_79 = arith.constant 0 : index
    %c33_80 = arith.constant 33 : index
    %109 = vector.load %arg7[%c0_79, %c33_80] : memref<4x290xf32, #tpu.memory_space<vmem>>, vector<4x256xf32>
    %110 = vector.broadcast %8 : vector<1x256xf32> to vector<4x256xf32>
    %111 = arith.mulf %109, %110 : vector<4x256xf32>
    %c64 = arith.constant 64 : index
    %c0_81 = arith.constant 0 : index
    %112 = vector.load %arg2[%c64, %c0_81] : memref<144x4xf32, #tpu.memory_space<vmem>>, vector<4x4xf32>
    %cst_82 = arith.constant dense<0.000000e+00> : vector<4x256xf32>
    %113 = tpu.matmul %112, %111, %cst_82 {dimension_numbers = #tpu.dot_dimension_numbers<[1], [0], [0], [1], [0, 0, 1, 1], [], []>} : vector<4x4xf32>, vector<4x256xf32>, vector<4x256xf32> -> vector<4x256xf32>
    %114 = arith.addf %108, %113 : vector<4x256xf32>
    %c0_83 = arith.constant 0 : index
    %c34_84 = arith.constant 34 : index
    %115 = vector.load %arg7[%c0_83, %c34_84] : memref<4x290xf32, #tpu.memory_space<vmem>>, vector<4x256xf32>
    %116 = vector.broadcast %9 : vector<1x256xf32> to vector<4x256xf32>
    %117 = arith.mulf %115, %116 : vector<4x256xf32>
    %c68 = arith.constant 68 : index
    %c0_85 = arith.constant 0 : index
    %118 = vector.load %arg2[%c68, %c0_85] : memref<144x4xf32, #tpu.memory_space<vmem>>, vector<4x4xf32>
    %cst_86 = arith.constant dense<0.000000e+00> : vector<4x256xf32>
    %119 = tpu.matmul %118, %117, %cst_86 {dimension_numbers = #tpu.dot_dimension_numbers<[1], [0], [0], [1], [0, 0, 1, 1], [], []>} : vector<4x4xf32>, vector<4x256xf32>, vector<4x256xf32> -> vector<4x256xf32>
    %120 = arith.addf %114, %119 : vector<4x256xf32>
    %c4_87 = arith.constant 4 : index
    %c0_88 = arith.constant 0 : index
    %121 = vector.load %arg3[%c4_87, %c0_88] : memref<16x1xf32, #tpu.memory_space<vmem>>, vector<4x1xf32>
    %122 = vector.broadcast %121 : vector<4x1xf32> to vector<4x256xf32>
    %123 = arith.mulf %120, %122 : vector<4x256xf32>
    %c4_89 = arith.constant 4 : index
    %c0_90 = arith.constant 0 : index
    %124 = vector.load %arg4[%c4_89, %c0_90] : memref<16x1xf32, #tpu.memory_space<vmem>>, vector<4x1xf32>
    %125 = vector.broadcast %124 : vector<4x1xf32> to vector<4x256xf32>
    %126 = arith.addf %123, %125 : vector<4x256xf32>
    %127 = arith.addf %126, %10 : vector<4x256xf32>
    %cst_91 = arith.constant 0.000000e+00 : f32
    %128 = vector.broadcast %cst_91 : f32 to vector<4x256xf32>
    %129 = arith.maximumf %127, %128 : vector<4x256xf32>
    %c0_92 = arith.constant 0 : index
    %c17_93 = arith.constant 17 : index
    %130 = vector.load %arg7[%c0_92, %c17_93] : memref<4x290xf32, #tpu.memory_space<vmem>>, vector<4x256xf32>
    tpu.vector_store %arg7[%c0_92, %c17_93], %129 {strides = array<i32>} : memref<4x290xf32, #tpu.memory_space<vmem>>, vector<4x256xf32>,
    %c0_94 = arith.constant 0 : index
    %c0_95 = arith.constant 0 : index
    %131 = vector.load %arg7[%c0_94, %c0_95] : memref<4x290xf32, #tpu.memory_space<vmem>>, vector<4x256xf32>
    %132 = vector.broadcast %2 : vector<1x256xf32> to vector<4x256xf32>
    %133 = arith.mulf %131, %132 : vector<4x256xf32>
    %c72 = arith.constant 72 : index
    %c0_96 = arith.constant 0 : index
    %134 = vector.load %arg2[%c72, %c0_96] : memref<144x4xf32, #tpu.memory_space<vmem>>, vector<4x4xf32>
    %cst_97 = arith.constant dense<0.000000e+00> : vector<4x256xf32>
    %135 = tpu.matmul %134, %133, %cst_97 {dimension_numbers = #tpu.dot_dimension_numbers<[1], [0], [0], [1], [0, 0, 1, 1], [], []>} : vector<4x4xf32>, vector<4x256xf32>, vector<4x256xf32> -> vector<4x256xf32>
    %c0_98 = arith.constant 0 : index
    %c1_99 = arith.constant 1 : index
    %136 = vector.load %arg7[%c0_98, %c1_99] : memref<4x290xf32, #tpu.memory_space<vmem>>, vector<4x256xf32>
    %137 = vector.broadcast %3 : vector<1x256xf32> to vector<4x256xf32>
    %138 = arith.mulf %136, %137 : vector<4x256xf32>
    %c76 = arith.constant 76 : index
    %c0_100 = arith.constant 0 : index
    %139 = vector.load %arg2[%c76, %c0_100] : memref<144x4xf32, #tpu.memory_space<vmem>>, vector<4x4xf32>
    %cst_101 = arith.constant dense<0.000000e+00> : vector<4x256xf32>
    %140 = tpu.matmul %139, %138, %cst_101 {dimension_numbers = #tpu.dot_dimension_numbers<[1], [0], [0], [1], [0, 0, 1, 1], [], []>} : vector<4x4xf32>, vector<4x256xf32>, vector<4x256xf32> -> vector<4x256xf32>
    %141 = arith.addf %135, %140 : vector<4x256xf32>
    %c0_102 = arith.constant 0 : index
    %c2_103 = arith.constant 2 : index
    %142 = vector.load %arg7[%c0_102, %c2_103] : memref<4x290xf32, #tpu.memory_space<vmem>>, vector<4x256xf32>
    %143 = vector.broadcast %4 : vector<1x256xf32> to vector<4x256xf32>
    %144 = arith.mulf %142, %143 : vector<4x256xf32>
    %c80 = arith.constant 80 : index
    %c0_104 = arith.constant 0 : index
    %145 = vector.load %arg2[%c80, %c0_104] : memref<144x4xf32, #tpu.memory_space<vmem>>, vector<4x4xf32>
    %cst_105 = arith.constant dense<0.000000e+00> : vector<4x256xf32>
    %146 = tpu.matmul %145, %144, %cst_105 {dimension_numbers = #tpu.dot_dimension_numbers<[1], [0], [0], [1], [0, 0, 1, 1], [], []>} : vector<4x4xf32>, vector<4x256xf32>, vector<4x256xf32> -> vector<4x256xf32>
    %147 = arith.addf %141, %146 : vector<4x256xf32>
    %c0_106 = arith.constant 0 : index
    %c16_107 = arith.constant 16 : index
    %148 = vector.load %arg7[%c0_106, %c16_107] : memref<4x290xf32, #tpu.memory_space<vmem>>, vector<4x256xf32>
    %149 = vector.broadcast %5 : vector<1x256xf32> to vector<4x256xf32>
    %150 = arith.mulf %148, %149 : vector<4x256xf32>
    %c84 = arith.constant 84 : index
    %c0_108 = arith.constant 0 : index
    %151 = vector.load %arg2[%c84, %c0_108] : memref<144x4xf32, #tpu.memory_space<vmem>>, vector<4x4xf32>
    %cst_109 = arith.constant dense<0.000000e+00> : vector<4x256xf32>
    %152 = tpu.matmul %151, %150, %cst_109 {dimension_numbers = #tpu.dot_dimension_numbers<[1], [0], [0], [1], [0, 0, 1, 1], [], []>} : vector<4x4xf32>, vector<4x256xf32>, vector<4x256xf32> -> vector<4x256xf32>
    %153 = arith.addf %147, %152 : vector<4x256xf32>
    %c88 = arith.constant 88 : index
    %c0_110 = arith.constant 0 : index
    %154 = vector.load %arg2[%c88, %c0_110] : memref<144x4xf32, #tpu.memory_space<vmem>>, vector<4x4xf32>
    %cst_111 = arith.constant dense<0.000000e+00> : vector<4x256xf32>
    %155 = tpu.matmul %154, %129, %cst_111 {dimension_numbers = #tpu.dot_dimension_numbers<[1], [0], [0], [1], [0, 0, 1, 1], [], []>} : vector<4x4xf32>, vector<4x256xf32>, vector<4x256xf32> -> vector<4x256xf32>
    %156 = arith.addf %153, %155 : vector<4x256xf32>
    %c0_112 = arith.constant 0 : index
    %c18_113 = arith.constant 18 : index
    %157 = vector.load %arg7[%c0_112, %c18_113] : memref<4x290xf32, #tpu.memory_space<vmem>>, vector<4x256xf32>
    %158 = vector.broadcast %6 : vector<1x256xf32> to vector<4x256xf32>
    %159 = arith.mulf %157, %158 : vector<4x256xf32>
    %c92 = arith.constant 92 : index
    %c0_114 = arith.constant 0 : index
    %160 = vector.load %arg2[%c92, %c0_114] : memref<144x4xf32, #tpu.memory_space<vmem>>, vector<4x4xf32>
    %cst_115 = arith.constant dense<0.000000e+00> : vector<4x256xf32>
    %161 = tpu.matmul %160, %159, %cst_115 {dimension_numbers = #tpu.dot_dimension_numbers<[1], [0], [0], [1], [0, 0, 1, 1], [], []>} : vector<4x4xf32>, vector<4x256xf32>, vector<4x256xf32> -> vector<4x256xf32>
    %162 = arith.addf %156, %161 : vector<4x256xf32>
    %c0_116 = arith.constant 0 : index
    %c32_117 = arith.constant 32 : index
    %163 = vector.load %arg7[%c0_116, %c32_117] : memref<4x290xf32, #tpu.memory_space<vmem>>, vector<4x256xf32>
    %164 = vector.broadcast %7 : vector<1x256xf32> to vector<4x256xf32>
    %165 = arith.mulf %163, %164 : vector<4x256xf32>
    %c96 = arith.constant 96 : index
    %c0_118 = arith.constant 0 : index
    %166 = vector.load %arg2[%c96, %c0_118] : memref<144x4xf32, #tpu.memory_space<vmem>>, vector<4x4xf32>
    %cst_119 = arith.constant dense<0.000000e+00> : vector<4x256xf32>
    %167 = tpu.matmul %166, %165, %cst_119 {dimension_numbers = #tpu.dot_dimension_numbers<[1], [0], [0], [1], [0, 0, 1, 1], [], []>} : vector<4x4xf32>, vector<4x256xf32>, vector<4x256xf32> -> vector<4x256xf32>
    %168 = arith.addf %162, %167 : vector<4x256xf32>
    %c0_120 = arith.constant 0 : index
    %c33_121 = arith.constant 33 : index
    %169 = vector.load %arg7[%c0_120, %c33_121] : memref<4x290xf32, #tpu.memory_space<vmem>>, vector<4x256xf32>
    %170 = vector.broadcast %8 : vector<1x256xf32> to vector<4x256xf32>
    %171 = arith.mulf %169, %170 : vector<4x256xf32>
    %c100 = arith.constant 100 : index
    %c0_122 = arith.constant 0 : index
    %172 = vector.load %arg2[%c100, %c0_122] : memref<144x4xf32, #tpu.memory_space<vmem>>, vector<4x4xf32>
    %cst_123 = arith.constant dense<0.000000e+00> : vector<4x256xf32>
    %173 = tpu.matmul %172, %171, %cst_123 {dimension_numbers = #tpu.dot_dimension_numbers<[1], [0], [0], [1], [0, 0, 1, 1], [], []>} : vector<4x4xf32>, vector<4x256xf32>, vector<4x256xf32> -> vector<4x256xf32>
    %174 = arith.addf %168, %173 : vector<4x256xf32>
    %c0_124 = arith.constant 0 : index
    %c34_125 = arith.constant 34 : index
    %175 = vector.load %arg7[%c0_124, %c34_125] : memref<4x290xf32, #tpu.memory_space<vmem>>, vector<4x256xf32>
    %176 = vector.broadcast %9 : vector<1x256xf32> to vector<4x256xf32>
    %177 = arith.mulf %175, %176 : vector<4x256xf32>
    %c104 = arith.constant 104 : index
    %c0_126 = arith.constant 0 : index
    %178 = vector.load %arg2[%c104, %c0_126] : memref<144x4xf32, #tpu.memory_space<vmem>>, vector<4x4xf32>
    %cst_127 = arith.constant dense<0.000000e+00> : vector<4x256xf32>
    %179 = tpu.matmul %178, %177, %cst_127 {dimension_numbers = #tpu.dot_dimension_numbers<[1], [0], [0], [1], [0, 0, 1, 1], [], []>} : vector<4x4xf32>, vector<4x256xf32>, vector<4x256xf32> -> vector<4x256xf32>
    %180 = arith.addf %174, %179 : vector<4x256xf32>
    %c8_128 = arith.constant 8 : index
    %c0_129 = arith.constant 0 : index
    %181 = vector.load %arg3[%c8_128, %c0_129] : memref<16x1xf32, #tpu.memory_space<vmem>>, vector<4x1xf32>
    %182 = vector.broadcast %181 : vector<4x1xf32> to vector<4x256xf32>
    %183 = arith.mulf %180, %182 : vector<4x256xf32>
    %c8_130 = arith.constant 8 : index
    %c0_131 = arith.constant 0 : index
    %184 = vector.load %arg4[%c8_130, %c0_131] : memref<16x1xf32, #tpu.memory_space<vmem>>, vector<4x1xf32>
    %185 = vector.broadcast %184 : vector<4x1xf32> to vector<4x256xf32>
    %186 = arith.addf %183, %185 : vector<4x256xf32>
    %cst_132 = arith.constant 0.000000e+00 : f32
    %187 = vector.broadcast %cst_132 : f32 to vector<4x256xf32>
    %188 = arith.maximumf %186, %187 : vector<4x256xf32>
    %c0_133 = arith.constant 0 : index
    %c17_134 = arith.constant 17 : index
    %189 = vector.load %arg7[%c0_133, %c17_134] : memref<4x290xf32, #tpu.memory_space<vmem>>, vector<4x256xf32>
    tpu.vector_store %arg7[%c0_133, %c17_134], %188 {strides = array<i32>} : memref<4x290xf32, #tpu.memory_space<vmem>>, vector<4x256xf32>,
    %c0_135 = arith.constant 0 : index
    %c0_136 = arith.constant 0 : index
    %190 = vector.load %arg7[%c0_135, %c0_136] : memref<4x290xf32, #tpu.memory_space<vmem>>, vector<4x256xf32>
    %191 = vector.broadcast %2 : vector<1x256xf32> to vector<4x256xf32>
    %192 = arith.mulf %190, %191 : vector<4x256xf32>
    %c108 = arith.constant 108 : index
    %c0_137 = arith.constant 0 : index
    %193 = vector.load %arg2[%c108, %c0_137] : memref<144x4xf32, #tpu.memory_space<vmem>>, vector<4x4xf32>
    %cst_138 = arith.constant dense<0.000000e+00> : vector<4x256xf32>
    %194 = tpu.matmul %193, %192, %cst_138 {dimension_numbers = #tpu.dot_dimension_numbers<[1], [0], [0], [1], [0, 0, 1, 1], [], []>} : vector<4x4xf32>, vector<4x256xf32>, vector<4x256xf32> -> vector<4x256xf32>
    %c0_139 = arith.constant 0 : index
    %c1_140 = arith.constant 1 : index
    %195 = vector.load %arg7[%c0_139, %c1_140] : memref<4x290xf32, #tpu.memory_space<vmem>>, vector<4x256xf32>
    %196 = vector.broadcast %3 : vector<1x256xf32> to vector<4x256xf32>
    %197 = arith.mulf %195, %196 : vector<4x256xf32>
    %c112 = arith.constant 112 : index
    %c0_141 = arith.constant 0 : index
    %198 = vector.load %arg2[%c112, %c0_141] : memref<144x4xf32, #tpu.memory_space<vmem>>, vector<4x4xf32>
    %cst_142 = arith.constant dense<0.000000e+00> : vector<4x256xf32>
    %199 = tpu.matmul %198, %197, %cst_142 {dimension_numbers = #tpu.dot_dimension_numbers<[1], [0], [0], [1], [0, 0, 1, 1], [], []>} : vector<4x4xf32>, vector<4x256xf32>, vector<4x256xf32> -> vector<4x256xf32>
    %200 = arith.addf %194, %199 : vector<4x256xf32>
    %c0_143 = arith.constant 0 : index
    %c2_144 = arith.constant 2 : index
    %201 = vector.load %arg7[%c0_143, %c2_144] : memref<4x290xf32, #tpu.memory_space<vmem>>, vector<4x256xf32>
    %202 = vector.broadcast %4 : vector<1x256xf32> to vector<4x256xf32>
    %203 = arith.mulf %201, %202 : vector<4x256xf32>
    %c116 = arith.constant 116 : index
    %c0_145 = arith.constant 0 : index
    %204 = vector.load %arg2[%c116, %c0_145] : memref<144x4xf32, #tpu.memory_space<vmem>>, vector<4x4xf32>
    %cst_146 = arith.constant dense<0.000000e+00> : vector<4x256xf32>
    %205 = tpu.matmul %204, %203, %cst_146 {dimension_numbers = #tpu.dot_dimension_numbers<[1], [0], [0], [1], [0, 0, 1, 1], [], []>} : vector<4x4xf32>, vector<4x256xf32>, vector<4x256xf32> -> vector<4x256xf32>
    %206 = arith.addf %200, %205 : vector<4x256xf32>
    %c0_147 = arith.constant 0 : index
    %c16_148 = arith.constant 16 : index
    %207 = vector.load %arg7[%c0_147, %c16_148] : memref<4x290xf32, #tpu.memory_space<vmem>>, vector<4x256xf32>
    %208 = vector.broadcast %5 : vector<1x256xf32> to vector<4x256xf32>
    %209 = arith.mulf %207, %208 : vector<4x256xf32>
    %c120 = arith.constant 120 : index
    %c0_149 = arith.constant 0 : index
    %210 = vector.load %arg2[%c120, %c0_149] : memref<144x4xf32, #tpu.memory_space<vmem>>, vector<4x4xf32>
    %cst_150 = arith.constant dense<0.000000e+00> : vector<4x256xf32>
    %211 = tpu.matmul %210, %209, %cst_150 {dimension_numbers = #tpu.dot_dimension_numbers<[1], [0], [0], [1], [0, 0, 1, 1], [], []>} : vector<4x4xf32>, vector<4x256xf32>, vector<4x256xf32> -> vector<4x256xf32>
    %212 = arith.addf %206, %211 : vector<4x256xf32>
    %c124 = arith.constant 124 : index
    %c0_151 = arith.constant 0 : index
    %213 = vector.load %arg2[%c124, %c0_151] : memref<144x4xf32, #tpu.memory_space<vmem>>, vector<4x4xf32>
    %cst_152 = arith.constant dense<0.000000e+00> : vector<4x256xf32>
    %214 = tpu.matmul %213, %188, %cst_152 {dimension_numbers = #tpu.dot_dimension_numbers<[1], [0], [0], [1], [0, 0, 1, 1], [], []>} : vector<4x4xf32>, vector<4x256xf32>, vector<4x256xf32> -> vector<4x256xf32>
    %215 = arith.addf %212, %214 : vector<4x256xf32>
    %c0_153 = arith.constant 0 : index
    %c18_154 = arith.constant 18 : index
    %216 = vector.load %arg7[%c0_153, %c18_154] : memref<4x290xf32, #tpu.memory_space<vmem>>, vector<4x256xf32>
    %217 = vector.broadcast %6 : vector<1x256xf32> to vector<4x256xf32>
    %218 = arith.mulf %216, %217 : vector<4x256xf32>
    %c128 = arith.constant 128 : index
    %c0_155 = arith.constant 0 : index
    %219 = vector.load %arg2[%c128, %c0_155] : memref<144x4xf32, #tpu.memory_space<vmem>>, vector<4x4xf32>
    %cst_156 = arith.constant dense<0.000000e+00> : vector<4x256xf32>
    %220 = tpu.matmul %219, %218, %cst_156 {dimension_numbers = #tpu.dot_dimension_numbers<[1], [0], [0], [1], [0, 0, 1, 1], [], []>} : vector<4x4xf32>, vector<4x256xf32>, vector<4x256xf32> -> vector<4x256xf32>
    %221 = arith.addf %215, %220 : vector<4x256xf32>
    %c0_157 = arith.constant 0 : index
    %c32_158 = arith.constant 32 : index
    %222 = vector.load %arg7[%c0_157, %c32_158] : memref<4x290xf32, #tpu.memory_space<vmem>>, vector<4x256xf32>
    %223 = vector.broadcast %7 : vector<1x256xf32> to vector<4x256xf32>
    %224 = arith.mulf %222, %223 : vector<4x256xf32>
    %c132 = arith.constant 132 : index
    %c0_159 = arith.constant 0 : index
    %225 = vector.load %arg2[%c132, %c0_159] : memref<144x4xf32, #tpu.memory_space<vmem>>, vector<4x4xf32>
    %cst_160 = arith.constant dense<0.000000e+00> : vector<4x256xf32>
    %226 = tpu.matmul %225, %224, %cst_160 {dimension_numbers = #tpu.dot_dimension_numbers<[1], [0], [0], [1], [0, 0, 1, 1], [], []>} : vector<4x4xf32>, vector<4x256xf32>, vector<4x256xf32> -> vector<4x256xf32>
    %227 = arith.addf %221, %226 : vector<4x256xf32>
    %c0_161 = arith.constant 0 : index
    %c33_162 = arith.constant 33 : index
    %228 = vector.load %arg7[%c0_161, %c33_162] : memref<4x290xf32, #tpu.memory_space<vmem>>, vector<4x256xf32>
    %229 = vector.broadcast %8 : vector<1x256xf32> to vector<4x256xf32>
    %230 = arith.mulf %228, %229 : vector<4x256xf32>
    %c136 = arith.constant 136 : index
    %c0_163 = arith.constant 0 : index
    %231 = vector.load %arg2[%c136, %c0_163] : memref<144x4xf32, #tpu.memory_space<vmem>>, vector<4x4xf32>
    %cst_164 = arith.constant dense<0.000000e+00> : vector<4x256xf32>
    %232 = tpu.matmul %231, %230, %cst_164 {dimension_numbers = #tpu.dot_dimension_numbers<[1], [0], [0], [1], [0, 0, 1, 1], [], []>} : vector<4x4xf32>, vector<4x256xf32>, vector<4x256xf32> -> vector<4x256xf32>
    %233 = arith.addf %227, %232 : vector<4x256xf32>
    %c0_165 = arith.constant 0 : index
    %c34_166 = arith.constant 34 : index
    %234 = vector.load %arg7[%c0_165, %c34_166] : memref<4x290xf32, #tpu.memory_space<vmem>>, vector<4x256xf32>
    %235 = vector.broadcast %9 : vector<1x256xf32> to vector<4x256xf32>
    %236 = arith.mulf %234, %235 : vector<4x256xf32>
    %c140 = arith.constant 140 : index
    %c0_167 = arith.constant 0 : index
    %237 = vector.load %arg2[%c140, %c0_167] : memref<144x4xf32, #tpu.memory_space<vmem>>, vector<4x4xf32>
    %cst_168 = arith.constant dense<0.000000e+00> : vector<4x256xf32>
    %238 = tpu.matmul %237, %236, %cst_168 {dimension_numbers = #tpu.dot_dimension_numbers<[1], [0], [0], [1], [0, 0, 1, 1], [], []>} : vector<4x4xf32>, vector<4x256xf32>, vector<4x256xf32> -> vector<4x256xf32>
    %239 = arith.addf %233, %238 : vector<4x256xf32>
    %c12_169 = arith.constant 12 : index
    %c0_170 = arith.constant 0 : index
    %240 = vector.load %arg3[%c12_169, %c0_170] : memref<16x1xf32, #tpu.memory_space<vmem>>, vector<4x1xf32>
    %241 = vector.broadcast %240 : vector<4x1xf32> to vector<4x256xf32>
    %242 = arith.mulf %239, %241 : vector<4x256xf32>
    %c12_171 = arith.constant 12 : index
    %c0_172 = arith.constant 0 : index
    %243 = vector.load %arg4[%c12_171, %c0_172] : memref<16x1xf32, #tpu.memory_space<vmem>>, vector<4x1xf32>
    %244 = vector.broadcast %243 : vector<4x1xf32> to vector<4x256xf32>
    %245 = arith.addf %242, %244 : vector<4x256xf32>
    %246 = arith.addf %245, %129 : vector<4x256xf32>
    %cst_173 = arith.constant 0.000000e+00 : f32
    %247 = vector.broadcast %cst_173 : f32 to vector<4x256xf32>
    %248 = arith.maximumf %246, %247 : vector<4x256xf32>
    %c0_174 = arith.constant 0 : index
    %c0_175 = arith.constant 0 : index
    %249 = vector.load %arg6[%c0_174, %c0_175] : memref<4x256xf32, #tpu.memory_space<vmem>>, vector<4x256xf32>
    tpu.vector_store %arg6[%c0_174, %c0_175], %248 {strides = array<i32>} : memref<4x256xf32, #tpu.memory_space<vmem>>, vector<4x256xf32>,
    return
  }
  func.func @transform_0(%arg0: i32) -> (i32, i32) {
    %c0_i32 = arith.constant 0 : i32
    %c0_i32_0 = arith.constant 0 : i32
    return %c0_i32, %arg0 : i32, i32
  }
  func.func @transform_1(%arg0: i32) -> (i32, i32) {
    %c0_i32 = arith.constant 0 : i32
    %c0_i32_0 = arith.constant 0 : i32
    %c0_i32_1 = arith.constant 0 : i32
    return %c0_i32, %c0_i32_0 : i32, i32
  }
  func.func @transform_2(%arg0: i32) -> (i32, i32) {
    %c0_i32 = arith.constant 0 : i32
    %c0_i32_0 = arith.constant 0 : i32
    %c0_i32_1 = arith.constant 0 : i32
    return %c0_i32, %c0_i32_0 : i32, i32
  }
  func.func @transform_3(%arg0: i32) -> (i32, i32) {
    %c0_i32 = arith.constant 0 : i32
    %c0_i32_0 = arith.constant 0 : i32
    %c0_i32_1 = arith.constant 0 : i32
    return %c0_i32, %c0_i32_0 : i32, i32
  }
  func.func @transform_4(%arg0: i32) -> (i32, i32) {
    %c0_i32 = arith.constant 0 : i32
    %c0_i32_0 = arith.constant 0 : i32
    %c0_i32_1 = arith.constant 0 : i32
    return %c0_i32, %c0_i32_0 : i32, i32
  }
  func.func @transform_5(%arg0: i32) -> (i32, i32) {
    %c0_i32 = arith.constant 0 : i32
    %c0_i32_0 = arith.constant 0 : i32
    return %c0_i32, %arg0 : i32, i32
  }
}

module attributes {stable_mosaic.version = 11 : i64} {
  func.func @_branch_fuse01_kernel(%arg0: i32, %arg1: memref<8x128xf32, #tpu.memory_space<vmem>>, %arg2: memref<288x8xf32, #tpu.memory_space<vmem>>, %arg3: memref<32x1xf32, #tpu.memory_space<vmem>>, %arg4: memref<32x1xf32, #tpu.memory_space<vmem>>, %arg5: memref<9x128xf32, #tpu.memory_space<vmem>>, %arg6: memref<4x8xf32, #tpu.memory_space<vmem>>, %arg7: memref<4x1xf32, #tpu.memory_space<vmem>>, %arg8: memref<4x1xf32, #tpu.memory_space<vmem>>, %arg9: memref<8x128xf32, #tpu.memory_space<vmem>>, %arg10: memref<4x128xf32, #tpu.memory_space<vmem>>, %arg11: memref<8x146xf32, #tpu.memory_space<vmem>>) attributes {dimension_semantics = [#tpu.dimension_semantics<parallel>], iteration_bounds = array<i64: 1>, scalar_prefetch = 0 : i64, scratch_operands = 1 : i64, tpu.core_type = #tpu.core_type<tc>, window_params = [{transform_indices = @transform_0, window_bounds = array<i64: 8, 128>}, {pipeline_mode = #tpu.pipeline_mode<synchronous>, transform_indices = @transform_1, window_bounds = array<i64: 288, 8>}, {pipeline_mode = #tpu.pipeline_mode<synchronous>, transform_indices = @transform_2, window_bounds = array<i64: 32, 1>}, {pipeline_mode = #tpu.pipeline_mode<synchronous>, transform_indices = @transform_3, window_bounds = array<i64: 32, 1>}, {pipeline_mode = #tpu.pipeline_mode<synchronous>, transform_indices = @transform_4, window_bounds = array<i64: 9, 128>}, {pipeline_mode = #tpu.pipeline_mode<synchronous>, transform_indices = @transform_5, window_bounds = array<i64: 4, 8>}, {pipeline_mode = #tpu.pipeline_mode<synchronous>, transform_indices = @transform_6, window_bounds = array<i64: 4, 1>}, {pipeline_mode = #tpu.pipeline_mode<synchronous>, transform_indices = @transform_7, window_bounds = array<i64: 4, 1>}, {transform_indices = @transform_8, window_bounds = array<i64: 8, 128>}, {transform_indices = @transform_9, window_bounds = array<i64: 4, 128>}]} {
    %cst = arith.constant 0.000000e+00 : f32
    %0 = vector.broadcast %cst : f32 to vector<8x146xf32>
    %c0 = arith.constant 0 : index
    %c0_0 = arith.constant 0 : index
    %1 = vector.load %arg11[%c0, %c0_0] : memref<8x146xf32, #tpu.memory_space<vmem>>, vector<8x146xf32>
    tpu.vector_store %arg11[%c0, %c0_0], %0 {strides = array<i32>} : memref<8x146xf32, #tpu.memory_space<vmem>>, vector<8x146xf32>,
    %c0_1 = arith.constant 0 : index
    %c0_2 = arith.constant 0 : index
    %2 = vector.load %arg5[%c0_1, %c0_2] : memref<9x128xf32, #tpu.memory_space<vmem>>, vector<1x128xf32>
    %c1 = arith.constant 1 : index
    %c0_3 = arith.constant 0 : index
    %3 = vector.load %arg5[%c1, %c0_3] : memref<9x128xf32, #tpu.memory_space<vmem>>, vector<1x128xf32>
    %c2 = arith.constant 2 : index
    %c0_4 = arith.constant 0 : index
    %4 = vector.load %arg5[%c2, %c0_4] : memref<9x128xf32, #tpu.memory_space<vmem>>, vector<1x128xf32>
    %c3 = arith.constant 3 : index
    %c0_5 = arith.constant 0 : index
    %5 = vector.load %arg5[%c3, %c0_5] : memref<9x128xf32, #tpu.memory_space<vmem>>, vector<1x128xf32>
    %c5 = arith.constant 5 : index
    %c0_6 = arith.constant 0 : index
    %6 = vector.load %arg5[%c5, %c0_6] : memref<9x128xf32, #tpu.memory_space<vmem>>, vector<1x128xf32>
    %c6 = arith.constant 6 : index
    %c0_7 = arith.constant 0 : index
    %7 = vector.load %arg5[%c6, %c0_7] : memref<9x128xf32, #tpu.memory_space<vmem>>, vector<1x128xf32>
    %c7 = arith.constant 7 : index
    %c0_8 = arith.constant 0 : index
    %8 = vector.load %arg5[%c7, %c0_8] : memref<9x128xf32, #tpu.memory_space<vmem>>, vector<1x128xf32>
    %c8 = arith.constant 8 : index
    %c0_9 = arith.constant 0 : index
    %9 = vector.load %arg5[%c8, %c0_9] : memref<9x128xf32, #tpu.memory_space<vmem>>, vector<1x128xf32>
    %c0_10 = arith.constant 0 : index
    %c0_11 = arith.constant 0 : index
    %10 = vector.load %arg1[%c0_10, %c0_11] : memref<8x128xf32, #tpu.memory_space<vmem>>, vector<8x128xf32>
    %c0_12 = arith.constant 0 : index
    %c9 = arith.constant 9 : index
    %11 = vector.load %arg11[%c0_12, %c9] : memref<8x146xf32, #tpu.memory_space<vmem>>, vector<8x128xf32>
    tpu.vector_store %arg11[%c0_12, %c9], %10 {strides = array<i32>} : memref<8x146xf32, #tpu.memory_space<vmem>>, vector<8x128xf32>,
    %c0_13 = arith.constant 0 : index
    %c0_14 = arith.constant 0 : index
    %12 = vector.load %arg11[%c0_13, %c0_14] : memref<8x146xf32, #tpu.memory_space<vmem>>, vector<8x128xf32>
    %13 = vector.broadcast %2 : vector<1x128xf32> to vector<8x128xf32>
    %14 = arith.mulf %12, %13 : vector<8x128xf32>
    %c0_15 = arith.constant 0 : index
    %c0_16 = arith.constant 0 : index
    %15 = vector.load %arg2[%c0_15, %c0_16] : memref<288x8xf32, #tpu.memory_space<vmem>>, vector<8x8xf32>
    %cst_17 = arith.constant dense<0.000000e+00> : vector<8x128xf32>
    %16 = tpu.matmul %15, %14, %cst_17 {dimension_numbers = #tpu.dot_dimension_numbers<[1], [0], [0], [1], [0, 0, 1, 1], [], []>} : vector<8x8xf32>, vector<8x128xf32>, vector<8x128xf32> -> vector<8x128xf32>
    %c0_18 = arith.constant 0 : index
    %c1_19 = arith.constant 1 : index
    %17 = vector.load %arg11[%c0_18, %c1_19] : memref<8x146xf32, #tpu.memory_space<vmem>>, vector<8x128xf32>
    %18 = vector.broadcast %3 : vector<1x128xf32> to vector<8x128xf32>
    %19 = arith.mulf %17, %18 : vector<8x128xf32>
    %c8_20 = arith.constant 8 : index
    %c0_21 = arith.constant 0 : index
    %20 = vector.load %arg2[%c8_20, %c0_21] : memref<288x8xf32, #tpu.memory_space<vmem>>, vector<8x8xf32>
    %cst_22 = arith.constant dense<0.000000e+00> : vector<8x128xf32>
    %21 = tpu.matmul %20, %19, %cst_22 {dimension_numbers = #tpu.dot_dimension_numbers<[1], [0], [0], [1], [0, 0, 1, 1], [], []>} : vector<8x8xf32>, vector<8x128xf32>, vector<8x128xf32> -> vector<8x128xf32>
    %22 = arith.addf %16, %21 : vector<8x128xf32>
    %c0_23 = arith.constant 0 : index
    %c2_24 = arith.constant 2 : index
    %23 = vector.load %arg11[%c0_23, %c2_24] : memref<8x146xf32, #tpu.memory_space<vmem>>, vector<8x128xf32>
    %24 = vector.broadcast %4 : vector<1x128xf32> to vector<8x128xf32>
    %25 = arith.mulf %23, %24 : vector<8x128xf32>
    %c16 = arith.constant 16 : index
    %c0_25 = arith.constant 0 : index
    %26 = vector.load %arg2[%c16, %c0_25] : memref<288x8xf32, #tpu.memory_space<vmem>>, vector<8x8xf32>
    %cst_26 = arith.constant dense<0.000000e+00> : vector<8x128xf32>
    %27 = tpu.matmul %26, %25, %cst_26 {dimension_numbers = #tpu.dot_dimension_numbers<[1], [0], [0], [1], [0, 0, 1, 1], [], []>} : vector<8x8xf32>, vector<8x128xf32>, vector<8x128xf32> -> vector<8x128xf32>
    %28 = arith.addf %22, %27 : vector<8x128xf32>
    %c0_27 = arith.constant 0 : index
    %c8_28 = arith.constant 8 : index
    %29 = vector.load %arg11[%c0_27, %c8_28] : memref<8x146xf32, #tpu.memory_space<vmem>>, vector<8x128xf32>
    %30 = vector.broadcast %5 : vector<1x128xf32> to vector<8x128xf32>
    %31 = arith.mulf %29, %30 : vector<8x128xf32>
    %c24 = arith.constant 24 : index
    %c0_29 = arith.constant 0 : index
    %32 = vector.load %arg2[%c24, %c0_29] : memref<288x8xf32, #tpu.memory_space<vmem>>, vector<8x8xf32>
    %cst_30 = arith.constant dense<0.000000e+00> : vector<8x128xf32>
    %33 = tpu.matmul %32, %31, %cst_30 {dimension_numbers = #tpu.dot_dimension_numbers<[1], [0], [0], [1], [0, 0, 1, 1], [], []>} : vector<8x8xf32>, vector<8x128xf32>, vector<8x128xf32> -> vector<8x128xf32>
    %34 = arith.addf %28, %33 : vector<8x128xf32>
    %c32 = arith.constant 32 : index
    %c0_31 = arith.constant 0 : index
    %35 = vector.load %arg2[%c32, %c0_31] : memref<288x8xf32, #tpu.memory_space<vmem>>, vector<8x8xf32>
    %cst_32 = arith.constant dense<0.000000e+00> : vector<8x128xf32>
    %36 = tpu.matmul %35, %10, %cst_32 {dimension_numbers = #tpu.dot_dimension_numbers<[1], [0], [0], [1], [0, 0, 1, 1], [], []>} : vector<8x8xf32>, vector<8x128xf32>, vector<8x128xf32> -> vector<8x128xf32>
    %37 = arith.addf %34, %36 : vector<8x128xf32>
    %c0_33 = arith.constant 0 : index
    %c10 = arith.constant 10 : index
    %38 = vector.load %arg11[%c0_33, %c10] : memref<8x146xf32, #tpu.memory_space<vmem>>, vector<8x128xf32>
    %39 = vector.broadcast %6 : vector<1x128xf32> to vector<8x128xf32>
    %40 = arith.mulf %38, %39 : vector<8x128xf32>
    %c40 = arith.constant 40 : index
    %c0_34 = arith.constant 0 : index
    %41 = vector.load %arg2[%c40, %c0_34] : memref<288x8xf32, #tpu.memory_space<vmem>>, vector<8x8xf32>
    %cst_35 = arith.constant dense<0.000000e+00> : vector<8x128xf32>
    %42 = tpu.matmul %41, %40, %cst_35 {dimension_numbers = #tpu.dot_dimension_numbers<[1], [0], [0], [1], [0, 0, 1, 1], [], []>} : vector<8x8xf32>, vector<8x128xf32>, vector<8x128xf32> -> vector<8x128xf32>
    %43 = arith.addf %37, %42 : vector<8x128xf32>
    %c0_36 = arith.constant 0 : index
    %c16_37 = arith.constant 16 : index
    %44 = vector.load %arg11[%c0_36, %c16_37] : memref<8x146xf32, #tpu.memory_space<vmem>>, vector<8x128xf32>
    %45 = vector.broadcast %7 : vector<1x128xf32> to vector<8x128xf32>
    %46 = arith.mulf %44, %45 : vector<8x128xf32>
    %c48 = arith.constant 48 : index
    %c0_38 = arith.constant 0 : index
    %47 = vector.load %arg2[%c48, %c0_38] : memref<288x8xf32, #tpu.memory_space<vmem>>, vector<8x8xf32>
    %cst_39 = arith.constant dense<0.000000e+00> : vector<8x128xf32>
    %48 = tpu.matmul %47, %46, %cst_39 {dimension_numbers = #tpu.dot_dimension_numbers<[1], [0], [0], [1], [0, 0, 1, 1], [], []>} : vector<8x8xf32>, vector<8x128xf32>, vector<8x128xf32> -> vector<8x128xf32>
    %49 = arith.addf %43, %48 : vector<8x128xf32>
    %c0_40 = arith.constant 0 : index
    %c17 = arith.constant 17 : index
    %50 = vector.load %arg11[%c0_40, %c17] : memref<8x146xf32, #tpu.memory_space<vmem>>, vector<8x128xf32>
    %51 = vector.broadcast %8 : vector<1x128xf32> to vector<8x128xf32>
    %52 = arith.mulf %50, %51 : vector<8x128xf32>
    %c56 = arith.constant 56 : index
    %c0_41 = arith.constant 0 : index
    %53 = vector.load %arg2[%c56, %c0_41] : memref<288x8xf32, #tpu.memory_space<vmem>>, vector<8x8xf32>
    %cst_42 = arith.constant dense<0.000000e+00> : vector<8x128xf32>
    %54 = tpu.matmul %53, %52, %cst_42 {dimension_numbers = #tpu.dot_dimension_numbers<[1], [0], [0], [1], [0, 0, 1, 1], [], []>} : vector<8x8xf32>, vector<8x128xf32>, vector<8x128xf32> -> vector<8x128xf32>
    %55 = arith.addf %49, %54 : vector<8x128xf32>
    %c0_43 = arith.constant 0 : index
    %c18 = arith.constant 18 : index
    %56 = vector.load %arg11[%c0_43, %c18] : memref<8x146xf32, #tpu.memory_space<vmem>>, vector<8x128xf32>
    %57 = vector.broadcast %9 : vector<1x128xf32> to vector<8x128xf32>
    %58 = arith.mulf %56, %57 : vector<8x128xf32>
    %c64 = arith.constant 64 : index
    %c0_44 = arith.constant 0 : index
    %59 = vector.load %arg2[%c64, %c0_44] : memref<288x8xf32, #tpu.memory_space<vmem>>, vector<8x8xf32>
    %cst_45 = arith.constant dense<0.000000e+00> : vector<8x128xf32>
    %60 = tpu.matmul %59, %58, %cst_45 {dimension_numbers = #tpu.dot_dimension_numbers<[1], [0], [0], [1], [0, 0, 1, 1], [], []>} : vector<8x8xf32>, vector<8x128xf32>, vector<8x128xf32> -> vector<8x128xf32>
    %61 = arith.addf %55, %60 : vector<8x128xf32>
    %c0_46 = arith.constant 0 : index
    %c0_47 = arith.constant 0 : index
    %62 = vector.load %arg3[%c0_46, %c0_47] : memref<32x1xf32, #tpu.memory_space<vmem>>, vector<8x1xf32>
    %63 = vector.broadcast %62 : vector<8x1xf32> to vector<8x128xf32>
    %64 = arith.mulf %61, %63 : vector<8x128xf32>
    %c0_48 = arith.constant 0 : index
    %c0_49 = arith.constant 0 : index
    %65 = vector.load %arg4[%c0_48, %c0_49] : memref<32x1xf32, #tpu.memory_space<vmem>>, vector<8x1xf32>
    %66 = vector.broadcast %65 : vector<8x1xf32> to vector<8x128xf32>
    %67 = arith.addf %64, %66 : vector<8x128xf32>
    %cst_50 = arith.constant 0.000000e+00 : f32
    %68 = vector.broadcast %cst_50 : f32 to vector<8x128xf32>
    %69 = arith.maximumf %67, %68 : vector<8x128xf32>
    %c0_51 = arith.constant 0 : index
    %c9_52 = arith.constant 9 : index
    %70 = vector.load %arg11[%c0_51, %c9_52] : memref<8x146xf32, #tpu.memory_space<vmem>>, vector<8x128xf32>
    tpu.vector_store %arg11[%c0_51, %c9_52], %69 {strides = array<i32>} : memref<8x146xf32, #tpu.memory_space<vmem>>, vector<8x128xf32>,
    %c0_53 = arith.constant 0 : index
    %c0_54 = arith.constant 0 : index
    %71 = vector.load %arg11[%c0_53, %c0_54] : memref<8x146xf32, #tpu.memory_space<vmem>>, vector<8x128xf32>
    %72 = vector.broadcast %2 : vector<1x128xf32> to vector<8x128xf32>
    %73 = arith.mulf %71, %72 : vector<8x128xf32>
    %c72 = arith.constant 72 : index
    %c0_55 = arith.constant 0 : index
    %74 = vector.load %arg2[%c72, %c0_55] : memref<288x8xf32, #tpu.memory_space<vmem>>, vector<8x8xf32>
    %cst_56 = arith.constant dense<0.000000e+00> : vector<8x128xf32>
    %75 = tpu.matmul %74, %73, %cst_56 {dimension_numbers = #tpu.dot_dimension_numbers<[1], [0], [0], [1], [0, 0, 1, 1], [], []>} : vector<8x8xf32>, vector<8x128xf32>, vector<8x128xf32> -> vector<8x128xf32>
    %c0_57 = arith.constant 0 : index
    %c1_58 = arith.constant 1 : index
    %76 = vector.load %arg11[%c0_57, %c1_58] : memref<8x146xf32, #tpu.memory_space<vmem>>, vector<8x128xf32>
    %77 = vector.broadcast %3 : vector<1x128xf32> to vector<8x128xf32>
    %78 = arith.mulf %76, %77 : vector<8x128xf32>
    %c80 = arith.constant 80 : index
    %c0_59 = arith.constant 0 : index
    %79 = vector.load %arg2[%c80, %c0_59] : memref<288x8xf32, #tpu.memory_space<vmem>>, vector<8x8xf32>
    %cst_60 = arith.constant dense<0.000000e+00> : vector<8x128xf32>
    %80 = tpu.matmul %79, %78, %cst_60 {dimension_numbers = #tpu.dot_dimension_numbers<[1], [0], [0], [1], [0, 0, 1, 1], [], []>} : vector<8x8xf32>, vector<8x128xf32>, vector<8x128xf32> -> vector<8x128xf32>
    %81 = arith.addf %75, %80 : vector<8x128xf32>
    %c0_61 = arith.constant 0 : index
    %c2_62 = arith.constant 2 : index
    %82 = vector.load %arg11[%c0_61, %c2_62] : memref<8x146xf32, #tpu.memory_space<vmem>>, vector<8x128xf32>
    %83 = vector.broadcast %4 : vector<1x128xf32> to vector<8x128xf32>
    %84 = arith.mulf %82, %83 : vector<8x128xf32>
    %c88 = arith.constant 88 : index
    %c0_63 = arith.constant 0 : index
    %85 = vector.load %arg2[%c88, %c0_63] : memref<288x8xf32, #tpu.memory_space<vmem>>, vector<8x8xf32>
    %cst_64 = arith.constant dense<0.000000e+00> : vector<8x128xf32>
    %86 = tpu.matmul %85, %84, %cst_64 {dimension_numbers = #tpu.dot_dimension_numbers<[1], [0], [0], [1], [0, 0, 1, 1], [], []>} : vector<8x8xf32>, vector<8x128xf32>, vector<8x128xf32> -> vector<8x128xf32>
    %87 = arith.addf %81, %86 : vector<8x128xf32>
    %c0_65 = arith.constant 0 : index
    %c8_66 = arith.constant 8 : index
    %88 = vector.load %arg11[%c0_65, %c8_66] : memref<8x146xf32, #tpu.memory_space<vmem>>, vector<8x128xf32>
    %89 = vector.broadcast %5 : vector<1x128xf32> to vector<8x128xf32>
    %90 = arith.mulf %88, %89 : vector<8x128xf32>
    %c96 = arith.constant 96 : index
    %c0_67 = arith.constant 0 : index
    %91 = vector.load %arg2[%c96, %c0_67] : memref<288x8xf32, #tpu.memory_space<vmem>>, vector<8x8xf32>
    %cst_68 = arith.constant dense<0.000000e+00> : vector<8x128xf32>
    %92 = tpu.matmul %91, %90, %cst_68 {dimension_numbers = #tpu.dot_dimension_numbers<[1], [0], [0], [1], [0, 0, 1, 1], [], []>} : vector<8x8xf32>, vector<8x128xf32>, vector<8x128xf32> -> vector<8x128xf32>
    %93 = arith.addf %87, %92 : vector<8x128xf32>
    %c104 = arith.constant 104 : index
    %c0_69 = arith.constant 0 : index
    %94 = vector.load %arg2[%c104, %c0_69] : memref<288x8xf32, #tpu.memory_space<vmem>>, vector<8x8xf32>
    %cst_70 = arith.constant dense<0.000000e+00> : vector<8x128xf32>
    %95 = tpu.matmul %94, %69, %cst_70 {dimension_numbers = #tpu.dot_dimension_numbers<[1], [0], [0], [1], [0, 0, 1, 1], [], []>} : vector<8x8xf32>, vector<8x128xf32>, vector<8x128xf32> -> vector<8x128xf32>
    %96 = arith.addf %93, %95 : vector<8x128xf32>
    %c0_71 = arith.constant 0 : index
    %c10_72 = arith.constant 10 : index
    %97 = vector.load %arg11[%c0_71, %c10_72] : memref<8x146xf32, #tpu.memory_space<vmem>>, vector<8x128xf32>
    %98 = vector.broadcast %6 : vector<1x128xf32> to vector<8x128xf32>
    %99 = arith.mulf %97, %98 : vector<8x128xf32>
    %c112 = arith.constant 112 : index
    %c0_73 = arith.constant 0 : index
    %100 = vector.load %arg2[%c112, %c0_73] : memref<288x8xf32, #tpu.memory_space<vmem>>, vector<8x8xf32>
    %cst_74 = arith.constant dense<0.000000e+00> : vector<8x128xf32>
    %101 = tpu.matmul %100, %99, %cst_74 {dimension_numbers = #tpu.dot_dimension_numbers<[1], [0], [0], [1], [0, 0, 1, 1], [], []>} : vector<8x8xf32>, vector<8x128xf32>, vector<8x128xf32> -> vector<8x128xf32>
    %102 = arith.addf %96, %101 : vector<8x128xf32>
    %c0_75 = arith.constant 0 : index
    %c16_76 = arith.constant 16 : index
    %103 = vector.load %arg11[%c0_75, %c16_76] : memref<8x146xf32, #tpu.memory_space<vmem>>, vector<8x128xf32>
    %104 = vector.broadcast %7 : vector<1x128xf32> to vector<8x128xf32>
    %105 = arith.mulf %103, %104 : vector<8x128xf32>
    %c120 = arith.constant 120 : index
    %c0_77 = arith.constant 0 : index
    %106 = vector.load %arg2[%c120, %c0_77] : memref<288x8xf32, #tpu.memory_space<vmem>>, vector<8x8xf32>
    %cst_78 = arith.constant dense<0.000000e+00> : vector<8x128xf32>
    %107 = tpu.matmul %106, %105, %cst_78 {dimension_numbers = #tpu.dot_dimension_numbers<[1], [0], [0], [1], [0, 0, 1, 1], [], []>} : vector<8x8xf32>, vector<8x128xf32>, vector<8x128xf32> -> vector<8x128xf32>
    %108 = arith.addf %102, %107 : vector<8x128xf32>
    %c0_79 = arith.constant 0 : index
    %c17_80 = arith.constant 17 : index
    %109 = vector.load %arg11[%c0_79, %c17_80] : memref<8x146xf32, #tpu.memory_space<vmem>>, vector<8x128xf32>
    %110 = vector.broadcast %8 : vector<1x128xf32> to vector<8x128xf32>
    %111 = arith.mulf %109, %110 : vector<8x128xf32>
    %c128 = arith.constant 128 : index
    %c0_81 = arith.constant 0 : index
    %112 = vector.load %arg2[%c128, %c0_81] : memref<288x8xf32, #tpu.memory_space<vmem>>, vector<8x8xf32>
    %cst_82 = arith.constant dense<0.000000e+00> : vector<8x128xf32>
    %113 = tpu.matmul %112, %111, %cst_82 {dimension_numbers = #tpu.dot_dimension_numbers<[1], [0], [0], [1], [0, 0, 1, 1], [], []>} : vector<8x8xf32>, vector<8x128xf32>, vector<8x128xf32> -> vector<8x128xf32>
    %114 = arith.addf %108, %113 : vector<8x128xf32>
    %c0_83 = arith.constant 0 : index
    %c18_84 = arith.constant 18 : index
    %115 = vector.load %arg11[%c0_83, %c18_84] : memref<8x146xf32, #tpu.memory_space<vmem>>, vector<8x128xf32>
    %116 = vector.broadcast %9 : vector<1x128xf32> to vector<8x128xf32>
    %117 = arith.mulf %115, %116 : vector<8x128xf32>
    %c136 = arith.constant 136 : index
    %c0_85 = arith.constant 0 : index
    %118 = vector.load %arg2[%c136, %c0_85] : memref<288x8xf32, #tpu.memory_space<vmem>>, vector<8x8xf32>
    %cst_86 = arith.constant dense<0.000000e+00> : vector<8x128xf32>
    %119 = tpu.matmul %118, %117, %cst_86 {dimension_numbers = #tpu.dot_dimension_numbers<[1], [0], [0], [1], [0, 0, 1, 1], [], []>} : vector<8x8xf32>, vector<8x128xf32>, vector<8x128xf32> -> vector<8x128xf32>
    %120 = arith.addf %114, %119 : vector<8x128xf32>
    %c8_87 = arith.constant 8 : index
    %c0_88 = arith.constant 0 : index
    %121 = vector.load %arg3[%c8_87, %c0_88] : memref<32x1xf32, #tpu.memory_space<vmem>>, vector<8x1xf32>
    %122 = vector.broadcast %121 : vector<8x1xf32> to vector<8x128xf32>
    %123 = arith.mulf %120, %122 : vector<8x128xf32>
    %c8_89 = arith.constant 8 : index
    %c0_90 = arith.constant 0 : index
    %124 = vector.load %arg4[%c8_89, %c0_90] : memref<32x1xf32, #tpu.memory_space<vmem>>, vector<8x1xf32>
    %125 = vector.broadcast %124 : vector<8x1xf32> to vector<8x128xf32>
    %126 = arith.addf %123, %125 : vector<8x128xf32>
    %127 = arith.addf %126, %10 : vector<8x128xf32>
    %cst_91 = arith.constant 0.000000e+00 : f32
    %128 = vector.broadcast %cst_91 : f32 to vector<8x128xf32>
    %129 = arith.maximumf %127, %128 : vector<8x128xf32>
    %c0_92 = arith.constant 0 : index
    %c9_93 = arith.constant 9 : index
    %130 = vector.load %arg11[%c0_92, %c9_93] : memref<8x146xf32, #tpu.memory_space<vmem>>, vector<8x128xf32>
    tpu.vector_store %arg11[%c0_92, %c9_93], %129 {strides = array<i32>} : memref<8x146xf32, #tpu.memory_space<vmem>>, vector<8x128xf32>,
    %c0_94 = arith.constant 0 : index
    %c0_95 = arith.constant 0 : index
    %131 = vector.load %arg11[%c0_94, %c0_95] : memref<8x146xf32, #tpu.memory_space<vmem>>, vector<8x128xf32>
    %132 = vector.broadcast %2 : vector<1x128xf32> to vector<8x128xf32>
    %133 = arith.mulf %131, %132 : vector<8x128xf32>
    %c144 = arith.constant 144 : index
    %c0_96 = arith.constant 0 : index
    %134 = vector.load %arg2[%c144, %c0_96] : memref<288x8xf32, #tpu.memory_space<vmem>>, vector<8x8xf32>
    %cst_97 = arith.constant dense<0.000000e+00> : vector<8x128xf32>
    %135 = tpu.matmul %134, %133, %cst_97 {dimension_numbers = #tpu.dot_dimension_numbers<[1], [0], [0], [1], [0, 0, 1, 1], [], []>} : vector<8x8xf32>, vector<8x128xf32>, vector<8x128xf32> -> vector<8x128xf32>
    %c0_98 = arith.constant 0 : index
    %c1_99 = arith.constant 1 : index
    %136 = vector.load %arg11[%c0_98, %c1_99] : memref<8x146xf32, #tpu.memory_space<vmem>>, vector<8x128xf32>
    %137 = vector.broadcast %3 : vector<1x128xf32> to vector<8x128xf32>
    %138 = arith.mulf %136, %137 : vector<8x128xf32>
    %c152 = arith.constant 152 : index
    %c0_100 = arith.constant 0 : index
    %139 = vector.load %arg2[%c152, %c0_100] : memref<288x8xf32, #tpu.memory_space<vmem>>, vector<8x8xf32>
    %cst_101 = arith.constant dense<0.000000e+00> : vector<8x128xf32>
    %140 = tpu.matmul %139, %138, %cst_101 {dimension_numbers = #tpu.dot_dimension_numbers<[1], [0], [0], [1], [0, 0, 1, 1], [], []>} : vector<8x8xf32>, vector<8x128xf32>, vector<8x128xf32> -> vector<8x128xf32>
    %141 = arith.addf %135, %140 : vector<8x128xf32>
    %c0_102 = arith.constant 0 : index
    %c2_103 = arith.constant 2 : index
    %142 = vector.load %arg11[%c0_102, %c2_103] : memref<8x146xf32, #tpu.memory_space<vmem>>, vector<8x128xf32>
    %143 = vector.broadcast %4 : vector<1x128xf32> to vector<8x128xf32>
    %144 = arith.mulf %142, %143 : vector<8x128xf32>
    %c160 = arith.constant 160 : index
    %c0_104 = arith.constant 0 : index
    %145 = vector.load %arg2[%c160, %c0_104] : memref<288x8xf32, #tpu.memory_space<vmem>>, vector<8x8xf32>
    %cst_105 = arith.constant dense<0.000000e+00> : vector<8x128xf32>
    %146 = tpu.matmul %145, %144, %cst_105 {dimension_numbers = #tpu.dot_dimension_numbers<[1], [0], [0], [1], [0, 0, 1, 1], [], []>} : vector<8x8xf32>, vector<8x128xf32>, vector<8x128xf32> -> vector<8x128xf32>
    %147 = arith.addf %141, %146 : vector<8x128xf32>
    %c0_106 = arith.constant 0 : index
    %c8_107 = arith.constant 8 : index
    %148 = vector.load %arg11[%c0_106, %c8_107] : memref<8x146xf32, #tpu.memory_space<vmem>>, vector<8x128xf32>
    %149 = vector.broadcast %5 : vector<1x128xf32> to vector<8x128xf32>
    %150 = arith.mulf %148, %149 : vector<8x128xf32>
    %c168 = arith.constant 168 : index
    %c0_108 = arith.constant 0 : index
    %151 = vector.load %arg2[%c168, %c0_108] : memref<288x8xf32, #tpu.memory_space<vmem>>, vector<8x8xf32>
    %cst_109 = arith.constant dense<0.000000e+00> : vector<8x128xf32>
    %152 = tpu.matmul %151, %150, %cst_109 {dimension_numbers = #tpu.dot_dimension_numbers<[1], [0], [0], [1], [0, 0, 1, 1], [], []>} : vector<8x8xf32>, vector<8x128xf32>, vector<8x128xf32> -> vector<8x128xf32>
    %153 = arith.addf %147, %152 : vector<8x128xf32>
    %c176 = arith.constant 176 : index
    %c0_110 = arith.constant 0 : index
    %154 = vector.load %arg2[%c176, %c0_110] : memref<288x8xf32, #tpu.memory_space<vmem>>, vector<8x8xf32>
    %cst_111 = arith.constant dense<0.000000e+00> : vector<8x128xf32>
    %155 = tpu.matmul %154, %129, %cst_111 {dimension_numbers = #tpu.dot_dimension_numbers<[1], [0], [0], [1], [0, 0, 1, 1], [], []>} : vector<8x8xf32>, vector<8x128xf32>, vector<8x128xf32> -> vector<8x128xf32>
    %156 = arith.addf %153, %155 : vector<8x128xf32>
    %c0_112 = arith.constant 0 : index
    %c10_113 = arith.constant 10 : index
    %157 = vector.load %arg11[%c0_112, %c10_113] : memref<8x146xf32, #tpu.memory_space<vmem>>, vector<8x128xf32>
    %158 = vector.broadcast %6 : vector<1x128xf32> to vector<8x128xf32>
    %159 = arith.mulf %157, %158 : vector<8x128xf32>
    %c184 = arith.constant 184 : index
    %c0_114 = arith.constant 0 : index
    %160 = vector.load %arg2[%c184, %c0_114] : memref<288x8xf32, #tpu.memory_space<vmem>>, vector<8x8xf32>
    %cst_115 = arith.constant dense<0.000000e+00> : vector<8x128xf32>
    %161 = tpu.matmul %160, %159, %cst_115 {dimension_numbers = #tpu.dot_dimension_numbers<[1], [0], [0], [1], [0, 0, 1, 1], [], []>} : vector<8x8xf32>, vector<8x128xf32>, vector<8x128xf32> -> vector<8x128xf32>
    %162 = arith.addf %156, %161 : vector<8x128xf32>
    %c0_116 = arith.constant 0 : index
    %c16_117 = arith.constant 16 : index
    %163 = vector.load %arg11[%c0_116, %c16_117] : memref<8x146xf32, #tpu.memory_space<vmem>>, vector<8x128xf32>
    %164 = vector.broadcast %7 : vector<1x128xf32> to vector<8x128xf32>
    %165 = arith.mulf %163, %164 : vector<8x128xf32>
    %c192 = arith.constant 192 : index
    %c0_118 = arith.constant 0 : index
    %166 = vector.load %arg2[%c192, %c0_118] : memref<288x8xf32, #tpu.memory_space<vmem>>, vector<8x8xf32>
    %cst_119 = arith.constant dense<0.000000e+00> : vector<8x128xf32>
    %167 = tpu.matmul %166, %165, %cst_119 {dimension_numbers = #tpu.dot_dimension_numbers<[1], [0], [0], [1], [0, 0, 1, 1], [], []>} : vector<8x8xf32>, vector<8x128xf32>, vector<8x128xf32> -> vector<8x128xf32>
    %168 = arith.addf %162, %167 : vector<8x128xf32>
    %c0_120 = arith.constant 0 : index
    %c17_121 = arith.constant 17 : index
    %169 = vector.load %arg11[%c0_120, %c17_121] : memref<8x146xf32, #tpu.memory_space<vmem>>, vector<8x128xf32>
    %170 = vector.broadcast %8 : vector<1x128xf32> to vector<8x128xf32>
    %171 = arith.mulf %169, %170 : vector<8x128xf32>
    %c200 = arith.constant 200 : index
    %c0_122 = arith.constant 0 : index
    %172 = vector.load %arg2[%c200, %c0_122] : memref<288x8xf32, #tpu.memory_space<vmem>>, vector<8x8xf32>
    %cst_123 = arith.constant dense<0.000000e+00> : vector<8x128xf32>
    %173 = tpu.matmul %172, %171, %cst_123 {dimension_numbers = #tpu.dot_dimension_numbers<[1], [0], [0], [1], [0, 0, 1, 1], [], []>} : vector<8x8xf32>, vector<8x128xf32>, vector<8x128xf32> -> vector<8x128xf32>
    %174 = arith.addf %168, %173 : vector<8x128xf32>
    %c0_124 = arith.constant 0 : index
    %c18_125 = arith.constant 18 : index
    %175 = vector.load %arg11[%c0_124, %c18_125] : memref<8x146xf32, #tpu.memory_space<vmem>>, vector<8x128xf32>
    %176 = vector.broadcast %9 : vector<1x128xf32> to vector<8x128xf32>
    %177 = arith.mulf %175, %176 : vector<8x128xf32>
    %c208 = arith.constant 208 : index
    %c0_126 = arith.constant 0 : index
    %178 = vector.load %arg2[%c208, %c0_126] : memref<288x8xf32, #tpu.memory_space<vmem>>, vector<8x8xf32>
    %cst_127 = arith.constant dense<0.000000e+00> : vector<8x128xf32>
    %179 = tpu.matmul %178, %177, %cst_127 {dimension_numbers = #tpu.dot_dimension_numbers<[1], [0], [0], [1], [0, 0, 1, 1], [], []>} : vector<8x8xf32>, vector<8x128xf32>, vector<8x128xf32> -> vector<8x128xf32>
    %180 = arith.addf %174, %179 : vector<8x128xf32>
    %c16_128 = arith.constant 16 : index
    %c0_129 = arith.constant 0 : index
    %181 = vector.load %arg3[%c16_128, %c0_129] : memref<32x1xf32, #tpu.memory_space<vmem>>, vector<8x1xf32>
    %182 = vector.broadcast %181 : vector<8x1xf32> to vector<8x128xf32>
    %183 = arith.mulf %180, %182 : vector<8x128xf32>
    %c16_130 = arith.constant 16 : index
    %c0_131 = arith.constant 0 : index
    %184 = vector.load %arg4[%c16_130, %c0_131] : memref<32x1xf32, #tpu.memory_space<vmem>>, vector<8x1xf32>
    %185 = vector.broadcast %184 : vector<8x1xf32> to vector<8x128xf32>
    %186 = arith.addf %183, %185 : vector<8x128xf32>
    %cst_132 = arith.constant 0.000000e+00 : f32
    %187 = vector.broadcast %cst_132 : f32 to vector<8x128xf32>
    %188 = arith.maximumf %186, %187 : vector<8x128xf32>
    %c0_133 = arith.constant 0 : index
    %c9_134 = arith.constant 9 : index
    %189 = vector.load %arg11[%c0_133, %c9_134] : memref<8x146xf32, #tpu.memory_space<vmem>>, vector<8x128xf32>
    tpu.vector_store %arg11[%c0_133, %c9_134], %188 {strides = array<i32>} : memref<8x146xf32, #tpu.memory_space<vmem>>, vector<8x128xf32>,
    %c0_135 = arith.constant 0 : index
    %c0_136 = arith.constant 0 : index
    %190 = vector.load %arg11[%c0_135, %c0_136] : memref<8x146xf32, #tpu.memory_space<vmem>>, vector<8x128xf32>
    %191 = vector.broadcast %2 : vector<1x128xf32> to vector<8x128xf32>
    %192 = arith.mulf %190, %191 : vector<8x128xf32>
    %c216 = arith.constant 216 : index
    %c0_137 = arith.constant 0 : index
    %193 = vector.load %arg2[%c216, %c0_137] : memref<288x8xf32, #tpu.memory_space<vmem>>, vector<8x8xf32>
    %cst_138 = arith.constant dense<0.000000e+00> : vector<8x128xf32>
    %194 = tpu.matmul %193, %192, %cst_138 {dimension_numbers = #tpu.dot_dimension_numbers<[1], [0], [0], [1], [0, 0, 1, 1], [], []>} : vector<8x8xf32>, vector<8x128xf32>, vector<8x128xf32> -> vector<8x128xf32>
    %c0_139 = arith.constant 0 : index
    %c1_140 = arith.constant 1 : index
    %195 = vector.load %arg11[%c0_139, %c1_140] : memref<8x146xf32, #tpu.memory_space<vmem>>, vector<8x128xf32>
    %196 = vector.broadcast %3 : vector<1x128xf32> to vector<8x128xf32>
    %197 = arith.mulf %195, %196 : vector<8x128xf32>
    %c224 = arith.constant 224 : index
    %c0_141 = arith.constant 0 : index
    %198 = vector.load %arg2[%c224, %c0_141] : memref<288x8xf32, #tpu.memory_space<vmem>>, vector<8x8xf32>
    %cst_142 = arith.constant dense<0.000000e+00> : vector<8x128xf32>
    %199 = tpu.matmul %198, %197, %cst_142 {dimension_numbers = #tpu.dot_dimension_numbers<[1], [0], [0], [1], [0, 0, 1, 1], [], []>} : vector<8x8xf32>, vector<8x128xf32>, vector<8x128xf32> -> vector<8x128xf32>
    %200 = arith.addf %194, %199 : vector<8x128xf32>
    %c0_143 = arith.constant 0 : index
    %c2_144 = arith.constant 2 : index
    %201 = vector.load %arg11[%c0_143, %c2_144] : memref<8x146xf32, #tpu.memory_space<vmem>>, vector<8x128xf32>
    %202 = vector.broadcast %4 : vector<1x128xf32> to vector<8x128xf32>
    %203 = arith.mulf %201, %202 : vector<8x128xf32>
    %c232 = arith.constant 232 : index
    %c0_145 = arith.constant 0 : index
    %204 = vector.load %arg2[%c232, %c0_145] : memref<288x8xf32, #tpu.memory_space<vmem>>, vector<8x8xf32>
    %cst_146 = arith.constant dense<0.000000e+00> : vector<8x128xf32>
    %205 = tpu.matmul %204, %203, %cst_146 {dimension_numbers = #tpu.dot_dimension_numbers<[1], [0], [0], [1], [0, 0, 1, 1], [], []>} : vector<8x8xf32>, vector<8x128xf32>, vector<8x128xf32> -> vector<8x128xf32>
    %206 = arith.addf %200, %205 : vector<8x128xf32>
    %c0_147 = arith.constant 0 : index
    %c8_148 = arith.constant 8 : index
    %207 = vector.load %arg11[%c0_147, %c8_148] : memref<8x146xf32, #tpu.memory_space<vmem>>, vector<8x128xf32>
    %208 = vector.broadcast %5 : vector<1x128xf32> to vector<8x128xf32>
    %209 = arith.mulf %207, %208 : vector<8x128xf32>
    %c240 = arith.constant 240 : index
    %c0_149 = arith.constant 0 : index
    %210 = vector.load %arg2[%c240, %c0_149] : memref<288x8xf32, #tpu.memory_space<vmem>>, vector<8x8xf32>
    %cst_150 = arith.constant dense<0.000000e+00> : vector<8x128xf32>
    %211 = tpu.matmul %210, %209, %cst_150 {dimension_numbers = #tpu.dot_dimension_numbers<[1], [0], [0], [1], [0, 0, 1, 1], [], []>} : vector<8x8xf32>, vector<8x128xf32>, vector<8x128xf32> -> vector<8x128xf32>
    %212 = arith.addf %206, %211 : vector<8x128xf32>
    %c248 = arith.constant 248 : index
    %c0_151 = arith.constant 0 : index
    %213 = vector.load %arg2[%c248, %c0_151] : memref<288x8xf32, #tpu.memory_space<vmem>>, vector<8x8xf32>
    %cst_152 = arith.constant dense<0.000000e+00> : vector<8x128xf32>
    %214 = tpu.matmul %213, %188, %cst_152 {dimension_numbers = #tpu.dot_dimension_numbers<[1], [0], [0], [1], [0, 0, 1, 1], [], []>} : vector<8x8xf32>, vector<8x128xf32>, vector<8x128xf32> -> vector<8x128xf32>
    %215 = arith.addf %212, %214 : vector<8x128xf32>
    %c0_153 = arith.constant 0 : index
    %c10_154 = arith.constant 10 : index
    %216 = vector.load %arg11[%c0_153, %c10_154] : memref<8x146xf32, #tpu.memory_space<vmem>>, vector<8x128xf32>
    %217 = vector.broadcast %6 : vector<1x128xf32> to vector<8x128xf32>
    %218 = arith.mulf %216, %217 : vector<8x128xf32>
    %c256 = arith.constant 256 : index
    %c0_155 = arith.constant 0 : index
    %219 = vector.load %arg2[%c256, %c0_155] : memref<288x8xf32, #tpu.memory_space<vmem>>, vector<8x8xf32>
    %cst_156 = arith.constant dense<0.000000e+00> : vector<8x128xf32>
    %220 = tpu.matmul %219, %218, %cst_156 {dimension_numbers = #tpu.dot_dimension_numbers<[1], [0], [0], [1], [0, 0, 1, 1], [], []>} : vector<8x8xf32>, vector<8x128xf32>, vector<8x128xf32> -> vector<8x128xf32>
    %221 = arith.addf %215, %220 : vector<8x128xf32>
    %c0_157 = arith.constant 0 : index
    %c16_158 = arith.constant 16 : index
    %222 = vector.load %arg11[%c0_157, %c16_158] : memref<8x146xf32, #tpu.memory_space<vmem>>, vector<8x128xf32>
    %223 = vector.broadcast %7 : vector<1x128xf32> to vector<8x128xf32>
    %224 = arith.mulf %222, %223 : vector<8x128xf32>
    %c264 = arith.constant 264 : index
    %c0_159 = arith.constant 0 : index
    %225 = vector.load %arg2[%c264, %c0_159] : memref<288x8xf32, #tpu.memory_space<vmem>>, vector<8x8xf32>
    %cst_160 = arith.constant dense<0.000000e+00> : vector<8x128xf32>
    %226 = tpu.matmul %225, %224, %cst_160 {dimension_numbers = #tpu.dot_dimension_numbers<[1], [0], [0], [1], [0, 0, 1, 1], [], []>} : vector<8x8xf32>, vector<8x128xf32>, vector<8x128xf32> -> vector<8x128xf32>
    %227 = arith.addf %221, %226 : vector<8x128xf32>
    %c0_161 = arith.constant 0 : index
    %c17_162 = arith.constant 17 : index
    %228 = vector.load %arg11[%c0_161, %c17_162] : memref<8x146xf32, #tpu.memory_space<vmem>>, vector<8x128xf32>
    %229 = vector.broadcast %8 : vector<1x128xf32> to vector<8x128xf32>
    %230 = arith.mulf %228, %229 : vector<8x128xf32>
    %c272 = arith.constant 272 : index
    %c0_163 = arith.constant 0 : index
    %231 = vector.load %arg2[%c272, %c0_163] : memref<288x8xf32, #tpu.memory_space<vmem>>, vector<8x8xf32>
    %cst_164 = arith.constant dense<0.000000e+00> : vector<8x128xf32>
    %232 = tpu.matmul %231, %230, %cst_164 {dimension_numbers = #tpu.dot_dimension_numbers<[1], [0], [0], [1], [0, 0, 1, 1], [], []>} : vector<8x8xf32>, vector<8x128xf32>, vector<8x128xf32> -> vector<8x128xf32>
    %233 = arith.addf %227, %232 : vector<8x128xf32>
    %c0_165 = arith.constant 0 : index
    %c18_166 = arith.constant 18 : index
    %234 = vector.load %arg11[%c0_165, %c18_166] : memref<8x146xf32, #tpu.memory_space<vmem>>, vector<8x128xf32>
    %235 = vector.broadcast %9 : vector<1x128xf32> to vector<8x128xf32>
    %236 = arith.mulf %234, %235 : vector<8x128xf32>
    %c280 = arith.constant 280 : index
    %c0_167 = arith.constant 0 : index
    %237 = vector.load %arg2[%c280, %c0_167] : memref<288x8xf32, #tpu.memory_space<vmem>>, vector<8x8xf32>
    %cst_168 = arith.constant dense<0.000000e+00> : vector<8x128xf32>
    %238 = tpu.matmul %237, %236, %cst_168 {dimension_numbers = #tpu.dot_dimension_numbers<[1], [0], [0], [1], [0, 0, 1, 1], [], []>} : vector<8x8xf32>, vector<8x128xf32>, vector<8x128xf32> -> vector<8x128xf32>
    %239 = arith.addf %233, %238 : vector<8x128xf32>
    %c24_169 = arith.constant 24 : index
    %c0_170 = arith.constant 0 : index
    %240 = vector.load %arg3[%c24_169, %c0_170] : memref<32x1xf32, #tpu.memory_space<vmem>>, vector<8x1xf32>
    %241 = vector.broadcast %240 : vector<8x1xf32> to vector<8x128xf32>
    %242 = arith.mulf %239, %241 : vector<8x128xf32>
    %c24_171 = arith.constant 24 : index
    %c0_172 = arith.constant 0 : index
    %243 = vector.load %arg4[%c24_171, %c0_172] : memref<32x1xf32, #tpu.memory_space<vmem>>, vector<8x1xf32>
    %244 = vector.broadcast %243 : vector<8x1xf32> to vector<8x128xf32>
    %245 = arith.addf %242, %244 : vector<8x128xf32>
    %246 = arith.addf %245, %129 : vector<8x128xf32>
    %cst_173 = arith.constant 0.000000e+00 : f32
    %247 = vector.broadcast %cst_173 : f32 to vector<8x128xf32>
    %248 = arith.maximumf %246, %247 : vector<8x128xf32>
    %c0_174 = arith.constant 0 : index
    %c0_175 = arith.constant 0 : index
    %249 = vector.load %arg9[%c0_174, %c0_175] : memref<8x128xf32, #tpu.memory_space<vmem>>, vector<8x128xf32>
    tpu.vector_store %arg9[%c0_174, %c0_175], %248 {strides = array<i32>} : memref<8x128xf32, #tpu.memory_space<vmem>>, vector<8x128xf32>,
    %c0_176 = arith.constant 0 : index
    %c0_177 = arith.constant 0 : index
    %250 = vector.load %arg6[%c0_176, %c0_177] : memref<4x8xf32, #tpu.memory_space<vmem>>, vector<4x8xf32>
    %cst_178 = arith.constant dense<0.000000e+00> : vector<4x128xf32>
    %251 = tpu.matmul %250, %248, %cst_178 {dimension_numbers = #tpu.dot_dimension_numbers<[1], [0], [0], [1], [0, 0, 1, 1], [], []>} : vector<4x8xf32>, vector<8x128xf32>, vector<4x128xf32> -> vector<4x128xf32>
    %c0_179 = arith.constant 0 : index
    %c0_180 = arith.constant 0 : index
    %252 = vector.load %arg7[%c0_179, %c0_180] : memref<4x1xf32, #tpu.memory_space<vmem>>, vector<4x1xf32>
    %253 = vector.broadcast %252 : vector<4x1xf32> to vector<4x128xf32>
    %254 = arith.mulf %251, %253 : vector<4x128xf32>
    %c0_181 = arith.constant 0 : index
    %c0_182 = arith.constant 0 : index
    %255 = vector.load %arg8[%c0_181, %c0_182] : memref<4x1xf32, #tpu.memory_space<vmem>>, vector<4x1xf32>
    %256 = vector.broadcast %255 : vector<4x1xf32> to vector<4x128xf32>
    %257 = arith.addf %254, %256 : vector<4x128xf32>
    %c0_183 = arith.constant 0 : index
    %c0_184 = arith.constant 0 : index
    %258 = vector.load %arg10[%c0_183, %c0_184] : memref<4x128xf32, #tpu.memory_space<vmem>>, vector<4x128xf32>
    tpu.vector_store %arg10[%c0_183, %c0_184], %257 {strides = array<i32>} : memref<4x128xf32, #tpu.memory_space<vmem>>, vector<4x128xf32>,
    return
  }
  func.func @transform_0(%arg0: i32) -> (i32, i32) {
    %c0_i32 = arith.constant 0 : i32
    %c0_i32_0 = arith.constant 0 : i32
    return %c0_i32, %arg0 : i32, i32
  }
  func.func @transform_1(%arg0: i32) -> (i32, i32) {
    %c0_i32 = arith.constant 0 : i32
    %c0_i32_0 = arith.constant 0 : i32
    %c0_i32_1 = arith.constant 0 : i32
    return %c0_i32, %c0_i32_0 : i32, i32
  }
  func.func @transform_2(%arg0: i32) -> (i32, i32) {
    %c0_i32 = arith.constant 0 : i32
    %c0_i32_0 = arith.constant 0 : i32
    %c0_i32_1 = arith.constant 0 : i32
    return %c0_i32, %c0_i32_0 : i32, i32
  }
  func.func @transform_3(%arg0: i32) -> (i32, i32) {
    %c0_i32 = arith.constant 0 : i32
    %c0_i32_0 = arith.constant 0 : i32
    %c0_i32_1 = arith.constant 0 : i32
    return %c0_i32, %c0_i32_0 : i32, i32
  }
  func.func @transform_4(%arg0: i32) -> (i32, i32) {
    %c0_i32 = arith.constant 0 : i32
    %c0_i32_0 = arith.constant 0 : i32
    %c0_i32_1 = arith.constant 0 : i32
    return %c0_i32, %c0_i32_0 : i32, i32
  }
  func.func @transform_5(%arg0: i32) -> (i32, i32) {
    %c0_i32 = arith.constant 0 : i32
    %c0_i32_0 = arith.constant 0 : i32
    %c0_i32_1 = arith.constant 0 : i32
    return %c0_i32, %c0_i32_0 : i32, i32
  }
  func.func @transform_6(%arg0: i32) -> (i32, i32) {
    %c0_i32 = arith.constant 0 : i32
    %c0_i32_0 = arith.constant 0 : i32
    %c0_i32_1 = arith.constant 0 : i32
    return %c0_i32, %c0_i32_0 : i32, i32
  }
  func.func @transform_7(%arg0: i32) -> (i32, i32) {
    %c0_i32 = arith.constant 0 : i32
    %c0_i32_0 = arith.constant 0 : i32
    %c0_i32_1 = arith.constant 0 : i32
    return %c0_i32, %c0_i32_0 : i32, i32
  }
  func.func @transform_8(%arg0: i32) -> (i32, i32) {
    %c0_i32 = arith.constant 0 : i32
    %c0_i32_0 = arith.constant 0 : i32
    return %c0_i32, %arg0 : i32, i32
  }
  func.func @transform_9(%arg0: i32) -> (i32, i32) {
    %c0_i32 = arith.constant 0 : i32
    %c0_i32_0 = arith.constant 0 : i32
    return %c0_i32, %arg0 : i32, i32
  }
}

module attributes {stable_mosaic.version = 11 : i64} {
  func.func @_add_relu_kernel(%arg0: i32, %arg1: memref<4x256xf32, #tpu.memory_space<vmem>>, %arg2: memref<4x256xf32, #tpu.memory_space<vmem>>, %arg3: memref<4x256xf32, #tpu.memory_space<vmem>>) attributes {dimension_semantics = [#tpu.dimension_semantics<parallel>], iteration_bounds = array<i64: 2>, scalar_prefetch = 0 : i64, scratch_operands = 0 : i64, tpu.core_type = #tpu.core_type<tc>, window_params = [{transform_indices = @transform_0, window_bounds = array<i64: 4, 256>}, {transform_indices = @transform_1, window_bounds = array<i64: 4, 256>}, {transform_indices = @transform_2, window_bounds = array<i64: 4, 256>}]} {
    %c0 = arith.constant 0 : index
    %c0_0 = arith.constant 0 : index
    %0 = vector.load %arg1[%c0, %c0_0] : memref<4x256xf32, #tpu.memory_space<vmem>>, vector<4x256xf32>
    %c0_1 = arith.constant 0 : index
    %c0_2 = arith.constant 0 : index
    %1 = vector.load %arg2[%c0_1, %c0_2] : memref<4x256xf32, #tpu.memory_space<vmem>>, vector<4x256xf32>
    %2 = arith.addf %0, %1 : vector<4x256xf32>
    %cst = arith.constant 0.000000e+00 : f32
    %3 = vector.broadcast %cst : f32 to vector<4x256xf32>
    %4 = arith.maximumf %2, %3 : vector<4x256xf32>
    %c0_3 = arith.constant 0 : index
    %c0_4 = arith.constant 0 : index
    %5 = vector.load %arg3[%c0_3, %c0_4] : memref<4x256xf32, #tpu.memory_space<vmem>>, vector<4x256xf32>
    tpu.vector_store %arg3[%c0_3, %c0_4], %4 {strides = array<i32>} : memref<4x256xf32, #tpu.memory_space<vmem>>, vector<4x256xf32>,
    return
  }
  func.func @transform_0(%arg0: i32) -> (i32, i32) {
    %c0_i32 = arith.constant 0 : i32
    %c0_i32_0 = arith.constant 0 : i32
    return %c0_i32, %arg0 : i32, i32
  }
  func.func @transform_1(%arg0: i32) -> (i32, i32) {
    %c0_i32 = arith.constant 0 : i32
    %c0_i32_0 = arith.constant 0 : i32
    return %c0_i32, %arg0 : i32, i32
  }
  func.func @transform_2(%arg0: i32) -> (i32, i32) {
    %c0_i32 = arith.constant 0 : i32
    %c0_i32_0 = arith.constant 0 : i32
    return %c0_i32, %arg0 : i32, i32
  }
}

module attributes {stable_mosaic.version = 11 : i64} {
  func.func @_fuse_down_kernel(%arg0: memref<8x36xf32, #tpu.memory_space<vmem>>, %arg1: memref<36x128xf32, #tpu.memory_space<vmem>>, %arg2: memref<8x1xf32, #tpu.memory_space<vmem>>, %arg3: memref<8x1xf32, #tpu.memory_space<vmem>>, %arg4: memref<8x128xf32, #tpu.memory_space<vmem>>, %arg5: memref<8x128xf32, #tpu.memory_space<vmem>>) attributes {dimension_semantics = [], scalar_prefetch = 0 : i64, scratch_operands = 0 : i64, tpu.core_type = #tpu.core_type<tc>} {
    %c0 = arith.constant 0 : index
    %c0_0 = arith.constant 0 : index
    %0 = vector.load %arg0[%c0, %c0_0] : memref<8x36xf32, #tpu.memory_space<vmem>>, vector<8x36xf32>
    %c0_1 = arith.constant 0 : index
    %c0_2 = arith.constant 0 : index
    %1 = vector.load %arg1[%c0_1, %c0_2] : memref<36x128xf32, #tpu.memory_space<vmem>>, vector<36x128xf32>
    %cst = arith.constant dense<0.000000e+00> : vector<8x128xf32>
    %2 = tpu.matmul %0, %1, %cst {dimension_numbers = #tpu.dot_dimension_numbers<[1], [0], [0], [1], [0, 0, 1, 1], [], []>} : vector<8x36xf32>, vector<36x128xf32>, vector<8x128xf32> -> vector<8x128xf32>
    %c0_3 = arith.constant 0 : index
    %c0_4 = arith.constant 0 : index
    %3 = vector.load %arg2[%c0_3, %c0_4] : memref<8x1xf32, #tpu.memory_space<vmem>>, vector<8x1xf32>
    %4 = vector.broadcast %3 : vector<8x1xf32> to vector<8x128xf32>
    %5 = arith.mulf %2, %4 : vector<8x128xf32>
    %c0_5 = arith.constant 0 : index
    %c0_6 = arith.constant 0 : index
    %6 = vector.load %arg3[%c0_5, %c0_6] : memref<8x1xf32, #tpu.memory_space<vmem>>, vector<8x1xf32>
    %7 = vector.broadcast %6 : vector<8x1xf32> to vector<8x128xf32>
    %8 = arith.addf %5, %7 : vector<8x128xf32>
    %c0_7 = arith.constant 0 : index
    %c0_8 = arith.constant 0 : index
    %9 = vector.load %arg4[%c0_7, %c0_8] : memref<8x128xf32, #tpu.memory_space<vmem>>, vector<8x128xf32>
    %10 = arith.addf %8, %9 : vector<8x128xf32>
    %cst_9 = arith.constant 0.000000e+00 : f32
    %11 = vector.broadcast %cst_9 : f32 to vector<8x128xf32>
    %12 = arith.maximumf %10, %11 : vector<8x128xf32>
    %c0_10 = arith.constant 0 : index
    %c0_11 = arith.constant 0 : index
    %13 = vector.load %arg5[%c0_10, %c0_11] : memref<8x128xf32, #tpu.memory_space<vmem>>, vector<8x128xf32>
    tpu.vector_store %arg5[%c0_10, %c0_11], %12 {strides = array<i32>} : memref<8x128xf32, #tpu.memory_space<vmem>>, vector<8x128xf32>,
    return
  }
}

</mosaic_0001>

<llo_original>
// kernel: hr_module_forward.6
$region0: #{hr_module_forward.6}
  #allocation0 [shape = 'u32[]', space=smem, size = 0x4, offset = 0x4, fixed_abs, tag = 'smem constant byte address 0x4 - core index']
  #allocation1 [shape = 'u32[144,128]{1,0:T(1,128)}', space=vmem, size = 0x12000, scoped, tag = 'internal scratch']
  %s0 = inlined_call_operand.vmem [shape: f32[4,512], index: 0, kind: input, shape index: {}]
  %s1 = inlined_call_operand.vmem [shape: f32[4,512], index: 1, kind: input, shape index: {}]
  %s2 = inlined_call_operand.vmem [shape: f32[4,512], index: 2, kind: output, shape index: {}]
  %s3 = sld [smem:[#allocation0]]
  $region41: #{hr_module_forward.6} parent=0
    _
  %s5 = ssub.s32 1, %s3
  %s6 = scalar_select 0, %s5, %s3
  loop: start=0, step=1, limit=4
  $region2: #{hr_module_forward.6} parent=0 // loop_pre_header
    _
  $region3: #{hr_module_forward.6} parent=0 // loop_header
    %s8 = sphi 0, %s12
    %p9 = scmp.ge.s32.totalorder %s8, 4
    %s18 = sphi 0, %s20
    %s21 = sphi 0, %s18
    %s22 = sphi 0, %s21
    %s38 = sphi 0, %s22
    %s44 = sphi 0, %s46
    %s47 = sphi 0, %s44
    %s48 = sphi 0, %s47
    %s64 = sphi 0, %s48
    %s70 = sphi 0, %s72
    %s73 = sphi 0, %s70
    %s74 = sphi 0, %s73
    %s90 = sphi 0, %s74
  $region4: #{hr_module_forward.6} parent=0 // loop_header_branch
    %11 = sbr.rel (%p9) target = $region8
  $region5: #{hr_module_forward.6} parent=0 // loop_body
    %s13 = ssub.s32 %s8, 1
    %s14 = ssub.s32 %s8, 2
    %s15 = sadd.s32 %s8, 1
    %s16 = ssub.s32 %s8, %s15
    %p17 = scmp.eq.s32.totalorder %s16, 0
    %s19 = sadd.s32 %s18, 1
    %s20 = scalar_select %p17, %s18, %s19
    %p23 = pneg %p17
    %p24 = scmp.eq.s32.totalorder %s8, 1
    %p25 = por %p23, %p24
    %p26 = scmp.ne.s32.totalorder %s18, %s21
    %p27 = scmp.eq.s32.totalorder %s8, 0
    %p28 = por %p26, %p27
    %p29 = scmp.ne.s32.totalorder %s18, %s21
    %p30 = scmp.eq.s32.totalorder %s13, 1
    %p31 = por %p29, %p30
    %p32 = scmp.ne.s32.totalorder %s21, %s22
    %p33 = scmp.eq.s32.totalorder %s13, 0
    %p34 = por %p32, %p33
    %p35 = scmp.ne.s32.totalorder %s21, %s22
    %p36 = scmp.eq.s32.totalorder %s14, 1
    %p37 = por %p35, %p36
    %p39 = scmp.ne.s32.totalorder %s22, %s38
    %p40 = scmp.eq.s32.totalorder %s14, 0
    %p41 = por %p39, %p40
    %s42 = ssub.s32 %s8, %s15
    %p43 = scmp.eq.s32.totalorder %s42, 0
    %s45 = sadd.s32 %s44, 1
    %s46 = scalar_select %p43, %s44, %s45
    %p49 = pneg %p43
    %p50 = scmp.eq.s32.totalorder %s8, 1
    %p51 = por %p49, %p50
    %p52 = scmp.ne.s32.totalorder %s44, %s47
    %p53 = scmp.eq.s32.totalorder %s8, 0
    %p54 = por %p52, %p53
    %p55 = scmp.ne.s32.totalorder %s44, %s47
    %p56 = scmp.eq.s32.totalorder %s13, 1
    %p57 = por %p55, %p56
    %p58 = scmp.ne.s32.totalorder %s47, %s48
    %p59 = scmp.eq.s32.totalorder %s13, 0
    %p60 = por %p58, %p59
    %p61 = scmp.ne.s32.totalorder %s47, %s48
    %p62 = scmp.eq.s32.totalorder %s14, 1
    %p63 = por %p61, %p62
    %p65 = scmp.ne.s32.totalorder %s48, %s64
    %p66 = scmp.eq.s32.totalorder %s14, 0
    %p67 = por %p65, %p66
    %s68 = ssub.s32 %s8, %s15
    %p69 = scmp.eq.s32.totalorder %s68, 0
    %s71 = sadd.s32 %s70, 1
    %s72 = scalar_select %p69, %s70, %s71
    %p75 = pneg %p69
    %p76 = scmp.eq.s32.totalorder %s8, 1
    %p77 = por %p75, %p76
    %p78 = scmp.ne.s32.totalorder %s70, %s73
    %p79 = scmp.eq.s32.totalorder %s8, 0
    %p80 = por %p78, %p79
    %p81 = scmp.ne.s32.totalorder %s70, %s73
    %p82 = scmp.eq.s32.totalorder %s13, 1
    %p83 = por %p81, %p82
    %p84 = scmp.ne.s32.totalorder %s73, %s74
    %p85 = scmp.eq.s32.totalorder %s13, 0
    %p86 = por %p84, %p85
    %p87 = scmp.ne.s32.totalorder %s73, %s74
    %p88 = scmp.eq.s32.totalorder %s14, 1
    %p89 = por %p87, %p88
    %p91 = scmp.ne.s32.totalorder %s74, %s90
    %p92 = scmp.eq.s32.totalorder %s14, 0
    %p93 = por %p91, %p92
    %p94 = scmp.le.s32.totalorder 1, %s8
    %p95 = scmp.lt.s32.totalorder %s8, 3
    %p96 = pnand %p94, %p95
    %p97 = pneg %p96
    // Predicated region
    $region9: #{hr_module_forward.6} parent=5 // pred_check
      _
    $region10: #{hr_module_forward.6} parent=5 // pred_check_branch
      %99 = sbr.rel (%p96) target = $region12
    $region11: #{hr_module_forward.6} parent=5 // pred_region
      %s100 = ssub.s32 %s8, 1
    $region12: #{hr_module_forward.6} parent=5 // pred_fallthru
      _
    %p101 = scmp.lt.s32.totalorder %s8, 2
    // Predicated region
    $region13: #{hr_module_forward.6} parent=5 // pred_check
      %p102 = pneg %p101
    $region14: #{hr_module_forward.6} parent=5 // pred_check_branch
      %104 = sbr.rel (%p102) target = $region16
    $region15: #{hr_module_forward.6} parent=5 // pred_region
      // Predicated region
      $region17: #{hr_module_forward.6} parent=15 // pred_check
        %p105 = pneg %p28
      $region18: #{hr_module_forward.6} parent=15 // pred_check_branch
        %107 = sbr.rel (%p105) target = $region20
      $region19: #{hr_module_forward.6} parent=15 // pred_region
        %s108 = smul.u32 2, %s8
        %p109 = scmp.lt.s32.totalorder %s108, 3
        %s110 = scalar_select %p109, %s108, 3
        %s111 = smul.addr %s110, 4
        %s112 = scalar_lea.vmem %s0, %s111
        %s113 = smul.u32 2, %s8
      $region20: #{hr_module_forward.6} parent=15 // pred_fallthru
        _
      // Predicated region
      $region21: #{hr_module_forward.6} parent=15 // pred_check
        %p114 = pneg %p54
      $region22: #{hr_module_forward.6} parent=15 // pred_check_branch
        %116 = sbr.rel (%p114) target = $region24
      $region23: #{hr_module_forward.6} parent=15 // pred_region
        %s117 = smul.u32 2, %s8
        %p118 = scmp.lt.s32.totalorder %s117, 3
        %s119 = scalar_select %p118, %s117, 3
        %s120 = smul.addr %s119, 4
        %s121 = scalar_lea.vmem %s1, %s120
        %s122 = smul.u32 2, %s8
      $region24: #{hr_module_forward.6} parent=15 // pred_fallthru
        _
    $region16: #{hr_module_forward.6} parent=5 // pred_fallthru
      _
    %p123 = scmp.le.s32.totalorder 1, %s8
    %p124 = scmp.lt.s32.totalorder %s8, 3
    %p125 = pnand %p123, %p124
    %p126 = pneg %p125
    // Predicated region
    $region25: #{hr_module_forward.6} parent=5 // pred_check
      _
    $region26: #{hr_module_forward.6} parent=5 // pred_check_branch
      %128 = sbr.rel (%p125) target = $region28
    $region27: #{hr_module_forward.6} parent=5 // pred_region
      %s129 = ssub.s32 %s8, 1
      %s130 = smul.u32 2, %s13
      %p131 = scmp.lt.s32.totalorder %s130, 3
      %s132 = scalar_select %p131, %s130, 3
      %s133 = smul.addr %s132, 4
      %s134 = scalar_lea.vmem %s0, %s133
      %p135 = pneg %p34
      %p136 = pneg %p31
      %s137 = smul.u32 2, %s13
      %p138 = scmp.lt.s32.totalorder %s137, 3
      %s139 = scalar_select %p138, %s137, 3
      %s140 = smul.addr %s139, 4
      %s141 = scalar_lea.vmem %s1, %s140
      %p142 = pneg %p60
      %p143 = pneg %p57
      %p144 = pneg %p86
      %p145 = pneg %p83
      %s146 = smul.u32 2, %s13
      %p147 = scmp.lt.s32.totalorder %s146, 3
      %s148 = scalar_select %p147, %s146, 3
      %s149 = smul.addr %s148, 4
      %s150 = scalar_lea.vmem %s2, %s149
      %s151 = smul.u32 2, %s13
      %p152 = scmp.lt.s32.totalorder %s151, 3
      %s153 = scalar_select %p152, %s151, 3
      %s154 = smul.addr %s153, 4
      %s155 = scalar_lea.vmem %s0, %s154
      %s156 = smul.u32 2, %s13
      %s157 = smul.u32 2, %s13
      %p158 = scmp.lt.s32.totalorder %s157, 3
      %s159 = scalar_select %p158, %s157, 3
      %s160 = smul.addr %s159, 4
      %s161 = scalar_lea.vmem %s1, %s160
      %s162 = smul.u32 2, %s13
      %s163 = smul.u32 2, %s13
      %p164 = scmp.lt.s32.totalorder %s163, 3
      %s165 = scalar_select %p164, %s163, 3
      %s166 = smul.addr %s165, 4
      %s167 = scalar_lea.vmem %s2, %s166
      %s168 = smul.u32 2, %s13
      %v169 = vld [vmem:[%s155] sm:$0xff]
      %v170 = vld [vmem:[%s161] sm:$0xff]
      %v171 = vadd.f32 %v169, %v170
      %v172 = vmax.f32 %v171, 0.0
      %173 = vst [vmem:[%s167] sm:$0xff] %v172
      %s174 = smul.u32 2, %s13
      %p175 = scmp.lt.s32.totalorder %s174, 3
      %s176 = scalar_select %p175, %s174, 3
      %s177 = smul.addr %s176, 4
      %s178 = scalar_lea.vmem %s2, %s177
      // Predicated region
      $region29: #{hr_module_forward.6} parent=27 // pred_check
        %p179 = pneg %p83
      $region30: #{hr_module_forward.6} parent=27 // pred_check_branch
        %181 = sbr.rel (%p179) target = $region32
      $region31: #{hr_module_forward.6} parent=27 // pred_region
        %s182 = smul.u32 2, %s13
      $region32: #{hr_module_forward.6} parent=27 // pred_fallthru
        _
    $region28: #{hr_module_forward.6} parent=5 // pred_fallthru
      _
    %p183 = scmp.le.s32.totalorder 2, %s8
    // Predicated region
    $region33: #{hr_module_forward.6} parent=5 // pred_check
      %p184 = pneg %p183
    $region34: #{hr_module_forward.6} parent=5 // pred_check_branch
      %186 = sbr.rel (%p184) target = $region36
    $region35: #{hr_module_forward.6} parent=5 // pred_region
      %s187 = ssub.s32 %s8, 2
      // Predicated region
      $region37: #{hr_module_forward.6} parent=35 // pred_check
        %p188 = pneg %p89
      $region38: #{hr_module_forward.6} parent=35 // pred_check_branch
        %190 = sbr.rel (%p188) target = $region40
      $region39: #{hr_module_forward.6} parent=35 // pred_region
        %s191 = smul.u32 2, %s14
        %p192 = scmp.lt.s32.totalorder %s191, 3
        %s193 = scalar_select %p192, %s191, 3
        %s194 = smul.addr %s193, 4
        %s195 = scalar_lea.vmem %s2, %s194
      $region40: #{hr_module_forward.6} parent=35 // pred_fallthru
        _
    $region36: #{hr_module_forward.6} parent=5 // pred_fallthru
      _
  $region6: #{hr_module_forward.6} parent=0 // loop_footer
    %s12 = sadd.s32 1, %s8
  $region7: #{hr_module_forward.6} parent=0 // loop_footer_branch
    %7 = sbr.rel target = $region3
  $region8: #{hr_module_forward.6} parent=0 // loop_exit
    _

// kernel: hr_module_forward.5
$region0: #{hr_module_forward.5}
  #allocation0 [shape = 'u32[]', space=smem, size = 0x4, offset = 0x4, fixed_abs, tag = 'smem constant byte address 0x4 - core index']
  #allocation1 [shape = 'u32[144,128]{1,0:T(1,128)}', space=vmem, size = 0x12000, scoped, tag = 'internal scratch']
  #allocation2 [shape = 'f32[8,146]{1,0:T(8,128)}', space=vmem, size = 0x2000, scoped, tag = 'scratch operand']
  %s0 = inlined_call_operand.vmem [shape: f32[8,128], index: 0, kind: input, shape index: {}]
  %s1 = inlined_call_operand.vmem [shape: f32[288,8], index: 1, kind: input, shape index: {}]
  %s2 = inlined_call_operand.vmem [shape: f32[32,1], index: 2, kind: input, shape index: {}]
  %s3 = inlined_call_operand.vmem [shape: f32[32,1], index: 3, kind: input, shape index: {}]
  %s4 = inlined_call_operand.vmem [shape: f32[9,128], index: 4, kind: input, shape index: {}]
  %s5 = inlined_call_operand.vmem [shape: f32[4,8], index: 5, kind: input, shape index: {}]
  %s6 = inlined_call_operand.vmem [shape: f32[4,1], index: 6, kind: input, shape index: {}]
  %s7 = inlined_call_operand.vmem [shape: f32[4,1], index: 7, kind: input, shape index: {}]
  %s8 = inlined_call_operand.vmem [shape: f32[8,128], index: 8, kind: output, shape index: {0}]
  %s9 = inlined_call_operand.vmem [shape: f32[4,128], index: 9, kind: output, shape index: {1}]
  %10 = xla_tuple %s8, %s9
  %s11 = sld [smem:[#allocation0]]
  $region50: #{hr_module_forward.5} parent=0
    _
  %s13 = ssub.s32 1, %s11
  %s14 = scalar_select 0, %s13, %s11
  // Predicated region
  $region2: #{hr_module_forward.5} parent=0 // pred_check
    _
  $region3: #{hr_module_forward.5} parent=0 // pred_check_branch
    %16 = sbr.rel (0) target = $region5
  $region4: #{hr_module_forward.5} parent=0 // pred_region
    _
  $region5: #{hr_module_forward.5} parent=0 // pred_fallthru
    _
  // Predicated region
  $region6: #{hr_module_forward.5} parent=0 // pred_check
    _
  $region7: #{hr_module_forward.5} parent=0 // pred_check_branch
    %18 = sbr.rel (0) target = $region9
  $region8: #{hr_module_forward.5} parent=0 // pred_region
    _
  $region9: #{hr_module_forward.5} parent=0 // pred_fallthru
    _
  // Predicated region
  $region10: #{hr_module_forward.5} parent=0 // pred_check
    _
  $region11: #{hr_module_forward.5} parent=0 // pred_check_branch
    %20 = sbr.rel (0) target = $region13
  $region12: #{hr_module_forward.5} parent=0 // pred_region
    _
  $region13: #{hr_module_forward.5} parent=0 // pred_fallthru
    _
  // Predicated region
  $region14: #{hr_module_forward.5} parent=0 // pred_check
    _
  $region15: #{hr_module_forward.5} parent=0 // pred_check_branch
    %22 = sbr.rel (0) target = $region17
  $region16: #{hr_module_forward.5} parent=0 // pred_region
    _
  $region17: #{hr_module_forward.5} parent=0 // pred_fallthru
    _
  // Predicated region
  $region18: #{hr_module_forward.5} parent=0 // pred_check
    _
  $region19: #{hr_module_forward.5} parent=0 // pred_check_branch
    %24 = sbr.rel (0) target = $region21
  $region20: #{hr_module_forward.5} parent=0 // pred_region
    _
  $region21: #{hr_module_forward.5} parent=0 // pred_fallthru
    _
  // Predicated region
  $region22: #{hr_module_forward.5} parent=0 // pred_check
    _
  $region23: #{hr_module_forward.5} parent=0 // pred_check_branch
    %26 = sbr.rel (0) target = $region25
  $region24: #{hr_module_forward.5} parent=0 // pred_region
    _
  $region25: #{hr_module_forward.5} parent=0 // pred_fallthru
    _
  // Predicated region
  $region26: #{hr_module_forward.5} parent=0 // pred_check
    _
  $region27: #{hr_module_forward.5} parent=0 // pred_check_branch
    %28 = sbr.rel (0) target = $region29
  $region28: #{hr_module_forward.5} parent=0 // pred_region
    _
  $region29: #{hr_module_forward.5} parent=0 // pred_fallthru
    _
  // Predicated region
  $region30: #{hr_module_forward.5} parent=0 // pred_check
    _
  $region31: #{hr_module_forward.5} parent=0 // pred_check_branch
    %30 = sbr.rel (0) target = $region33
  $region32: #{hr_module_forward.5} parent=0 // pred_region
    _
  $region33: #{hr_module_forward.5} parent=0 // pred_fallthru
    _
  %31 = vst [vmem:[#allocation2] sm:$0xff] 0.0
  %vm32 = vcmask 146432
  %33 = vst.msk [vmem:[#allocation2 + $0x8] sm:$0xff] %vm32, 0.0
  %v34 = vld [vmem:[%s4] sm:$0x1]
  %v35 = vld [vmem:[%s4 + $0x1] sm:$0x1]
  %v36 = vld [vmem:[%s4 + $0x2] sm:$0x1]
  %v37 = vld [vmem:[%s4 + $0x3] sm:$0x1]
  %v38 = vld [vmem:[%s4 + $0x5] sm:$0x1]
  %v39 = vld [vmem:[%s4 + $0x6] sm:$0x1]
  %v40 = vld [vmem:[%s4 + $0x7] sm:$0x1]
  %v41 = vld [vmem:[%s4 + $0x8] sm:$0x1]
  %v42 = vld [vmem:[%s0] sm:$0xff]
  %44 = vrot.lane.b32.xlu0 %v42, 9
  %v45 = vpop.permute.xlu0 %44
  %vm47 = vcmask 1047624
  %48 = vst.msk [vmem:[#allocation2] sm:$0xff] %vm47, %v45
  %vm49 = vcmask 72704
  %50 = vst.msk [vmem:[#allocation2 + $0x8] sm:$0xff] %vm49, %v45
  %v51 = vld [vmem:[#allocation2] sm:$0xff]
  %v52 = vlaneseq
  %v53 = vshrl.u32 %v52, 7
  %v54 = vsub.s32 0, %v53
  %v55 = vrot.slane %v34, %v54
  %v56 = vmul.f32 %v51, %v55
  %v57 = vld [vmem:[%s1] sm:$0xff]
  %v58 = vld [vmem:[#allocation2 + $0x8] sm:$0xff]
  %v59 = vlaneseq
  %v60 = vshrl.u32 %v59, 7
  %v61 = vsub.s32 0, %v60
  %v62 = vrot.slane %v35, %v61
  %64 = vrot.lane.b32.xlu0 %v62, 1
  %v65 = vpop.permute.xlu0 %64
  %v67 = vmul.f32 %v51, %v65
  %v68 = vmul.f32 %v58, %v65
  %v69 = vld [vmem:[%s1 + $0x8] sm:$0xff]
  %72 = vrot.lane.b32.xlu0 %v67, 127
  %v73 = vpop.permute.xlu0 %72
  %74 = vrot.lane.b32.xlu0 %v68, 127
  %v75 = vpop.permute.xlu0 %74
  %vm76 = vcmask 1039360
  %v77 = vsel %vm76, %v73, %v75
  %vm79 = vcmask 64512
  %v81 = vsel %vm79, %v69, 0
  %83 = vmatprep.subr.mxu0 0.0
  %84 = vmatpush1.msra.mxu0 %v77
  %85 = vmatprep.subr.mxu0 0.0
  %86 = vmatpush1.msra.mxu0 0.0
  %87 = vmatprep.subr.mxu0 0.0
  %88 = vmatpush1.msra.mxu0 0.0
  %89 = vmatprep.subr.mxu0 0.0
  %90 = vmatpush1.msra.mxu0 0.0
  %91 = vmatprep.subr.mxu0 0.0
  %92 = vmatpush1.msra.mxu0 0.0
  %93 = vmatprep.subr.mxu0 0.0
  %94 = vmatpush1.msra.mxu0 0.0
  %95 = vmatprep.subr.mxu0 0.0
  %96 = vmatpush1.msra.mxu0 0.0
  %97 = vmatprep.subr.mxu0 0.0
  %98 = vmatpush1.msra.mxu0 0.0
  %99 = vmatprep.subr.mxu0 0.0
  %100 = vmatpush1.msra.mxu0 0.0
  %101 = vmatprep.subr.mxu0 0.0
  %102 = vmatpush1.msra.mxu0 0.0
  %103 = vmatprep.subr.mxu0 0.0
  %104 = vmatpush1.msra.mxu0 0.0
  %105 = vmatprep.subr.mxu0 0.0
  %106 = vmatpush1.msra.mxu0 0.0
  %107 = vmatprep.subr.mxu0 0.0
  %108 = vmatpush1.msra.mxu0 0.0
  %109 = vmatprep.subr.mxu0 0.0
  %110 = vmatpush1.msra.mxu0 0.0
  %111 = vmatprep.subr.mxu0 0.0
  %112 = vmatpush1.msra.mxu0 0.0
  %113 = vmatprep.subr.mxu0 0.0
  %114 = vmatpush1.msra.mxu0 0.0
  %115 = vmatprep.subr.mxu0 0.0
  %116 = vmatpush1.msra.mxu0 0.0
  %117 = vmatprep.subr.mxu0 0.0
  %118 = vmatpush1.msra.mxu0 0.0
  %119 = vmatprep.subr.mxu0 0.0
  %120 = vmatpush1.msra.mxu0 0.0
  %121 = vmatprep.subr.mxu0 0.0
  %122 = vmatpush1.msra.mxu0 0.0
  %123 = vmatprep.subr.mxu0 0.0
  %124 = vmatpush1.msra.mxu0 0.0
  %125 = vmatprep.subr.mxu0 0.0
  %126 = vmatpush1.msra.mxu0 0.0
  %127 = vmatprep.subr.mxu0 0.0
  %128 = vmatpush1.msra.mxu0 0.0
  %129 = vmatprep.subr.mxu0 0.0
  %130 = vmatpush1.msra.mxu0 0.0
  %131 = vmatprep.subr.mxu0 0.0
  %132 = vmatpush1.msra.mxu0 0.0
  %133 = vmatprep.subr.mxu0 0.0
  %134 = vmatpush1.msra.mxu0 0.0
  %135 = vmatprep.subr.mxu0 0.0
  %136 = vmatpush1.msra.mxu0 0.0
  %137 = vmatprep.subr.mxu0 0.0
  %138 = vmatpush1.msra.mxu0 0.0
  %139 = vmatprep.subr.mxu0 0.0
  %140 = vmatpush1.msra.mxu0 0.0
  %141 = vmatprep.subr.mxu0 0.0
  %142 = vmatpush1.msra.mxu0 0.0
  %143 = vmatprep.subr.mxu0 0.0
  %144 = vmatpush1.msra.mxu0 0.0
  %145 = vmatprep.subr.mxu0 0.0
  %146 = vmatpush1.msra.mxu0 0.0
  %147 = vmatprep.mubr.f32.mxu0 0.0
  %148 = vmatmul.mubr.f32.gmra.mrb[0].mxu0 %v81
  %v149 = vpop.f32.mrb[0].mxu0
  %v150 = vadd.f32 0.0, %v149
  %v151 = vpop.f32.mrb[0].mxu0
  %152 = vdwg.mxu0
  %v154 = vsel %vm79, %v57, 0
  %156 = vmatprep.subr.mxu0 0.0
  %157 = vmatpush1.msra.mxu0 %v56
  %158 = vmatprep.subr.mxu0 0.0
  %159 = vmatpush1.msra.mxu0 0.0
  %160 = vmatprep.subr.mxu0 0.0
  %161 = vmatpush1.msra.mxu0 0.0
  %162 = vmatprep.subr.mxu0 0.0
  %163 = vmatpush1.msra.mxu0 0.0
  %164 = vmatprep.subr.mxu0 0.0
  %165 = vmatpush1.msra.mxu0 0.0
  %166 = vmatprep.subr.mxu0 0.0
  %167 = vmatpush1.msra.mxu0 0.0
  %168 = vmatprep.subr.mxu0 0.0
  %169 = vmatpush1.msra.mxu0 0.0
  %170 = vmatprep.subr.mxu0 0.0
  %171 = vmatpush1.msra.mxu0 0.0
  %172 = vmatprep.subr.mxu0 0.0
  %173 = vmatpush1.msra.mxu0 0.0
  %174 = vmatprep.subr.mxu0 0.0
  %175 = vmatpush1.msra.mxu0 0.0
  %176 = vmatprep.subr.mxu0 0.0
  %177 = vmatpush1.msra.mxu0 0.0
  %178 = vmatprep.subr.mxu0 0.0
  %179 = vmatpush1.msra.mxu0 0.0
  %180 = vmatprep.subr.mxu0 0.0
  %181 = vmatpush1.msra.mxu0 0.0
  %182 = vmatprep.subr.mxu0 0.0
  %183 = vmatpush1.msra.mxu0 0.0
  %184 = vmatprep.subr.mxu0 0.0
  %185 = vmatpush1.msra.mxu0 0.0
  %186 = vmatprep.subr.mxu0 0.0
  %187 = vmatpush1.msra.mxu0 0.0
  %188 = vmatprep.subr.mxu0 0.0
  %189 = vmatpush1.msra.mxu0 0.0
  %190 = vmatprep.subr.mxu0 0.0
  %191 = vmatpush1.msra.mxu0 0.0
  %192 = vmatprep.subr.mxu0 0.0
  %193 = vmatpush1.msra.mxu0 0.0
  %194 = vmatprep.subr.mxu0 0.0
  %195 = vmatpush1.msra.mxu0 0.0
  %196 = vmatprep.subr.mxu0 0.0
  %197 = vmatpush1.msra.mxu0 0.0
  %198 = vmatprep.subr.mxu0 0.0
  %199 = vmatpush1.msra.mxu0 0.0
  %200 = vmatprep.subr.mxu0 0.0
  %201 = vmatpush1.msra.mxu0 0.0
  %202 = vmatprep.subr.mxu0 0.0
  %203 = vmatpush1.msra.mxu0 0.0
  %204 = vmatprep.subr.mxu0 0.0
  %205 = vmatpush1.msra.mxu0 0.0
  %206 = vmatprep.subr.mxu0 0.0
  %207 = vmatpush1.msra.mxu0 0.0
  %208 = vmatprep.subr.mxu0 0.0
  %209 = vmatpush1.msra.mxu0 0.0
  %210 = vmatprep.subr.mxu0 0.0
  %211 = vmatpush1.msra.mxu0 0.0
  %212 = vmatprep.subr.mxu0 0.0
  %213 = vmatpush1.msra.mxu0 0.0
  %214 = vmatprep.subr.mxu0 0.0
  %215 = vmatpush1.msra.mxu0 0.0
  %216 = vmatprep.subr.mxu0 0.0
  %217 = vmatpush1.msra.mxu0 0.0
  %218 = vmatprep.subr.mxu0 0.0
  %219 = vmatpush1.msra.mxu0 0.0
  %220 = vmatprep.mubr.f32.mxu0 0.0
  %221 = vmatmul.mubr.f32.gmra.mrb[0].mxu0 %v154
  %v222 = vpop.f32.mrb[0].mxu0
  %v223 = vadd.f32 %v150, %v222
  %v224 = vpop.f32.mrb[0].mxu0
  %225 = vdwg.mxu0
  %v226 = vlaneseq
  %v227 = vshrl.u32 %v226, 7
  %v228 = vsub.s32 0, %v227
  %v229 = vrot.slane %v36, %v228
  %231 = vrot.lane.b32.xlu0 %v229, 2
  %v232 = vpop.permute.xlu0 %231
  %v234 = vmul.f32 %v51, %v232
  %v235 = vmul.f32 %v58, %v232
  %v236 = vld [vmem:[%s1 + $0x10] sm:$0xff]
  %239 = vrot.lane.b32.xlu0 %v234, 126
  %v240 = vpop.permute.xlu0 %239
  %241 = vrot.lane.b32.xlu0 %v235, 126
  %v242 = vpop.permute.xlu0 %241
  %vm243 = vcmask 1031168
  %v244 = vsel %vm243, %v240, %v242
  %v247 = vsel %vm79, %v236, 0
  %249 = vmatprep.subr.mxu0 0.0
  %250 = vmatpush1.msra.mxu0 %v244
  %251 = vmatprep.subr.mxu0 0.0
  %252 = vmatpush1.msra.mxu0 0.0
  %253 = vmatprep.subr.mxu0 0.0
  %254 = vmatpush1.msra.mxu0 0.0
  %255 = vmatprep.subr.mxu0 0.0
  %256 = vmatpush1.msra.mxu0 0.0
  %257 = vmatprep.subr.mxu0 0.0
  %258 = vmatpush1.msra.mxu0 0.0
  %259 = vmatprep.subr.mxu0 0.0
  %260 = vmatpush1.msra.mxu0 0.0
  %261 = vmatprep.subr.mxu0 0.0
  %262 = vmatpush1.msra.mxu0 0.0
  %263 = vmatprep.subr.mxu0 0.0
  %264 = vmatpush1.msra.mxu0 0.0
  %265 = vmatprep.subr.mxu0 0.0
  %266 = vmatpush1.msra.mxu0 0.0
  %267 = vmatprep.subr.mxu0 0.0
  %268 = vmatpush1.msra.mxu0 0.0
  %269 = vmatprep.subr.mxu0 0.0
  %270 = vmatpush1.msra.mxu0 0.0
  %271 = vmatprep.subr.mxu0 0.0
  %272 = vmatpush1.msra.mxu0 0.0
  %273 = vmatprep.subr.mxu0 0.0
  %274 = vmatpush1.msra.mxu0 0.0
  %275 = vmatprep.subr.mxu0 0.0
  %276 = vmatpush1.msra.mxu0 0.0
  %277 = vmatprep.subr.mxu0 0.0
  %278 = vmatpush1.msra.mxu0 0.0
  %279 = vmatprep.subr.mxu0 0.0
  %280 = vmatpush1.msra.mxu0 0.0
  %281 = vmatprep.subr.mxu0 0.0
  %282 = vmatpush1.msra.mxu0 0.0
  %283 = vmatprep.subr.mxu0 0.0
  %284 = vmatpush1.msra.mxu0 0.0
  %285 = vmatprep.subr.mxu0 0.0
  %286 = vmatpush1.msra.mxu0 0.0
  %287 = vmatprep.subr.mxu0 0.0
  %288 = vmatpush1.msra.mxu0 0.0
  %289 = vmatprep.subr.mxu0 0.0
  %290 = vmatpush1.msra.mxu0 0.0
  %291 = vmatprep.subr.mxu0 0.0
  %292 = vmatpush1.msra.mxu0 0.0
  %293 = vmatprep.subr.mxu0 0.0
  %294 = vmatpush1.msra.mxu0 0.0
  %295 = vmatprep.subr.mxu0 0.0
  %296 = vmatpush1.msra.mxu0 0.0
  %297 = vmatprep.subr.mxu0 0.0
  %298 = vmatpush1.msra.mxu0 0.0
  %299 = vmatprep.subr.mxu0 0.0
  %300 = vmatpush1.msra.mxu0 0.0
  %301 = vmatprep.subr.mxu0 0.0
  %302 = vmatpush1.msra.mxu0 0.0
  %303 = vmatprep.subr.mxu0 0.0
  %304 = vmatpush1.msra.mxu0 0.0
  %305 = vmatprep.subr.mxu0 0.0
  %306 = vmatpush1.msra.mxu0 0.0
  %307 = vmatprep.subr.mxu0 0.0
  %308 = vmatpush1.msra.mxu0 0.0
  %309 = vmatprep.subr.mxu0 0.0
  %310 = vmatpush1.msra.mxu0 0.0
  %311 = vmatprep.subr.mxu0 0.0
  %312 = vmatpush1.msra.mxu0 0.0
  %313 = vmatprep.mubr.f32.mxu0 0.0
  %314 = vmatmul.mubr.f32.gmra.mrb[0].mxu0 %v247
  %v315 = vpop.f32.mrb[0].mxu0
  %v316 = vadd.f32 0.0, %v315
  %v317 = vpop.f32.mrb[0].mxu0
  %318 = vdwg.mxu0
  %v319 = vadd.f32 %v223, %v316
  %v320 = vlaneseq
  %v321 = vshrl.u32 %v320, 7
  %v322 = vsub.s32 0, %v321
  %v323 = vrot.slane %v37, %v322
  %325 = vrot.lane.b32.xlu0 %v323, 8
  %v326 = vpop.permute.xlu0 %325
  %v328 = vmul.f32 %v51, %v326
  %v329 = vmul.f32 %v58, %v326
  %v330 = vld [vmem:[%s1 + $0x18] sm:$0xff]
  %333 = vrot.lane.b32.xlu0 %v328, 120
  %v334 = vpop.permute.xlu0 %333
  %335 = vrot.lane.b32.xlu0 %v329, 120
  %v336 = vpop.permute.xlu0 %335
  %vm337 = vcmask 982016
  %v338 = vsel %vm337, %v334, %v336
  %v341 = vsel %vm79, %v330, 0
  %343 = vmatprep.subr.mxu0 0.0
  %344 = vmatpush1.msra.mxu0 %v338
  %345 = vmatprep.subr.mxu0 0.0
  %346 = vmatpush1.msra.mxu0 0.0
  %347 = vmatprep.subr.mxu0 0.0
  %348 = vmatpush1.msra.mxu0 0.0
  %349 = vmatprep.subr.mxu0 0.0
  %350 = vmatpush1.msra.mxu0 0.0
  %351 = vmatprep.subr.mxu0 0.0
  %352 = vmatpush1.msra.mxu0 0.0
  %353 = vmatprep.subr.mxu0 0.0
  %354 = vmatpush1.msra.mxu0 0.0
  %355 = vmatprep.subr.mxu0 0.0
  %356 = vmatpush1.msra.mxu0 0.0
  %357 = vmatprep.subr.mxu0 0.0
  %358 = vmatpush1.msra.mxu0 0.0
  %359 = vmatprep.subr.mxu0 0.0
  %360 = vmatpush1.msra.mxu0 0.0
  %361 = vmatprep.subr.mxu0 0.0
  %362 = vmatpush1.msra.mxu0 0.0
  %363 = vmatprep.subr.mxu0 0.0
  %364 = vmatpush1.msra.mxu0 0.0
  %365 = vmatprep.subr.mxu0 0.0
  %366 = vmatpush1.msra.mxu0 0.0
  %367 = vmatprep.subr.mxu0 0.0
  %368 = vmatpush1.msra.mxu0 0.0
  %369 = vmatprep.subr.mxu0 0.0
  %370 = vmatpush1.msra.mxu0 0.0
  %371 = vmatprep.subr.mxu0 0.0
  %372 = vmatpush1.msra.mxu0 0.0
  %373 = vmatprep.subr.mxu0 0.0
  %374 = vmatpush1.msra.mxu0 0.0
  %375 = vmatprep.subr.mxu0 0.0
  %376 = vmatpush1.msra.mxu0 0.0
  %377 = vmatprep.subr.mxu0 0.0
  %378 = vmatpush1.msra.mxu0 0.0
  %379 = vmatprep.subr.mxu0 0.0
  %380 = vmatpush1.msra.mxu0 0.0
  %381 = vmatprep.subr.mxu0 0.0
  %382 = vmatpush1.msra.mxu0 0.0
  %383 = vmatprep.subr.mxu0 0.0
  %384 = vmatpush1.msra.mxu0 0.0
  %385 = vmatprep.subr.mxu0 0.0
  %386 = vmatpush1.msra.mxu0 0.0
  %387 = vmatprep.subr.mxu0 0.0
  %388 = vmatpush1.msra.mxu0 0.0
  %389 = vmatprep.subr.mxu0 0.0
  %390 = vmatpush1.msra.mxu0 0.0
  %391 = vmatprep.subr.mxu0 0.0
  %392 = vmatpush1.msra.mxu0 0.0
  %393 = vmatprep.subr.mxu0 0.0
  %394 = vmatpush1.msra.mxu0 0.0
  %395 = vmatprep.subr.mxu0 0.0
  %396 = vmatpush1.msra.mxu0 0.0
  %397 = vmatprep.subr.mxu0 0.0
  %398 = vmatpush1.msra.mxu0 0.0
  %399 = vmatprep.subr.mxu0 0.0
  %400 = vmatpush1.msra.mxu0 0.0
  %401 = vmatprep.subr.mxu0 0.0
  %402 = vmatpush1.msra.mxu0 0.0
  %403 = vmatprep.subr.mxu0 0.0
  %404 = vmatpush1.msra.mxu0 0.0
  %405 = vmatprep.subr.mxu0 0.0
  %406 = vmatpush1.msra.mxu0 0.0
  %407 = vmatprep.mubr.f32.mxu0 0.0
  %408 = vmatmul.mubr.f32.gmra.mrb[0].mxu0 %v341
  %v409 = vpop.f32.mrb[0].mxu0
  %v410 = vadd.f32 0.0, %v409
  %v411 = vpop.f32.mrb[0].mxu0
  %412 = vdwg.mxu0
  %v413 = vadd.f32 %v319, %v410
  %v414 = vld [vmem:[%s1 + $0x20] sm:$0xff]
  %v416 = vsel %vm79, %v414, 0
  %418 = vmatprep.subr.mxu0 0.0
  %419 = vmatpush1.msra.mxu0 %v42
  %420 = vmatprep.subr.mxu0 0.0
  %421 = vmatpush1.msra.mxu0 0.0
  %422 = vmatprep.subr.mxu0 0.0
  %423 = vmatpush1.msra.mxu0 0.0
  %424 = vmatprep.subr.mxu0 0.0
  %425 = vmatpush1.msra.mxu0 0.0
  %426 = vmatprep.subr.mxu0 0.0
  %427 = vmatpush1.msra.mxu0 0.0
  %428 = vmatprep.subr.mxu0 0.0
  %429 = vmatpush1.msra.mxu0 0.0
  %430 = vmatprep.subr.mxu0 0.0
  %431 = vmatpush1.msra.mxu0 0.0
  %432 = vmatprep.subr.mxu0 0.0
  %433 = vmatpush1.msra.mxu0 0.0
  %434 = vmatprep.subr.mxu0 0.0
  %435 = vmatpush1.msra.mxu0 0.0
  %436 = vmatprep.subr.mxu0 0.0
  %437 = vmatpush1.msra.mxu0 0.0
  %438 = vmatprep.subr.mxu0 0.0
  %439 = vmatpush1.msra.mxu0 0.0
  %440 = vmatprep.subr.mxu0 0.0
  %441 = vmatpush1.msra.mxu0 0.0
  %442 = vmatprep.subr.mxu0 0.0
  %443 = vmatpush1.msra.mxu0 0.0
  %444 = vmatprep.subr.mxu0 0.0
  %445 = vmatpush1.msra.mxu0 0.0
  %446 = vmatprep.subr.mxu0 0.0
  %447 = vmatpush1.msra.mxu0 0.0
  %448 = vmatprep.subr.mxu0 0.0
  %449 = vmatpush1.msra.mxu0 0.0
  %450 = vmatprep.subr.mxu0 0.0
  %451 = vmatpush1.msra.mxu0 0.0
  %452 = vmatprep.subr.mxu0 0.0
  %453 = vmatpush1.msra.mxu0 0.0
  %454 = vmatprep.subr.mxu0 0.0
  %455 = vmatpush1.msra.mxu0 0.0
  %456 = vmatprep.subr.mxu0 0.0
  %457 = vmatpush1.msra.mxu0 0.0
  %458 = vmatprep.subr.mxu0 0.0
  %459 = vmatpush1.msra.mxu0 0.0
  %460 = vmatprep.subr.mxu0 0.0
  %461 = vmatpush1.msra.mxu0 0.0
  %462 = vmatprep.subr.mxu0 0.0
  %463 = vmatpush1.msra.mxu0 0.0
  %464 = vmatprep.subr.mxu0 0.0
  %465 = vmatpush1.msra.mxu0 0.0
  %466 = vmatprep.subr.mxu0 0.0
  %467 = vmatpush1.msra.mxu0 0.0
  %468 = vmatprep.subr.mxu0 0.0
  %469 = vmatpush1.msra.mxu0 0.0
  %470 = vmatprep.subr.mxu0 0.0
  %471 = vmatpush1.msra.mxu0 0.0
  %472 = vmatprep.subr.mxu0 0.0
  %473 = vmatpush1.msra.mxu0 0.0
  %474 = vmatprep.subr.mxu0 0.0
  %475 = vmatpush1.msra.mxu0 0.0
  %476 = vmatprep.subr.mxu0 0.0
  %477 = vmatpush1.msra.mxu0 0.0
  %478 = vmatprep.subr.mxu0 0.0
  %479 = vmatpush1.msra.mxu0 0.0
  %480 = vmatprep.subr.mxu0 0.0
  %481 = vmatpush1.msra.mxu0 0.0
  %482 = vmatprep.mubr.f32.mxu0 0.0
  %483 = vmatmul.mubr.f32.gmra.mrb[0].mxu0 %v416
  %v484 = vpop.f32.mrb[0].mxu0
  %v485 = vadd.f32 0.0, %v484
  %v486 = vpop.f32.mrb[0].mxu0
  %487 = vdwg.mxu0
  %v488 = vadd.f32 %v413, %v485
  %v489 = vlaneseq
  %v490 = vshrl.u32 %v489, 7
  %v491 = vsub.s32 0, %v490
  %v492 = vrot.slane %v38, %v491
  %494 = vrot.lane.b32.xlu0 %v492, 10
  %v495 = vpop.permute.xlu0 %494
  %v497 = vmul.f32 %v51, %v495
  %v498 = vmul.f32 %v58, %v495
  %v499 = vld [vmem:[%s1 + $0x28] sm:$0xff]
  %502 = vrot.lane.b32.xlu0 %v497, 118
  %v503 = vpop.permute.xlu0 %502
  %504 = vrot.lane.b32.xlu0 %v498, 118
  %v505 = vpop.permute.xlu0 %504
  %vm506 = vcmask 965632
  %v507 = vsel %vm506, %v503, %v505
  %v510 = vsel %vm79, %v499, 0
  %512 = vmatprep.subr.mxu0 0.0
  %513 = vmatpush1.msra.mxu0 %v507
  %514 = vmatprep.subr.mxu0 0.0
  %515 = vmatpush1.msra.mxu0 0.0
  %516 = vmatprep.subr.mxu0 0.0
  %517 = vmatpush1.msra.mxu0 0.0
  %518 = vmatprep.subr.mxu0 0.0
  %519 = vmatpush1.msra.mxu0 0.0
  %520 = vmatprep.subr.mxu0 0.0
  %521 = vmatpush1.msra.mxu0 0.0
  %522 = vmatprep.subr.mxu0 0.0
  %523 = vmatpush1.msra.mxu0 0.0
  %524 = vmatprep.subr.mxu0 0.0
  %525 = vmatpush1.msra.mxu0 0.0
  %526 = vmatprep.subr.mxu0 0.0
  %527 = vmatpush1.msra.mxu0 0.0
  %528 = vmatprep.subr.mxu0 0.0
  %529 = vmatpush1.msra.mxu0 0.0
  %530 = vmatprep.subr.mxu0 0.0
  %531 = vmatpush1.msra.mxu0 0.0
  %532 = vmatprep.subr.mxu0 0.0
  %533 = vmatpush1.msra.mxu0 0.0
  %534 = vmatprep.subr.mxu0 0.0
  %535 = vmatpush1.msra.mxu0 0.0
  %536 = vmatprep.subr.mxu0 0.0
  %537 = vmatpush1.msra.mxu0 0.0
  %538 = vmatprep.subr.mxu0 0.0
  %539 = vmatpush1.msra.mxu0 0.0
  %540 = vmatprep.subr.mxu0 0.0
  %541 = vmatpush1.msra.mxu0 0.0
  %542 = vmatprep.subr.mxu0 0.0
  %543 = vmatpush1.msra.mxu0 0.0
  %544 = vmatprep.subr.mxu0 0.0
  %545 = vmatpush1.msra.mxu0 0.0
  %546 = vmatprep.subr.mxu0 0.0
  %547 = vmatpush1.msra.mxu0 0.0
  %548 = vmatprep.subr.mxu0 0.0
  %549 = vmatpush1.msra.mxu0 0.0
  %550 = vmatprep.subr.mxu0 0.0
  %551 = vmatpush1.msra.mxu0 0.0
  %552 = vmatprep.subr.mxu0 0.0
  %553 = vmatpush1.msra.mxu0 0.0
  %554 = vmatprep.subr.mxu0 0.0
  %555 = vmatpush1.msra.mxu0 0.0
  %556 = vmatprep.subr.mxu0 0.0
  %557 = vmatpush1.msra.mxu0 0.0
  %558 = vmatprep.subr.mxu0 0.0
  %559 = vmatpush1.msra.mxu0 0.0
  %560 = vmatprep.subr.mxu0 0.0
  %561 = vmatpush1.msra.mxu0 0.0
  %562 = vmatprep.subr.mxu0 0.0
  %563 = vmatpush1.msra.mxu0 0.0
  %564 = vmatprep.subr.mxu0 0.0
  %565 = vmatpush1.msra.mxu0 0.0
  %566 = vmatprep.subr.mxu0 0.0
  %567 = vmatpush1.msra.mxu0 0.0
  %568 = vmatprep.subr.mxu0 0.0
  %569 = vmatpush1.msra.mxu0 0.0
  %570 = vmatprep.subr.mxu0 0.0
  %571 = vmatpush1.msra.mxu0 0.0
  %572 = vmatprep.subr.mxu0 0.0
  %573 = vmatpush1.msra.mxu0 0.0
  %574 = vmatprep.subr.mxu0 0.0
  %575 = vmatpush1.msra.mxu0 0.0
  %576 = vmatprep.mubr.f32.mxu0 0.0
  %577 = vmatmul.mubr.f32.gmra.mrb[0].mxu0 %v510
  %v578 = vpop.f32.mrb[0].mxu0
  %v579 = vadd.f32 0.0, %v578
  %v580 = vpop.f32.mrb[0].mxu0
  %581 = vdwg.mxu0
  %v582 = vadd.f32 %v488, %v579
  %v583 = vlaneseq
  %v584 = vshrl.u32 %v583, 7
  %v585 = vsub.s32 0, %v584
  %v586 = vrot.slane %v39, %v585
  %588 = vrot.lane.b32.xlu0 %v586, 16
  %v589 = vpop.permute.xlu0 %588
  %v591 = vmul.f32 %v51, %v589
  %v592 = vmul.f32 %v58, %v589
  %v593 = vld [vmem:[%s1 + $0x30] sm:$0xff]
  %596 = vrot.lane.b32.xlu0 %v591, 112
  %v597 = vpop.permute.xlu0 %596
  %598 = vrot.lane.b32.xlu0 %v592, 112
  %v599 = vpop.permute.xlu0 %598
  %vm600 = vcmask 916480
  %v601 = vsel %vm600, %v597, %v599
  %v604 = vsel %vm79, %v593, 0
  %606 = vmatprep.subr.mxu0 0.0
  %607 = vmatpush1.msra.mxu0 %v601
  %608 = vmatprep.subr.mxu0 0.0
  %609 = vmatpush1.msra.mxu0 0.0
  %610 = vmatprep.subr.mxu0 0.0
  %611 = vmatpush1.msra.mxu0 0.0
  %612 = vmatprep.subr.mxu0 0.0
  %613 = vmatpush1.msra.mxu0 0.0
  %614 = vmatprep.subr.mxu0 0.0
  %615 = vmatpush1.msra.mxu0 0.0
  %616 = vmatprep.subr.mxu0 0.0
  %617 = vmatpush1.msra.mxu0 0.0
  %618 = vmatprep.subr.mxu0 0.0
  %619 = vmatpush1.msra.mxu0 0.0
  %620 = vmatprep.subr.mxu0 0.0
  %621 = vmatpush1.msra.mxu0 0.0
  %622 = vmatprep.subr.mxu0 0.0
  %623 = vmatpush1.msra.mxu0 0.0
  %624 = vmatprep.subr.mxu0 0.0
  %625 = vmatpush1.msra.mxu0 0.0
  %626 = vmatprep.subr.mxu0 0.0
  %627 = vmatpush1.msra.mxu0 0.0
  %628 = vmatprep.subr.mxu0 0.0
  %629 = vmatpush1.msra.mxu0 0.0
  %630 = vmatprep.subr.mxu0 0.0
  %631 = vmatpush1.msra.mxu0 0.0
  %632 = vmatprep.subr.mxu0 0.0
  %633 = vmatpush1.msra.mxu0 0.0
  %634 = vmatprep.subr.mxu0 0.0
  %635 = vmatpush1.msra.mxu0 0.0
  %636 = vmatprep.subr.mxu0 0.0
  %637 = vmatpush1.msra.mxu0 0.0
  %638 = vmatprep.subr.mxu0 0.0
  %639 = vmatpush1.msra.mxu0 0.0
  %640 = vmatprep.subr.mxu0 0.0
  %641 = vmatpush1.msra.mxu0 0.0
  %642 = vmatprep.subr.mxu0 0.0
  %643 = vmatpush1.msra.mxu0 0.0
  %644 = vmatprep.subr.mxu0 0.0
  %645 = vmatpush1.msra.mxu0 0.0
  %646 = vmatprep.subr.mxu0 0.0
  %647 = vmatpush1.msra.mxu0 0.0
  %648 = vmatprep.subr.mxu0 0.0
  %649 = vmatpush1.msra.mxu0 0.0
  %650 = vmatprep.subr.mxu0 0.0
  %651 = vmatpush1.msra.mxu0 0.0
  %652 = vmatprep.subr.mxu0 0.0
  %653 = vmatpush1.msra.mxu0 0.0
  %654 = vmatprep.subr.mxu0 0.0
  %655 = vmatpush1.msra.mxu0 0.0
  %656 = vmatprep.subr.mxu0 0.0
  %657 = vmatpush1.msra.mxu0 0.0
  %658 = vmatprep.subr.mxu0 0.0
  %659 = vmatpush1.msra.mxu0 0.0
  %660 = vmatprep.subr.mxu0 0.0
  %661 = vmatpush1.msra.mxu0 0.0
  %662 = vmatprep.subr.mxu0 0.0
  %663 = vmatpush1.msra.mxu0 0.0
  %664 = vmatprep.subr.mxu0 0.0
  %665 = vmatpush1.msra.mxu0 0.0
  %666 = vmatprep.subr.mxu0 0.0
  %667 = vmatpush1.msra.mxu0 0.0
  %668 = vmatprep.subr.mxu0 0.0
  %669 = vmatpush1.msra.mxu0 0.0
  %670 = vmatprep.mubr.f32.mxu0 0.0
  %671 = vmatmul.mubr.f32.gmra.mrb[0].mxu0 %v604
  %v672 = vpop.f32.mrb[0].mxu0
  %v673 = vadd.f32 0.0, %v672
  %v674 = vpop.f32.mrb[0].mxu0
  %675 = vdwg.mxu0
  %v676 = vadd.f32 %v582, %v673
  %v677 = vlaneseq
  %v678 = vshrl.u32 %v677, 7
  %v679 = vsub.s32 0, %v678
  %v680 = vrot.slane %v40, %v679
  %682 = vrot.lane.b32.xlu0 %v680, 17
  %v683 = vpop.permute.xlu0 %682
  %v685 = vmul.f32 %v51, %v683
  %v686 = vmul.f32 %v58, %v683
  %v687 = vld [vmem:[%s1 + $0x38] sm:$0xff]
  %690 = vrot.lane.b32.xlu0 %v685, 111
  %v691 = vpop.permute.xlu0 %690
  %692 = vrot.lane.b32.xlu0 %v686, 111
  %v693 = vpop.permute.xlu0 %692
  %vm694 = vcmask 908288
  %v695 = vsel %vm694, %v691, %v693
  %v698 = vsel %vm79, %v687, 0
  %700 = vmatprep.subr.mxu0 0.0
  %701 = vmatpush1.msra.mxu0 %v695
  %702 = vmatprep.subr.mxu0 0.0
  %703 = vmatpush1.msra.mxu0 0.0
  %704 = vmatprep.subr.mxu0 0.0
  %705 = vmatpush1.msra.mxu0 0.0
  %706 = vmatprep.subr.mxu0 0.0
  %707 = vmatpush1.msra.mxu0 0.0
  %708 = vmatprep.subr.mxu0 0.0
  %709 = vmatpush1.msra.mxu0 0.0
  %710 = vmatprep.subr.mxu0 0.0
  %711 = vmatpush1.msra.mxu0 0.0
  %712 = vmatprep.subr.mxu0 0.0
  %713 = vmatpush1.msra.mxu0 0.0
  %714 = vmatprep.subr.mxu0 0.0
  %715 = vmatpush1.msra.mxu0 0.0
  %716 = vmatprep.subr.mxu0 0.0
  %717 = vmatpush1.msra.mxu0 0.0
  %718 = vmatprep.subr.mxu0 0.0
  %719 = vmatpush1.msra.mxu0 0.0
  %720 = vmatprep.subr.mxu0 0.0
  %721 = vmatpush1.msra.mxu0 0.0
  %722 = vmatprep.subr.mxu0 0.0
  %723 = vmatpush1.msra.mxu0 0.0
  %724 = vmatprep.subr.mxu0 0.0
  %725 = vmatpush1.msra.mxu0 0.0
  %726 = vmatprep.subr.mxu0 0.0
  %727 = vmatpush1.msra.mxu0 0.0
  %728 = vmatprep.subr.mxu0 0.0
  %729 = vmatpush1.msra.mxu0 0.0
  %730 = vmatprep.subr.mxu0 0.0
  %731 = vmatpush1.msra.mxu0 0.0
  %732 = vmatprep.subr.mxu0 0.0
  %733 = vmatpush1.msra.mxu0 0.0
  %734 = vmatprep.subr.mxu0 0.0
  %735 = vmatpush1.msra.mxu0 0.0
  %736 = vmatprep.subr.mxu0 0.0
  %737 = vmatpush1.msra.mxu0 0.0
  %738 = vmatprep.subr.mxu0 0.0
  %739 = vmatpush1.msra.mxu0 0.0
  %740 = vmatprep.subr.mxu0 0.0
  %741 = vmatpush1.msra.mxu0 0.0
  %742 = vmatprep.subr.mxu0 0.0
  %743 = vmatpush1.msra.mxu0 0.0
  %744 = vmatprep.subr.mxu0 0.0
  %745 = vmatpush1.msra.mxu0 0.0
  %746 = vmatprep.subr.mxu0 0.0
  %747 = vmatpush1.msra.mxu0 0.0
  %748 = vmatprep.subr.mxu0 0.0
  %749 = vmatpush1.msra.mxu0 0.0
  %750 = vmatprep.subr.mxu0 0.0
  %751 = vmatpush1.msra.mxu0 0.0
  %752 = vmatprep.subr.mxu0 0.0
  %753 = vmatpush1.msra.mxu0 0.0
  %754 = vmatprep.subr.mxu0 0.0
  %755 = vmatpush1.msra.mxu0 0.0
  %756 = vmatprep.subr.mxu0 0.0
  %757 = vmatpush1.msra.mxu0 0.0
  %758 = vmatprep.subr.mxu0 0.0
  %759 = vmatpush1.msra.mxu0 0.0
  %760 = vmatprep.subr.mxu0 0.0
  %761 = vmatpush1.msra.mxu0 0.0
  %762 = vmatprep.subr.mxu0 0.0
  %763 = vmatpush1.msra.mxu0 0.0
  %764 = vmatprep.mubr.f32.mxu0 0.0
  %765 = vmatmul.mubr.f32.gmra.mrb[0].mxu0 %v698
  %v766 = vpop.f32.mrb[0].mxu0
  %v767 = vadd.f32 0.0, %v766
  %v768 = vpop.f32.mrb[0].mxu0
  %769 = vdwg.mxu0
  %v770 = vadd.f32 %v676, %v767
  %v771 = vlaneseq
  %v772 = vshrl.u32 %v771, 7
  %v773 = vsub.s32 0, %v772
  %v774 = vrot.slane %v41, %v773
  %776 = vrot.lane.b32.xlu0 %v774, 18
  %v777 = vpop.permute.xlu0 %776
  %v779 = vmul.f32 %v51, %v777
  %v780 = vmul.f32 %v58, %v777
  %v781 = vld [vmem:[%s1 + $0x40] sm:$0xff]
  %784 = vrot.lane.b32.xlu0 %v779, 110
  %v785 = vpop.permute.xlu0 %784
  %786 = vrot.lane.b32.xlu0 %v780, 110
  %v787 = vpop.permute.xlu0 %786
  %vm788 = vcmask 900096
  %v789 = vsel %vm788, %v785, %v787
  %v792 = vsel %vm79, %v781, 0
  %794 = vmatprep.subr.mxu0 0.0
  %795 = vmatpush1.msra.mxu0 %v789
  %796 = vmatprep.subr.mxu0 0.0
  %797 = vmatpush1.msra.mxu0 0.0
  %798 = vmatprep.subr.mxu0 0.0
  %799 = vmatpush1.msra.mxu0 0.0
  %800 = vmatprep.subr.mxu0 0.0
  %801 = vmatpush1.msra.mxu0 0.0
  %802 = vmatprep.subr.mxu0 0.0
  %803 = vmatpush1.msra.mxu0 0.0
  %804 = vmatprep.subr.mxu0 0.0
  %805 = vmatpush1.msra.mxu0 0.0
  %806 = vmatprep.subr.mxu0 0.0
  %807 = vmatpush1.msra.mxu0 0.0
  %808 = vmatprep.subr.mxu0 0.0
  %809 = vmatpush1.msra.mxu0 0.0
  %810 = vmatprep.subr.mxu0 0.0
  %811 = vmatpush1.msra.mxu0 0.0
  %812 = vmatprep.subr.mxu0 0.0
  %813 = vmatpush1.msra.mxu0 0.0
  %814 = vmatprep.subr.mxu0 0.0
  %815 = vmatpush1.msra.mxu0 0.0
  %816 = vmatprep.subr.mxu0 0.0
  %817 = vmatpush1.msra.mxu0 0.0
  %818 = vmatprep.subr.mxu0 0.0
  %819 = vmatpush1.msra.mxu0 0.0
  %820 = vmatprep.subr.mxu0 0.0
  %821 = vmatpush1.msra.mxu0 0.0
  %822 = vmatprep.subr.mxu0 0.0
  %823 = vmatpush1.msra.mxu0 0.0
  %824 = vmatprep.subr.mxu0 0.0
  %825 = vmatpush1.msra.mxu0 0.0
  %826 = vmatprep.subr.mxu0 0.0
  %827 = vmatpush1.msra.mxu0 0.0
  %828 = vmatprep.subr.mxu0 0.0
  %829 = vmatpush1.msra.mxu0 0.0
  %830 = vmatprep.subr.mxu0 0.0
  %831 = vmatpush1.msra.mxu0 0.0
  %832 = vmatprep.subr.mxu0 0.0
  %833 = vmatpush1.msra.mxu0 0.0
  %834 = vmatprep.subr.mxu0 0.0
  %835 = vmatpush1.msra.mxu0 0.0
  %836 = vmatprep.subr.mxu0 0.0
  %837 = vmatpush1.msra.mxu0 0.0
  %838 = vmatprep.subr.mxu0 0.0
  %839 = vmatpush1.msra.mxu0 0.0
  %840 = vmatprep.subr.mxu0 0.0
  %841 = vmatpush1.msra.mxu0 0.0
  %842 = vmatprep.subr.mxu0 0.0
  %843 = vmatpush1.msra.mxu0 0.0
  %844 = vmatprep.subr.mxu0 0.0
  %845 = vmatpush1.msra.mxu0 0.0
  %846 = vmatprep.subr.mxu0 0.0
  %847 = vmatpush1.msra.mxu0 0.0
  %848 = vmatprep.subr.mxu0 0.0
  %849 = vmatpush1.msra.mxu0 0.0
  %850 = vmatprep.subr.mxu0 0.0
  %851 = vmatpush1.msra.mxu0 0.0
  %852 = vmatprep.subr.mxu0 0.0
  %853 = vmatpush1.msra.mxu0 0.0
  %854 = vmatprep.subr.mxu0 0.0
  %855 = vmatpush1.msra.mxu0 0.0
  %856 = vmatprep.subr.mxu0 0.0
  %857 = vmatpush1.msra.mxu0 0.0
  %858 = vmatprep.mubr.f32.mxu0 0.0
  %859 = vmatmul.mubr.f32.gmra.mrb[0].mxu0 %v792
  %v860 = vpop.f32.mrb[0].mxu0
  %v861 = vadd.f32 0.0, %v860
  %v862 = vpop.f32.mrb[0].mxu0
  %863 = vdwg.mxu0
  %v864 = vadd.f32 %v770, %v861
  %v865 = vld [vmem:[%s2] sm:$0xff]
  %867 = vset.pattern.permute.xlu0 0
  %868 = vperm.xlu0 %867, %v865
  %v869 = vpop.permute.xlu0 %868
  %v871 = vmul.f32 %v864, %v869
  %v872 = vld [vmem:[%s3] sm:$0xff]
  %874 = vset.pattern.permute.xlu0 0
  %875 = vperm.xlu0 %874, %v872
  %v876 = vpop.permute.xlu0 %875
  %v878 = vadd.f32 %v871, %v876
  %v879 = vmax.f32 %v878, 0.0
  %881 = vrot.lane.b32.xlu0 %v879, 9
  %v882 = vpop.permute.xlu0 %881
  %884 = vst.msk [vmem:[#allocation2] sm:$0xff] %vm47, %v882
  %885 = vst.msk [vmem:[#allocation2 + $0x8] sm:$0xff] %vm49, %v882
  %v886 = vld [vmem:[#allocation2] sm:$0xff]
  %v887 = vmul.f32 %v886, %v55
  %v888 = vld [vmem:[%s1 + $0x48] sm:$0xff]
  %v889 = vld [vmem:[#allocation2 + $0x8] sm:$0xff]
  %v890 = vmul.f32 %v886, %v65
  %v891 = vmul.f32 %v889, %v65
  %v892 = vld [vmem:[%s1 + $0x50] sm:$0xff]
  %895 = vrot.lane.b32.xlu0 %v890, 127
  %v896 = vpop.permute.xlu0 %895
  %897 = vrot.lane.b32.xlu0 %v891, 127
  %v898 = vpop.permute.xlu0 %897
  %v899 = vsel %vm76, %v896, %v898
  %v902 = vsel %vm79, %v892, 0
  %904 = vmatprep.subr.mxu0 0.0
  %905 = vmatpush1.msra.mxu0 %v899
  %906 = vmatprep.subr.mxu0 0.0
  %907 = vmatpush1.msra.mxu0 0.0
  %908 = vmatprep.subr.mxu0 0.0
  %909 = vmatpush1.msra.mxu0 0.0
  %910 = vmatprep.subr.mxu0 0.0
  %911 = vmatpush1.msra.mxu0 0.0
  %912 = vmatprep.subr.mxu0 0.0
  %913 = vmatpush1.msra.mxu0 0.0
  %914 = vmatprep.subr.mxu0 0.0
  %915 = vmatpush1.msra.mxu0 0.0
  %916 = vmatprep.subr.mxu0 0.0
  %917 = vmatpush1.msra.mxu0 0.0
  %918 = vmatprep.subr.mxu0 0.0
  %919 = vmatpush1.msra.mxu0 0.0
  %920 = vmatprep.subr.mxu0 0.0
  %921 = vmatpush1.msra.mxu0 0.0
  %922 = vmatprep.subr.mxu0 0.0
  %923 = vmatpush1.msra.mxu0 0.0
  %924 = vmatprep.subr.mxu0 0.0
  %925 = vmatpush1.msra.mxu0 0.0
  %926 = vmatprep.subr.mxu0 0.0
  %927 = vmatpush1.msra.mxu0 0.0
  %928 = vmatprep.subr.mxu0 0.0
  %929 = vmatpush1.msra.mxu0 0.0
  %930 = vmatprep.subr.mxu0 0.0
  %931 = vmatpush1.msra.mxu0 0.0
  %932 = vmatprep.subr.mxu0 0.0
  %933 = vmatpush1.msra.mxu0 0.0
  %934 = vmatprep.subr.mxu0 0.0
  %935 = vmatpush1.msra.mxu0 0.0
  %936 = vmatprep.subr.mxu0 0.0
  %937 = vmatpush1.msra.mxu0 0.0
  %938 = vmatprep.subr.mxu0 0.0
  %939 = vmatpush1.msra.mxu0 0.0
  %940 = vmatprep.subr.mxu0 0.0
  %941 = vmatpush1.msra.mxu0 0.0
  %942 = vmatprep.subr.mxu0 0.0
  %943 = vmatpush1.msra.mxu0 0.0
  %944 = vmatprep.subr.mxu0 0.0
  %945 = vmatpush1.msra.mxu0 0.0
  %946 = vmatprep.subr.mxu0 0.0
  %947 = vmatpush1.msra.mxu0 0.0
  %948 = vmatprep.subr.mxu0 0.0
  %949 = vmatpush1.msra.mxu0 0.0
  %950 = vmatprep.subr.mxu0 0.0
  %951 = vmatpush1.msra.mxu0 0.0
  %952 = vmatprep.subr.mxu0 0.0
  %953 = vmatpush1.msra.mxu0 0.0
  %954 = vmatprep.subr.mxu0 0.0
  %955 = vmatpush1.msra.mxu0 0.0
  %956 = vmatprep.subr.mxu0 0.0
  %957 = vmatpush1.msra.mxu0 0.0
  %958 = vmatprep.subr.mxu0 0.0
  %959 = vmatpush1.msra.mxu0 0.0
  %960 = vmatprep.subr.mxu0 0.0
  %961 = vmatpush1.msra.mxu0 0.0
  %962 = vmatprep.subr.mxu0 0.0
  %963 = vmatpush1.msra.mxu0 0.0
  %964 = vmatprep.subr.mxu0 0.0
  %965 = vmatpush1.msra.mxu0 0.0
  %966 = vmatprep.subr.mxu0 0.0
  %967 = vmatpush1.msra.mxu0 0.0
  %968 = vmatprep.mubr.f32.mxu0 0.0
  %969 = vmatmul.mubr.f32.gmra.mrb[0].mxu0 %v902
  %v970 = vpop.f32.mrb[0].mxu0
  %v971 = vadd.f32 0.0, %v970
  %v972 = vpop.f32.mrb[0].mxu0
  %973 = vdwg.mxu0
  %v975 = vsel %vm79, %v888, 0
  %977 = vmatprep.subr.mxu0 0.0
  %978 = vmatpush1.msra.mxu0 %v887
  %979 = vmatprep.subr.mxu0 0.0
  %980 = vmatpush1.msra.mxu0 0.0
  %981 = vmatprep.subr.mxu0 0.0
  %982 = vmatpush1.msra.mxu0 0.0
  %983 = vmatprep.subr.mxu0 0.0
  %984 = vmatpush1.msra.mxu0 0.0
  %985 = vmatprep.subr.mxu0 0.0
  %986 = vmatpush1.msra.mxu0 0.0
  %987 = vmatprep.subr.mxu0 0.0
  %988 = vmatpush1.msra.mxu0 0.0
  %989 = vmatprep.subr.mxu0 0.0
  %990 = vmatpush1.msra.mxu0 0.0
  %991 = vmatprep.subr.mxu0 0.0
  %992 = vmatpush1.msra.mxu0 0.0
  %993 = vmatprep.subr.mxu0 0.0
  %994 = vmatpush1.msra.mxu0 0.0
  %995 = vmatprep.subr.mxu0 0.0
  %996 = vmatpush1.msra.mxu0 0.0
  %997 = vmatprep.subr.mxu0 0.0
  %998 = vmatpush1.msra.mxu0 0.0
  %999 = vmatprep.subr.mxu0 0.0
  %1000 = vmatpush1.msra.mxu0 0.0
  %1001 = vmatprep.subr.mxu0 0.0
  %1002 = vmatpush1.msra.mxu0 0.0
  %1003 = vmatprep.subr.mxu0 0.0
  %1004 = vmatpush1.msra.mxu0 0.0
  %1005 = vmatprep.subr.mxu0 0.0
  %1006 = vmatpush1.msra.mxu0 0.0
  %1007 = vmatprep.subr.mxu0 0.0
  %1008 = vmatpush1.msra.mxu0 0.0
  %1009 = vmatprep.subr.mxu0 0.0
  %1010 = vmatpush1.msra.mxu0 0.0
  %1011 = vmatprep.subr.mxu0 0.0
  %1012 = vmatpush1.msra.mxu0 0.0
  %1013 = vmatprep.subr.mxu0 0.0
  %1014 = vmatpush1.msra.mxu0 0.0
  %1015 = vmatprep.subr.mxu0 0.0
  %1016 = vmatpush1.msra.mxu0 0.0
  %1017 = vmatprep.subr.mxu0 0.0
  %1018 = vmatpush1.msra.mxu0 0.0
  %1019 = vmatprep.subr.mxu0 0.0
  %1020 = vmatpush1.msra.mxu0 0.0
  %1021 = vmatprep.subr.mxu0 0.0
  %1022 = vmatpush1.msra.mxu0 0.0
  %1023 = vmatprep.subr.mxu0 0.0
  %1024 = vmatpush1.msra.mxu0 0.0
  %1025 = vmatprep.subr.mxu0 0.0
  %1026 = vmatpush1.msra.mxu0 0.0
  %1027 = vmatprep.subr.mxu0 0.0
  %1028 = vmatpush1.msra.mxu0 0.0
  %1029 = vmatprep.subr.mxu0 0.0
  %1030 = vmatpush1.msra.mxu0 0.0
  %1031 = vmatprep.subr.mxu0 0.0
  %1032 = vmatpush1.msra.mxu0 0.0
  %1033 = vmatprep.subr.mxu0 0.0
  %1034 = vmatpush1.msra.mxu0 0.0
  %1035 = vmatprep.subr.mxu0 0.0
  %1036 = vmatpush1.msra.mxu0 0.0
  %1037 = vmatprep.subr.mxu0 0.0
  %1038 = vmatpush1.msra.mxu0 0.0
  %1039 = vmatprep.subr.mxu0 0.0
  %1040 = vmatpush1.msra.mxu0 0.0
  %1041 = vmatprep.mubr.f32.mxu0 0.0
  %1042 = vmatmul.mubr.f32.gmra.mrb[0].mxu0 %v975
  %v1043 = vpop.f32.mrb[0].mxu0
  %v1044 = vadd.f32 %v971, %v1043
  %v1045 = vpop.f32.mrb[0].mxu0
  %1046 = vdwg.mxu0
  %v1047 = vmul.f32 %v886, %v232
  %v1048 = vmul.f32 %v889, %v232
  %v1049 = vld [vmem:[%s1 + $0x58] sm:$0xff]
  %1052 = vrot.lane.b32.xlu0 %v1047, 126
  %v1053 = vpop.permute.xlu0 %1052
  %1054 = vrot.lane.b32.xlu0 %v1048, 126
  %v1055 = vpop.permute.xlu0 %1054
  %v1056 = vsel %vm243, %v1053, %v1055
  %v1059 = vsel %vm79, %v1049, 0
  %1061 = vmatprep.subr.mxu0 0.0
  %1062 = vmatpush1.msra.mxu0 %v1056
  %1063 = vmatprep.subr.mxu0 0.0
  %1064 = vmatpush1.msra.mxu0 0.0
  %1065 = vmatprep.subr.mxu0 0.0
  %1066 = vmatpush1.msra.mxu0 0.0
  %1067 = vmatprep.subr.mxu0 0.0
  %1068 = vmatpush1.msra.mxu0 0.0
  %1069 = vmatprep.subr.mxu0 0.0
  %1070 = vmatpush1.msra.mxu0 0.0
  %1071 = vmatprep.subr.mxu0 0.0
  %1072 = vmatpush1.msra.mxu0 0.0
  %1073 = vmatprep.subr.mxu0 0.0
  %1074 = vmatpush1.msra.mxu0 0.0
  %1075 = vmatprep.subr.mxu0 0.0
  %1076 = vmatpush1.msra.mxu0 0.0
  %1077 = vmatprep.subr.mxu0 0.0
  %1078 = vmatpush1.msra.mxu0 0.0
  %1079 = vmatprep.subr.mxu0 0.0
  %1080 = vmatpush1.msra.mxu0 0.0
  %1081 = vmatprep.subr.mxu0 0.0
  %1082 = vmatpush1.msra.mxu0 0.0
  %1083 = vmatprep.subr.mxu0 0.0
  %1084 = vmatpush1.msra.mxu0 0.0
  %1085 = vmatprep.subr.mxu0 0.0
  %1086 = vmatpush1.msra.mxu0 0.0
  %1087 = vmatprep.subr.mxu0 0.0
  %1088 = vmatpush1.msra.mxu0 0.0
  %1089 = vmatprep.subr.mxu0 0.0
  %1090 = vmatpush1.msra.mxu0 0.0
  %1091 = vmatprep.subr.mxu0 0.0
  %1092 = vmatpush1.msra.mxu0 0.0
  %1093 = vmatprep.subr.mxu0 0.0
  %1094 = vmatpush1.msra.mxu0 0.0
  %1095 = vmatprep.subr.mxu0 0.0
  %1096 = vmatpush1.msra.mxu0 0.0
  %1097 = vmatprep.subr.mxu0 0.0
  %1098 = vmatpush1.msra.mxu0 0.0
  %1099 = vmatprep.subr.mxu0 0.0
  %1100 = vmatpush1.msra.mxu0 0.0
  %1101 = vmatprep.subr.mxu0 0.0
  %1102 = vmatpush1.msra.mxu0 0.0
  %1103 = vmatprep.subr.mxu0 0.0
  %1104 = vmatpush1.msra.mxu0 0.0
  %1105 = vmatprep.subr.mxu0 0.0
  %1106 = vmatpush1.msra.mxu0 0.0
  %1107 = vmatprep.subr.mxu0 0.0
  %1108 = vmatpush1.msra.mxu0 0.0
  %1109 = vmatprep.subr.mxu0 0.0
  %1110 = vmatpush1.msra.mxu0 0.0
  %1111 = vmatprep.subr.mxu0 0.0
  %1112 = vmatpush1.msra.mxu0 0.0
  %1113 = vmatprep.subr.mxu0 0.0
  %1114 = vmatpush1.msra.mxu0 0.0
  %1115 = vmatprep.subr.mxu0 0.0
  %1116 = vmatpush1.msra.mxu0 0.0
  %1117 = vmatprep.subr.mxu0 0.0
  %1118 = vmatpush1.msra.mxu0 0.0
  %1119 = vmatprep.subr.mxu0 0.0
  %1120 = vmatpush1.msra.mxu0 0.0
  %1121 = vmatprep.subr.mxu0 0.0
  %1122 = vmatpush1.msra.mxu0 0.0
  %1123 = vmatprep.subr.mxu0 0.0
  %1124 = vmatpush1.msra.mxu0 0.0
  %1125 = vmatprep.mubr.f32.mxu0 0.0
  %1126 = vmatmul.mubr.f32.gmra.mrb[0].mxu0 %v1059
  %v1127 = vpop.f32.mrb[0].mxu0
  %v1128 = vadd.f32 0.0, %v1127
  %v1129 = vpop.f32.mrb[0].mxu0
  %1130 = vdwg.mxu0
  %v1131 = vadd.f32 %v1044, %v1128
  %v1132 = vmul.f32 %v886, %v326
  %v1133 = vmul.f32 %v889, %v326
  %v1134 = vld [vmem:[%s1 + $0x60] sm:$0xff]
  %1137 = vrot.lane.b32.xlu0 %v1132, 120
  %v1138 = vpop.permute.xlu0 %1137
  %1139 = vrot.lane.b32.xlu0 %v1133, 120
  %v1140 = vpop.permute.xlu0 %1139
  %v1141 = vsel %vm337, %v1138, %v1140
  %v1144 = vsel %vm79, %v1134, 0
  %1146 = vmatprep.subr.mxu0 0.0
  %1147 = vmatpush1.msra.mxu0 %v1141
  %1148 = vmatprep.subr.mxu0 0.0
  %1149 = vmatpush1.msra.mxu0 0.0
  %1150 = vmatprep.subr.mxu0 0.0
  %1151 = vmatpush1.msra.mxu0 0.0
  %1152 = vmatprep.subr.mxu0 0.0
  %1153 = vmatpush1.msra.mxu0 0.0
  %1154 = vmatprep.subr.mxu0 0.0
  %1155 = vmatpush1.msra.mxu0 0.0
  %1156 = vmatprep.subr.mxu0 0.0
  %1157 = vmatpush1.msra.mxu0 0.0
  %1158 = vmatprep.subr.mxu0 0.0
  %1159 = vmatpush1.msra.mxu0 0.0
  %1160 = vmatprep.subr.mxu0 0.0
  %1161 = vmatpush1.msra.mxu0 0.0
  %1162 = vmatprep.subr.mxu0 0.0
  %1163 = vmatpush1.msra.mxu0 0.0
  %1164 = vmatprep.subr.mxu0 0.0
  %1165 = vmatpush1.msra.mxu0 0.0
  %1166 = vmatprep.subr.mxu0 0.0
  %1167 = vmatpush1.msra.mxu0 0.0
  %1168 = vmatprep.subr.mxu0 0.0
  %1169 = vmatpush1.msra.mxu0 0.0
  %1170 = vmatprep.subr.mxu0 0.0
  %1171 = vmatpush1.msra.mxu0 0.0
  %1172 = vmatprep.subr.mxu0 0.0
  %1173 = vmatpush1.msra.mxu0 0.0
  %1174 = vmatprep.subr.mxu0 0.0
  %1175 = vmatpush1.msra.mxu0 0.0
  %1176 = vmatprep.subr.mxu0 0.0
  %1177 = vmatpush1.msra.mxu0 0.0
  %1178 = vmatprep.subr.mxu0 0.0
  %1179 = vmatpush1.msra.mxu0 0.0
  %1180 = vmatprep.subr.mxu0 0.0
  %1181 = vmatpush1.msra.mxu0 0.0
  %1182 = vmatprep.subr.mxu0 0.0
  %1183 = vmatpush1.msra.mxu0 0.0
  %1184 = vmatprep.subr.mxu0 0.0
  %1185 = vmatpush1.msra.mxu0 0.0
  %1186 = vmatprep.subr.mxu0 0.0
  %1187 = vmatpush1.msra.mxu0 0.0
  %1188 = vmatprep.subr.mxu0 0.0
  %1189 = vmatpush1.msra.mxu0 0.0
  %1190 = vmatprep.subr.mxu0 0.0
  %1191 = vmatpush1.msra.mxu0 0.0
  %1192 = vmatprep.subr.mxu0 0.0
  %1193 = vmatpush1.msra.mxu0 0.0
  %1194 = vmatprep.subr.mxu0 0.0
  %1195 = vmatpush1.msra.mxu0 0.0
  %1196 = vmatprep.subr.mxu0 0.0
  %1197 = vmatpush1.msra.mxu0 0.0
  %1198 = vmatprep.subr.mxu0 0.0
  %1199 = vmatpush1.msra.mxu0 0.0
  %1200 = vmatprep.subr.mxu0 0.0
  %1201 = vmatpush1.msra.mxu0 0.0
  %1202 = vmatprep.subr.mxu0 0.0
  %1203 = vmatpush1.msra.mxu0 0.0
  %1204 = vmatprep.subr.mxu0 0.0
  %1205 = vmatpush1.msra.mxu0 0.0
  %1206 = vmatprep.subr.mxu0 0.0
  %1207 = vmatpush1.msra.mxu0 0.0
  %1208 = vmatprep.subr.mxu0 0.0
  %1209 = vmatpush1.msra.mxu0 0.0
  %1210 = vmatprep.mubr.f32.mxu0 0.0
  %1211 = vmatmul.mubr.f32.gmra.mrb[0].mxu0 %v1144
  %v1212 = vpop.f32.mrb[0].mxu0
  %v1213 = vadd.f32 0.0, %v1212
  %v1214 = vpop.f32.mrb[0].mxu0
  %1215 = vdwg.mxu0
  %v1216 = vadd.f32 %v1131, %v1213
  %v1217 = vld [vmem:[%s1 + $0x68] sm:$0xff]
  %v1219 = vsel %vm79, %v1217, 0
  %1221 = vmatprep.subr.mxu0 0.0
  %1222 = vmatpush1.msra.mxu0 %v879
  %1223 = vmatprep.subr.mxu0 0.0
  %1224 = vmatpush1.msra.mxu0 0.0
  %1225 = vmatprep.subr.mxu0 0.0
  %1226 = vmatpush1.msra.mxu0 0.0
  %1227 = vmatprep.subr.mxu0 0.0
  %1228 = vmatpush1.msra.mxu0 0.0
  %1229 = vmatprep.subr.mxu0 0.0
  %1230 = vmatpush1.msra.mxu0 0.0
  %1231 = vmatprep.subr.mxu0 0.0
  %1232 = vmatpush1.msra.mxu0 0.0
  %1233 = vmatprep.subr.mxu0 0.0
  %1234 = vmatpush1.msra.mxu0 0.0
  %1235 = vmatprep.subr.mxu0 0.0
  %1236 = vmatpush1.msra.mxu0 0.0
  %1237 = vmatprep.subr.mxu0 0.0
  %1238 = vmatpush1.msra.mxu0 0.0
  %1239 = vmatprep.subr.mxu0 0.0
  %1240 = vmatpush1.msra.mxu0 0.0
  %1241 = vmatprep.subr.mxu0 0.0
  %1242 = vmatpush1.msra.mxu0 0.0
  %1243 = vmatprep.subr.mxu0 0.0
  %1244 = vmatpush1.msra.mxu0 0.0
  %1245 = vmatprep.subr.mxu0 0.0
  %1246 = vmatpush1.msra.mxu0 0.0
  %1247 = vmatprep.subr.mxu0 0.0
  %1248 = vmatpush1.msra.mxu0 0.0
  %1249 = vmatprep.subr.mxu0 0.0
  %1250 = vmatpush1.msra.mxu0 0.0
  %1251 = vmatprep.subr.mxu0 0.0
  %1252 = vmatpush1.msra.mxu0 0.0
  %1253 = vmatprep.subr.mxu0 0.0
  %1254 = vmatpush1.msra.mxu0 0.0
  %1255 = vmatprep.subr.mxu0 0.0
  %1256 = vmatpush1.msra.mxu0 0.0
  %1257 = vmatprep.subr.mxu0 0.0
  %1258 = vmatpush1.msra.mxu0 0.0
  %1259 = vmatprep.subr.mxu0 0.0
  %1260 = vmatpush1.msra.mxu0 0.0
  %1261 = vmatprep.subr.mxu0 0.0
  %1262 = vmatpush1.msra.mxu0 0.0
  %1263 = vmatprep.subr.mxu0 0.0
  %1264 = vmatpush1.msra.mxu0 0.0
  %1265 = vmatprep.subr.mxu0 0.0
  %1266 = vmatpush1.msra.mxu0 0.0
  %1267 = vmatprep.subr.mxu0 0.0
  %1268 = vmatpush1.msra.mxu0 0.0
  %1269 = vmatprep.subr.mxu0 0.0
  %1270 = vmatpush1.msra.mxu0 0.0
  %1271 = vmatprep.subr.mxu0 0.0
  %1272 = vmatpush1.msra.mxu0 0.0
  %1273 = vmatprep.subr.mxu0 0.0
  %1274 = vmatpush1.msra.mxu0 0.0
  %1275 = vmatprep.subr.mxu0 0.0
  %1276 = vmatpush1.msra.mxu0 0.0
  %1277 = vmatprep.subr.mxu0 0.0
  %1278 = vmatpush1.msra.mxu0 0.0
  %1279 = vmatprep.subr.mxu0 0.0
  %1280 = vmatpush1.msra.mxu0 0.0
  %1281 = vmatprep.subr.mxu0 0.0
  %1282 = vmatpush1.msra.mxu0 0.0
  %1283 = vmatprep.subr.mxu0 0.0
  %1284 = vmatpush1.msra.mxu0 0.0
  %1285 = vmatprep.mubr.f32.mxu0 0.0
  %1286 = vmatmul.mubr.f32.gmra.mrb[0].mxu0 %v1219
  %v1287 = vpop.f32.mrb[0].mxu0
  %v1288 = vadd.f32 0.0, %v1287
  %v1289 = vpop.f32.mrb[0].mxu0
  %1290 = vdwg.mxu0
  %v1291 = vadd.f32 %v1216, %v1288
  %v1292 = vmul.f32 %v886, %v495
  %v1293 = vmul.f32 %v889, %v495
  %v1294 = vld [vmem:[%s1 + $0x70] sm:$0xff]
  %1297 = vrot.lane.b32.xlu0 %v1292, 118
  %v1298 = vpop.permute.xlu0 %1297
  %1299 = vrot.lane.b32.xlu0 %v1293, 118
  %v1300 = vpop.permute.xlu0 %1299
  %v1301 = vsel %vm506, %v1298, %v1300
  %v1304 = vsel %vm79, %v1294, 0
  %1306 = vmatprep.subr.mxu0 0.0
  %1307 = vmatpush1.msra.mxu0 %v1301
  %1308 = vmatprep.subr.mxu0 0.0
  %1309 = vmatpush1.msra.mxu0 0.0
  %1310 = vmatprep.subr.mxu0 0.0
  %1311 = vmatpush1.msra.mxu0 0.0
  %1312 = vmatprep.subr.mxu0 0.0
  %1313 = vmatpush1.msra.mxu0 0.0
  %1314 = vmatprep.subr.mxu0 0.0
  %1315 = vmatpush1.msra.mxu0 0.0
  %1316 = vmatprep.subr.mxu0 0.0
  %1317 = vmatpush1.msra.mxu0 0.0
  %1318 = vmatprep.subr.mxu0 0.0
  %1319 = vmatpush1.msra.mxu0 0.0
  %1320 = vmatprep.subr.mxu0 0.0
  %1321 = vmatpush1.msra.mxu0 0.0
  %1322 = vmatprep.subr.mxu0 0.0
  %1323 = vmatpush1.msra.mxu0 0.0
  %1324 = vmatprep.subr.mxu0 0.0
  %1325 = vmatpush1.msra.mxu0 0.0
  %1326 = vmatprep.subr.mxu0 0.0
  %1327 = vmatpush1.msra.mxu0 0.0
  %1328 = vmatprep.subr.mxu0 0.0
  %1329 = vmatpush1.msra.mxu0 0.0
  %1330 = vmatprep.subr.mxu0 0.0
  %1331 = vmatpush1.msra.mxu0 0.0
  %1332 = vmatprep.subr.mxu0 0.0
  %1333 = vmatpush1.msra.mxu0 0.0
  %1334 = vmatprep.subr.mxu0 0.0
  %1335 = vmatpush1.msra.mxu0 0.0
  %1336 = vmatprep.subr.mxu0 0.0
  %1337 = vmatpush1.msra.mxu0 0.0
  %1338 = vmatprep.subr.mxu0 0.0
  %1339 = vmatpush1.msra.mxu0 0.0
  %1340 = vmatprep.subr.mxu0 0.0
  %1341 = vmatpush1.msra.mxu0 0.0
  %1342 = vmatprep.subr.mxu0 0.0
  %1343 = vmatpush1.msra.mxu0 0.0
  %1344 = vmatprep.subr.mxu0 0.0
  %1345 = vmatpush1.msra.mxu0 0.0
  %1346 = vmatprep.subr.mxu0 0.0
  %1347 = vmatpush1.msra.mxu0 0.0
  %1348 = vmatprep.subr.mxu0 0.0
  %1349 = vmatpush1.msra.mxu0 0.0
  %1350 = vmatprep.subr.mxu0 0.0
  %1351 = vmatpush1.msra.mxu0 0.0
  %1352 = vmatprep.subr.mxu0 0.0
  %1353 = vmatpush1.msra.mxu0 0.0
  %1354 = vmatprep.subr.mxu0 0.0
  %1355 = vmatpush1.msra.mxu0 0.0
  %1356 = vmatprep.subr.mxu0 0.0
  %1357 = vmatpush1.msra.mxu0 0.0
  %1358 = vmatprep.subr.mxu0 0.0
  %1359 = vmatpush1.msra.mxu0 0.0
  %1360 = vmatprep.subr.mxu0 0.0
  %1361 = vmatpush1.msra.mxu0 0.0
  %1362 = vmatprep.subr.mxu0 0.0
  %1363 = vmatpush1.msra.mxu0 0.0
  %1364 = vmatprep.subr.mxu0 0.0
  %1365 = vmatpush1.msra.mxu0 0.0
  %1366 = vmatprep.subr.mxu0 0.0
  %1367 = vmatpush1.msra.mxu0 0.0
  %1368 = vmatprep.subr.mxu0 0.0
  %1369 = vmatpush1.msra.mxu0 0.0
  %1370 = vmatprep.mubr.f32.mxu0 0.0
  %1371 = vmatmul.mubr.f32.gmra.mrb[0].mxu0 %v1304
  %v1372 = vpop.f32.mrb[0].mxu0
  %v1373 = vadd.f32 0.0, %v1372
  %v1374 = vpop.f32.mrb[0].mxu0
  %1375 = vdwg.mxu0
  %v1376 = vadd.f32 %v1291, %v1373
  %v1377 = vmul.f32 %v886, %v589
  %v1378 = vmul.f32 %v889, %v589
  %v1379 = vld [vmem:[%s1 + $0x78] sm:$0xff]
  %1382 = vrot.lane.b32.xlu0 %v1377, 112
  %v1383 = vpop.permute.xlu0 %1382
  %1384 = vrot.lane.b32.xlu0 %v1378, 112
  %v1385 = vpop.permute.xlu0 %1384
  %v1386 = vsel %vm600, %v1383, %v1385
  %v1389 = vsel %vm79, %v1379, 0
  %1391 = vmatprep.subr.mxu0 0.0
  %1392 = vmatpush1.msra.mxu0 %v1386
  %1393 = vmatprep.subr.mxu0 0.0
  %1394 = vmatpush1.msra.mxu0 0.0
  %1395 = vmatprep.subr.mxu0 0.0
  %1396 = vmatpush1.msra.mxu0 0.0
  %1397 = vmatprep.subr.mxu0 0.0
  %1398 = vmatpush1.msra.mxu0 0.0
  %1399 = vmatprep.subr.mxu0 0.0
  %1400 = vmatpush1.msra.mxu0 0.0
  %1401 = vmatprep.subr.mxu0 0.0
  %1402 = vmatpush1.msra.mxu0 0.0
  %1403 = vmatprep.subr.mxu0 0.0
  %1404 = vmatpush1.msra.mxu0 0.0
  %1405 = vmatprep.subr.mxu0 0.0
  %1406 = vmatpush1.msra.mxu0 0.0
  %1407 = vmatprep.subr.mxu0 0.0
  %1408 = vmatpush1.msra.mxu0 0.0
  %1409 = vmatprep.subr.mxu0 0.0
  %1410 = vmatpush1.msra.mxu0 0.0
  %1411 = vmatprep.subr.mxu0 0.0
  %1412 = vmatpush1.msra.mxu0 0.0
  %1413 = vmatprep.subr.mxu0 0.0
  %1414 = vmatpush1.msra.mxu0 0.0
  %1415 = vmatprep.subr.mxu0 0.0
  %1416 = vmatpush1.msra.mxu0 0.0
  %1417 = vmatprep.subr.mxu0 0.0
  %1418 = vmatpush1.msra.mxu0 0.0
  %1419 = vmatprep.subr.mxu0 0.0
  %1420 = vmatpush1.msra.mxu0 0.0
  %1421 = vmatprep.subr.mxu0 0.0
  %1422 = vmatpush1.msra.mxu0 0.0
  %1423 = vmatprep.subr.mxu0 0.0
  %1424 = vmatpush1.msra.mxu0 0.0
  %1425 = vmatprep.subr.mxu0 0.0
  %1426 = vmatpush1.msra.mxu0 0.0
  %1427 = vmatprep.subr.mxu0 0.0
  %1428 = vmatpush1.msra.mxu0 0.0
  %1429 = vmatprep.subr.mxu0 0.0
  %1430 = vmatpush1.msra.mxu0 0.0
  %1431 = vmatprep.subr.mxu0 0.0
  %1432 = vmatpush1.msra.mxu0 0.0
  %1433 = vmatprep.subr.mxu0 0.0
  %1434 = vmatpush1.msra.mxu0 0.0
  %1435 = vmatprep.subr.mxu0 0.0
  %1436 = vmatpush1.msra.mxu0 0.0
  %1437 = vmatprep.subr.mxu0 0.0
  %1438 = vmatpush1.msra.mxu0 0.0
  %1439 = vmatprep.subr.mxu0 0.0
  %1440 = vmatpush1.msra.mxu0 0.0
  %1441 = vmatprep.subr.mxu0 0.0
  %1442 = vmatpush1.msra.mxu0 0.0
  %1443 = vmatprep.subr.mxu0 0.0
  %1444 = vmatpush1.msra.mxu0 0.0
  %1445 = vmatprep.subr.mxu0 0.0
  %1446 = vmatpush1.msra.mxu0 0.0
  %1447 = vmatprep.subr.mxu0 0.0
  %1448 = vmatpush1.msra.mxu0 0.0
  %1449 = vmatprep.subr.mxu0 0.0
  %1450 = vmatpush1.msra.mxu0 0.0
  %1451 = vmatprep.subr.mxu0 0.0
  %1452 = vmatpush1.msra.mxu0 0.0
  %1453 = vmatprep.subr.mxu0 0.0
  %1454 = vmatpush1.msra.mxu0 0.0
  %1455 = vmatprep.mubr.f32.mxu0 0.0
  %1456 = vmatmul.mubr.f32.gmra.mrb[0].mxu0 %v1389
  %v1457 = vpop.f32.mrb[0].mxu0
  %v1458 = vadd.f32 0.0, %v1457
  %v1459 = vpop.f32.mrb[0].mxu0
  %1460 = vdwg.mxu0
  %v1461 = vadd.f32 %v1376, %v1458
  %v1462 = vmul.f32 %v886, %v683
  %v1463 = vmul.f32 %v889, %v683
  %v1464 = vld [vmem:[%s1 + $0x80] sm:$0xff]
  %1467 = vrot.lane.b32.xlu0 %v1462, 111
  %v1468 = vpop.permute.xlu0 %1467
  %1469 = vrot.lane.b32.xlu0 %v1463, 111
  %v1470 = vpop.permute.xlu0 %1469
  %v1471 = vsel %vm694, %v1468, %v1470
  %v1474 = vsel %vm79, %v1464, 0
  %1476 = vmatprep.subr.mxu0 0.0
  %1477 = vmatpush1.msra.mxu0 %v1471
  %1478 = vmatprep.subr.mxu0 0.0
  %1479 = vmatpush1.msra.mxu0 0.0
  %1480 = vmatprep.subr.mxu0 0.0
  %1481 = vmatpush1.msra.mxu0 0.0
  %1482 = vmatprep.subr.mxu0 0.0
  %1483 = vmatpush1.msra.mxu0 0.0
  %1484 = vmatprep.subr.mxu0 0.0
  %1485 = vmatpush1.msra.mxu0 0.0
  %1486 = vmatprep.subr.mxu0 0.0
  %1487 = vmatpush1.msra.mxu0 0.0
  %1488 = vmatprep.subr.mxu0 0.0
  %1489 = vmatpush1.msra.mxu0 0.0
  %1490 = vmatprep.subr.mxu0 0.0
  %1491 = vmatpush1.msra.mxu0 0.0
  %1492 = vmatprep.subr.mxu0 0.0
  %1493 = vmatpush1.msra.mxu0 0.0
  %1494 = vmatprep.subr.mxu0 0.0
  %1495 = vmatpush1.msra.mxu0 0.0
  %1496 = vmatprep.subr.mxu0 0.0
  %1497 = vmatpush1.msra.mxu0 0.0
  %1498 = vmatprep.subr.mxu0 0.0
  %1499 = vmatpush1.msra.mxu0 0.0
  %1500 = vmatprep.subr.mxu0 0.0
  %1501 = vmatpush1.msra.mxu0 0.0
  %1502 = vmatprep.subr.mxu0 0.0
  %1503 = vmatpush1.msra.mxu0 0.0
  %1504 = vmatprep.subr.mxu0 0.0
  %1505 = vmatpush1.msra.mxu0 0.0
  %1506 = vmatprep.subr.mxu0 0.0
  %1507 = vmatpush1.msra.mxu0 0.0
  %1508 = vmatprep.subr.mxu0 0.0
  %1509 = vmatpush1.msra.mxu0 0.0
  %1510 = vmatprep.subr.mxu0 0.0
  %1511 = vmatpush1.msra.mxu0 0.0
  %1512 = vmatprep.subr.mxu0 0.0
  %1513 = vmatpush1.msra.mxu0 0.0
  %1514 = vmatprep.subr.mxu0 0.0
  %1515 = vmatpush1.msra.mxu0 0.0
  %1516 = vmatprep.subr.mxu0 0.0
  %1517 = vmatpush1.msra.mxu0 0.0
  %1518 = vmatprep.subr.mxu0 0.0
  %1519 = vmatpush1.msra.mxu0 0.0
  %1520 = vmatprep.subr.mxu0 0.0
  %1521 = vmatpush1.msra.mxu0 0.0
  %1522 = vmatprep.subr.mxu0 0.0
  %1523 = vmatpush1.msra.mxu0 0.0
  %1524 = vmatprep.subr.mxu0 0.0
  %1525 = vmatpush1.msra.mxu0 0.0
  %1526 = vmatprep.subr.mxu0 0.0
  %1527 = vmatpush1.msra.mxu0 0.0
  %1528 = vmatprep.subr.mxu0 0.0
  %1529 = vmatpush1.msra.mxu0 0.0
  %1530 = vmatprep.subr.mxu0 0.0
  %1531 = vmatpush1.msra.mxu0 0.0
  %1532 = vmatprep.subr.mxu0 0.0
  %1533 = vmatpush1.msra.mxu0 0.0
  %1534 = vmatprep.subr.mxu0 0.0
  %1535 = vmatpush1.msra.mxu0 0.0
  %1536 = vmatprep.subr.mxu0 0.0
  %1537 = vmatpush1.msra.mxu0 0.0
  %1538 = vmatprep.subr.mxu0 0.0
  %1539 = vmatpush1.msra.mxu0 0.0
  %1540 = vmatprep.mubr.f32.mxu0 0.0
  %1541 = vmatmul.mubr.f32.gmra.mrb[0].mxu0 %v1474
  %v1542 = vpop.f32.mrb[0].mxu0
  %v1543 = vadd.f32 0.0, %v1542
  %v1544 = vpop.f32.mrb[0].mxu0
  %1545 = vdwg.mxu0
  %v1546 = vadd.f32 %v1461, %v1543
  %v1547 = vmul.f32 %v886, %v777
  %v1548 = vmul.f32 %v889, %v777
  %v1549 = vld [vmem:[%s1 + $0x88] sm:$0xff]
  %1552 = vrot.lane.b32.xlu0 %v1547, 110
  %v1553 = vpop.permute.xlu0 %1552
  %1554 = vrot.lane.b32.xlu0 %v1548, 110
  %v1555 = vpop.permute.xlu0 %1554
  %v1556 = vsel %vm788, %v1553, %v1555
  %v1559 = vsel %vm79, %v1549, 0
  %1561 = vmatprep.subr.mxu0 0.0
  %1562 = vmatpush1.msra.mxu0 %v1556
  %1563 = vmatprep.subr.mxu0 0.0
  %1564 = vmatpush1.msra.mxu0 0.0
  %1565 = vmatprep.subr.mxu0 0.0
  %1566 = vmatpush1.msra.mxu0 0.0
  %1567 = vmatprep.subr.mxu0 0.0
  %1568 = vmatpush1.msra.mxu0 0.0
  %1569 = vmatprep.subr.mxu0 0.0
  %1570 = vmatpush1.msra.mxu0 0.0
  %1571 = vmatprep.subr.mxu0 0.0
  %1572 = vmatpush1.msra.mxu0 0.0
  %1573 = vmatprep.subr.mxu0 0.0
  %1574 = vmatpush1.msra.mxu0 0.0
  %1575 = vmatprep.subr.mxu0 0.0
  %1576 = vmatpush1.msra.mxu0 0.0
  %1577 = vmatprep.subr.mxu0 0.0
  %1578 = vmatpush1.msra.mxu0 0.0
  %1579 = vmatprep.subr.mxu0 0.0
  %1580 = vmatpush1.msra.mxu0 0.0
  %1581 = vmatprep.subr.mxu0 0.0
  %1582 = vmatpush1.msra.mxu0 0.0
  %1583 = vmatprep.subr.mxu0 0.0
  %1584 = vmatpush1.msra.mxu0 0.0
  %1585 = vmatprep.subr.mxu0 0.0
  %1586 = vmatpush1.msra.mxu0 0.0
  %1587 = vmatprep.subr.mxu0 0.0
  %1588 = vmatpush1.msra.mxu0 0.0
  %1589 = vmatprep.subr.mxu0 0.0
  %1590 = vmatpush1.msra.mxu0 0.0
  %1591 = vmatprep.subr.mxu0 0.0
  %1592 = vmatpush1.msra.mxu0 0.0
  %1593 = vmatprep.subr.mxu0 0.0
  %1594 = vmatpush1.msra.mxu0 0.0
  %1595 = vmatprep.subr.mxu0 0.0
  %1596 = vmatpush1.msra.mxu0 0.0
  %1597 = vmatprep.subr.mxu0 0.0
  %1598 = vmatpush1.msra.mxu0 0.0
  %1599 = vmatprep.subr.mxu0 0.0
  %1600 = vmatpush1.msra.mxu0 0.0
  %1601 = vmatprep.subr.mxu0 0.0
  %1602 = vmatpush1.msra.mxu0 0.0
  %1603 = vmatprep.subr.mxu0 0.0
  %1604 = vmatpush1.msra.mxu0 0.0
  %1605 = vmatprep.subr.mxu0 0.0
  %1606 = vmatpush1.msra.mxu0 0.0
  %1607 = vmatprep.subr.mxu0 0.0
  %1608 = vmatpush1.msra.mxu0 0.0
  %1609 = vmatprep.subr.mxu0 0.0
  %1610 = vmatpush1.msra.mxu0 0.0
  %1611 = vmatprep.subr.mxu0 0.0
  %1612 = vmatpush1.msra.mxu0 0.0
  %1613 = vmatprep.subr.mxu0 0.0
  %1614 = vmatpush1.msra.mxu0 0.0
  %1615 = vmatprep.subr.mxu0 0.0
  %1616 = vmatpush1.msra.mxu0 0.0
  %1617 = vmatprep.subr.mxu0 0.0
  %1618 = vmatpush1.msra.mxu0 0.0
  %1619 = vmatprep.subr.mxu0 0.0
  %1620 = vmatpush1.msra.mxu0 0.0
  %1621 = vmatprep.subr.mxu0 0.0
  %1622 = vmatpush1.msra.mxu0 0.0
  %1623 = vmatprep.subr.mxu0 0.0
  %1624 = vmatpush1.msra.mxu0 0.0
  %1625 = vmatprep.mubr.f32.mxu0 0.0
  %1626 = vmatmul.mubr.f32.gmra.mrb[0].mxu0 %v1559
  %v1627 = vpop.f32.mrb[0].mxu0
  %v1628 = vadd.f32 0.0, %v1627
  %v1629 = vpop.f32.mrb[0].mxu0
  %1630 = vdwg.mxu0
  %v1631 = vadd.f32 %v1546, %v1628
  %v1632 = vld [vmem:[%s2 + $0x8] sm:$0xff]
  %1634 = vset.pattern.permute.xlu0 0
  %1635 = vperm.xlu0 %1634, %v1632
  %v1636 = vpop.permute.xlu0 %1635
  %v1638 = vmul.f32 %v1631, %v1636
  %v1639 = vld [vmem:[%s3 + $0x8] sm:$0xff]
  %1641 = vset.pattern.permute.xlu0 0
  %1642 = vperm.xlu0 %1641, %v1639
  %v1643 = vpop.permute.xlu0 %1642
  %v1645 = vadd.f32 %v1638, %v1643
  %v1646 = vadd.f32 %v1645, %v42
  %v1647 = vmax.f32 %v1646, 0.0
  %1649 = vrot.lane.b32.xlu0 %v1647, 9
  %v1650 = vpop.permute.xlu0 %1649
  %1652 = vst.msk [vmem:[#allocation2] sm:$0xff] %vm47, %v1650
  %1653 = vst.msk [vmem:[#allocation2 + $0x8] sm:$0xff] %vm49, %v1650
  %v1654 = vld [vmem:[#allocation2] sm:$0xff]
  %v1655 = vmul.f32 %v1654, %v55
  %v1656 = vld [vmem:[%s1 + $0x90] sm:$0xff]
  %v1657 = vld [vmem:[#allocation2 + $0x8] sm:$0xff]
  %v1658 = vmul.f32 %v1654, %v65
  %v1659 = vmul.f32 %v1657, %v65
  %v1660 = vld [vmem:[%s1 + $0x98] sm:$0xff]
  %1663 = vrot.lane.b32.xlu0 %v1658, 127
  %v1664 = vpop.permute.xlu0 %1663
  %1665 = vrot.lane.b32.xlu0 %v1659, 127
  %v1666 = vpop.permute.xlu0 %1665
  %v1667 = vsel %vm76, %v1664, %v1666
  %v1670 = vsel %vm79, %v1660, 0
  %1672 = vmatprep.subr.mxu0 0.0
  %1673 = vmatpush1.msra.mxu0 %v1667
  %1674 = vmatprep.subr.mxu0 0.0
  %1675 = vmatpush1.msra.mxu0 0.0
  %1676 = vmatprep.subr.mxu0 0.0
  %1677 = vmatpush1.msra.mxu0 0.0
  %1678 = vmatprep.subr.mxu0 0.0
  %1679 = vmatpush1.msra.mxu0 0.0
  %1680 = vmatprep.subr.mxu0 0.0
  %1681 = vmatpush1.msra.mxu0 0.0
  %1682 = vmatprep.subr.mxu0 0.0
  %1683 = vmatpush1.msra.mxu0 0.0
  %1684 = vmatprep.subr.mxu0 0.0
  %1685 = vmatpush1.msra.mxu0 0.0
  %1686 = vmatprep.subr.mxu0 0.0
  %1687 = vmatpush1.msra.mxu0 0.0
  %1688 = vmatprep.subr.mxu0 0.0
  %1689 = vmatpush1.msra.mxu0 0.0
  %1690 = vmatprep.subr.mxu0 0.0
  %1691 = vmatpush1.msra.mxu0 0.0
  %1692 = vmatprep.subr.mxu0 0.0
  %1693 = vmatpush1.msra.mxu0 0.0
  %1694 = vmatprep.subr.mxu0 0.0
  %1695 = vmatpush1.msra.mxu0 0.0
  %1696 = vmatprep.subr.mxu0 0.0
  %1697 = vmatpush1.msra.mxu0 0.0
  %1698 = vmatprep.subr.mxu0 0.0
  %1699 = vmatpush1.msra.mxu0 0.0
  %1700 = vmatprep.subr.mxu0 0.0
  %1701 = vmatpush1.msra.mxu0 0.0
  %1702 = vmatprep.subr.mxu0 0.0
  %1703 = vmatpush1.msra.mxu0 0.0
  %1704 = vmatprep.subr.mxu0 0.0
  %1705 = vmatpush1.msra.mxu0 0.0
  %1706 = vmatprep.subr.mxu0 0.0
  %1707 = vmatpush1.msra.mxu0 0.0
  %1708 = vmatprep.subr.mxu0 0.0
  %1709 = vmatpush1.msra.mxu0 0.0
  %1710 = vmatprep.subr.mxu0 0.0
  %1711 = vmatpush1.msra.mxu0 0.0
  %1712 = vmatprep.subr.mxu0 0.0
  %1713 = vmatpush1.msra.mxu0 0.0
  %1714 = vmatprep.subr.mxu0 0.0
  %1715 = vmatpush1.msra.mxu0 0.0
  %1716 = vmatprep.subr.mxu0 0.0
  %1717 = vmatpush1.msra.mxu0 0.0
  %1718 = vmatprep.subr.mxu0 0.0
  %1719 = vmatpush1.msra.mxu0 0.0
  %1720 = vmatprep.subr.mxu0 0.0
  %1721 = vmatpush1.msra.mxu0 0.0
  %1722 = vmatprep.subr.mxu0 0.0
  %1723 = vmatpush1.msra.mxu0 0.0
  %1724 = vmatprep.subr.mxu0 0.0
  %1725 = vmatpush1.msra.mxu0 0.0
  %1726 = vmatprep.subr.mxu0 0.0
  %1727 = vmatpush1.msra.mxu0 0.0
  %1728 = vmatprep.subr.mxu0 0.0
  %1729 = vmatpush1.msra.mxu0 0.0
  %1730 = vmatprep.subr.mxu0 0.0
  %1731 = vmatpush1.msra.mxu0 0.0
  %1732 = vmatprep.subr.mxu0 0.0
  %1733 = vmatpush1.msra.mxu0 0.0
  %1734 = vmatprep.subr.mxu0 0.0
  %1735 = vmatpush1.msra.mxu0 0.0
  %1736 = vmatprep.mubr.f32.mxu0 0.0
  %1737 = vmatmul.mubr.f32.gmra.mrb[0].mxu0 %v1670
  %v1738 = vpop.f32.mrb[0].mxu0
  %v1739 = vadd.f32 0.0, %v1738
  %v1740 = vpop.f32.mrb[0].mxu0
  %1741 = vdwg.mxu0
  %v1743 = vsel %vm79, %v1656, 0
  %1745 = vmatprep.subr.mxu0 0.0
  %1746 = vmatpush1.msra.mxu0 %v1655
  %1747 = vmatprep.subr.mxu0 0.0
  %1748 = vmatpush1.msra.mxu0 0.0
  %1749 = vmatprep.subr.mxu0 0.0
  %1750 = vmatpush1.msra.mxu0 0.0
  %1751 = vmatprep.subr.mxu0 0.0
  %1752 = vmatpush1.msra.mxu0 0.0
  %1753 = vmatprep.subr.mxu0 0.0
  %1754 = vmatpush1.msra.mxu0 0.0
  %1755 = vmatprep.subr.mxu0 0.0
  %1756 = vmatpush1.msra.mxu0 0.0
  %1757 = vmatprep.subr.mxu0 0.0
  %1758 = vmatpush1.msra.mxu0 0.0
  %1759 = vmatprep.subr.mxu0 0.0
  %1760 = vmatpush1.msra.mxu0 0.0
  %1761 = vmatprep.subr.mxu0 0.0
  %1762 = vmatpush1.msra.mxu0 0.0
  %1763 = vmatprep.subr.mxu0 0.0
  %1764 = vmatpush1.msra.mxu0 0.0
  %1765 = vmatprep.subr.mxu0 0.0
  %1766 = vmatpush1.msra.mxu0 0.0
  %1767 = vmatprep.subr.mxu0 0.0
  %1768 = vmatpush1.msra.mxu0 0.0
  %1769 = vmatprep.subr.mxu0 0.0
  %1770 = vmatpush1.msra.mxu0 0.0
  %1771 = vmatprep.subr.mxu0 0.0
  %1772 = vmatpush1.msra.mxu0 0.0
  %1773 = vmatprep.subr.mxu0 0.0
  %1774 = vmatpush1.msra.mxu0 0.0
  %1775 = vmatprep.subr.mxu0 0.0
  %1776 = vmatpush1.msra.mxu0 0.0
  %1777 = vmatprep.subr.mxu0 0.0
  %1778 = vmatpush1.msra.mxu0 0.0
  %1779 = vmatprep.subr.mxu0 0.0
  %1780 = vmatpush1.msra.mxu0 0.0
  %1781 = vmatprep.subr.mxu0 0.0
  %1782 = vmatpush1.msra.mxu0 0.0
  %1783 = vmatprep.subr.mxu0 0.0
  %1784 = vmatpush1.msra.mxu0 0.0
  %1785 = vmatprep.subr.mxu0 0.0
  %1786 = vmatpush1.msra.mxu0 0.0
  %1787 = vmatprep.subr.mxu0 0.0
  %1788 = vmatpush1.msra.mxu0 0.0
  %1789 = vmatprep.subr.mxu0 0.0
  %1790 = vmatpush1.msra.mxu0 0.0
  %1791 = vmatprep.subr.mxu0 0.0
  %1792 = vmatpush1.msra.mxu0 0.0
  %1793 = vmatprep.subr.mxu0 0.0
  %1794 = vmatpush1.msra.mxu0 0.0
  %1795 = vmatprep.subr.mxu0 0.0
  %1796 = vmatpush1.msra.mxu0 0.0
  %1797 = vmatprep.subr.mxu0 0.0
  %1798 = vmatpush1.msra.mxu0 0.0
  %1799 = vmatprep.subr.mxu0 0.0
  %1800 = vmatpush1.msra.mxu0 0.0
  %1801 = vmatprep.subr.mxu0 0.0
  %1802 = vmatpush1.msra.mxu0 0.0
  %1803 = vmatprep.subr.mxu0 0.0
  %1804 = vmatpush1.msra.mxu0 0.0
  %1805 = vmatprep.subr.mxu0 0.0
  %1806 = vmatpush1.msra.mxu0 0.0
  %1807 = vmatprep.subr.mxu0 0.0
  %1808 = vmatpush1.msra.mxu0 0.0
  %1809 = vmatprep.mubr.f32.mxu0 0.0
  %1810 = vmatmul.mubr.f32.gmra.mrb[0].mxu0 %v1743
  %v1811 = vpop.f32.mrb[0].mxu0
  %v1812 = vadd.f32 %v1739, %v1811
  %v1813 = vpop.f32.mrb[0].mxu0
  %1814 = vdwg.mxu0
  %v1815 = vmul.f32 %v1654, %v232
  %v1816 = vmul.f32 %v1657, %v232
  %v1817 = vld [vmem:[%s1 + $0xa0] sm:$0xff]
  %1820 = vrot.lane.b32.xlu0 %v1815, 126
  %v1821 = vpop.permute.xlu0 %1820
  %1822 = vrot.lane.b32.xlu0 %v1816, 126
  %v1823 = vpop.permute.xlu0 %1822
  %v1824 = vsel %vm243, %v1821, %v1823
  %v1827 = vsel %vm79, %v1817, 0
  %1829 = vmatprep.subr.mxu0 0.0
  %1830 = vmatpush1.msra.mxu0 %v1824
  %1831 = vmatprep.subr.mxu0 0.0
  %1832 = vmatpush1.msra.mxu0 0.0
  %1833 = vmatprep.subr.mxu0 0.0
  %1834 = vmatpush1.msra.mxu0 0.0
  %1835 = vmatprep.subr.mxu0 0.0
  %1836 = vmatpush1.msra.mxu0 0.0
  %1837 = vmatprep.subr.mxu0 0.0
  %1838 = vmatpush1.msra.mxu0 0.0
  %1839 = vmatprep.subr.mxu0 0.0
  %1840 = vmatpush1.msra.mxu0 0.0
  %1841 = vmatprep.subr.mxu0 0.0
  %1842 = vmatpush1.msra.mxu0 0.0
  %1843 = vmatprep.subr.mxu0 0.0
  %1844 = vmatpush1.msra.mxu0 0.0
  %1845 = vmatprep.subr.mxu0 0.0
  %1846 = vmatpush1.msra.mxu0 0.0
  %1847 = vmatprep.subr.mxu0 0.0
  %1848 = vmatpush1.msra.mxu0 0.0
  %1849 = vmatprep.subr.mxu0 0.0
  %1850 = vmatpush1.msra.mxu0 0.0
  %1851 = vmatprep.subr.mxu0 0.0
  %1852 = vmatpush1.msra.mxu0 0.0
  %1853 = vmatprep.subr.mxu0 0.0
  %1854 = vmatpush1.msra.mxu0 0.0
  %1855 = vmatprep.subr.mxu0 0.0
  %1856 = vmatpush1.msra.mxu0 0.0
  %1857 = vmatprep.subr.mxu0 0.0
  %1858 = vmatpush1.msra.mxu0 0.0
  %1859 = vmatprep.subr.mxu0 0.0
  %1860 = vmatpush1.msra.mxu0 0.0
  %1861 = vmatprep.subr.mxu0 0.0
  %1862 = vmatpush1.msra.mxu0 0.0
  %1863 = vmatprep.subr.mxu0 0.0
  %1864 = vmatpush1.msra.mxu0 0.0
  %1865 = vmatprep.subr.mxu0 0.0
  %1866 = vmatpush1.msra.mxu0 0.0
  %1867 = vmatprep.subr.mxu0 0.0
  %1868 = vmatpush1.msra.mxu0 0.0
  %1869 = vmatprep.subr.mxu0 0.0
  %1870 = vmatpush1.msra.mxu0 0.0
  %1871 = vmatprep.subr.mxu0 0.0
  %1872 = vmatpush1.msra.mxu0 0.0
  %1873 = vmatprep.subr.mxu0 0.0
  %1874 = vmatpush1.msra.mxu0 0.0
  %1875 = vmatprep.subr.mxu0 0.0
  %1876 = vmatpush1.msra.mxu0 0.0
  %1877 = vmatprep.subr.mxu0 0.0
  %1878 = vmatpush1.msra.mxu0 0.0
  %1879 = vmatprep.subr.mxu0 0.0
  %1880 = vmatpush1.msra.mxu0 0.0
  %1881 = vmatprep.subr.mxu0 0.0
  %1882 = vmatpush1.msra.mxu0 0.0
  %1883 = vmatprep.subr.mxu0 0.0
  %1884 = vmatpush1.msra.mxu0 0.0
  %1885 = vmatprep.subr.mxu0 0.0
  %1886 = vmatpush1.msra.mxu0 0.0
  %1887 = vmatprep.subr.mxu0 0.0
  %1888 = vmatpush1.msra.mxu0 0.0
  %1889 = vmatprep.subr.mxu0 0.0
  %1890 = vmatpush1.msra.mxu0 0.0
  %1891 = vmatprep.subr.mxu0 0.0
  %1892 = vmatpush1.msra.mxu0 0.0
  %1893 = vmatprep.mubr.f32.mxu0 0.0
  %1894 = vmatmul.mubr.f32.gmra.mrb[0].mxu0 %v1827
  %v1895 = vpop.f32.mrb[0].mxu0
  %v1896 = vadd.f32 0.0, %v1895
  %v1897 = vpop.f32.mrb[0].mxu0
  %1898 = vdwg.mxu0
  %v1899 = vadd.f32 %v1812, %v1896
  %v1900 = vmul.f32 %v1654, %v326
  %v1901 = vmul.f32 %v1657, %v326
  %v1902 = vld [vmem:[%s1 + $0xa8] sm:$0xff]
  %1905 = vrot.lane.b32.xlu0 %v1900, 120
  %v1906 = vpop.permute.xlu0 %1905
  %1907 = vrot.lane.b32.xlu0 %v1901, 120
  %v1908 = vpop.permute.xlu0 %1907
  %v1909 = vsel %vm337, %v1906, %v1908
  %v1912 = vsel %vm79, %v1902, 0
  %1914 = vmatprep.subr.mxu0 0.0
  %1915 = vmatpush1.msra.mxu0 %v1909
  %1916 = vmatprep.subr.mxu0 0.0
  %1917 = vmatpush1.msra.mxu0 0.0
  %1918 = vmatprep.subr.mxu0 0.0
  %1919 = vmatpush1.msra.mxu0 0.0
  %1920 = vmatprep.subr.mxu0 0.0
  %1921 = vmatpush1.msra.mxu0 0.0
  %1922 = vmatprep.subr.mxu0 0.0
  %1923 = vmatpush1.msra.mxu0 0.0
  %1924 = vmatprep.subr.mxu0 0.0
  %1925 = vmatpush1.msra.mxu0 0.0
  %1926 = vmatprep.subr.mxu0 0.0
  %1927 = vmatpush1.msra.mxu0 0.0
  %1928 = vmatprep.subr.mxu0 0.0
  %1929 = vmatpush1.msra.mxu0 0.0
  %1930 = vmatprep.subr.mxu0 0.0
  %1931 = vmatpush1.msra.mxu0 0.0
  %1932 = vmatprep.subr.mxu0 0.0
  %1933 = vmatpush1.msra.mxu0 0.0
  %1934 = vmatprep.subr.mxu0 0.0
  %1935 = vmatpush1.msra.mxu0 0.0
  %1936 = vmatprep.subr.mxu0 0.0
  %1937 = vmatpush1.msra.mxu0 0.0
  %1938 = vmatprep.subr.mxu0 0.0
  %1939 = vmatpush1.msra.mxu0 0.0
  %1940 = vmatprep.subr.mxu0 0.0
  %1941 = vmatpush1.msra.mxu0 0.0
  %1942 = vmatprep.subr.mxu0 0.0
  %1943 = vmatpush1.msra.mxu0 0.0
  %1944 = vmatprep.subr.mxu0 0.0
  %1945 = vmatpush1.msra.mxu0 0.0
  %1946 = vmatprep.subr.mxu0 0.0
  %1947 = vmatpush1.msra.mxu0 0.0
  %1948 = vmatprep.subr.mxu0 0.0
  %1949 = vmatpush1.msra.mxu0 0.0
  %1950 = vmatprep.subr.mxu0 0.0
  %1951 = vmatpush1.msra.mxu0 0.0
  %1952 = vmatprep.subr.mxu0 0.0
  %1953 = vmatpush1.msra.mxu0 0.0
  %1954 = vmatprep.subr.mxu0 0.0
  %1955 = vmatpush1.msra.mxu0 0.0
  %1956 = vmatprep.subr.mxu0 0.0
  %1957 = vmatpush1.msra.mxu0 0.0
  %1958 = vmatprep.subr.mxu0 0.0
  %1959 = vmatpush1.msra.mxu0 0.0
  %1960 = vmatprep.subr.mxu0 0.0
  %1961 = vmatpush1.msra.mxu0 0.0
  %1962 = vmatprep.subr.mxu0 0.0
  %1963 = vmatpush1.msra.mxu0 0.0
  %1964 = vmatprep.subr.mxu0 0.0
  %1965 = vmatpush1.msra.mxu0 0.0
  %1966 = vmatprep.subr.mxu0 0.0
  %1967 = vmatpush1.msra.mxu0 0.0
  %1968 = vmatprep.subr.mxu0 0.0
  %1969 = vmatpush1.msra.mxu0 0.0
  %1970 = vmatprep.subr.mxu0 0.0
  %1971 = vmatpush1.msra.mxu0 0.0
  %1972 = vmatprep.subr.mxu0 0.0
  %1973 = vmatpush1.msra.mxu0 0.0
  %1974 = vmatprep.subr.mxu0 0.0
  %1975 = vmatpush1.msra.mxu0 0.0
  %1976 = vmatprep.subr.mxu0 0.0
  %1977 = vmatpush1.msra.mxu0 0.0
  %1978 = vmatprep.mubr.f32.mxu0 0.0
  %1979 = vmatmul.mubr.f32.gmra.mrb[0].mxu0 %v1912
  %v1980 = vpop.f32.mrb[0].mxu0
  %v1981 = vadd.f32 0.0, %v1980
  %v1982 = vpop.f32.mrb[0].mxu0
  %1983 = vdwg.mxu0
  %v1984 = vadd.f32 %v1899, %v1981
  %v1985 = vld [vmem:[%s1 + $0xb0] sm:$0xff]
  %v1987 = vsel %vm79, %v1985, 0
  %1989 = vmatprep.subr.mxu0 0.0
  %1990 = vmatpush1.msra.mxu0 %v1647
  %1991 = vmatprep.subr.mxu0 0.0
  %1992 = vmatpush1.msra.mxu0 0.0
  %1993 = vmatprep.subr.mxu0 0.0
  %1994 = vmatpush1.msra.mxu0 0.0
  %1995 = vmatprep.subr.mxu0 0.0
  %1996 = vmatpush1.msra.mxu0 0.0
  %1997 = vmatprep.subr.mxu0 0.0
  %1998 = vmatpush1.msra.mxu0 0.0
  %1999 = vmatprep.subr.mxu0 0.0
  %2000 = vmatpush1.msra.mxu0 0.0
  %2001 = vmatprep.subr.mxu0 0.0
  %2002 = vmatpush1.msra.mxu0 0.0
  %2003 = vmatprep.subr.mxu0 0.0
  %2004 = vmatpush1.msra.mxu0 0.0
  %2005 = vmatprep.subr.mxu0 0.0
  %2006 = vmatpush1.msra.mxu0 0.0
  %2007 = vmatprep.subr.mxu0 0.0
  %2008 = vmatpush1.msra.mxu0 0.0
  %2009 = vmatprep.subr.mxu0 0.0
  %2010 = vmatpush1.msra.mxu0 0.0
  %2011 = vmatprep.subr.mxu0 0.0
  %2012 = vmatpush1.msra.mxu0 0.0
  %2013 = vmatprep.subr.mxu0 0.0
  %2014 = vmatpush1.msra.mxu0 0.0
  %2015 = vmatprep.subr.mxu0 0.0
  %2016 = vmatpush1.msra.mxu0 0.0
  %2017 = vmatprep.subr.mxu0 0.0
  %2018 = vmatpush1.msra.mxu0 0.0
  %2019 = vmatprep.subr.mxu0 0.0
  %2020 = vmatpush1.msra.mxu0 0.0
  %2021 = vmatprep.subr.mxu0 0.0
  %2022 = vmatpush1.msra.mxu0 0.0
  %2023 = vmatprep.subr.mxu0 0.0
  %2024 = vmatpush1.msra.mxu0 0.0
  %2025 = vmatprep.subr.mxu0 0.0
  %2026 = vmatpush1.msra.mxu0 0.0
  %2027 = vmatprep.subr.mxu0 0.0
  %2028 = vmatpush1.msra.mxu0 0.0
  %2029 = vmatprep.subr.mxu0 0.0
  %2030 = vmatpush1.msra.mxu0 0.0
  %2031 = vmatprep.subr.mxu0 0.0
  %2032 = vmatpush1.msra.mxu0 0.0
  %2033 = vmatprep.subr.mxu0 0.0
  %2034 = vmatpush1.msra.mxu0 0.0
  %2035 = vmatprep.subr.mxu0 0.0
  %2036 = vmatpush1.msra.mxu0 0.0
  %2037 = vmatprep.subr.mxu0 0.0
  %2038 = vmatpush1.msra.mxu0 0.0
  %2039 = vmatprep.subr.mxu0 0.0
  %2040 = vmatpush1.msra.mxu0 0.0
  %2041 = vmatprep.subr.mxu0 0.0
  %2042 = vmatpush1.msra.mxu0 0.0
  %2043 = vmatprep.subr.mxu0 0.0
  %2044 = vmatpush1.msra.mxu0 0.0
  %2045 = vmatprep.subr.mxu0 0.0
  %2046 = vmatpush1.msra.mxu0 0.0
  %2047 = vmatprep.subr.mxu0 0.0
  %2048 = vmatpush1.msra.mxu0 0.0
  %2049 = vmatprep.subr.mxu0 0.0
  %2050 = vmatpush1.msra.mxu0 0.0
  %2051 = vmatprep.subr.mxu0 0.0
  %2052 = vmatpush1.msra.mxu0 0.0
  %2053 = vmatprep.mubr.f32.mxu0 0.0
  %2054 = vmatmul.mubr.f32.gmra.mrb[0].mxu0 %v1987
  %v2055 = vpop.f32.mrb[0].mxu0
  %v2056 = vadd.f32 0.0, %v2055
  %v2057 = vpop.f32.mrb[0].mxu0
  %2058 = vdwg.mxu0
  %v2059 = vadd.f32 %v1984, %v2056
  %v2060 = vmul.f32 %v1654, %v495
  %v2061 = vmul.f32 %v1657, %v495
  %v2062 = vld [vmem:[%s1 + $0xb8] sm:$0xff]
  %2065 = vrot.lane.b32.xlu0 %v2060, 118
  %v2066 = vpop.permute.xlu0 %2065
  %2067 = vrot.lane.b32.xlu0 %v2061, 118
  %v2068 = vpop.permute.xlu0 %2067
  %v2069 = vsel %vm506, %v2066, %v2068
  %v2072 = vsel %vm79, %v2062, 0
  %2074 = vmatprep.subr.mxu0 0.0
  %2075 = vmatpush1.msra.mxu0 %v2069
  %2076 = vmatprep.subr.mxu0 0.0
  %2077 = vmatpush1.msra.mxu0 0.0
  %2078 = vmatprep.subr.mxu0 0.0
  %2079 = vmatpush1.msra.mxu0 0.0
  %2080 = vmatprep.subr.mxu0 0.0
  %2081 = vmatpush1.msra.mxu0 0.0
  %2082 = vmatprep.subr.mxu0 0.0
  %2083 = vmatpush1.msra.mxu0 0.0
  %2084 = vmatprep.subr.mxu0 0.0
  %2085 = vmatpush1.msra.mxu0 0.0
  %2086 = vmatprep.subr.mxu0 0.0
  %2087 = vmatpush1.msra.mxu0 0.0
  %2088 = vmatprep.subr.mxu0 0.0
  %2089 = vmatpush1.msra.mxu0 0.0
  %2090 = vmatprep.subr.mxu0 0.0
  %2091 = vmatpush1.msra.mxu0 0.0
  %2092 = vmatprep.subr.mxu0 0.0
  %2093 = vmatpush1.msra.mxu0 0.0
  %2094 = vmatprep.subr.mxu0 0.0
  %2095 = vmatpush1.msra.mxu0 0.0
  %2096 = vmatprep.subr.mxu0 0.0
  %2097 = vmatpush1.msra.mxu0 0.0
  %2098 = vmatprep.subr.mxu0 0.0
  %2099 = vmatpush1.msra.mxu0 0.0
  %2100 = vmatprep.subr.mxu0 0.0
  %2101 = vmatpush1.msra.mxu0 0.0
  %2102 = vmatprep.subr.mxu0 0.0
  %2103 = vmatpush1.msra.mxu0 0.0
  %2104 = vmatprep.subr.mxu0 0.0
  %2105 = vmatpush1.msra.mxu0 0.0
  %2106 = vmatprep.subr.mxu0 0.0
  %2107 = vmatpush1.msra.mxu0 0.0
  %2108 = vmatprep.subr.mxu0 0.0
  %2109 = vmatpush1.msra.mxu0 0.0
  %2110 = vmatprep.subr.mxu0 0.0
  %2111 = vmatpush1.msra.mxu0 0.0
  %2112 = vmatprep.subr.mxu0 0.0
  %2113 = vmatpush1.msra.mxu0 0.0
  %2114 = vmatprep.subr.mxu0 0.0
  %2115 = vmatpush1.msra.mxu0 0.0
  %2116 = vmatprep.subr.mxu0 0.0
  %2117 = vmatpush1.msra.mxu0 0.0
  %2118 = vmatprep.subr.mxu0 0.0
  %2119 = vmatpush1.msra.mxu0 0.0
  %2120 = vmatprep.subr.mxu0 0.0
  %2121 = vmatpush1.msra.mxu0 0.0
  %2122 = vmatprep.subr.mxu0 0.0
  %2123 = vmatpush1.msra.mxu0 0.0
  %2124 = vmatprep.subr.mxu0 0.0
  %2125 = vmatpush1.msra.mxu0 0.0
  %2126 = vmatprep.subr.mxu0 0.0
  %2127 = vmatpush1.msra.mxu0 0.0
  %2128 = vmatprep.subr.mxu0 0.0
  %2129 = vmatpush1.msra.mxu0 0.0
  %2130 = vmatprep.subr.mxu0 0.0
  %2131 = vmatpush1.msra.mxu0 0.0
  %2132 = vmatprep.subr.mxu0 0.0
  %2133 = vmatpush1.msra.mxu0 0.0
  %2134 = vmatprep.subr.mxu0 0.0
  %2135 = vmatpush1.msra.mxu0 0.0
  %2136 = vmatprep.subr.mxu0 0.0
  %2137 = vmatpush1.msra.mxu0 0.0
  %2138 = vmatprep.mubr.f32.mxu0 0.0
  %2139 = vmatmul.mubr.f32.gmra.mrb[0].mxu0 %v2072
  %v2140 = vpop.f32.mrb[0].mxu0
  %v2141 = vadd.f32 0.0, %v2140
  %v2142 = vpop.f32.mrb[0].mxu0
  %2143 = vdwg.mxu0
  %v2144 = vadd.f32 %v2059, %v2141
  %v2145 = vmul.f32 %v1654, %v589
  %v2146 = vmul.f32 %v1657, %v589
  %v2147 = vld [vmem:[%s1 + $0xc0] sm:$0xff]
  %2150 = vrot.lane.b32.xlu0 %v2145, 112
  %v2151 = vpop.permute.xlu0 %2150
  %2152 = vrot.lane.b32.xlu0 %v2146, 112
  %v2153 = vpop.permute.xlu0 %2152
  %v2154 = vsel %vm600, %v2151, %v2153
  %v2157 = vsel %vm79, %v2147, 0
  %2159 = vmatprep.subr.mxu0 0.0
  %2160 = vmatpush1.msra.mxu0 %v2154
  %2161 = vmatprep.subr.mxu0 0.0
  %2162 = vmatpush1.msra.mxu0 0.0
  %2163 = vmatprep.subr.mxu0 0.0
  %2164 = vmatpush1.msra.mxu0 0.0
  %2165 = vmatprep.subr.mxu0 0.0
  %2166 = vmatpush1.msra.mxu0 0.0
  %2167 = vmatprep.subr.mxu0 0.0
  %2168 = vmatpush1.msra.mxu0 0.0
  %2169 = vmatprep.subr.mxu0 0.0
  %2170 = vmatpush1.msra.mxu0 0.0
  %2171 = vmatprep.subr.mxu0 0.0
  %2172 = vmatpush1.msra.mxu0 0.0
  %2173 = vmatprep.subr.mxu0 0.0
  %2174 = vmatpush1.msra.mxu0 0.0
  %2175 = vmatprep.subr.mxu0 0.0
  %2176 = vmatpush1.msra.mxu0 0.0
  %2177 = vmatprep.subr.mxu0 0.0
  %2178 = vmatpush1.msra.mxu0 0.0
  %2179 = vmatprep.subr.mxu0 0.0
  %2180 = vmatpush1.msra.mxu0 0.0
  %2181 = vmatprep.subr.mxu0 0.0
  %2182 = vmatpush1.msra.mxu0 0.0
  %2183 = vmatprep.subr.mxu0 0.0
  %2184 = vmatpush1.msra.mxu0 0.0
  %2185 = vmatprep.subr.mxu0 0.0
  %2186 = vmatpush1.msra.mxu0 0.0
  %2187 = vmatprep.subr.mxu0 0.0
  %2188 = vmatpush1.msra.mxu0 0.0
  %2189 = vmatprep.subr.mxu0 0.0
  %2190 = vmatpush1.msra.mxu0 0.0
  %2191 = vmatprep.subr.mxu0 0.0
  %2192 = vmatpush1.msra.mxu0 0.0
  %2193 = vmatprep.subr.mxu0 0.0
  %2194 = vmatpush1.msra.mxu0 0.0
  %2195 = vmatprep.subr.mxu0 0.0
  %2196 = vmatpush1.msra.mxu0 0.0
  %2197 = vmatprep.subr.mxu0 0.0
  %2198 = vmatpush1.msra.mxu0 0.0
  %2199 = vmatprep.subr.mxu0 0.0
  %2200 = vmatpush1.msra.mxu0 0.0
  %2201 = vmatprep.subr.mxu0 0.0
  %2202 = vmatpush1.msra.mxu0 0.0
  %2203 = vmatprep.subr.mxu0 0.0
  %2204 = vmatpush1.msra.mxu0 0.0
  %2205 = vmatprep.subr.mxu0 0.0
  %2206 = vmatpush1.msra.mxu0 0.0
  %2207 = vmatprep.subr.mxu0 0.0
  %2208 = vmatpush1.msra.mxu0 0.0
  %2209 = vmatprep.subr.mxu0 0.0
  %2210 = vmatpush1.msra.mxu0 0.0
  %2211 = vmatprep.subr.mxu0 0.0
  %2212 = vmatpush1.msra.mxu0 0.0
  %2213 = vmatprep.subr.mxu0 0.0
  %2214 = vmatpush1.msra.mxu0 0.0
  %2215 = vmatprep.subr.mxu0 0.0
  %2216 = vmatpush1.msra.mxu0 0.0
  %2217 = vmatprep.subr.mxu0 0.0
  %2218 = vmatpush1.msra.mxu0 0.0
  %2219 = vmatprep.subr.mxu0 0.0
  %2220 = vmatpush1.msra.mxu0 0.0
  %2221 = vmatprep.subr.mxu0 0.0
  %2222 = vmatpush1.msra.mxu0 0.0
  %2223 = vmatprep.mubr.f32.mxu0 0.0
  %2224 = vmatmul.mubr.f32.gmra.mrb[0].mxu0 %v2157
  %v2225 = vpop.f32.mrb[0].mxu0
  %v2226 = vadd.f32 0.0, %v2225
  %v2227 = vpop.f32.mrb[0].mxu0
  %2228 = vdwg.mxu0
  %v2229 = vadd.f32 %v2144, %v2226
  %v2230 = vmul.f32 %v1654, %v683
  %v2231 = vmul.f32 %v1657, %v683
  %v2232 = vld [vmem:[%s1 + $0xc8] sm:$0xff]
  %2235 = vrot.lane.b32.xlu0 %v2230, 111
  %v2236 = vpop.permute.xlu0 %2235
  %2237 = vrot.lane.b32.xlu0 %v2231, 111
  %v2238 = vpop.permute.xlu0 %2237
  %v2239 = vsel %vm694, %v2236, %v2238
  %v2242 = vsel %vm79, %v2232, 0
  %2244 = vmatprep.subr.mxu0 0.0
  %2245 = vmatpush1.msra.mxu0 %v2239
  %2246 = vmatprep.subr.mxu0 0.0
  %2247 = vmatpush1.msra.mxu0 0.0
  %2248 = vmatprep.subr.mxu0 0.0
  %2249 = vmatpush1.msra.mxu0 0.0
  %2250 = vmatprep.subr.mxu0 0.0
  %2251 = vmatpush1.msra.mxu0 0.0
  %2252 = vmatprep.subr.mxu0 0.0
  %2253 = vmatpush1.msra.mxu0 0.0
  %2254 = vmatprep.subr.mxu0 0.0
  %2255 = vmatpush1.msra.mxu0 0.0
  %2256 = vmatprep.subr.mxu0 0.0
  %2257 = vmatpush1.msra.mxu0 0.0
  %2258 = vmatprep.subr.mxu0 0.0
  %2259 = vmatpush1.msra.mxu0 0.0
  %2260 = vmatprep.subr.mxu0 0.0
  %2261 = vmatpush1.msra.mxu0 0.0
  %2262 = vmatprep.subr.mxu0 0.0
  %2263 = vmatpush1.msra.mxu0 0.0
  %2264 = vmatprep.subr.mxu0 0.0
  %2265 = vmatpush1.msra.mxu0 0.0
  %2266 = vmatprep.subr.mxu0 0.0
  %2267 = vmatpush1.msra.mxu0 0.0
  %2268 = vmatprep.subr.mxu0 0.0
  %2269 = vmatpush1.msra.mxu0 0.0
  %2270 = vmatprep.subr.mxu0 0.0
  %2271 = vmatpush1.msra.mxu0 0.0
  %2272 = vmatprep.subr.mxu0 0.0
  %2273 = vmatpush1.msra.mxu0 0.0
  %2274 = vmatprep.subr.mxu0 0.0
  %2275 = vmatpush1.msra.mxu0 0.0
  %2276 = vmatprep.subr.mxu0 0.0
  %2277 = vmatpush1.msra.mxu0 0.0
  %2278 = vmatprep.subr.mxu0 0.0
  %2279 = vmatpush1.msra.mxu0 0.0
  %2280 = vmatprep.subr.mxu0 0.0
  %2281 = vmatpush1.msra.mxu0 0.0
  %2282 = vmatprep.subr.mxu0 0.0
  %2283 = vmatpush1.msra.mxu0 0.0
  %2284 = vmatprep.subr.mxu0 0.0
  %2285 = vmatpush1.msra.mxu0 0.0
  %2286 = vmatprep.subr.mxu0 0.0
  %2287 = vmatpush1.msra.mxu0 0.0
  %2288 = vmatprep.subr.mxu0 0.0
  %2289 = vmatpush1.msra.mxu0 0.0
  %2290 = vmatprep.subr.mxu0 0.0
  %2291 = vmatpush1.msra.mxu0 0.0
  %2292 = vmatprep.subr.mxu0 0.0
  %2293 = vmatpush1.msra.mxu0 0.0
  %2294 = vmatprep.subr.mxu0 0.0
  %2295 = vmatpush1.msra.mxu0 0.0
  %2296 = vmatprep.subr.mxu0 0.0
  %2297 = vmatpush1.msra.mxu0 0.0
  %2298 = vmatprep.subr.mxu0 0.0
  %2299 = vmatpush1.msra.mxu0 0.0
  %2300 = vmatprep.subr.mxu0 0.0
  %2301 = vmatpush1.msra.mxu0 0.0
  %2302 = vmatprep.subr.mxu0 0.0
  %2303 = vmatpush1.msra.mxu0 0.0
  %2304 = vmatprep.subr.mxu0 0.0
  %2305 = vmatpush1.msra.mxu0 0.0
  %2306 = vmatprep.subr.mxu0 0.0
  %2307 = vmatpush1.msra.mxu0 0.0
  %2308 = vmatprep.mubr.f32.mxu0 0.0
  %2309 = vmatmul.mubr.f32.gmra.mrb[0].mxu0 %v2242
  %v2310 = vpop.f32.mrb[0].mxu0
  %v2311 = vadd.f32 0.0, %v2310
  %v2312 = vpop.f32.mrb[0].mxu0
  %2313 = vdwg.mxu0
  %v2314 = vadd.f32 %v2229, %v2311
  %v2315 = vmul.f32 %v1654, %v777
  %v2316 = vmul.f32 %v1657, %v777
  %v2317 = vld [vmem:[%s1 + $0xd0] sm:$0xff]
  %2320 = vrot.lane.b32.xlu0 %v2315, 110
  %v2321 = vpop.permute.xlu0 %2320
  %2322 = vrot.lane.b32.xlu0 %v2316, 110
  %v2323 = vpop.permute.xlu0 %2322
  %v2324 = vsel %vm788, %v2321, %v2323
  %v2327 = vsel %vm79, %v2317, 0
  %2329 = vmatprep.subr.mxu0 0.0
  %2330 = vmatpush1.msra.mxu0 %v2324
  %2331 = vmatprep.subr.mxu0 0.0
  %2332 = vmatpush1.msra.mxu0 0.0
  %2333 = vmatprep.subr.mxu0 0.0
  %2334 = vmatpush1.msra.mxu0 0.0
  %2335 = vmatprep.subr.mxu0 0.0
  %2336 = vmatpush1.msra.mxu0 0.0
  %2337 = vmatprep.subr.mxu0 0.0
  %2338 = vmatpush1.msra.mxu0 0.0
  %2339 = vmatprep.subr.mxu0 0.0
  %2340 = vmatpush1.msra.mxu0 0.0
  %2341 = vmatprep.subr.mxu0 0.0
  %2342 = vmatpush1.msra.mxu0 0.0
  %2343 = vmatprep.subr.mxu0 0.0
  %2344 = vmatpush1.msra.mxu0 0.0
  %2345 = vmatprep.subr.mxu0 0.0
  %2346 = vmatpush1.msra.mxu0 0.0
  %2347 = vmatprep.subr.mxu0 0.0
  %2348 = vmatpush1.msra.mxu0 0.0
  %2349 = vmatprep.subr.mxu0 0.0
  %2350 = vmatpush1.msra.mxu0 0.0
  %2351 = vmatprep.subr.mxu0 0.0
  %2352 = vmatpush1.msra.mxu0 0.0
  %2353 = vmatprep.subr.mxu0 0.0
  %2354 = vmatpush1.msra.mxu0 0.0
  %2355 = vmatprep.subr.mxu0 0.0
  %2356 = vmatpush1.msra.mxu0 0.0
  %2357 = vmatprep.subr.mxu0 0.0
  %2358 = vmatpush1.msra.mxu0 0.0
  %2359 = vmatprep.subr.mxu0 0.0
  %2360 = vmatpush1.msra.mxu0 0.0
  %2361 = vmatprep.subr.mxu0 0.0
  %2362 = vmatpush1.msra.mxu0 0.0
  %2363 = vmatprep.subr.mxu0 0.0
  %2364 = vmatpush1.msra.mxu0 0.0
  %2365 = vmatprep.subr.mxu0 0.0
  %2366 = vmatpush1.msra.mxu0 0.0
  %2367 = vmatprep.subr.mxu0 0.0
  %2368 = vmatpush1.msra.mxu0 0.0
  %2369 = vmatprep.subr.mxu0 0.0
  %2370 = vmatpush1.msra.mxu0 0.0
  %2371 = vmatprep.subr.mxu0 0.0
  %2372 = vmatpush1.msra.mxu0 0.0
  %2373 = vmatprep.subr.mxu0 0.0
  %2374 = vmatpush1.msra.mxu0 0.0
  %2375 = vmatprep.subr.mxu0 0.0
  %2376 = vmatpush1.msra.mxu0 0.0
  %2377 = vmatprep.subr.mxu0 0.0
  %2378 = vmatpush1.msra.mxu0 0.0
  %2379 = vmatprep.subr.mxu0 0.0
  %2380 = vmatpush1.msra.mxu0 0.0
  %2381 = vmatprep.subr.mxu0 0.0
  %2382 = vmatpush1.msra.mxu0 0.0
  %2383 = vmatprep.subr.mxu0 0.0
  %2384 = vmatpush1.msra.mxu0 0.0
  %2385 = vmatprep.subr.mxu0 0.0
  %2386 = vmatpush1.msra.mxu0 0.0
  %2387 = vmatprep.subr.mxu0 0.0
  %2388 = vmatpush1.msra.mxu0 0.0
  %2389 = vmatprep.subr.mxu0 0.0
  %2390 = vmatpush1.msra.mxu0 0.0
  %2391 = vmatprep.subr.mxu0 0.0
  %2392 = vmatpush1.msra.mxu0 0.0
  %2393 = vmatprep.mubr.f32.mxu0 0.0
  %2394 = vmatmul.mubr.f32.gmra.mrb[0].mxu0 %v2327
  %v2395 = vpop.f32.mrb[0].mxu0
  %v2396 = vadd.f32 0.0, %v2395
  %v2397 = vpop.f32.mrb[0].mxu0
  %2398 = vdwg.mxu0
  %v2399 = vadd.f32 %v2314, %v2396
  %v2400 = vld [vmem:[%s2 + $0x10] sm:$0xff]
  %2402 = vset.pattern.permute.xlu0 0
  %2403 = vperm.xlu0 %2402, %v2400
  %v2404 = vpop.permute.xlu0 %2403
  %v2406 = vmul.f32 %v2399, %v2404
  %v2407 = vld [vmem:[%s3 + $0x10] sm:$0xff]
  %2409 = vset.pattern.permute.xlu0 0
  %2410 = vperm.xlu0 %2409, %v2407
  %v2411 = vpop.permute.xlu0 %2410
  %v2413 = vadd.f32 %v2406, %v2411
  %v2414 = vmax.f32 %v2413, 0.0
  %2416 = vrot.lane.b32.xlu0 %v2414, 9
  %v2417 = vpop.permute.xlu0 %2416
  %2419 = vst.msk [vmem:[#allocation2] sm:$0xff] %vm47, %v2417
  %2420 = vst.msk [vmem:[#allocation2 + $0x8] sm:$0xff] %vm49, %v2417
  %v2421 = vld [vmem:[#allocation2] sm:$0xff]
  %v2422 = vmul.f32 %v2421, %v55
  %v2423 = vld [vmem:[%s1 + $0xd8] sm:$0xff]
  %v2424 = vld [vmem:[#allocation2 + $0x8] sm:$0xff]
  %v2425 = vmul.f32 %v2421, %v65
  %v2426 = vmul.f32 %v2424, %v65
  %v2427 = vld [vmem:[%s1 + $0xe0] sm:$0xff]
  %2430 = vrot.lane.b32.xlu0 %v2425, 127
  %v2431 = vpop.permute.xlu0 %2430
  %2432 = vrot.lane.b32.xlu0 %v2426, 127
  %v2433 = vpop.permute.xlu0 %2432
  %v2434 = vsel %vm76, %v2431, %v2433
  %v2437 = vsel %vm79, %v2427, 0
  %2439 = vmatprep.subr.mxu0 0.0
  %2440 = vmatpush1.msra.mxu0 %v2434
  %2441 = vmatprep.subr.mxu0 0.0
  %2442 = vmatpush1.msra.mxu0 0.0
  %2443 = vmatprep.subr.mxu0 0.0
  %2444 = vmatpush1.msra.mxu0 0.0
  %2445 = vmatprep.subr.mxu0 0.0
  %2446 = vmatpush1.msra.mxu0 0.0
  %2447 = vmatprep.subr.mxu0 0.0
  %2448 = vmatpush1.msra.mxu0 0.0
  %2449 = vmatprep.subr.mxu0 0.0
  %2450 = vmatpush1.msra.mxu0 0.0
  %2451 = vmatprep.subr.mxu0 0.0
  %2452 = vmatpush1.msra.mxu0 0.0
  %2453 = vmatprep.subr.mxu0 0.0
  %2454 = vmatpush1.msra.mxu0 0.0
  %2455 = vmatprep.subr.mxu0 0.0
  %2456 = vmatpush1.msra.mxu0 0.0
  %2457 = vmatprep.subr.mxu0 0.0
  %2458 = vmatpush1.msra.mxu0 0.0
  %2459 = vmatprep.subr.mxu0 0.0
  %2460 = vmatpush1.msra.mxu0 0.0
  %2461 = vmatprep.subr.mxu0 0.0
  %2462 = vmatpush1.msra.mxu0 0.0
  %2463 = vmatprep.subr.mxu0 0.0
  %2464 = vmatpush1.msra.mxu0 0.0
  %2465 = vmatprep.subr.mxu0 0.0
  %2466 = vmatpush1.msra.mxu0 0.0
  %2467 = vmatprep.subr.mxu0 0.0
  %2468 = vmatpush1.msra.mxu0 0.0
  %2469 = vmatprep.subr.mxu0 0.0
  %2470 = vmatpush1.msra.mxu0 0.0
  %2471 = vmatprep.subr.mxu0 0.0
  %2472 = vmatpush1.msra.mxu0 0.0
  %2473 = vmatprep.subr.mxu0 0.0
  %2474 = vmatpush1.msra.mxu0 0.0
  %2475 = vmatprep.subr.mxu0 0.0
  %2476 = vmatpush1.msra.mxu0 0.0
  %2477 = vmatprep.subr.mxu0 0.0
  %2478 = vmatpush1.msra.mxu0 0.0
  %2479 = vmatprep.subr.mxu0 0.0
  %2480 = vmatpush1.msra.mxu0 0.0
  %2481 = vmatprep.subr.mxu0 0.0
  %2482 = vmatpush1.msra.mxu0 0.0
  %2483 = vmatprep.subr.mxu0 0.0
  %2484 = vmatpush1.msra.mxu0 0.0
  %2485 = vmatprep.subr.mxu0 0.0
  %2486 = vmatpush1.msra.mxu0 0.0
  %2487 = vmatprep.subr.mxu0 0.0
  %2488 = vmatpush1.msra.mxu0 0.0
  %2489 = vmatprep.subr.mxu0 0.0
  %2490 = vmatpush1.msra.mxu0 0.0
  %2491 = vmatprep.subr.mxu0 0.0
  %2492 = vmatpush1.msra.mxu0 0.0
  %2493 = vmatprep.subr.mxu0 0.0
  %2494 = vmatpush1.msra.mxu0 0.0
  %2495 = vmatprep.subr.mxu0 0.0
  %2496 = vmatpush1.msra.mxu0 0.0
  %2497 = vmatprep.subr.mxu0 0.0
  %2498 = vmatpush1.msra.mxu0 0.0
  %2499 = vmatprep.subr.mxu0 0.0
  %2500 = vmatpush1.msra.mxu0 0.0
  %2501 = vmatprep.subr.mxu0 0.0
  %2502 = vmatpush1.msra.mxu0 0.0
  %2503 = vmatprep.mubr.f32.mxu0 0.0
  %2504 = vmatmul.mubr.f32.gmra.mrb[0].mxu0 %v2437
  %v2505 = vpop.f32.mrb[0].mxu0
  %v2506 = vadd.f32 0.0, %v2505
  %v2507 = vpop.f32.mrb[0].mxu0
  %2508 = vdwg.mxu0
  %v2510 = vsel %vm79, %v2423, 0
  %2512 = vmatprep.subr.mxu0 0.0
  %2513 = vmatpush1.msra.mxu0 %v2422
  %2514 = vmatprep.subr.mxu0 0.0
  %2515 = vmatpush1.msra.mxu0 0.0
  %2516 = vmatprep.subr.mxu0 0.0
  %2517 = vmatpush1.msra.mxu0 0.0
  %2518 = vmatprep.subr.mxu0 0.0
  %2519 = vmatpush1.msra.mxu0 0.0
  %2520 = vmatprep.subr.mxu0 0.0
  %2521 = vmatpush1.msra.mxu0 0.0
  %2522 = vmatprep.subr.mxu0 0.0
  %2523 = vmatpush1.msra.mxu0 0.0
  %2524 = vmatprep.subr.mxu0 0.0
  %2525 = vmatpush1.msra.mxu0 0.0
  %2526 = vmatprep.subr.mxu0 0.0
  %2527 = vmatpush1.msra.mxu0 0.0
  %2528 = vmatprep.subr.mxu0 0.0
  %2529 = vmatpush1.msra.mxu0 0.0
  %2530 = vmatprep.subr.mxu0 0.0
  %2531 = vmatpush1.msra.mxu0 0.0
  %2532 = vmatprep.subr.mxu0 0.0
  %2533 = vmatpush1.msra.mxu0 0.0
  %2534 = vmatprep.subr.mxu0 0.0
  %2535 = vmatpush1.msra.mxu0 0.0
  %2536 = vmatprep.subr.mxu0 0.0
  %2537 = vmatpush1.msra.mxu0 0.0
  %2538 = vmatprep.subr.mxu0 0.0
  %2539 = vmatpush1.msra.mxu0 0.0
  %2540 = vmatprep.subr.mxu0 0.0
  %2541 = vmatpush1.msra.mxu0 0.0
  %2542 = vmatprep.subr.mxu0 0.0
  %2543 = vmatpush1.msra.mxu0 0.0
  %2544 = vmatprep.subr.mxu0 0.0
  %2545 = vmatpush1.msra.mxu0 0.0
  %2546 = vmatprep.subr.mxu0 0.0
  %2547 = vmatpush1.msra.mxu0 0.0
  %2548 = vmatprep.subr.mxu0 0.0
  %2549 = vmatpush1.msra.mxu0 0.0
  %2550 = vmatprep.subr.mxu0 0.0
  %2551 = vmatpush1.msra.mxu0 0.0
  %2552 = vmatprep.subr.mxu0 0.0
  %2553 = vmatpush1.msra.mxu0 0.0
  %2554 = vmatprep.subr.mxu0 0.0
  %2555 = vmatpush1.msra.mxu0 0.0
  %2556 = vmatprep.subr.mxu0 0.0
  %2557 = vmatpush1.msra.mxu0 0.0
  %2558 = vmatprep.subr.mxu0 0.0
  %2559 = vmatpush1.msra.mxu0 0.0
  %2560 = vmatprep.subr.mxu0 0.0
  %2561 = vmatpush1.msra.mxu0 0.0
  %2562 = vmatprep.subr.mxu0 0.0
  %2563 = vmatpush1.msra.mxu0 0.0
  %2564 = vmatprep.subr.mxu0 0.0
  %2565 = vmatpush1.msra.mxu0 0.0
  %2566 = vmatprep.subr.mxu0 0.0
  %2567 = vmatpush1.msra.mxu0 0.0
  %2568 = vmatprep.subr.mxu0 0.0
  %2569 = vmatpush1.msra.mxu0 0.0
  %2570 = vmatprep.subr.mxu0 0.0
  %2571 = vmatpush1.msra.mxu0 0.0
  %2572 = vmatprep.subr.mxu0 0.0
  %2573 = vmatpush1.msra.mxu0 0.0
  %2574 = vmatprep.subr.mxu0 0.0
  %2575 = vmatpush1.msra.mxu0 0.0
  %2576 = vmatprep.mubr.f32.mxu0 0.0
  %2577 = vmatmul.mubr.f32.gmra.mrb[0].mxu0 %v2510
  %v2578 = vpop.f32.mrb[0].mxu0
  %v2579 = vadd.f32 %v2506, %v2578
  %v2580 = vpop.f32.mrb[0].mxu0
  %2581 = vdwg.mxu0
  %v2582 = vmul.f32 %v2421, %v232
  %v2583 = vmul.f32 %v2424, %v232
  %v2584 = vld [vmem:[%s1 + $0xe8] sm:$0xff]
  %2587 = vrot.lane.b32.xlu0 %v2582, 126
  %v2588 = vpop.permute.xlu0 %2587
  %2589 = vrot.lane.b32.xlu0 %v2583, 126
  %v2590 = vpop.permute.xlu0 %2589
  %v2591 = vsel %vm243, %v2588, %v2590
  %v2594 = vsel %vm79, %v2584, 0
  %2596 = vmatprep.subr.mxu0 0.0
  %2597 = vmatpush1.msra.mxu0 %v2591
  %2598 = vmatprep.subr.mxu0 0.0
  %2599 = vmatpush1.msra.mxu0 0.0
  %2600 = vmatprep.subr.mxu0 0.0
  %2601 = vmatpush1.msra.mxu0 0.0
  %2602 = vmatprep.subr.mxu0 0.0
  %2603 = vmatpush1.msra.mxu0 0.0
  %2604 = vmatprep.subr.mxu0 0.0
  %2605 = vmatpush1.msra.mxu0 0.0
  %2606 = vmatprep.subr.mxu0 0.0
  %2607 = vmatpush1.msra.mxu0 0.0
  %2608 = vmatprep.subr.mxu0 0.0
  %2609 = vmatpush1.msra.mxu0 0.0
  %2610 = vmatprep.subr.mxu0 0.0
  %2611 = vmatpush1.msra.mxu0 0.0
  %2612 = vmatprep.subr.mxu0 0.0
  %2613 = vmatpush1.msra.mxu0 0.0
  %2614 = vmatprep.subr.mxu0 0.0
  %2615 = vmatpush1.msra.mxu0 0.0
  %2616 = vmatprep.subr.mxu0 0.0
  %2617 = vmatpush1.msra.mxu0 0.0
  %2618 = vmatprep.subr.mxu0 0.0
  %2619 = vmatpush1.msra.mxu0 0.0
  %2620 = vmatprep.subr.mxu0 0.0
  %2621 = vmatpush1.msra.mxu0 0.0
  %2622 = vmatprep.subr.mxu0 0.0
  %2623 = vmatpush1.msra.mxu0 0.0
  %2624 = vmatprep.subr.mxu0 0.0
  %2625 = vmatpush1.msra.mxu0 0.0
  %2626 = vmatprep.subr.mxu0 0.0
  %2627 = vmatpush1.msra.mxu0 0.0
  %2628 = vmatprep.subr.mxu0 0.0
  %2629 = vmatpush1.msra.mxu0 0.0
  %2630 = vmatprep.subr.mxu0 0.0
  %2631 = vmatpush1.msra.mxu0 0.0
  %2632 = vmatprep.subr.mxu0 0.0
  %2633 = vmatpush1.msra.mxu0 0.0
  %2634 = vmatprep.subr.mxu0 0.0
  %2635 = vmatpush1.msra.mxu0 0.0
  %2636 = vmatprep.subr.mxu0 0.0
  %2637 = vmatpush1.msra.mxu0 0.0
  %2638 = vmatprep.subr.mxu0 0.0
  %2639 = vmatpush1.msra.mxu0 0.0
  %2640 = vmatprep.subr.mxu0 0.0
  %2641 = vmatpush1.msra.mxu0 0.0
  %2642 = vmatprep.subr.mxu0 0.0
  %2643 = vmatpush1.msra.mxu0 0.0
  %2644 = vmatprep.subr.mxu0 0.0
  %2645 = vmatpush1.msra.mxu0 0.0
  %2646 = vmatprep.subr.mxu0 0.0
  %2647 = vmatpush1.msra.mxu0 0.0
  %2648 = vmatprep.subr.mxu0 0.0
  %2649 = vmatpush1.msra.mxu0 0.0
  %2650 = vmatprep.subr.mxu0 0.0
  %2651 = vmatpush1.msra.mxu0 0.0
  %2652 = vmatprep.subr.mxu0 0.0
  %2653 = vmatpush1.msra.mxu0 0.0
  %2654 = vmatprep.subr.mxu0 0.0
  %2655 = vmatpush1.msra.mxu0 0.0
  %2656 = vmatprep.subr.mxu0 0.0
  %2657 = vmatpush1.msra.mxu0 0.0
  %2658 = vmatprep.subr.mxu0 0.0
  %2659 = vmatpush1.msra.mxu0 0.0
  %2660 = vmatprep.mubr.f32.mxu0 0.0
  %2661 = vmatmul.mubr.f32.gmra.mrb[0].mxu0 %v2594
  %v2662 = vpop.f32.mrb[0].mxu0
  %v2663 = vadd.f32 0.0, %v2662
  %v2664 = vpop.f32.mrb[0].mxu0
  %2665 = vdwg.mxu0
  %v2666 = vadd.f32 %v2579, %v2663
  %v2667 = vmul.f32 %v2421, %v326
  %v2668 = vmul.f32 %v2424, %v326
  %v2669 = vld [vmem:[%s1 + $0xf0] sm:$0xff]
  %2672 = vrot.lane.b32.xlu0 %v2667, 120
  %v2673 = vpop.permute.xlu0 %2672
  %2674 = vrot.lane.b32.xlu0 %v2668, 120
  %v2675 = vpop.permute.xlu0 %2674
  %v2676 = vsel %vm337, %v2673, %v2675
  %v2679 = vsel %vm79, %v2669, 0
  %2681 = vmatprep.subr.mxu0 0.0
  %2682 = vmatpush1.msra.mxu0 %v2676
  %2683 = vmatprep.subr.mxu0 0.0
  %2684 = vmatpush1.msra.mxu0 0.0
  %2685 = vmatprep.subr.mxu0 0.0
  %2686 = vmatpush1.msra.mxu0 0.0
  %2687 = vmatprep.subr.mxu0 0.0
  %2688 = vmatpush1.msra.mxu0 0.0
  %2689 = vmatprep.subr.mxu0 0.0
  %2690 = vmatpush1.msra.mxu0 0.0
  %2691 = vmatprep.subr.mxu0 0.0
  %2692 = vmatpush1.msra.mxu0 0.0
  %2693 = vmatprep.subr.mxu0 0.0
  %2694 = vmatpush1.msra.mxu0 0.0
  %2695 = vmatprep.subr.mxu0 0.0
  %2696 = vmatpush1.msra.mxu0 0.0
  %2697 = vmatprep.subr.mxu0 0.0
  %2698 = vmatpush1.msra.mxu0 0.0
  %2699 = vmatprep.subr.mxu0 0.0
  %2700 = vmatpush1.msra.mxu0 0.0
  %2701 = vmatprep.subr.mxu0 0.0
  %2702 = vmatpush1.msra.mxu0 0.0
  %2703 = vmatprep.subr.mxu0 0.0
  %2704 = vmatpush1.msra.mxu0 0.0
  %2705 = vmatprep.subr.mxu0 0.0
  %2706 = vmatpush1.msra.mxu0 0.0
  %2707 = vmatprep.subr.mxu0 0.0
  %2708 = vmatpush1.msra.mxu0 0.0
  %2709 = vmatprep.subr.mxu0 0.0
  %2710 = vmatpush1.msra.mxu0 0.0
  %2711 = vmatprep.subr.mxu0 0.0
  %2712 = vmatpush1.msra.mxu0 0.0
  %2713 = vmatprep.subr.mxu0 0.0
  %2714 = vmatpush1.msra.mxu0 0.0
  %2715 = vmatprep.subr.mxu0 0.0
  %2716 = vmatpush1.msra.mxu0 0.0
  %2717 = vmatprep.subr.mxu0 0.0
  %2718 = vmatpush1.msra.mxu0 0.0
  %2719 = vmatprep.subr.mxu0 0.0
  %2720 = vmatpush1.msra.mxu0 0.0
  %2721 = vmatprep.subr.mxu0 0.0
  %2722 = vmatpush1.msra.mxu0 0.0
  %2723 = vmatprep.subr.mxu0 0.0
  %2724 = vmatpush1.msra.mxu0 0.0
  %2725 = vmatprep.subr.mxu0 0.0
  %2726 = vmatpush1.msra.mxu0 0.0
  %2727 = vmatprep.subr.mxu0 0.0
  %2728 = vmatpush1.msra.mxu0 0.0
  %2729 = vmatprep.subr.mxu0 0.0
  %2730 = vmatpush1.msra.mxu0 0.0
  %2731 = vmatprep.subr.mxu0 0.0
  %2732 = vmatpush1.msra.mxu0 0.0
  %2733 = vmatprep.subr.mxu0 0.0
  %2734 = vmatpush1.msra.mxu0 0.0
  %2735 = vmatprep.subr.mxu0 0.0
  %2736 = vmatpush1.msra.mxu0 0.0
  %2737 = vmatprep.subr.mxu0 0.0
  %2738 = vmatpush1.msra.mxu0 0.0
  %2739 = vmatprep.subr.mxu0 0.0
  %2740 = vmatpush1.msra.mxu0 0.0
  %2741 = vmatprep.subr.mxu0 0.0
  %2742 = vmatpush1.msra.mxu0 0.0
  %2743 = vmatprep.subr.mxu0 0.0
  %2744 = vmatpush1.msra.mxu0 0.0
  %2745 = vmatprep.mubr.f32.mxu0 0.0
  %2746 = vmatmul.mubr.f32.gmra.mrb[0].mxu0 %v2679
  %v2747 = vpop.f32.mrb[0].mxu0
  %v2748 = vadd.f32 0.0, %v2747
  %v2749 = vpop.f32.mrb[0].mxu0
  %2750 = vdwg.mxu0
  %v2751 = vadd.f32 %v2666, %v2748
  %v2752 = vld [vmem:[%s1 + $0xf8] sm:$0xff]
  %v2754 = vsel %vm79, %v2752, 0
  %2756 = vmatprep.subr.mxu0 0.0
  %2757 = vmatpush1.msra.mxu0 %v2414
  %2758 = vmatprep.subr.mxu0 0.0
  %2759 = vmatpush1.msra.mxu0 0.0
  %2760 = vmatprep.subr.mxu0 0.0
  %2761 = vmatpush1.msra.mxu0 0.0
  %2762 = vmatprep.subr.mxu0 0.0
  %2763 = vmatpush1.msra.mxu0 0.0
  %2764 = vmatprep.subr.mxu0 0.0
  %2765 = vmatpush1.msra.mxu0 0.0
  %2766 = vmatprep.subr.mxu0 0.0
  %2767 = vmatpush1.msra.mxu0 0.0
  %2768 = vmatprep.subr.mxu0 0.0
  %2769 = vmatpush1.msra.mxu0 0.0
  %2770 = vmatprep.subr.mxu0 0.0
  %2771 = vmatpush1.msra.mxu0 0.0
  %2772 = vmatprep.subr.mxu0 0.0
  %2773 = vmatpush1.msra.mxu0 0.0
  %2774 = vmatprep.subr.mxu0 0.0
  %2775 = vmatpush1.msra.mxu0 0.0
  %2776 = vmatprep.subr.mxu0 0.0
  %2777 = vmatpush1.msra.mxu0 0.0
  %2778 = vmatprep.subr.mxu0 0.0
  %2779 = vmatpush1.msra.mxu0 0.0
  %2780 = vmatprep.subr.mxu0 0.0
  %2781 = vmatpush1.msra.mxu0 0.0
  %2782 = vmatprep.subr.mxu0 0.0
  %2783 = vmatpush1.msra.mxu0 0.0
  %2784 = vmatprep.subr.mxu0 0.0
  %2785 = vmatpush1.msra.mxu0 0.0
  %2786 = vmatprep.subr.mxu0 0.0
  %2787 = vmatpush1.msra.mxu0 0.0
  %2788 = vmatprep.subr.mxu0 0.0
  %2789 = vmatpush1.msra.mxu0 0.0
  %2790 = vmatprep.subr.mxu0 0.0
  %2791 = vmatpush1.msra.mxu0 0.0
  %2792 = vmatprep.subr.mxu0 0.0
  %2793 = vmatpush1.msra.mxu0 0.0
  %2794 = vmatprep.subr.mxu0 0.0
  %2795 = vmatpush1.msra.mxu0 0.0
  %2796 = vmatprep.subr.mxu0 0.0
  %2797 = vmatpush1.msra.mxu0 0.0
  %2798 = vmatprep.subr.mxu0 0.0
  %2799 = vmatpush1.msra.mxu0 0.0
  %2800 = vmatprep.subr.mxu0 0.0
  %2801 = vmatpush1.msra.mxu0 0.0
  %2802 = vmatprep.subr.mxu0 0.0
  %2803 = vmatpush1.msra.mxu0 0.0
  %2804 = vmatprep.subr.mxu0 0.0
  %2805 = vmatpush1.msra.mxu0 0.0
  %2806 = vmatprep.subr.mxu0 0.0
  %2807 = vmatpush1.msra.mxu0 0.0
  %2808 = vmatprep.subr.mxu0 0.0
  %2809 = vmatpush1.msra.mxu0 0.0
  %2810 = vmatprep.subr.mxu0 0.0
  %2811 = vmatpush1.msra.mxu0 0.0
  %2812 = vmatprep.subr.mxu0 0.0
  %2813 = vmatpush1.msra.mxu0 0.0
  %2814 = vmatprep.subr.mxu0 0.0
  %2815 = vmatpush1.msra.mxu0 0.0
  %2816 = vmatprep.subr.mxu0 0.0
  %2817 = vmatpush1.msra.mxu0 0.0
  %2818 = vmatprep.subr.mxu0 0.0
  %2819 = vmatpush1.msra.mxu0 0.0
  %2820 = vmatprep.mubr.f32.mxu0 0.0
  %2821 = vmatmul.mubr.f32.gmra.mrb[0].mxu0 %v2754
  %v2822 = vpop.f32.mrb[0].mxu0
  %v2823 = vadd.f32 0.0, %v2822
  %v2824 = vpop.f32.mrb[0].mxu0
  %2825 = vdwg.mxu0
  %v2826 = vadd.f32 %v2751, %v2823
  %v2827 = vmul.f32 %v2421, %v495
  %v2828 = vmul.f32 %v2424, %v495
  %v2829 = vld [vmem:[%s1 + $0x100] sm:$0xff]
  %2832 = vrot.lane.b32.xlu0 %v2827, 118
  %v2833 = vpop.permute.xlu0 %2832
  %2834 = vrot.lane.b32.xlu0 %v2828, 118
  %v2835 = vpop.permute.xlu0 %2834
  %v2836 = vsel %vm506, %v2833, %v2835
  %v2839 = vsel %vm79, %v2829, 0
  %2841 = vmatprep.subr.mxu0 0.0
  %2842 = vmatpush1.msra.mxu0 %v2836
  %2843 = vmatprep.subr.mxu0 0.0
  %2844 = vmatpush1.msra.mxu0 0.0
  %2845 = vmatprep.subr.mxu0 0.0
  %2846 = vmatpush1.msra.mxu0 0.0
  %2847 = vmatprep.subr.mxu0 0.0
  %2848 = vmatpush1.msra.mxu0 0.0
  %2849 = vmatprep.subr.mxu0 0.0
  %2850 = vmatpush1.msra.mxu0 0.0
  %2851 = vmatprep.subr.mxu0 0.0
  %2852 = vmatpush1.msra.mxu0 0.0
  %2853 = vmatprep.subr.mxu0 0.0
  %2854 = vmatpush1.msra.mxu0 0.0
  %2855 = vmatprep.subr.mxu0 0.0
  %2856 = vmatpush1.msra.mxu0 0.0
  %2857 = vmatprep.subr.mxu0 0.0
  %2858 = vmatpush1.msra.mxu0 0.0
  %2859 = vmatprep.subr.mxu0 0.0
  %2860 = vmatpush1.msra.mxu0 0.0
  %2861 = vmatprep.subr.mxu0 0.0
  %2862 = vmatpush1.msra.mxu0 0.0
  %2863 = vmatprep.subr.mxu0 0.0
  %2864 = vmatpush1.msra.mxu0 0.0
  %2865 = vmatprep.subr.mxu0 0.0
  %2866 = vmatpush1.msra.mxu0 0.0
  %2867 = vmatprep.subr.mxu0 0.0
  %2868 = vmatpush1.msra.mxu0 0.0
  %2869 = vmatprep.subr.mxu0 0.0
  %2870 = vmatpush1.msra.mxu0 0.0
  %2871 = vmatprep.subr.mxu0 0.0
  %2872 = vmatpush1.msra.mxu0 0.0
  %2873 = vmatprep.subr.mxu0 0.0
  %2874 = vmatpush1.msra.mxu0 0.0
  %2875 = vmatprep.subr.mxu0 0.0
  %2876 = vmatpush1.msra.mxu0 0.0
  %2877 = vmatprep.subr.mxu0 0.0
  %2878 = vmatpush1.msra.mxu0 0.0
  %2879 = vmatprep.subr.mxu0 0.0
  %2880 = vmatpush1.msra.mxu0 0.0
  %2881 = vmatprep.subr.mxu0 0.0
  %2882 = vmatpush1.msra.mxu0 0.0
  %2883 = vmatprep.subr.mxu0 0.0
  %2884 = vmatpush1.msra.mxu0 0.0
  %2885 = vmatprep.subr.mxu0 0.0
  %2886 = vmatpush1.msra.mxu0 0.0
  %2887 = vmatprep.subr.mxu0 0.0
  %2888 = vmatpush1.msra.mxu0 0.0
  %2889 = vmatprep.subr.mxu0 0.0
  %2890 = vmatpush1.msra.mxu0 0.0
  %2891 = vmatprep.subr.mxu0 0.0
  %2892 = vmatpush1.msra.mxu0 0.0
  %2893 = vmatprep.subr.mxu0 0.0
  %2894 = vmatpush1.msra.mxu0 0.0
  %2895 = vmatprep.subr.mxu0 0.0
  %2896 = vmatpush1.msra.mxu0 0.0
  %2897 = vmatprep.subr.mxu0 0.0
  %2898 = vmatpush1.msra.mxu0 0.0
  %2899 = vmatprep.subr.mxu0 0.0
  %2900 = vmatpush1.msra.mxu0 0.0
  %2901 = vmatprep.subr.mxu0 0.0
  %2902 = vmatpush1.msra.mxu0 0.0
  %2903 = vmatprep.subr.mxu0 0.0
  %2904 = vmatpush1.msra.mxu0 0.0
  %2905 = vmatprep.mubr.f32.mxu0 0.0
  %2906 = vmatmul.mubr.f32.gmra.mrb[0].mxu0 %v2839
  %v2907 = vpop.f32.mrb[0].mxu0
  %v2908 = vadd.f32 0.0, %v2907
  %v2909 = vpop.f32.mrb[0].mxu0
  %2910 = vdwg.mxu0
  %v2911 = vadd.f32 %v2826, %v2908
  %v2912 = vmul.f32 %v2421, %v589
  %v2913 = vmul.f32 %v2424, %v589
  %v2914 = vld [vmem:[%s1 + $0x108] sm:$0xff]
  %2917 = vrot.lane.b32.xlu0 %v2912, 112
  %v2918 = vpop.permute.xlu0 %2917
  %2919 = vrot.lane.b32.xlu0 %v2913, 112
  %v2920 = vpop.permute.xlu0 %2919
  %v2921 = vsel %vm600, %v2918, %v2920
  %v2924 = vsel %vm79, %v2914, 0
  %2926 = vmatprep.subr.mxu0 0.0
  %2927 = vmatpush1.msra.mxu0 %v2921
  %2928 = vmatprep.subr.mxu0 0.0
  %2929 = vmatpush1.msra.mxu0 0.0
  %2930 = vmatprep.subr.mxu0 0.0
  %2931 = vmatpush1.msra.mxu0 0.0
  %2932 = vmatprep.subr.mxu0 0.0
  %2933 = vmatpush1.msra.mxu0 0.0
  %2934 = vmatprep.subr.mxu0 0.0
  %2935 = vmatpush1.msra.mxu0 0.0
  %2936 = vmatprep.subr.mxu0 0.0
  %2937 = vmatpush1.msra.mxu0 0.0
  %2938 = vmatprep.subr.mxu0 0.0
  %2939 = vmatpush1.msra.mxu0 0.0
  %2940 = vmatprep.subr.mxu0 0.0
  %2941 = vmatpush1.msra.mxu0 0.0
  %2942 = vmatprep.subr.mxu0 0.0
  %2943 = vmatpush1.msra.mxu0 0.0
  %2944 = vmatprep.subr.mxu0 0.0
  %2945 = vmatpush1.msra.mxu0 0.0
  %2946 = vmatprep.subr.mxu0 0.0
  %2947 = vmatpush1.msra.mxu0 0.0
  %2948 = vmatprep.subr.mxu0 0.0
  %2949 = vmatpush1.msra.mxu0 0.0
  %2950 = vmatprep.subr.mxu0 0.0
  %2951 = vmatpush1.msra.mxu0 0.0
  %2952 = vmatprep.subr.mxu0 0.0
  %2953 = vmatpush1.msra.mxu0 0.0
  %2954 = vmatprep.subr.mxu0 0.0
  %2955 = vmatpush1.msra.mxu0 0.0
  %2956 = vmatprep.subr.mxu0 0.0
  %2957 = vmatpush1.msra.mxu0 0.0
  %2958 = vmatprep.subr.mxu0 0.0
  %2959 = vmatpush1.msra.mxu0 0.0
  %2960 = vmatprep.subr.mxu0 0.0
  %2961 = vmatpush1.msra.mxu0 0.0
  %2962 = vmatprep.subr.mxu0 0.0
  %2963 = vmatpush1.msra.mxu0 0.0
  %2964 = vmatprep.subr.mxu0 0.0
  %2965 = vmatpush1.msra.mxu0 0.0
  %2966 = vmatprep.subr.mxu0 0.0
  %2967 = vmatpush1.msra.mxu0 0.0
  %2968 = vmatprep.subr.mxu0 0.0
  %2969 = vmatpush1.msra.mxu0 0.0
  %2970 = vmatprep.subr.mxu0 0.0
  %2971 = vmatpush1.msra.mxu0 0.0
  %2972 = vmatprep.subr.mxu0 0.0
  %2973 = vmatpush1.msra.mxu0 0.0
  %2974 = vmatprep.subr.mxu0 0.0
  %2975 = vmatpush1.msra.mxu0 0.0
  %2976 = vmatprep.subr.mxu0 0.0
  %2977 = vmatpush1.msra.mxu0 0.0
  %2978 = vmatprep.subr.mxu0 0.0
  %2979 = vmatpush1.msra.mxu0 0.0
  %2980 = vmatprep.subr.mxu0 0.0
  %2981 = vmatpush1.msra.mxu0 0.0
  %2982 = vmatprep.subr.mxu0 0.0
  %2983 = vmatpush1.msra.mxu0 0.0
  %2984 = vmatprep.subr.mxu0 0.0
  %2985 = vmatpush1.msra.mxu0 0.0
  %2986 = vmatprep.subr.mxu0 0.0
  %2987 = vmatpush1.msra.mxu0 0.0
  %2988 = vmatprep.subr.mxu0 0.0
  %2989 = vmatpush1.msra.mxu0 0.0
  %2990 = vmatprep.mubr.f32.mxu0 0.0
  %2991 = vmatmul.mubr.f32.gmra.mrb[0].mxu0 %v2924
  %v2992 = vpop.f32.mrb[0].mxu0
  %v2993 = vadd.f32 0.0, %v2992
  %v2994 = vpop.f32.mrb[0].mxu0
  %2995 = vdwg.mxu0
  %v2996 = vadd.f32 %v2911, %v2993
  %v2997 = vmul.f32 %v2421, %v683
  %v2998 = vmul.f32 %v2424, %v683
  %v2999 = vld [vmem:[%s1 + $0x110] sm:$0xff]
  %3002 = vrot.lane.b32.xlu0 %v2997, 111
  %v3003 = vpop.permute.xlu0 %3002
  %3004 = vrot.lane.b32.xlu0 %v2998, 111
  %v3005 = vpop.permute.xlu0 %3004
  %v3006 = vsel %vm694, %v3003, %v3005
  %v3009 = vsel %vm79, %v2999, 0
  %3011 = vmatprep.subr.mxu0 0.0
  %3012 = vmatpush1.msra.mxu0 %v3006
  %3013 = vmatprep.subr.mxu0 0.0
  %3014 = vmatpush1.msra.mxu0 0.0
  %3015 = vmatprep.subr.mxu0 0.0
  %3016 = vmatpush1.msra.mxu0 0.0
  %3017 = vmatprep.subr.mxu0 0.0
  %3018 = vmatpush1.msra.mxu0 0.0
  %3019 = vmatprep.subr.mxu0 0.0
  %3020 = vmatpush1.msra.mxu0 0.0
  %3021 = vmatprep.subr.mxu0 0.0
  %3022 = vmatpush1.msra.mxu0 0.0
  %3023 = vmatprep.subr.mxu0 0.0
  %3024 = vmatpush1.msra.mxu0 0.0
  %3025 = vmatprep.subr.mxu0 0.0
  %3026 = vmatpush1.msra.mxu0 0.0
  %3027 = vmatprep.subr.mxu0 0.0
  %3028 = vmatpush1.msra.mxu0 0.0
  %3029 = vmatprep.subr.mxu0 0.0
  %3030 = vmatpush1.msra.mxu0 0.0
  %3031 = vmatprep.subr.mxu0 0.0
  %3032 = vmatpush1.msra.mxu0 0.0
  %3033 = vmatprep.subr.mxu0 0.0
  %3034 = vmatpush1.msra.mxu0 0.0
  %3035 = vmatprep.subr.mxu0 0.0
  %3036 = vmatpush1.msra.mxu0 0.0
  %3037 = vmatprep.subr.mxu0 0.0
  %3038 = vmatpush1.msra.mxu0 0.0
  %3039 = vmatprep.subr.mxu0 0.0
  %3040 = vmatpush1.msra.mxu0 0.0
  %3041 = vmatprep.subr.mxu0 0.0
  %3042 = vmatpush1.msra.mxu0 0.0
  %3043 = vmatprep.subr.mxu0 0.0
  %3044 = vmatpush1.msra.mxu0 0.0
  %3045 = vmatprep.subr.mxu0 0.0
  %3046 = vmatpush1.msra.mxu0 0.0
  %3047 = vmatprep.subr.mxu0 0.0
  %3048 = vmatpush1.msra.mxu0 0.0
  %3049 = vmatprep.subr.mxu0 0.0
  %3050 = vmatpush1.msra.mxu0 0.0
  %3051 = vmatprep.subr.mxu0 0.0
  %3052 = vmatpush1.msra.mxu0 0.0
  %3053 = vmatprep.subr.mxu0 0.0
  %3054 = vmatpush1.msra.mxu0 0.0
  %3055 = vmatprep.subr.mxu0 0.0
  %3056 = vmatpush1.msra.mxu0 0.0
  %3057 = vmatprep.subr.mxu0 0.0
  %3058 = vmatpush1.msra.mxu0 0.0
  %3059 = vmatprep.subr.mxu0 0.0
  %3060 = vmatpush1.msra.mxu0 0.0
  %3061 = vmatprep.subr.mxu0 0.0
  %3062 = vmatpush1.msra.mxu0 0.0
  %3063 = vmatprep.subr.mxu0 0.0
  %3064 = vmatpush1.msra.mxu0 0.0
  %3065 = vmatprep.subr.mxu0 0.0
  %3066 = vmatpush1.msra.mxu0 0.0
  %3067 = vmatprep.subr.mxu0 0.0
  %3068 = vmatpush1.msra.mxu0 0.0
  %3069 = vmatprep.subr.mxu0 0.0
  %3070 = vmatpush1.msra.mxu0 0.0
  %3071 = vmatprep.subr.mxu0 0.0
  %3072 = vmatpush1.msra.mxu0 0.0
  %3073 = vmatprep.subr.mxu0 0.0
  %3074 = vmatpush1.msra.mxu0 0.0
  %3075 = vmatprep.mubr.f32.mxu0 0.0
  %3076 = vmatmul.mubr.f32.gmra.mrb[0].mxu0 %v3009
  %v3077 = vpop.f32.mrb[0].mxu0
  %v3078 = vadd.f32 0.0, %v3077
  %v3079 = vpop.f32.mrb[0].mxu0
  %3080 = vdwg.mxu0
  %v3081 = vadd.f32 %v2996, %v3078
  %v3082 = vmul.f32 %v2421, %v777
  %v3083 = vmul.f32 %v2424, %v777
  %v3084 = vld [vmem:[%s1 + $0x118] sm:$0xff]
  %3087 = vrot.lane.b32.xlu0 %v3082, 110
  %v3088 = vpop.permute.xlu0 %3087
  %3089 = vrot.lane.b32.xlu0 %v3083, 110
  %v3090 = vpop.permute.xlu0 %3089
  %v3091 = vsel %vm788, %v3088, %v3090
  %v3094 = vsel %vm79, %v3084, 0
  %3096 = vmatprep.subr.mxu0 0.0
  %3097 = vmatpush1.msra.mxu0 %v3091
  %3098 = vmatprep.subr.mxu0 0.0
  %3099 = vmatpush1.msra.mxu0 0.0
  %3100 = vmatprep.subr.mxu0 0.0
  %3101 = vmatpush1.msra.mxu0 0.0
  %3102 = vmatprep.subr.mxu0 0.0
  %3103 = vmatpush1.msra.mxu0 0.0
  %3104 = vmatprep.subr.mxu0 0.0
  %3105 = vmatpush1.msra.mxu0 0.0
  %3106 = vmatprep.subr.mxu0 0.0
  %3107 = vmatpush1.msra.mxu0 0.0
  %3108 = vmatprep.subr.mxu0 0.0
  %3109 = vmatpush1.msra.mxu0 0.0
  %3110 = vmatprep.subr.mxu0 0.0
  %3111 = vmatpush1.msra.mxu0 0.0
  %3112 = vmatprep.subr.mxu0 0.0
  %3113 = vmatpush1.msra.mxu0 0.0
  %3114 = vmatprep.subr.mxu0 0.0
  %3115 = vmatpush1.msra.mxu0 0.0
  %3116 = vmatprep.subr.mxu0 0.0
  %3117 = vmatpush1.msra.mxu0 0.0
  %3118 = vmatprep.subr.mxu0 0.0
  %3119 = vmatpush1.msra.mxu0 0.0
  %3120 = vmatprep.subr.mxu0 0.0
  %3121 = vmatpush1.msra.mxu0 0.0
  %3122 = vmatprep.subr.mxu0 0.0
  %3123 = vmatpush1.msra.mxu0 0.0
  %3124 = vmatprep.subr.mxu0 0.0
  %3125 = vmatpush1.msra.mxu0 0.0
  %3126 = vmatprep.subr.mxu0 0.0
  %3127 = vmatpush1.msra.mxu0 0.0
  %3128 = vmatprep.subr.mxu0 0.0
  %3129 = vmatpush1.msra.mxu0 0.0
  %3130 = vmatprep.subr.mxu0 0.0
  %3131 = vmatpush1.msra.mxu0 0.0
  %3132 = vmatprep.subr.mxu0 0.0
  %3133 = vmatpush1.msra.mxu0 0.0
  %3134 = vmatprep.subr.mxu0 0.0
  %3135 = vmatpush1.msra.mxu0 0.0
  %3136 = vmatprep.subr.mxu0 0.0
  %3137 = vmatpush1.msra.mxu0 0.0
  %3138 = vmatprep.subr.mxu0 0.0
  %3139 = vmatpush1.msra.mxu0 0.0
  %3140 = vmatprep.subr.mxu0 0.0
  %3141 = vmatpush1.msra.mxu0 0.0
  %3142 = vmatprep.subr.mxu0 0.0
  %3143 = vmatpush1.msra.mxu0 0.0
  %3144 = vmatprep.subr.mxu0 0.0
  %3145 = vmatpush1.msra.mxu0 0.0
  %3146 = vmatprep.subr.mxu0 0.0
  %3147 = vmatpush1.msra.mxu0 0.0
  %3148 = vmatprep.subr.mxu0 0.0
  %3149 = vmatpush1.msra.mxu0 0.0
  %3150 = vmatprep.subr.mxu0 0.0
  %3151 = vmatpush1.msra.mxu0 0.0
  %3152 = vmatprep.subr.mxu0 0.0
  %3153 = vmatpush1.msra.mxu0 0.0
  %3154 = vmatprep.subr.mxu0 0.0
  %3155 = vmatpush1.msra.mxu0 0.0
  %3156 = vmatprep.subr.mxu0 0.0
  %3157 = vmatpush1.msra.mxu0 0.0
  %3158 = vmatprep.subr.mxu0 0.0
  %3159 = vmatpush1.msra.mxu0 0.0
  %3160 = vmatprep.mubr.f32.mxu0 0.0
  %3161 = vmatmul.mubr.f32.gmra.mrb[0].mxu0 %v3094
  %v3162 = vpop.f32.mrb[0].mxu0
  %v3163 = vadd.f32 0.0, %v3162
  %v3164 = vpop.f32.mrb[0].mxu0
  %3165 = vdwg.mxu0
  %v3166 = vadd.f32 %v3081, %v3163
  %v3167 = vld [vmem:[%s2 + $0x18] sm:$0xff]
  %3169 = vset.pattern.permute.xlu0 0
  %3170 = vperm.xlu0 %3169, %v3167
  %v3171 = vpop.permute.xlu0 %3170
  %v3173 = vmul.f32 %v3166, %v3171
  %v3174 = vld [vmem:[%s3 + $0x18] sm:$0xff]
  %3176 = vset.pattern.permute.xlu0 0
  %3177 = vperm.xlu0 %3176, %v3174
  %v3178 = vpop.permute.xlu0 %3177
  %v3180 = vadd.f32 %v3173, %v3178
  %v3181 = vadd.f32 %v3180, %v1647
  %v3182 = vmax.f32 %v3181, 0.0
  %3183 = vst [vmem:[%s8] sm:$0xff] %v3182
  %v3184 = vld [vmem:[%s5] sm:$0xf]
  %v3186 = vsel %vm79, %v3184, 0
  %3188 = vmatprep.subr.mxu0 0.0
  %3189 = vmatpush1.msra.mxu0 %v3182
  %3190 = vmatprep.subr.mxu0 0.0
  %3191 = vmatpush1.msra.mxu0 0.0
  %3192 = vmatprep.subr.mxu0 0.0
  %3193 = vmatpush1.msra.mxu0 0.0
  %3194 = vmatprep.subr.mxu0 0.0
  %3195 = vmatpush1.msra.mxu0 0.0
  %3196 = vmatprep.subr.mxu0 0.0
  %3197 = vmatpush1.msra.mxu0 0.0
  %3198 = vmatprep.subr.mxu0 0.0
  %3199 = vmatpush1.msra.mxu0 0.0
  %3200 = vmatprep.subr.mxu0 0.0
  %3201 = vmatpush1.msra.mxu0 0.0
  %3202 = vmatprep.subr.mxu0 0.0
  %3203 = vmatpush1.msra.mxu0 0.0
  %3204 = vmatprep.subr.mxu0 0.0
  %3205 = vmatpush1.msra.mxu0 0.0
  %3206 = vmatprep.subr.mxu0 0.0
  %3207 = vmatpush1.msra.mxu0 0.0
  %3208 = vmatprep.subr.mxu0 0.0
  %3209 = vmatpush1.msra.mxu0 0.0
  %3210 = vmatprep.subr.mxu0 0.0
  %3211 = vmatpush1.msra.mxu0 0.0
  %3212 = vmatprep.subr.mxu0 0.0
  %3213 = vmatpush1.msra.mxu0 0.0
  %3214 = vmatprep.subr.mxu0 0.0
  %3215 = vmatpush1.msra.mxu0 0.0
  %3216 = vmatprep.subr.mxu0 0.0
  %3217 = vmatpush1.msra.mxu0 0.0
  %3218 = vmatprep.subr.mxu0 0.0
  %3219 = vmatpush1.msra.mxu0 0.0
  %3220 = vmatprep.subr.mxu0 0.0
  %3221 = vmatpush1.msra.mxu0 0.0
  %3222 = vmatprep.subr.mxu0 0.0
  %3223 = vmatpush1.msra.mxu0 0.0
  %3224 = vmatprep.subr.mxu0 0.0
  %3225 = vmatpush1.msra.mxu0 0.0
  %3226 = vmatprep.subr.mxu0 0.0
  %3227 = vmatpush1.msra.mxu0 0.0
  %3228 = vmatprep.subr.mxu0 0.0
  %3229 = vmatpush1.msra.mxu0 0.0
  %3230 = vmatprep.subr.mxu0 0.0
  %3231 = vmatpush1.msra.mxu0 0.0
  %3232 = vmatprep.subr.mxu0 0.0
  %3233 = vmatpush1.msra.mxu0 0.0
  %3234 = vmatprep.subr.mxu0 0.0
  %3235 = vmatpush1.msra.mxu0 0.0
  %3236 = vmatprep.subr.mxu0 0.0
  %3237 = vmatpush1.msra.mxu0 0.0
  %3238 = vmatprep.subr.mxu0 0.0
  %3239 = vmatpush1.msra.mxu0 0.0
  %3240 = vmatprep.subr.mxu0 0.0
  %3241 = vmatpush1.msra.mxu0 0.0
  %3242 = vmatprep.subr.mxu0 0.0
  %3243 = vmatpush1.msra.mxu0 0.0
  %3244 = vmatprep.subr.mxu0 0.0
  %3245 = vmatpush1.msra.mxu0 0.0
  %3246 = vmatprep.subr.mxu0 0.0
  %3247 = vmatpush1.msra.mxu0 0.0
  %3248 = vmatprep.subr.mxu0 0.0
  %3249 = vmatpush1.msra.mxu0 0.0
  %3250 = vmatprep.subr.mxu0 0.0
  %3251 = vmatpush1.msra.mxu0 0.0
  %3252 = vmatprep.mubr.f32.mxu0 0.0
  %3253 = vmatmul.mubr.f32.gmra.mrb[0].mxu0 %v3186
  %v3254 = vpop.f32.mrb[0].mxu0
  %v3255 = vadd.f32 0.0, %v3254
  %v3256 = vpop.f32.mrb[0].mxu0
  %3257 = vdwg.mxu0
  %v3258 = vld [vmem:[%s6] sm:$0xf]
  %3260 = vset.pattern.permute.xlu0 0
  %3261 = vperm.xlu0 %3260, %v3258
  %v3262 = vpop.permute.xlu0 %3261
  %v3264 = vmul.f32 %v3255, %v3262
  %v3265 = vld [vmem:[%s7] sm:$0xf]
  %3267 = vset.pattern.permute.xlu0 0
  %3268 = vperm.xlu0 %3267, %v3265
  %v3269 = vpop.permute.xlu0 %3268
  %v3271 = vadd.f32 %v3264, %v3269
  %3272 = vst [vmem:[%s9] sm:$0xf] %v3271
  // Predicated region
  $region34: #{hr_module_forward.5} parent=0 // pred_check
    _
  $region35: #{hr_module_forward.5} parent=0 // pred_check_branch
    %3274 = sbr.rel (0) target = $region37
  $region36: #{hr_module_forward.5} parent=0 // pred_region
    _
  $region37: #{hr_module_forward.5} parent=0 // pred_fallthru
    _
  // Predicated region
  $region38: #{hr_module_forward.5} parent=0 // pred_check
    _
  $region39: #{hr_module_forward.5} parent=0 // pred_check_branch
    %3276 = sbr.rel (0) target = $region41
  $region40: #{hr_module_forward.5} parent=0 // pred_region
    _
  $region41: #{hr_module_forward.5} parent=0 // pred_fallthru
    _
  // Predicated region
  $region42: #{hr_module_forward.5} parent=0 // pred_check
    _
  $region43: #{hr_module_forward.5} parent=0 // pred_check_branch
    %3278 = sbr.rel (0) target = $region45
  $region44: #{hr_module_forward.5} parent=0 // pred_region
    _
  $region45: #{hr_module_forward.5} parent=0 // pred_fallthru
    _
  // Predicated region
  $region46: #{hr_module_forward.5} parent=0 // pred_check
    _
  $region47: #{hr_module_forward.5} parent=0 // pred_check_branch
    %3280 = sbr.rel (0) target = $region49
  $region48: #{hr_module_forward.5} parent=0 // pred_region
    _
  $region49: #{hr_module_forward.5} parent=0 // pred_fallthru
    _

// kernel: hr_module_forward.4
$region0: #{hr_module_forward.4}
  #allocation0 [shape = 'u32[]', space=smem, size = 0x4, offset = 0x4, fixed_abs, tag = 'smem constant byte address 0x4 - core index']
  #allocation1 [shape = 'u32[144,128]{1,0:T(1,128)}', space=vmem, size = 0x12000, scoped, tag = 'internal scratch']
  #allocation2 [shape = 'f32[4,290]{1,0:T(4,128)}', space=vmem, size = 0x1800, scoped, tag = 'scratch operand']
  %s0 = inlined_call_operand.vmem [shape: f32[4,512], index: 0, kind: input, shape index: {}]
  %s1 = inlined_call_operand.vmem [shape: f32[144,4], index: 1, kind: input, shape index: {}]
  %s2 = inlined_call_operand.vmem [shape: f32[16,1], index: 2, kind: input, shape index: {}]
  %s3 = inlined_call_operand.vmem [shape: f32[16,1], index: 3, kind: input, shape index: {}]
  %s4 = inlined_call_operand.vmem [shape: f32[9,256], index: 4, kind: input, shape index: {}]
  %s5 = inlined_call_operand.vmem [shape: f32[4,512], index: 5, kind: output, shape index: {}]
  %s6 = sld [smem:[#allocation0]]
  $region53: #{hr_module_forward.4} parent=0
    _
  %s8 = ssub.s32 1, %s6
  %s9 = scalar_select 0, %s8, %s6
  loop: start=0, step=1, limit=4
  $region2: #{hr_module_forward.4} parent=0 // loop_pre_header
    _
  $region3: #{hr_module_forward.4} parent=0 // loop_header
    %s11 = sphi 0, %s15
    %p12 = scmp.ge.s32.totalorder %s11, 4
    %s21 = sphi 0, %s23
    %s24 = sphi 0, %s21
    %s25 = sphi 0, %s24
    %s41 = sphi 0, %s25
    %s45 = sphi 0, %s45
    %s47 = sphi 0, %s45
    %s48 = sphi 0, %s47
    %s62 = sphi 0, %s48
    %s66 = sphi 0, %s66
    %s68 = sphi 0, %s66
    %s69 = sphi 0, %s68
    %s83 = sphi 0, %s69
    %s87 = sphi 0, %s87
    %s89 = sphi 0, %s87
    %s90 = sphi 0, %s89
    %s104 = sphi 0, %s90
    %s108 = sphi 0, %s108
    %s110 = sphi 0, %s108
    %s111 = sphi 0, %s110
    %s125 = sphi 0, %s111
    %s131 = sphi 0, %s133
    %s134 = sphi 0, %s131
    %s135 = sphi 0, %s134
    %s151 = sphi 0, %s135
  $region4: #{hr_module_forward.4} parent=0 // loop_header_branch
    %14 = sbr.rel (%p12) target = $region8
  $region5: #{hr_module_forward.4} parent=0 // loop_body
    %s16 = ssub.s32 %s11, 1
    %s17 = ssub.s32 %s11, 2
    %s18 = sadd.s32 %s11, 1
    %s19 = ssub.s32 %s11, %s18
    %p20 = scmp.eq.s32.totalorder %s19, 0
    %s22 = sadd.s32 %s21, 1
    %s23 = scalar_select %p20, %s21, %s22
    %p26 = pneg %p20
    %p27 = scmp.eq.s32.totalorder %s11, 1
    %p28 = por %p26, %p27
    %p29 = scmp.ne.s32.totalorder %s21, %s24
    %p30 = scmp.eq.s32.totalorder %s11, 0
    %p31 = por %p29, %p30
    %p32 = scmp.ne.s32.totalorder %s21, %s24
    %p33 = scmp.eq.s32.totalorder %s16, 1
    %p34 = por %p32, %p33
    %p35 = scmp.ne.s32.totalorder %s24, %s25
    %p36 = scmp.eq.s32.totalorder %s16, 0
    %p37 = por %p35, %p36
    %p38 = scmp.ne.s32.totalorder %s24, %s25
    %p39 = scmp.eq.s32.totalorder %s17, 1
    %p40 = por %p38, %p39
    %p42 = scmp.ne.s32.totalorder %s25, %s41
    %p43 = scmp.eq.s32.totalorder %s17, 0
    %p44 = por %p42, %p43
    %s46 = sadd.s32 %s45, 1
    %p49 = scmp.eq.s32.totalorder %s11, 1
    %p50 = scmp.ne.s32.totalorder %s45, %s47
    %p51 = scmp.eq.s32.totalorder %s11, 0
    %p52 = por %p50, %p51
    %p53 = scmp.ne.s32.totalorder %s45, %s47
    %p54 = scmp.eq.s32.totalorder %s16, 1
    %p55 = por %p53, %p54
    %p56 = scmp.ne.s32.totalorder %s47, %s48
    %p57 = scmp.eq.s32.totalorder %s16, 0
    %p58 = por %p56, %p57
    %p59 = scmp.ne.s32.totalorder %s47, %s48
    %p60 = scmp.eq.s32.totalorder %s17, 1
    %p61 = por %p59, %p60
    %p63 = scmp.ne.s32.totalorder %s48, %s62
    %p64 = scmp.eq.s32.totalorder %s17, 0
    %p65 = por %p63, %p64
    %s67 = sadd.s32 %s66, 1
    %p70 = scmp.eq.s32.totalorder %s11, 1
    %p71 = scmp.ne.s32.totalorder %s66, %s68
    %p72 = scmp.eq.s32.totalorder %s11, 0
    %p73 = por %p71, %p72
    %p74 = scmp.ne.s32.totalorder %s66, %s68
    %p75 = scmp.eq.s32.totalorder %s16, 1
    %p76 = por %p74, %p75
    %p77 = scmp.ne.s32.totalorder %s68, %s69
    %p78 = scmp.eq.s32.totalorder %s16, 0
    %p79 = por %p77, %p78
    %p80 = scmp.ne.s32.totalorder %s68, %s69
    %p81 = scmp.eq.s32.totalorder %s17, 1
    %p82 = por %p80, %p81
    %p84 = scmp.ne.s32.totalorder %s69, %s83
    %p85 = scmp.eq.s32.totalorder %s17, 0
    %p86 = por %p84, %p85
    %s88 = sadd.s32 %s87, 1
    %p91 = scmp.eq.s32.totalorder %s11, 1
    %p92 = scmp.ne.s32.totalorder %s87, %s89
    %p93 = scmp.eq.s32.totalorder %s11, 0
    %p94 = por %p92, %p93
    %p95 = scmp.ne.s32.totalorder %s87, %s89
    %p96 = scmp.eq.s32.totalorder %s16, 1
    %p97 = por %p95, %p96
    %p98 = scmp.ne.s32.totalorder %s89, %s90
    %p99 = scmp.eq.s32.totalorder %s16, 0
    %p100 = por %p98, %p99
    %p101 = scmp.ne.s32.totalorder %s89, %s90
    %p102 = scmp.eq.s32.totalorder %s17, 1
    %p103 = por %p101, %p102
    %p105 = scmp.ne.s32.totalorder %s90, %s104
    %p106 = scmp.eq.s32.totalorder %s17, 0
    %p107 = por %p105, %p106
    %s109 = sadd.s32 %s108, 1
    %p112 = scmp.eq.s32.totalorder %s11, 1
    %p113 = scmp.ne.s32.totalorder %s108, %s110
    %p114 = scmp.eq.s32.totalorder %s11, 0
    %p115 = por %p113, %p114
    %p116 = scmp.ne.s32.totalorder %s108, %s110
    %p117 = scmp.eq.s32.totalorder %s16, 1
    %p118 = por %p116, %p117
    %p119 = scmp.ne.s32.totalorder %s110, %s111
    %p120 = scmp.eq.s32.totalorder %s16, 0
    %p121 = por %p119, %p120
    %p122 = scmp.ne.s32.totalorder %s110, %s111
    %p123 = scmp.eq.s32.totalorder %s17, 1
    %p124 = por %p122, %p123
    %p126 = scmp.ne.s32.totalorder %s111, %s125
    %p127 = scmp.eq.s32.totalorder %s17, 0
    %p128 = por %p126, %p127
    %s129 = ssub.s32 %s11, %s18
    %p130 = scmp.eq.s32.totalorder %s129, 0
    %s132 = sadd.s32 %s131, 1
    %s133 = scalar_select %p130, %s131, %s132
    %p136 = pneg %p130
    %p137 = scmp.eq.s32.totalorder %s11, 1
    %p138 = por %p136, %p137
    %p139 = scmp.ne.s32.totalorder %s131, %s134
    %p140 = scmp.eq.s32.totalorder %s11, 0
    %p141 = por %p139, %p140
    %p142 = scmp.ne.s32.totalorder %s131, %s134
    %p143 = scmp.eq.s32.totalorder %s16, 1
    %p144 = por %p142, %p143
    %p145 = scmp.ne.s32.totalorder %s134, %s135
    %p146 = scmp.eq.s32.totalorder %s16, 0
    %p147 = por %p145, %p146
    %p148 = scmp.ne.s32.totalorder %s134, %s135
    %p149 = scmp.eq.s32.totalorder %s17, 1
    %p150 = por %p148, %p149
    %p152 = scmp.ne.s32.totalorder %s135, %s151
    %p153 = scmp.eq.s32.totalorder %s17, 0
    %p154 = por %p152, %p153
    %p155 = scmp.le.s32.totalorder 1, %s11
    %p156 = scmp.lt.s32.totalorder %s11, 3
    %p157 = pnand %p155, %p156
    %p158 = pneg %p157
    // Predicated region
    $region9: #{hr_module_forward.4} parent=5 // pred_check
      _
    $region10: #{hr_module_forward.4} parent=5 // pred_check_branch
      %160 = sbr.rel (%p157) target = $region12
    $region11: #{hr_module_forward.4} parent=5 // pred_region
      %s161 = ssub.s32 %s11, 1
      // Predicated region
      $region13: #{hr_module_forward.4} parent=11 // pred_check
        %p162 = pneg %p58
      $region14: #{hr_module_forward.4} parent=11 // pred_check_branch
        %164 = sbr.rel (%p162) target = $region16
      $region15: #{hr_module_forward.4} parent=11 // pred_region
        _
      $region16: #{hr_module_forward.4} parent=11 // pred_fallthru
        _
      // Predicated region
      $region17: #{hr_module_forward.4} parent=11 // pred_check
        %p165 = pneg %p79
      $region18: #{hr_module_forward.4} parent=11 // pred_check_branch
        %167 = sbr.rel (%p165) target = $region20
      $region19: #{hr_module_forward.4} parent=11 // pred_region
        _
      $region20: #{hr_module_forward.4} parent=11 // pred_fallthru
        _
      // Predicated region
      $region21: #{hr_module_forward.4} parent=11 // pred_check
        %p168 = pneg %p100
      $region22: #{hr_module_forward.4} parent=11 // pred_check_branch
        %170 = sbr.rel (%p168) target = $region24
      $region23: #{hr_module_forward.4} parent=11 // pred_region
        _
      $region24: #{hr_module_forward.4} parent=11 // pred_fallthru
        _
      // Predicated region
      $region25: #{hr_module_forward.4} parent=11 // pred_check
        %p171 = pneg %p121
      $region26: #{hr_module_forward.4} parent=11 // pred_check_branch
        %173 = sbr.rel (%p171) target = $region28
      $region27: #{hr_module_forward.4} parent=11 // pred_region
        _
      $region28: #{hr_module_forward.4} parent=11 // pred_fallthru
        _
    $region12: #{hr_module_forward.4} parent=5 // pred_fallthru
      _
    %p174 = scmp.lt.s32.totalorder %s11, 2
    // Predicated region
    $region29: #{hr_module_forward.4} parent=5 // pred_check
      %p175 = pneg %p174
    $region30: #{hr_module_forward.4} parent=5 // pred_check_branch
      %177 = sbr.rel (%p175) target = $region32
    $region31: #{hr_module_forward.4} parent=5 // pred_region
      // Predicated region
      $region33: #{hr_module_forward.4} parent=31 // pred_check
        %p178 = pneg %p31
      $region34: #{hr_module_forward.4} parent=31 // pred_check_branch
        %180 = sbr.rel (%p178) target = $region36
      $region35: #{hr_module_forward.4} parent=31 // pred_region
        %s181 = smul.u32 2, %s11
        %p182 = scmp.lt.s32.totalorder %s181, 3
        %s183 = scalar_select %p182, %s181, 3
        %s184 = smul.addr %s183, 4
        %s185 = scalar_lea.vmem %s0, %s184
        %s186 = smul.u32 2, %s11
      $region36: #{hr_module_forward.4} parent=31 // pred_fallthru
        _
    $region32: #{hr_module_forward.4} parent=5 // pred_fallthru
      _
    %p187 = scmp.le.s32.totalorder 1, %s11
    %p188 = scmp.lt.s32.totalorder %s11, 3
    %p189 = pnand %p187, %p188
    %p190 = pneg %p189
    // Predicated region
    $region37: #{hr_module_forward.4} parent=5 // pred_check
      _
    $region38: #{hr_module_forward.4} parent=5 // pred_check_branch
      %192 = sbr.rel (%p189) target = $region40
    $region39: #{hr_module_forward.4} parent=5 // pred_region
      %s193 = ssub.s32 %s11, 1
      %s194 = smul.u32 2, %s16
      %p195 = scmp.lt.s32.totalorder %s194, 3
      %s196 = scalar_select %p195, %s194, 3
      %s197 = smul.addr %s196, 4
      %s198 = scalar_lea.vmem %s0, %s197
      %p199 = pneg %p37
      %p200 = pneg %p34
      %p201 = pneg %p58
      %p202 = pneg %p55
      %p203 = pneg %p79
      %p204 = pneg %p76
      %p205 = pneg %p100
      %p206 = pneg %p97
      %p207 = pneg %p121
      %p208 = pneg %p118
      %p209 = pneg %p147
      %p210 = pneg %p144
      %s211 = smul.u32 2, %s16
      %p212 = scmp.lt.s32.totalorder %s211, 3
      %s213 = scalar_select %p212, %s211, 3
      %s214 = smul.addr %s213, 4
      %s215 = scalar_lea.vmem %s5, %s214
      %s216 = smul.u32 2, %s16
      %p217 = scmp.lt.s32.totalorder %s216, 3
      %s218 = scalar_select %p217, %s216, 3
      %s219 = smul.addr %s218, 4
      %s220 = scalar_lea.vmem %s0, %s219
      %s221 = smul.u32 2, %s16
      %s222 = smul.u32 2, %s16
      %p223 = scmp.lt.s32.totalorder %s222, 3
      %s224 = scalar_select %p223, %s222, 3
      %s225 = smul.addr %s224, 4
      %s226 = scalar_lea.vmem %s5, %s225
      %s227 = smul.u32 2, %s16
      %228 = vst [vmem:[#allocation2] sm:$0xff] 0.0
      %vm229 = vcmask 273408
      %230 = vst.msk [vmem:[#allocation2 + $0x8] sm:$0xf] %vm229, 0.0
      %v231 = vld [vmem:[%s4] ss:$8 sm:$0x3]
      %s232 = scalar_lea.vmem %s4, 1
      %v233 = vld [vmem:[%s232] ss:$8 sm:$0x3]
      %s234 = scalar_lea.vmem %s4, 2
      %v235 = vld [vmem:[%s234] ss:$8 sm:$0x3]
      %s236 = scalar_lea.vmem %s4, 3
      %v237 = vld [vmem:[%s236] ss:$8 sm:$0x3]
      %s238 = scalar_lea.vmem %s4, 5
      %v239 = vld [vmem:[%s238] ss:$8 sm:$0x3]
      %s240 = scalar_lea.vmem %s4, 6
      %v241 = vld [vmem:[%s240] ss:$8 sm:$0x3]
      %s242 = scalar_lea.vmem %s4, 7
      %v243 = vld [vmem:[%s242] ss:$8 sm:$0x3]
      %s244 = scalar_lea.vmem %s4, 16
      %v245 = vld [vmem:[%s244] ss:$8 sm:$0x3]
      %v246 = vld [vmem:[%s220] sm:$0xff]
      %248 = vrot.lane.b32.xlu0 %v246, 17
      %v249 = vpop.permute.xlu0 %248
      %v250 = vrot.slane %v249, 4
      %vm251 = vcmask 138240
      %v252 = vsel %vm251, %v250, %v249
      %vm255 = vcmask 1043592
      %vm256 = vcmask 1047556
      %vm257 = vmor %vm256, %vm255
      %258 = vst.msk [vmem:[#allocation2] sm:$0xff] %vm257, %v252
      %vm259 = vcmask 134144
      %260 = vst.msk [vmem:[#allocation2 + $0x8] sm:$0xf] %vm259, %v250
      %v261 = vld [vmem:[#allocation2] sm:$0xff]
      %v263 = vlaneseq
      %v264 = vshrl.u32 %v263, 7
      %v265 = vsub.s32 0, %v264
      %v266 = vrot.slane %v231, %v265
      %v267 = vlaneseq
      %v268 = vshrl.u32 %v267, 7
      %v269 = vsub.s32 1, %v268
      %v270 = vrot.slane %v231, %v269
      %v271 = vcombine.low %v266, %v270
      %v273 = vmul.f32 %v261, %v271
      %v274 = vld [vmem:[%s1] sm:$0xf]
      %v275 = vld [vmem:[#allocation2 + $0x8] sm:$0xf]
      %v277 = vlaneseq
      %v278 = vshrl.u32 %v277, 7
      %v279 = vsub.s32 0, %v278
      %v280 = vrot.slane %v233, %v279
      %v281 = vlaneseq
      %v282 = vshrl.u32 %v281, 7
      %v283 = vsub.s32 1, %v282
      %v284 = vrot.slane %v233, %v283
      %v285 = vcombine.low %v280, %v284
      %286 = vrot.lane.b32.xlu0 %v285, 1
      %v287 = vpop.permute.xlu0 %286
      %v288 = vrot.slane %v287, 4
      %vm289 = vcmask 7168
      %v290 = vsel %vm289, %v288, %v287
      %v293 = vmul.f32 %v261, %v290
      %v294 = vmul.f32 %v275, %v288
      %v295 = vld [vmem:[%s1 + $0x4] sm:$0xf]
      %v298 = vcombine.high %v293, %v293
      %299 = vrot.lane.b32.xlu0 %v293, 127
      %v300 = vpop.permute.xlu0 %299
      %301 = vrot.lane.b32.xlu0 %v298, 127
      %v302 = vpop.permute.xlu0 %301
      %303 = vrot.lane.b32.xlu0 %v294, 127
      %v304 = vpop.permute.xlu0 %303
      %vm305 = vcmask 1039360
      %v306 = vsel %vm305, %v300, %v302
      %v307 = vsel %vm305, %v302, %v304
      %vm308 = vcmask 31744
      %v310 = vsel %vm308, %v295, 0
      %vm312 = vcmask 1043456
      %v313 = vsel %vm312, %v306, 0
      %v315 = vsel %vm312, %v307, 0
      %317 = vmatprep.subr.mxu0 %v315
      %318 = vmatpush1.msra.mxu0 %v313
      %319 = vmatprep.subr.mxu0 0.0
      %320 = vmatpush1.msra.mxu0 0.0
      %321 = vmatprep.subr.mxu0 0.0
      %322 = vmatpush1.msra.mxu0 0.0
      %323 = vmatprep.subr.mxu0 0.0
      %324 = vmatpush1.msra.mxu0 0.0
      %325 = vmatprep.subr.mxu0 0.0
      %326 = vmatpush1.msra.mxu0 0.0
      %327 = vmatprep.subr.mxu0 0.0
      %328 = vmatpush1.msra.mxu0 0.0
      %329 = vmatprep.subr.mxu0 0.0
      %330 = vmatpush1.msra.mxu0 0.0
      %331 = vmatprep.subr.mxu0 0.0
      %332 = vmatpush1.msra.mxu0 0.0
      %333 = vmatprep.subr.mxu0 0.0
      %334 = vmatpush1.msra.mxu0 0.0
      %335 = vmatprep.subr.mxu0 0.0
      %336 = vmatpush1.msra.mxu0 0.0
      %337 = vmatprep.subr.mxu0 0.0
      %338 = vmatpush1.msra.mxu0 0.0
      %339 = vmatprep.subr.mxu0 0.0
      %340 = vmatpush1.msra.mxu0 0.0
      %341 = vmatprep.subr.mxu0 0.0
      %342 = vmatpush1.msra.mxu0 0.0
      %343 = vmatprep.subr.mxu0 0.0
      %344 = vmatpush1.msra.mxu0 0.0
      %345 = vmatprep.subr.mxu0 0.0
      %346 = vmatpush1.msra.mxu0 0.0
      %347 = vmatprep.subr.mxu0 0.0
      %348 = vmatpush1.msra.mxu0 0.0
      %349 = vmatprep.subr.mxu0 0.0
      %350 = vmatpush1.msra.mxu0 0.0
      %351 = vmatprep.subr.mxu0 0.0
      %352 = vmatpush1.msra.mxu0 0.0
      %353 = vmatprep.subr.mxu0 0.0
      %354 = vmatpush1.msra.mxu0 0.0
      %355 = vmatprep.subr.mxu0 0.0
      %356 = vmatpush1.msra.mxu0 0.0
      %357 = vmatprep.subr.mxu0 0.0
      %358 = vmatpush1.msra.mxu0 0.0
      %359 = vmatprep.subr.mxu0 0.0
      %360 = vmatpush1.msra.mxu0 0.0
      %361 = vmatprep.subr.mxu0 0.0
      %362 = vmatpush1.msra.mxu0 0.0
      %363 = vmatprep.subr.mxu0 0.0
      %364 = vmatpush1.msra.mxu0 0.0
      %365 = vmatprep.subr.mxu0 0.0
      %366 = vmatpush1.msra.mxu0 0.0
      %367 = vmatprep.subr.mxu0 0.0
      %368 = vmatpush1.msra.mxu0 0.0
      %369 = vmatprep.subr.mxu0 0.0
      %370 = vmatpush1.msra.mxu0 0.0
      %371 = vmatprep.subr.mxu0 0.0
      %372 = vmatpush1.msra.mxu0 0.0
      %373 = vmatprep.subr.mxu0 0.0
      %374 = vmatpush1.msra.mxu0 0.0
      %375 = vmatprep.subr.mxu0 0.0
      %376 = vmatpush1.msra.mxu0 0.0
      %377 = vmatprep.subr.mxu0 0.0
      %378 = vmatpush1.msra.mxu0 0.0
      %379 = vmatprep.subr.mxu0 0.0
      %380 = vmatpush1.msra.mxu0 0.0
      %381 = vmatprep.mubr.f32.mxu0 0.0
      %382 = vmatmul.mubr.f32.gmra.mrb[0].mxu0 %v310
      %v383 = vpop.f32.mrb[0].mxu0
      %v384 = vadd.f32 0.0, %v383
      %v385 = vpop.f32.mrb[0].mxu0
      %v386 = vadd.f32 0.0, %v385
      %387 = vdwg.mxu0
      %v389 = vcombine.high %v273, %v273
      %v391 = vsel %vm308, %v274, 0
      %v393 = vsel %vm312, %v273, 0
      %v395 = vsel %vm312, %v389, 0
      %397 = vmatprep.subr.mxu0 %v395
      %398 = vmatpush1.msra.mxu0 %v393
      %399 = vmatprep.subr.mxu0 0.0
      %400 = vmatpush1.msra.mxu0 0.0
      %401 = vmatprep.subr.mxu0 0.0
      %402 = vmatpush1.msra.mxu0 0.0
      %403 = vmatprep.subr.mxu0 0.0
      %404 = vmatpush1.msra.mxu0 0.0
      %405 = vmatprep.subr.mxu0 0.0
      %406 = vmatpush1.msra.mxu0 0.0
      %407 = vmatprep.subr.mxu0 0.0
      %408 = vmatpush1.msra.mxu0 0.0
      %409 = vmatprep.subr.mxu0 0.0
      %410 = vmatpush1.msra.mxu0 0.0
      %411 = vmatprep.subr.mxu0 0.0
      %412 = vmatpush1.msra.mxu0 0.0
      %413 = vmatprep.subr.mxu0 0.0
      %414 = vmatpush1.msra.mxu0 0.0
      %415 = vmatprep.subr.mxu0 0.0
      %416 = vmatpush1.msra.mxu0 0.0
      %417 = vmatprep.subr.mxu0 0.0
      %418 = vmatpush1.msra.mxu0 0.0
      %419 = vmatprep.subr.mxu0 0.0
      %420 = vmatpush1.msra.mxu0 0.0
      %421 = vmatprep.subr.mxu0 0.0
      %422 = vmatpush1.msra.mxu0 0.0
      %423 = vmatprep.subr.mxu0 0.0
      %424 = vmatpush1.msra.mxu0 0.0
      %425 = vmatprep.subr.mxu0 0.0
      %426 = vmatpush1.msra.mxu0 0.0
      %427 = vmatprep.subr.mxu0 0.0
      %428 = vmatpush1.msra.mxu0 0.0
      %429 = vmatprep.subr.mxu0 0.0
      %430 = vmatpush1.msra.mxu0 0.0
      %431 = vmatprep.subr.mxu0 0.0
      %432 = vmatpush1.msra.mxu0 0.0
      %433 = vmatprep.subr.mxu0 0.0
      %434 = vmatpush1.msra.mxu0 0.0
      %435 = vmatprep.subr.mxu0 0.0
      %436 = vmatpush1.msra.mxu0 0.0
      %437 = vmatprep.subr.mxu0 0.0
      %438 = vmatpush1.msra.mxu0 0.0
      %439 = vmatprep.subr.mxu0 0.0
      %440 = vmatpush1.msra.mxu0 0.0
      %441 = vmatprep.subr.mxu0 0.0
      %442 = vmatpush1.msra.mxu0 0.0
      %443 = vmatprep.subr.mxu0 0.0
      %444 = vmatpush1.msra.mxu0 0.0
      %445 = vmatprep.subr.mxu0 0.0
      %446 = vmatpush1.msra.mxu0 0.0
      %447 = vmatprep.subr.mxu0 0.0
      %448 = vmatpush1.msra.mxu0 0.0
      %449 = vmatprep.subr.mxu0 0.0
      %450 = vmatpush1.msra.mxu0 0.0
      %451 = vmatprep.subr.mxu0 0.0
      %452 = vmatpush1.msra.mxu0 0.0
      %453 = vmatprep.subr.mxu0 0.0
      %454 = vmatpush1.msra.mxu0 0.0
      %455 = vmatprep.subr.mxu0 0.0
      %456 = vmatpush1.msra.mxu0 0.0
      %457 = vmatprep.subr.mxu0 0.0
      %458 = vmatpush1.msra.mxu0 0.0
      %459 = vmatprep.subr.mxu0 0.0
      %460 = vmatpush1.msra.mxu0 0.0
      %461 = vmatprep.mubr.f32.mxu0 0.0
      %462 = vmatmul.mubr.f32.gmra.mrb[0].mxu0 %v391
      %v463 = vpop.f32.mrb[0].mxu0
      %v464 = vadd.f32 %v384, %v463
      %v465 = vpop.f32.mrb[0].mxu0
      %v466 = vadd.f32 %v386, %v465
      %467 = vdwg.mxu0
      %v468 = vld [vmem:[#allocation2] sm:$0xff]
      %v469 = vld [vmem:[#allocation2 + $0x8] sm:$0xf]
      %v471 = vlaneseq
      %v472 = vshrl.u32 %v471, 7
      %v473 = vsub.s32 0, %v472
      %v474 = vrot.slane %v235, %v473
      %v475 = vlaneseq
      %v476 = vshrl.u32 %v475, 7
      %v477 = vsub.s32 1, %v476
      %v478 = vrot.slane %v235, %v477
      %v479 = vcombine.low %v474, %v478
      %480 = vrot.lane.b32.xlu0 %v479, 2
      %v481 = vpop.permute.xlu0 %480
      %v482 = vrot.slane %v481, 4
      %vm483 = vcmask 15360
      %v484 = vsel %vm483, %v482, %v481
      %v487 = vmul.f32 %v468, %v484
      %v488 = vmul.f32 %v469, %v482
      %v489 = vld [vmem:[%s1 + $0x8] sm:$0xf]
      %v492 = vcombine.high %v487, %v487
      %493 = vrot.lane.b32.xlu0 %v487, 126
      %v494 = vpop.permute.xlu0 %493
      %495 = vrot.lane.b32.xlu0 %v492, 126
      %v496 = vpop.permute.xlu0 %495
      %497 = vrot.lane.b32.xlu0 %v488, 126
      %v498 = vpop.permute.xlu0 %497
      %vm499 = vcmask 1031168
      %v500 = vsel %vm499, %v494, %v496
      %v501 = vsel %vm499, %v496, %v498
      %v503 = vsel %vm308, %v489, 0
      %v505 = vsel %vm312, %v500, 0
      %v507 = vsel %vm312, %v501, 0
      %509 = vmatprep.subr.mxu0 %v507
      %510 = vmatpush1.msra.mxu0 %v505
      %511 = vmatprep.subr.mxu0 0.0
      %512 = vmatpush1.msra.mxu0 0.0
      %513 = vmatprep.subr.mxu0 0.0
      %514 = vmatpush1.msra.mxu0 0.0
      %515 = vmatprep.subr.mxu0 0.0
      %516 = vmatpush1.msra.mxu0 0.0
      %517 = vmatprep.subr.mxu0 0.0
      %518 = vmatpush1.msra.mxu0 0.0
      %519 = vmatprep.subr.mxu0 0.0
      %520 = vmatpush1.msra.mxu0 0.0
      %521 = vmatprep.subr.mxu0 0.0
      %522 = vmatpush1.msra.mxu0 0.0
      %523 = vmatprep.subr.mxu0 0.0
      %524 = vmatpush1.msra.mxu0 0.0
      %525 = vmatprep.subr.mxu0 0.0
      %526 = vmatpush1.msra.mxu0 0.0
      %527 = vmatprep.subr.mxu0 0.0
      %528 = vmatpush1.msra.mxu0 0.0
      %529 = vmatprep.subr.mxu0 0.0
      %530 = vmatpush1.msra.mxu0 0.0
      %531 = vmatprep.subr.mxu0 0.0
      %532 = vmatpush1.msra.mxu0 0.0
      %533 = vmatprep.subr.mxu0 0.0
      %534 = vmatpush1.msra.mxu0 0.0
      %535 = vmatprep.subr.mxu0 0.0
      %536 = vmatpush1.msra.mxu0 0.0
      %537 = vmatprep.subr.mxu0 0.0
      %538 = vmatpush1.msra.mxu0 0.0
      %539 = vmatprep.subr.mxu0 0.0
      %540 = vmatpush1.msra.mxu0 0.0
      %541 = vmatprep.subr.mxu0 0.0
      %542 = vmatpush1.msra.mxu0 0.0
      %543 = vmatprep.subr.mxu0 0.0
      %544 = vmatpush1.msra.mxu0 0.0
      %545 = vmatprep.subr.mxu0 0.0
      %546 = vmatpush1.msra.mxu0 0.0
      %547 = vmatprep.subr.mxu0 0.0
      %548 = vmatpush1.msra.mxu0 0.0
      %549 = vmatprep.subr.mxu0 0.0
      %550 = vmatpush1.msra.mxu0 0.0
      %551 = vmatprep.subr.mxu0 0.0
      %552 = vmatpush1.msra.mxu0 0.0
      %553 = vmatprep.subr.mxu0 0.0
      %554 = vmatpush1.msra.mxu0 0.0
      %555 = vmatprep.subr.mxu0 0.0
      %556 = vmatpush1.msra.mxu0 0.0
      %557 = vmatprep.subr.mxu0 0.0
      %558 = vmatpush1.msra.mxu0 0.0
      %559 = vmatprep.subr.mxu0 0.0
      %560 = vmatpush1.msra.mxu0 0.0
      %561 = vmatprep.subr.mxu0 0.0
      %562 = vmatpush1.msra.mxu0 0.0
      %563 = vmatprep.subr.mxu0 0.0
      %564 = vmatpush1.msra.mxu0 0.0
      %565 = vmatprep.subr.mxu0 0.0
      %566 = vmatpush1.msra.mxu0 0.0
      %567 = vmatprep.subr.mxu0 0.0
      %568 = vmatpush1.msra.mxu0 0.0
      %569 = vmatprep.subr.mxu0 0.0
      %570 = vmatpush1.msra.mxu0 0.0
      %571 = vmatprep.subr.mxu0 0.0
      %572 = vmatpush1.msra.mxu0 0.0
      %573 = vmatprep.mubr.f32.mxu0 0.0
      %574 = vmatmul.mubr.f32.gmra.mrb[0].mxu0 %v503
      %v575 = vpop.f32.mrb[0].mxu0
      %v576 = vadd.f32 0.0, %v575
      %v577 = vpop.f32.mrb[0].mxu0
      %v578 = vadd.f32 0.0, %v577
      %579 = vdwg.mxu0
      %v580 = vadd.f32 %v464, %v576
      %v581 = vadd.f32 %v466, %v578
      %v582 = vld [vmem:[#allocation2] sm:$0xff]
      %v583 = vld [vmem:[#allocation2 + $0x8] sm:$0xf]
      %v585 = vlaneseq
      %v586 = vshrl.u32 %v585, 7
      %v587 = vsub.s32 0, %v586
      %v588 = vrot.slane %v237, %v587
      %v589 = vlaneseq
      %v590 = vshrl.u32 %v589, 7
      %v591 = vsub.s32 1, %v590
      %v592 = vrot.slane %v237, %v591
      %v593 = vcombine.low %v588, %v592
      %594 = vrot.lane.b32.xlu0 %v593, 16
      %v595 = vpop.permute.xlu0 %594
      %v596 = vrot.slane %v595, 4
      %vm597 = vcmask 130048
      %v598 = vsel %vm597, %v596, %v595
      %v601 = vmul.f32 %v582, %v598
      %v602 = vmul.f32 %v583, %v596
      %v603 = vld [vmem:[%s1 + $0xc] sm:$0xf]
      %v606 = vcombine.high %v601, %v601
      %607 = vrot.lane.b32.xlu0 %v601, 112
      %v608 = vpop.permute.xlu0 %607
      %609 = vrot.lane.b32.xlu0 %v606, 112
      %v610 = vpop.permute.xlu0 %609
      %611 = vrot.lane.b32.xlu0 %v602, 112
      %v612 = vpop.permute.xlu0 %611
      %vm613 = vcmask 916480
      %v614 = vsel %vm613, %v608, %v610
      %v615 = vsel %vm613, %v610, %v612
      %v617 = vsel %vm308, %v603, 0
      %v619 = vsel %vm312, %v614, 0
      %v621 = vsel %vm312, %v615, 0
      %623 = vmatprep.subr.mxu0 %v621
      %624 = vmatpush1.msra.mxu0 %v619
      %625 = vmatprep.subr.mxu0 0.0
      %626 = vmatpush1.msra.mxu0 0.0
      %627 = vmatprep.subr.mxu0 0.0
      %628 = vmatpush1.msra.mxu0 0.0
      %629 = vmatprep.subr.mxu0 0.0
      %630 = vmatpush1.msra.mxu0 0.0
      %631 = vmatprep.subr.mxu0 0.0
      %632 = vmatpush1.msra.mxu0 0.0
      %633 = vmatprep.subr.mxu0 0.0
      %634 = vmatpush1.msra.mxu0 0.0
      %635 = vmatprep.subr.mxu0 0.0
      %636 = vmatpush1.msra.mxu0 0.0
      %637 = vmatprep.subr.mxu0 0.0
      %638 = vmatpush1.msra.mxu0 0.0
      %639 = vmatprep.subr.mxu0 0.0
      %640 = vmatpush1.msra.mxu0 0.0
      %641 = vmatprep.subr.mxu0 0.0
      %642 = vmatpush1.msra.mxu0 0.0
      %643 = vmatprep.subr.mxu0 0.0
      %644 = vmatpush1.msra.mxu0 0.0
      %645 = vmatprep.subr.mxu0 0.0
      %646 = vmatpush1.msra.mxu0 0.0
      %647 = vmatprep.subr.mxu0 0.0
      %648 = vmatpush1.msra.mxu0 0.0
      %649 = vmatprep.subr.mxu0 0.0
      %650 = vmatpush1.msra.mxu0 0.0
      %651 = vmatprep.subr.mxu0 0.0
      %652 = vmatpush1.msra.mxu0 0.0
      %653 = vmatprep.subr.mxu0 0.0
      %654 = vmatpush1.msra.mxu0 0.0
      %655 = vmatprep.subr.mxu0 0.0
      %656 = vmatpush1.msra.mxu0 0.0
      %657 = vmatprep.subr.mxu0 0.0
      %658 = vmatpush1.msra.mxu0 0.0
      %659 = vmatprep.subr.mxu0 0.0
      %660 = vmatpush1.msra.mxu0 0.0
      %661 = vmatprep.subr.mxu0 0.0
      %662 = vmatpush1.msra.mxu0 0.0
      %663 = vmatprep.subr.mxu0 0.0
      %664 = vmatpush1.msra.mxu0 0.0
      %665 = vmatprep.subr.mxu0 0.0
      %666 = vmatpush1.msra.mxu0 0.0
      %667 = vmatprep.subr.mxu0 0.0
      %668 = vmatpush1.msra.mxu0 0.0
      %669 = vmatprep.subr.mxu0 0.0
      %670 = vmatpush1.msra.mxu0 0.0
      %671 = vmatprep.subr.mxu0 0.0
      %672 = vmatpush1.msra.mxu0 0.0
      %673 = vmatprep.subr.mxu0 0.0
      %674 = vmatpush1.msra.mxu0 0.0
      %675 = vmatprep.subr.mxu0 0.0
      %676 = vmatpush1.msra.mxu0 0.0
      %677 = vmatprep.subr.mxu0 0.0
      %678 = vmatpush1.msra.mxu0 0.0
      %679 = vmatprep.subr.mxu0 0.0
      %680 = vmatpush1.msra.mxu0 0.0
      %681 = vmatprep.subr.mxu0 0.0
      %682 = vmatpush1.msra.mxu0 0.0
      %683 = vmatprep.subr.mxu0 0.0
      %684 = vmatpush1.msra.mxu0 0.0
      %685 = vmatprep.subr.mxu0 0.0
      %686 = vmatpush1.msra.mxu0 0.0
      %687 = vmatprep.mubr.f32.mxu0 0.0
      %688 = vmatmul.mubr.f32.gmra.mrb[0].mxu0 %v617
      %v689 = vpop.f32.mrb[0].mxu0
      %v690 = vadd.f32 0.0, %v689
      %v691 = vpop.f32.mrb[0].mxu0
      %v692 = vadd.f32 0.0, %v691
      %693 = vdwg.mxu0
      %v694 = vadd.f32 %v580, %v690
      %v695 = vadd.f32 %v581, %v692
      %v696 = vld [vmem:[%s1 + $0x10] sm:$0xf]
      %v697 = vcombine.high %v246, %v246
      %v699 = vsel %vm308, %v696, 0
      %v701 = vsel %vm312, %v246, 0
      %v703 = vsel %vm312, %v697, 0
      %705 = vmatprep.subr.mxu0 %v703
      %706 = vmatpush1.msra.mxu0 %v701
      %707 = vmatprep.subr.mxu0 0.0
      %708 = vmatpush1.msra.mxu0 0.0
      %709 = vmatprep.subr.mxu0 0.0
      %710 = vmatpush1.msra.mxu0 0.0
      %711 = vmatprep.subr.mxu0 0.0
      %712 = vmatpush1.msra.mxu0 0.0
      %713 = vmatprep.subr.mxu0 0.0
      %714 = vmatpush1.msra.mxu0 0.0
      %715 = vmatprep.subr.mxu0 0.0
      %716 = vmatpush1.msra.mxu0 0.0
      %717 = vmatprep.subr.mxu0 0.0
      %718 = vmatpush1.msra.mxu0 0.0
      %719 = vmatprep.subr.mxu0 0.0
      %720 = vmatpush1.msra.mxu0 0.0
      %721 = vmatprep.subr.mxu0 0.0
      %722 = vmatpush1.msra.mxu0 0.0
      %723 = vmatprep.subr.mxu0 0.0
      %724 = vmatpush1.msra.mxu0 0.0
      %725 = vmatprep.subr.mxu0 0.0
      %726 = vmatpush1.msra.mxu0 0.0
      %727 = vmatprep.subr.mxu0 0.0
      %728 = vmatpush1.msra.mxu0 0.0
      %729 = vmatprep.subr.mxu0 0.0
      %730 = vmatpush1.msra.mxu0 0.0
      %731 = vmatprep.subr.mxu0 0.0
      %732 = vmatpush1.msra.mxu0 0.0
      %733 = vmatprep.subr.mxu0 0.0
      %734 = vmatpush1.msra.mxu0 0.0
      %735 = vmatprep.subr.mxu0 0.0
      %736 = vmatpush1.msra.mxu0 0.0
      %737 = vmatprep.subr.mxu0 0.0
      %738 = vmatpush1.msra.mxu0 0.0
      %739 = vmatprep.subr.mxu0 0.0
      %740 = vmatpush1.msra.mxu0 0.0
      %741 = vmatprep.subr.mxu0 0.0
      %742 = vmatpush1.msra.mxu0 0.0
      %743 = vmatprep.subr.mxu0 0.0
      %744 = vmatpush1.msra.mxu0 0.0
      %745 = vmatprep.subr.mxu0 0.0
      %746 = vmatpush1.msra.mxu0 0.0
      %747 = vmatprep.subr.mxu0 0.0
      %748 = vmatpush1.msra.mxu0 0.0
      %749 = vmatprep.subr.mxu0 0.0
      %750 = vmatpush1.msra.mxu0 0.0
      %751 = vmatprep.subr.mxu0 0.0
      %752 = vmatpush1.msra.mxu0 0.0
      %753 = vmatprep.subr.mxu0 0.0
      %754 = vmatpush1.msra.mxu0 0.0
      %755 = vmatprep.subr.mxu0 0.0
      %756 = vmatpush1.msra.mxu0 0.0
      %757 = vmatprep.subr.mxu0 0.0
      %758 = vmatpush1.msra.mxu0 0.0
      %759 = vmatprep.subr.mxu0 0.0
      %760 = vmatpush1.msra.mxu0 0.0
      %761 = vmatprep.subr.mxu0 0.0
      %762 = vmatpush1.msra.mxu0 0.0
      %763 = vmatprep.subr.mxu0 0.0
      %764 = vmatpush1.msra.mxu0 0.0
      %765 = vmatprep.subr.mxu0 0.0
      %766 = vmatpush1.msra.mxu0 0.0
      %767 = vmatprep.subr.mxu0 0.0
      %768 = vmatpush1.msra.mxu0 0.0
      %769 = vmatprep.mubr.f32.mxu0 0.0
      %770 = vmatmul.mubr.f32.gmra.mrb[0].mxu0 %v699
      %v771 = vpop.f32.mrb[0].mxu0
      %v772 = vadd.f32 0.0, %v771
      %v773 = vpop.f32.mrb[0].mxu0
      %v774 = vadd.f32 0.0, %v773
      %775 = vdwg.mxu0
      %v776 = vadd.f32 %v694, %v772
      %v777 = vadd.f32 %v695, %v774
      %v778 = vld [vmem:[#allocation2] sm:$0xff]
      %v779 = vld [vmem:[#allocation2 + $0x8] sm:$0xf]
      %v781 = vlaneseq
      %v782 = vshrl.u32 %v781, 7
      %v783 = vsub.s32 0, %v782
      %v784 = vrot.slane %v239, %v783
      %v785 = vlaneseq
      %v786 = vshrl.u32 %v785, 7
      %v787 = vsub.s32 1, %v786
      %v788 = vrot.slane %v239, %v787
      %v789 = vcombine.low %v784, %v788
      %790 = vrot.lane.b32.xlu0 %v789, 18
      %v791 = vpop.permute.xlu0 %790
      %v792 = vrot.slane %v791, 4
      %vm793 = vcmask 146432
      %v794 = vsel %vm793, %v792, %v791
      %v797 = vmul.f32 %v778, %v794
      %v798 = vmul.f32 %v779, %v792
      %v799 = vld [vmem:[%s1 + $0x14] sm:$0xf]
      %v802 = vcombine.high %v797, %v797
      %803 = vrot.lane.b32.xlu0 %v797, 110
      %v804 = vpop.permute.xlu0 %803
      %805 = vrot.lane.b32.xlu0 %v802, 110
      %v806 = vpop.permute.xlu0 %805
      %807 = vrot.lane.b32.xlu0 %v798, 110
      %v808 = vpop.permute.xlu0 %807
      %vm809 = vcmask 900096
      %v810 = vsel %vm809, %v804, %v806
      %v811 = vsel %vm809, %v806, %v808
      %v813 = vsel %vm308, %v799, 0
      %v815 = vsel %vm312, %v810, 0
      %v817 = vsel %vm312, %v811, 0
      %819 = vmatprep.subr.mxu0 %v817
      %820 = vmatpush1.msra.mxu0 %v815
      %821 = vmatprep.subr.mxu0 0.0
      %822 = vmatpush1.msra.mxu0 0.0
      %823 = vmatprep.subr.mxu0 0.0
      %824 = vmatpush1.msra.mxu0 0.0
      %825 = vmatprep.subr.mxu0 0.0
      %826 = vmatpush1.msra.mxu0 0.0
      %827 = vmatprep.subr.mxu0 0.0
      %828 = vmatpush1.msra.mxu0 0.0
      %829 = vmatprep.subr.mxu0 0.0
      %830 = vmatpush1.msra.mxu0 0.0
      %831 = vmatprep.subr.mxu0 0.0
      %832 = vmatpush1.msra.mxu0 0.0
      %833 = vmatprep.subr.mxu0 0.0
      %834 = vmatpush1.msra.mxu0 0.0
      %835 = vmatprep.subr.mxu0 0.0
      %836 = vmatpush1.msra.mxu0 0.0
      %837 = vmatprep.subr.mxu0 0.0
      %838 = vmatpush1.msra.mxu0 0.0
      %839 = vmatprep.subr.mxu0 0.0
      %840 = vmatpush1.msra.mxu0 0.0
      %841 = vmatprep.subr.mxu0 0.0
      %842 = vmatpush1.msra.mxu0 0.0
      %843 = vmatprep.subr.mxu0 0.0
      %844 = vmatpush1.msra.mxu0 0.0
      %845 = vmatprep.subr.mxu0 0.0
      %846 = vmatpush1.msra.mxu0 0.0
      %847 = vmatprep.subr.mxu0 0.0
      %848 = vmatpush1.msra.mxu0 0.0
      %849 = vmatprep.subr.mxu0 0.0
      %850 = vmatpush1.msra.mxu0 0.0
      %851 = vmatprep.subr.mxu0 0.0
      %852 = vmatpush1.msra.mxu0 0.0
      %853 = vmatprep.subr.mxu0 0.0
      %854 = vmatpush1.msra.mxu0 0.0
      %855 = vmatprep.subr.mxu0 0.0
      %856 = vmatpush1.msra.mxu0 0.0
      %857 = vmatprep.subr.mxu0 0.0
      %858 = vmatpush1.msra.mxu0 0.0
      %859 = vmatprep.subr.mxu0 0.0
      %860 = vmatpush1.msra.mxu0 0.0
      %861 = vmatprep.subr.mxu0 0.0
      %862 = vmatpush1.msra.mxu0 0.0
      %863 = vmatprep.subr.mxu0 0.0
      %864 = vmatpush1.msra.mxu0 0.0
      %865 = vmatprep.subr.mxu0 0.0
      %866 = vmatpush1.msra.mxu0 0.0
      %867 = vmatprep.subr.mxu0 0.0
      %868 = vmatpush1.msra.mxu0 0.0
      %869 = vmatprep.subr.mxu0 0.0
      %870 = vmatpush1.msra.mxu0 0.0
      %871 = vmatprep.subr.mxu0 0.0
      %872 = vmatpush1.msra.mxu0 0.0
      %873 = vmatprep.subr.mxu0 0.0
      %874 = vmatpush1.msra.mxu0 0.0
      %875 = vmatprep.subr.mxu0 0.0
      %876 = vmatpush1.msra.mxu0 0.0
      %877 = vmatprep.subr.mxu0 0.0
      %878 = vmatpush1.msra.mxu0 0.0
      %879 = vmatprep.subr.mxu0 0.0
      %880 = vmatpush1.msra.mxu0 0.0
      %881 = vmatprep.subr.mxu0 0.0
      %882 = vmatpush1.msra.mxu0 0.0
      %883 = vmatprep.mubr.f32.mxu0 0.0
      %884 = vmatmul.mubr.f32.gmra.mrb[0].mxu0 %v813
      %v885 = vpop.f32.mrb[0].mxu0
      %v886 = vadd.f32 0.0, %v885
      %v887 = vpop.f32.mrb[0].mxu0
      %v888 = vadd.f32 0.0, %v887
      %889 = vdwg.mxu0
      %v890 = vadd.f32 %v776, %v886
      %v891 = vadd.f32 %v777, %v888
      %v892 = vld [vmem:[#allocation2] sm:$0xff]
      %v893 = vld [vmem:[#allocation2 + $0x8] sm:$0xf]
      %v895 = vlaneseq
      %v896 = vshrl.u32 %v895, 7
      %v897 = vsub.s32 0, %v896
      %v898 = vrot.slane %v241, %v897
      %v899 = vlaneseq
      %v900 = vshrl.u32 %v899, 7
      %v901 = vsub.s32 1, %v900
      %v902 = vrot.slane %v241, %v901
      %v903 = vcombine.low %v898, %v902
      %904 = vrot.lane.b32.xlu0 %v903, 32
      %v905 = vpop.permute.xlu0 %904
      %v906 = vrot.slane %v905, 4
      %vm907 = vcmask 261120
      %v908 = vsel %vm907, %v906, %v905
      %v911 = vmul.f32 %v892, %v908
      %v912 = vmul.f32 %v893, %v906
      %v913 = vld [vmem:[%s1 + $0x18] sm:$0xf]
      %v916 = vcombine.high %v911, %v911
      %917 = vrot.lane.b32.xlu0 %v911, 96
      %v918 = vpop.permute.xlu0 %917
      %919 = vrot.lane.b32.xlu0 %v916, 96
      %v920 = vpop.permute.xlu0 %919
      %921 = vrot.lane.b32.xlu0 %v912, 96
      %v922 = vpop.permute.xlu0 %921
      %vm923 = vcmask 785408
      %v924 = vsel %vm923, %v918, %v920
      %v925 = vsel %vm923, %v920, %v922
      %v927 = vsel %vm308, %v913, 0
      %v929 = vsel %vm312, %v924, 0
      %v931 = vsel %vm312, %v925, 0
      %933 = vmatprep.subr.mxu0 %v931
      %934 = vmatpush1.msra.mxu0 %v929
      %935 = vmatprep.subr.mxu0 0.0
      %936 = vmatpush1.msra.mxu0 0.0
      %937 = vmatprep.subr.mxu0 0.0
      %938 = vmatpush1.msra.mxu0 0.0
      %939 = vmatprep.subr.mxu0 0.0
      %940 = vmatpush1.msra.mxu0 0.0
      %941 = vmatprep.subr.mxu0 0.0
      %942 = vmatpush1.msra.mxu0 0.0
      %943 = vmatprep.subr.mxu0 0.0
      %944 = vmatpush1.msra.mxu0 0.0
      %945 = vmatprep.subr.mxu0 0.0
      %946 = vmatpush1.msra.mxu0 0.0
      %947 = vmatprep.subr.mxu0 0.0
      %948 = vmatpush1.msra.mxu0 0.0
      %949 = vmatprep.subr.mxu0 0.0
      %950 = vmatpush1.msra.mxu0 0.0
      %951 = vmatprep.subr.mxu0 0.0
      %952 = vmatpush1.msra.mxu0 0.0
      %953 = vmatprep.subr.mxu0 0.0
      %954 = vmatpush1.msra.mxu0 0.0
      %955 = vmatprep.subr.mxu0 0.0
      %956 = vmatpush1.msra.mxu0 0.0
      %957 = vmatprep.subr.mxu0 0.0
      %958 = vmatpush1.msra.mxu0 0.0
      %959 = vmatprep.subr.mxu0 0.0
      %960 = vmatpush1.msra.mxu0 0.0
      %961 = vmatprep.subr.mxu0 0.0
      %962 = vmatpush1.msra.mxu0 0.0
      %963 = vmatprep.subr.mxu0 0.0
      %964 = vmatpush1.msra.mxu0 0.0
      %965 = vmatprep.subr.mxu0 0.0
      %966 = vmatpush1.msra.mxu0 0.0
      %967 = vmatprep.subr.mxu0 0.0
      %968 = vmatpush1.msra.mxu0 0.0
      %969 = vmatprep.subr.mxu0 0.0
      %970 = vmatpush1.msra.mxu0 0.0
      %971 = vmatprep.subr.mxu0 0.0
      %972 = vmatpush1.msra.mxu0 0.0
      %973 = vmatprep.subr.mxu0 0.0
      %974 = vmatpush1.msra.mxu0 0.0
      %975 = vmatprep.subr.mxu0 0.0
      %976 = vmatpush1.msra.mxu0 0.0
      %977 = vmatprep.subr.mxu0 0.0
      %978 = vmatpush1.msra.mxu0 0.0
      %979 = vmatprep.subr.mxu0 0.0
      %980 = vmatpush1.msra.mxu0 0.0
      %981 = vmatprep.subr.mxu0 0.0
      %982 = vmatpush1.msra.mxu0 0.0
      %983 = vmatprep.subr.mxu0 0.0
      %984 = vmatpush1.msra.mxu0 0.0
      %985 = vmatprep.subr.mxu0 0.0
      %986 = vmatpush1.msra.mxu0 0.0
      %987 = vmatprep.subr.mxu0 0.0
      %988 = vmatpush1.msra.mxu0 0.0
      %989 = vmatprep.subr.mxu0 0.0
      %990 = vmatpush1.msra.mxu0 0.0
      %991 = vmatprep.subr.mxu0 0.0
      %992 = vmatpush1.msra.mxu0 0.0
      %993 = vmatprep.subr.mxu0 0.0
      %994 = vmatpush1.msra.mxu0 0.0
      %995 = vmatprep.subr.mxu0 0.0
      %996 = vmatpush1.msra.mxu0 0.0
      %997 = vmatprep.mubr.f32.mxu0 0.0
      %998 = vmatmul.mubr.f32.gmra.mrb[0].mxu0 %v927
      %v999 = vpop.f32.mrb[0].mxu0
      %v1000 = vadd.f32 0.0, %v999
      %v1001 = vpop.f32.mrb[0].mxu0
      %v1002 = vadd.f32 0.0, %v1001
      %1003 = vdwg.mxu0
      %v1004 = vadd.f32 %v890, %v1000
      %v1005 = vadd.f32 %v891, %v1002
      %v1006 = vld [vmem:[#allocation2] sm:$0xff]
      %v1007 = vld [vmem:[#allocation2 + $0x8] sm:$0xf]
      %v1009 = vlaneseq
      %v1010 = vshrl.u32 %v1009, 7
      %v1011 = vsub.s32 0, %v1010
      %v1012 = vrot.slane %v243, %v1011
      %v1013 = vlaneseq
      %v1014 = vshrl.u32 %v1013, 7
      %v1015 = vsub.s32 1, %v1014
      %v1016 = vrot.slane %v243, %v1015
      %v1017 = vcombine.low %v1012, %v1016
      %1018 = vrot.lane.b32.xlu0 %v1017, 33
      %v1019 = vpop.permute.xlu0 %1018
      %v1020 = vrot.slane %v1019, 4
      %vm1021 = vcmask 269312
      %v1022 = vsel %vm1021, %v1020, %v1019
      %v1025 = vmul.f32 %v1006, %v1022
      %v1026 = vmul.f32 %v1007, %v1020
      %v1027 = vld [vmem:[%s1 + $0x1c] sm:$0xf]
      %v1030 = vcombine.high %v1025, %v1025
      %1031 = vrot.lane.b32.xlu0 %v1025, 95
      %v1032 = vpop.permute.xlu0 %1031
      %1033 = vrot.lane.b32.xlu0 %v1030, 95
      %v1034 = vpop.permute.xlu0 %1033
      %1035 = vrot.lane.b32.xlu0 %v1026, 95
      %v1036 = vpop.permute.xlu0 %1035
      %vm1037 = vcmask 777216
      %v1038 = vsel %vm1037, %v1032, %v1034
      %v1039 = vsel %vm1037, %v1034, %v1036
      %v1041 = vsel %vm308, %v1027, 0
      %v1043 = vsel %vm312, %v1038, 0
      %v1045 = vsel %vm312, %v1039, 0
      %1047 = vmatprep.subr.mxu0 %v1045
      %1048 = vmatpush1.msra.mxu0 %v1043
      %1049 = vmatprep.subr.mxu0 0.0
      %1050 = vmatpush1.msra.mxu0 0.0
      %1051 = vmatprep.subr.mxu0 0.0
      %1052 = vmatpush1.msra.mxu0 0.0
      %1053 = vmatprep.subr.mxu0 0.0
      %1054 = vmatpush1.msra.mxu0 0.0
      %1055 = vmatprep.subr.mxu0 0.0
      %1056 = vmatpush1.msra.mxu0 0.0
      %1057 = vmatprep.subr.mxu0 0.0
      %1058 = vmatpush1.msra.mxu0 0.0
      %1059 = vmatprep.subr.mxu0 0.0
      %1060 = vmatpush1.msra.mxu0 0.0
      %1061 = vmatprep.subr.mxu0 0.0
      %1062 = vmatpush1.msra.mxu0 0.0
      %1063 = vmatprep.subr.mxu0 0.0
      %1064 = vmatpush1.msra.mxu0 0.0
      %1065 = vmatprep.subr.mxu0 0.0
      %1066 = vmatpush1.msra.mxu0 0.0
      %1067 = vmatprep.subr.mxu0 0.0
      %1068 = vmatpush1.msra.mxu0 0.0
      %1069 = vmatprep.subr.mxu0 0.0
      %1070 = vmatpush1.msra.mxu0 0.0
      %1071 = vmatprep.subr.mxu0 0.0
      %1072 = vmatpush1.msra.mxu0 0.0
      %1073 = vmatprep.subr.mxu0 0.0
      %1074 = vmatpush1.msra.mxu0 0.0
      %1075 = vmatprep.subr.mxu0 0.0
      %1076 = vmatpush1.msra.mxu0 0.0
      %1077 = vmatprep.subr.mxu0 0.0
      %1078 = vmatpush1.msra.mxu0 0.0
      %1079 = vmatprep.subr.mxu0 0.0
      %1080 = vmatpush1.msra.mxu0 0.0
      %1081 = vmatprep.subr.mxu0 0.0
      %1082 = vmatpush1.msra.mxu0 0.0
      %1083 = vmatprep.subr.mxu0 0.0
      %1084 = vmatpush1.msra.mxu0 0.0
      %1085 = vmatprep.subr.mxu0 0.0
      %1086 = vmatpush1.msra.mxu0 0.0
      %1087 = vmatprep.subr.mxu0 0.0
      %1088 = vmatpush1.msra.mxu0 0.0
      %1089 = vmatprep.subr.mxu0 0.0
      %1090 = vmatpush1.msra.mxu0 0.0
      %1091 = vmatprep.subr.mxu0 0.0
      %1092 = vmatpush1.msra.mxu0 0.0
      %1093 = vmatprep.subr.mxu0 0.0
      %1094 = vmatpush1.msra.mxu0 0.0
      %1095 = vmatprep.subr.mxu0 0.0
      %1096 = vmatpush1.msra.mxu0 0.0
      %1097 = vmatprep.subr.mxu0 0.0
      %1098 = vmatpush1.msra.mxu0 0.0
      %1099 = vmatprep.subr.mxu0 0.0
      %1100 = vmatpush1.msra.mxu0 0.0
      %1101 = vmatprep.subr.mxu0 0.0
      %1102 = vmatpush1.msra.mxu0 0.0
      %1103 = vmatprep.subr.mxu0 0.0
      %1104 = vmatpush1.msra.mxu0 0.0
      %1105 = vmatprep.subr.mxu0 0.0
      %1106 = vmatpush1.msra.mxu0 0.0
      %1107 = vmatprep.subr.mxu0 0.0
      %1108 = vmatpush1.msra.mxu0 0.0
      %1109 = vmatprep.subr.mxu0 0.0
      %1110 = vmatpush1.msra.mxu0 0.0
      %1111 = vmatprep.mubr.f32.mxu0 0.0
      %1112 = vmatmul.mubr.f32.gmra.mrb[0].mxu0 %v1041
      %v1113 = vpop.f32.mrb[0].mxu0
      %v1114 = vadd.f32 0.0, %v1113
      %v1115 = vpop.f32.mrb[0].mxu0
      %v1116 = vadd.f32 0.0, %v1115
      %1117 = vdwg.mxu0
      %v1118 = vadd.f32 %v1004, %v1114
      %v1119 = vadd.f32 %v1005, %v1116
      %v1120 = vld [vmem:[#allocation2] sm:$0xff]
      %v1121 = vld [vmem:[#allocation2 + $0x8] sm:$0xf]
      %v1123 = vlaneseq
      %v1124 = vshrl.u32 %v1123, 7
      %v1125 = vsub.s32 0, %v1124
      %v1126 = vrot.slane %v245, %v1125
      %v1127 = vlaneseq
      %v1128 = vshrl.u32 %v1127, 7
      %v1129 = vsub.s32 1, %v1128
      %v1130 = vrot.slane %v245, %v1129
      %v1131 = vcombine.low %v1126, %v1130
      %1132 = vrot.lane.b32.xlu0 %v1131, 34
      %v1133 = vpop.permute.xlu0 %1132
      %v1134 = vrot.slane %v1133, 4
      %vm1135 = vcmask 277504
      %v1136 = vsel %vm1135, %v1134, %v1133
      %v1139 = vmul.f32 %v1120, %v1136
      %v1140 = vmul.f32 %v1121, %v1134
      %v1141 = vld [vmem:[%s1 + $0x20] sm:$0xf]
      %v1144 = vcombine.high %v1139, %v1139
      %1145 = vrot.lane.b32.xlu0 %v1139, 94
      %v1146 = vpop.permute.xlu0 %1145
      %1147 = vrot.lane.b32.xlu0 %v1144, 94
      %v1148 = vpop.permute.xlu0 %1147
      %1149 = vrot.lane.b32.xlu0 %v1140, 94
      %v1150 = vpop.permute.xlu0 %1149
      %vm1151 = vcmask 769024
      %v1152 = vsel %vm1151, %v1146, %v1148
      %v1153 = vsel %vm1151, %v1148, %v1150
      %v1155 = vsel %vm308, %v1141, 0
      %v1157 = vsel %vm312, %v1152, 0
      %v1159 = vsel %vm312, %v1153, 0
      %1161 = vmatprep.subr.mxu0 %v1159
      %1162 = vmatpush1.msra.mxu0 %v1157
      %1163 = vmatprep.subr.mxu0 0.0
      %1164 = vmatpush1.msra.mxu0 0.0
      %1165 = vmatprep.subr.mxu0 0.0
      %1166 = vmatpush1.msra.mxu0 0.0
      %1167 = vmatprep.subr.mxu0 0.0
      %1168 = vmatpush1.msra.mxu0 0.0
      %1169 = vmatprep.subr.mxu0 0.0
      %1170 = vmatpush1.msra.mxu0 0.0
      %1171 = vmatprep.subr.mxu0 0.0
      %1172 = vmatpush1.msra.mxu0 0.0
      %1173 = vmatprep.subr.mxu0 0.0
      %1174 = vmatpush1.msra.mxu0 0.0
      %1175 = vmatprep.subr.mxu0 0.0
      %1176 = vmatpush1.msra.mxu0 0.0
      %1177 = vmatprep.subr.mxu0 0.0
      %1178 = vmatpush1.msra.mxu0 0.0
      %1179 = vmatprep.subr.mxu0 0.0
      %1180 = vmatpush1.msra.mxu0 0.0
      %1181 = vmatprep.subr.mxu0 0.0
      %1182 = vmatpush1.msra.mxu0 0.0
      %1183 = vmatprep.subr.mxu0 0.0
      %1184 = vmatpush1.msra.mxu0 0.0
      %1185 = vmatprep.subr.mxu0 0.0
      %1186 = vmatpush1.msra.mxu0 0.0
      %1187 = vmatprep.subr.mxu0 0.0
      %1188 = vmatpush1.msra.mxu0 0.0
      %1189 = vmatprep.subr.mxu0 0.0
      %1190 = vmatpush1.msra.mxu0 0.0
      %1191 = vmatprep.subr.mxu0 0.0
      %1192 = vmatpush1.msra.mxu0 0.0
      %1193 = vmatprep.subr.mxu0 0.0
      %1194 = vmatpush1.msra.mxu0 0.0
      %1195 = vmatprep.subr.mxu0 0.0
      %1196 = vmatpush1.msra.mxu0 0.0
      %1197 = vmatprep.subr.mxu0 0.0
      %1198 = vmatpush1.msra.mxu0 0.0
      %1199 = vmatprep.subr.mxu0 0.0
      %1200 = vmatpush1.msra.mxu0 0.0
      %1201 = vmatprep.subr.mxu0 0.0
      %1202 = vmatpush1.msra.mxu0 0.0
      %1203 = vmatprep.subr.mxu0 0.0
      %1204 = vmatpush1.msra.mxu0 0.0
      %1205 = vmatprep.subr.mxu0 0.0
      %1206 = vmatpush1.msra.mxu0 0.0
      %1207 = vmatprep.subr.mxu0 0.0
      %1208 = vmatpush1.msra.mxu0 0.0
      %1209 = vmatprep.subr.mxu0 0.0
      %1210 = vmatpush1.msra.mxu0 0.0
      %1211 = vmatprep.subr.mxu0 0.0
      %1212 = vmatpush1.msra.mxu0 0.0
      %1213 = vmatprep.subr.mxu0 0.0
      %1214 = vmatpush1.msra.mxu0 0.0
      %1215 = vmatprep.subr.mxu0 0.0
      %1216 = vmatpush1.msra.mxu0 0.0
      %1217 = vmatprep.subr.mxu0 0.0
      %1218 = vmatpush1.msra.mxu0 0.0
      %1219 = vmatprep.subr.mxu0 0.0
      %1220 = vmatpush1.msra.mxu0 0.0
      %1221 = vmatprep.subr.mxu0 0.0
      %1222 = vmatpush1.msra.mxu0 0.0
      %1223 = vmatprep.subr.mxu0 0.0
      %1224 = vmatpush1.msra.mxu0 0.0
      %1225 = vmatprep.mubr.f32.mxu0 0.0
      %1226 = vmatmul.mubr.f32.gmra.mrb[0].mxu0 %v1155
      %v1227 = vpop.f32.mrb[0].mxu0
      %v1228 = vadd.f32 0.0, %v1227
      %v1229 = vpop.f32.mrb[0].mxu0
      %v1230 = vadd.f32 0.0, %v1229
      %1231 = vdwg.mxu0
      %v1232 = vadd.f32 %v1118, %v1228
      %v1233 = vadd.f32 %v1119, %v1230
      %v1234 = vld [vmem:[%s2] sm:$0xf]
      %1236 = vset.pattern.permute.xlu0 0
      %1237 = vperm.xlu0 %1236, %v1234
      %v1238 = vpop.permute.xlu0 %1237
      %v1240 = vmul.f32 %v1232, %v1238
      %v1241 = vmul.f32 %v1233, %v1238
      %v1242 = vld [vmem:[%s3] sm:$0xf]
      %1244 = vset.pattern.permute.xlu0 0
      %1245 = vperm.xlu0 %1244, %v1242
      %v1246 = vpop.permute.xlu0 %1245
      %v1248 = vadd.f32 %v1240, %v1246
      %v1249 = vadd.f32 %v1241, %v1246
      %v1250 = vmax.f32 %v1248, 0.0
      %v1251 = vmax.f32 %v1249, 0.0
      %v1254 = vcombine.low %v1250, %v1251
      %1255 = vrot.lane.b32.xlu0 %v1254, 17
      %v1256 = vpop.permute.xlu0 %1255
      %v1257 = vrot.slane %v1256, 4
      %v1258 = vsel %vm251, %v1257, %v1256
      %1261 = vst.msk [vmem:[#allocation2] sm:$0xff] %vm257, %v1258
      %1262 = vst.msk [vmem:[#allocation2 + $0x8] sm:$0xf] %vm259, %v1257
      %v1263 = vld [vmem:[#allocation2] sm:$0xff]
      %v1264 = vmul.f32 %v1263, %v271
      %v1265 = vld [vmem:[%s1 + $0x24] sm:$0xf]
      %v1266 = vld [vmem:[#allocation2 + $0x8] sm:$0xf]
      %v1267 = vmul.f32 %v1263, %v290
      %v1268 = vmul.f32 %v1266, %v288
      %v1269 = vld [vmem:[%s1 + $0x28] sm:$0xf]
      %v1272 = vcombine.high %v1267, %v1267
      %1273 = vrot.lane.b32.xlu0 %v1267, 127
      %v1274 = vpop.permute.xlu0 %1273
      %1275 = vrot.lane.b32.xlu0 %v1272, 127
      %v1276 = vpop.permute.xlu0 %1275
      %1277 = vrot.lane.b32.xlu0 %v1268, 127
      %v1278 = vpop.permute.xlu0 %1277
      %v1279 = vsel %vm305, %v1274, %v1276
      %v1280 = vsel %vm305, %v1276, %v1278
      %v1282 = vsel %vm308, %v1269, 0
      %v1284 = vsel %vm312, %v1279, 0
      %v1286 = vsel %vm312, %v1280, 0
      %1288 = vmatprep.subr.mxu0 %v1286
      %1289 = vmatpush1.msra.mxu0 %v1284
      %1290 = vmatprep.subr.mxu0 0.0
      %1291 = vmatpush1.msra.mxu0 0.0
      %1292 = vmatprep.subr.mxu0 0.0
      %1293 = vmatpush1.msra.mxu0 0.0
      %1294 = vmatprep.subr.mxu0 0.0
      %1295 = vmatpush1.msra.mxu0 0.0
      %1296 = vmatprep.subr.mxu0 0.0
      %1297 = vmatpush1.msra.mxu0 0.0
      %1298 = vmatprep.subr.mxu0 0.0
      %1299 = vmatpush1.msra.mxu0 0.0
      %1300 = vmatprep.subr.mxu0 0.0
      %1301 = vmatpush1.msra.mxu0 0.0
      %1302 = vmatprep.subr.mxu0 0.0
      %1303 = vmatpush1.msra.mxu0 0.0
      %1304 = vmatprep.subr.mxu0 0.0
      %1305 = vmatpush1.msra.mxu0 0.0
      %1306 = vmatprep.subr.mxu0 0.0
      %1307 = vmatpush1.msra.mxu0 0.0
      %1308 = vmatprep.subr.mxu0 0.0
      %1309 = vmatpush1.msra.mxu0 0.0
      %1310 = vmatprep.subr.mxu0 0.0
      %1311 = vmatpush1.msra.mxu0 0.0
      %1312 = vmatprep.subr.mxu0 0.0
      %1313 = vmatpush1.msra.mxu0 0.0
      %1314 = vmatprep.subr.mxu0 0.0
      %1315 = vmatpush1.msra.mxu0 0.0
      %1316 = vmatprep.subr.mxu0 0.0
      %1317 = vmatpush1.msra.mxu0 0.0
      %1318 = vmatprep.subr.mxu0 0.0
      %1319 = vmatpush1.msra.mxu0 0.0
      %1320 = vmatprep.subr.mxu0 0.0
      %1321 = vmatpush1.msra.mxu0 0.0
      %1322 = vmatprep.subr.mxu0 0.0
      %1323 = vmatpush1.msra.mxu0 0.0
      %1324 = vmatprep.subr.mxu0 0.0
      %1325 = vmatpush1.msra.mxu0 0.0
      %1326 = vmatprep.subr.mxu0 0.0
      %1327 = vmatpush1.msra.mxu0 0.0
      %1328 = vmatprep.subr.mxu0 0.0
      %1329 = vmatpush1.msra.mxu0 0.0
      %1330 = vmatprep.subr.mxu0 0.0
      %1331 = vmatpush1.msra.mxu0 0.0
      %1332 = vmatprep.subr.mxu0 0.0
      %1333 = vmatpush1.msra.mxu0 0.0
      %1334 = vmatprep.subr.mxu0 0.0
      %1335 = vmatpush1.msra.mxu0 0.0
      %1336 = vmatprep.subr.mxu0 0.0
      %1337 = vmatpush1.msra.mxu0 0.0
      %1338 = vmatprep.subr.mxu0 0.0
      %1339 = vmatpush1.msra.mxu0 0.0
      %1340 = vmatprep.subr.mxu0 0.0
      %1341 = vmatpush1.msra.mxu0 0.0
      %1342 = vmatprep.subr.mxu0 0.0
      %1343 = vmatpush1.msra.mxu0 0.0
      %1344 = vmatprep.subr.mxu0 0.0
      %1345 = vmatpush1.msra.mxu0 0.0
      %1346 = vmatprep.subr.mxu0 0.0
      %1347 = vmatpush1.msra.mxu0 0.0
      %1348 = vmatprep.subr.mxu0 0.0
      %1349 = vmatpush1.msra.mxu0 0.0
      %1350 = vmatprep.subr.mxu0 0.0
      %1351 = vmatpush1.msra.mxu0 0.0
      %1352 = vmatprep.mubr.f32.mxu0 0.0
      %1353 = vmatmul.mubr.f32.gmra.mrb[0].mxu0 %v1282
      %v1354 = vpop.f32.mrb[0].mxu0
      %v1355 = vadd.f32 0.0, %v1354
      %v1356 = vpop.f32.mrb[0].mxu0
      %v1357 = vadd.f32 0.0, %v1356
      %1358 = vdwg.mxu0
      %v1360 = vcombine.high %v1264, %v1264
      %v1362 = vsel %vm308, %v1265, 0
      %v1364 = vsel %vm312, %v1264, 0
      %v1366 = vsel %vm312, %v1360, 0
      %1368 = vmatprep.subr.mxu0 %v1366
      %1369 = vmatpush1.msra.mxu0 %v1364
      %1370 = vmatprep.subr.mxu0 0.0
      %1371 = vmatpush1.msra.mxu0 0.0
      %1372 = vmatprep.subr.mxu0 0.0
      %1373 = vmatpush1.msra.mxu0 0.0
      %1374 = vmatprep.subr.mxu0 0.0
      %1375 = vmatpush1.msra.mxu0 0.0
      %1376 = vmatprep.subr.mxu0 0.0
      %1377 = vmatpush1.msra.mxu0 0.0
      %1378 = vmatprep.subr.mxu0 0.0
      %1379 = vmatpush1.msra.mxu0 0.0
      %1380 = vmatprep.subr.mxu0 0.0
      %1381 = vmatpush1.msra.mxu0 0.0
      %1382 = vmatprep.subr.mxu0 0.0
      %1383 = vmatpush1.msra.mxu0 0.0
      %1384 = vmatprep.subr.mxu0 0.0
      %1385 = vmatpush1.msra.mxu0 0.0
      %1386 = vmatprep.subr.mxu0 0.0
      %1387 = vmatpush1.msra.mxu0 0.0
      %1388 = vmatprep.subr.mxu0 0.0
      %1389 = vmatpush1.msra.mxu0 0.0
      %1390 = vmatprep.subr.mxu0 0.0
      %1391 = vmatpush1.msra.mxu0 0.0
      %1392 = vmatprep.subr.mxu0 0.0
      %1393 = vmatpush1.msra.mxu0 0.0
      %1394 = vmatprep.subr.mxu0 0.0
      %1395 = vmatpush1.msra.mxu0 0.0
      %1396 = vmatprep.subr.mxu0 0.0
      %1397 = vmatpush1.msra.mxu0 0.0
      %1398 = vmatprep.subr.mxu0 0.0
      %1399 = vmatpush1.msra.mxu0 0.0
      %1400 = vmatprep.subr.mxu0 0.0
      %1401 = vmatpush1.msra.mxu0 0.0
      %1402 = vmatprep.subr.mxu0 0.0
      %1403 = vmatpush1.msra.mxu0 0.0
      %1404 = vmatprep.subr.mxu0 0.0
      %1405 = vmatpush1.msra.mxu0 0.0
      %1406 = vmatprep.subr.mxu0 0.0
      %1407 = vmatpush1.msra.mxu0 0.0
      %1408 = vmatprep.subr.mxu0 0.0
      %1409 = vmatpush1.msra.mxu0 0.0
      %1410 = vmatprep.subr.mxu0 0.0
      %1411 = vmatpush1.msra.mxu0 0.0
      %1412 = vmatprep.subr.mxu0 0.0
      %1413 = vmatpush1.msra.mxu0 0.0
      %1414 = vmatprep.subr.mxu0 0.0
      %1415 = vmatpush1.msra.mxu0 0.0
      %1416 = vmatprep.subr.mxu0 0.0
      %1417 = vmatpush1.msra.mxu0 0.0
      %1418 = vmatprep.subr.mxu0 0.0
      %1419 = vmatpush1.msra.mxu0 0.0
      %1420 = vmatprep.subr.mxu0 0.0
      %1421 = vmatpush1.msra.mxu0 0.0
      %1422 = vmatprep.subr.mxu0 0.0
      %1423 = vmatpush1.msra.mxu0 0.0
      %1424 = vmatprep.subr.mxu0 0.0
      %1425 = vmatpush1.msra.mxu0 0.0
      %1426 = vmatprep.subr.mxu0 0.0
      %1427 = vmatpush1.msra.mxu0 0.0
      %1428 = vmatprep.subr.mxu0 0.0
      %1429 = vmatpush1.msra.mxu0 0.0
      %1430 = vmatprep.subr.mxu0 0.0
      %1431 = vmatpush1.msra.mxu0 0.0
      %1432 = vmatprep.mubr.f32.mxu0 0.0
      %1433 = vmatmul.mubr.f32.gmra.mrb[0].mxu0 %v1362
      %v1434 = vpop.f32.mrb[0].mxu0
      %v1435 = vadd.f32 %v1355, %v1434
      %v1436 = vpop.f32.mrb[0].mxu0
      %v1437 = vadd.f32 %v1357, %v1436
      %1438 = vdwg.mxu0
      %v1439 = vld [vmem:[#allocation2] sm:$0xff]
      %v1440 = vld [vmem:[#allocation2 + $0x8] sm:$0xf]
      %v1441 = vmul.f32 %v1439, %v484
      %v1442 = vmul.f32 %v1440, %v482
      %v1443 = vld [vmem:[%s1 + $0x2c] sm:$0xf]
      %v1446 = vcombine.high %v1441, %v1441
      %1447 = vrot.lane.b32.xlu0 %v1441, 126
      %v1448 = vpop.permute.xlu0 %1447
      %1449 = vrot.lane.b32.xlu0 %v1446, 126
      %v1450 = vpop.permute.xlu0 %1449
      %1451 = vrot.lane.b32.xlu0 %v1442, 126
      %v1452 = vpop.permute.xlu0 %1451
      %v1453 = vsel %vm499, %v1448, %v1450
      %v1454 = vsel %vm499, %v1450, %v1452
      %v1456 = vsel %vm308, %v1443, 0
      %v1458 = vsel %vm312, %v1453, 0
      %v1460 = vsel %vm312, %v1454, 0
      %1462 = vmatprep.subr.mxu0 %v1460
      %1463 = vmatpush1.msra.mxu0 %v1458
      %1464 = vmatprep.subr.mxu0 0.0
      %1465 = vmatpush1.msra.mxu0 0.0
      %1466 = vmatprep.subr.mxu0 0.0
      %1467 = vmatpush1.msra.mxu0 0.0
      %1468 = vmatprep.subr.mxu0 0.0
      %1469 = vmatpush1.msra.mxu0 0.0
      %1470 = vmatprep.subr.mxu0 0.0
      %1471 = vmatpush1.msra.mxu0 0.0
      %1472 = vmatprep.subr.mxu0 0.0
      %1473 = vmatpush1.msra.mxu0 0.0
      %1474 = vmatprep.subr.mxu0 0.0
      %1475 = vmatpush1.msra.mxu0 0.0
      %1476 = vmatprep.subr.mxu0 0.0
      %1477 = vmatpush1.msra.mxu0 0.0
      %1478 = vmatprep.subr.mxu0 0.0
      %1479 = vmatpush1.msra.mxu0 0.0
      %1480 = vmatprep.subr.mxu0 0.0
      %1481 = vmatpush1.msra.mxu0 0.0
      %1482 = vmatprep.subr.mxu0 0.0
      %1483 = vmatpush1.msra.mxu0 0.0
      %1484 = vmatprep.subr.mxu0 0.0
      %1485 = vmatpush1.msra.mxu0 0.0
      %1486 = vmatprep.subr.mxu0 0.0
      %1487 = vmatpush1.msra.mxu0 0.0
      %1488 = vmatprep.subr.mxu0 0.0
      %1489 = vmatpush1.msra.mxu0 0.0
      %1490 = vmatprep.subr.mxu0 0.0
      %1491 = vmatpush1.msra.mxu0 0.0
      %1492 = vmatprep.subr.mxu0 0.0
      %1493 = vmatpush1.msra.mxu0 0.0
      %1494 = vmatprep.subr.mxu0 0.0
      %1495 = vmatpush1.msra.mxu0 0.0
      %1496 = vmatprep.subr.mxu0 0.0
      %1497 = vmatpush1.msra.mxu0 0.0
      %1498 = vmatprep.subr.mxu0 0.0
      %1499 = vmatpush1.msra.mxu0 0.0
      %1500 = vmatprep.subr.mxu0 0.0
      %1501 = vmatpush1.msra.mxu0 0.0
      %1502 = vmatprep.subr.mxu0 0.0
      %1503 = vmatpush1.msra.mxu0 0.0
      %1504 = vmatprep.subr.mxu0 0.0
      %1505 = vmatpush1.msra.mxu0 0.0
      %1506 = vmatprep.subr.mxu0 0.0
      %1507 = vmatpush1.msra.mxu0 0.0
      %1508 = vmatprep.subr.mxu0 0.0
      %1509 = vmatpush1.msra.mxu0 0.0
      %1510 = vmatprep.subr.mxu0 0.0
      %1511 = vmatpush1.msra.mxu0 0.0
      %1512 = vmatprep.subr.mxu0 0.0
      %1513 = vmatpush1.msra.mxu0 0.0
      %1514 = vmatprep.subr.mxu0 0.0
      %1515 = vmatpush1.msra.mxu0 0.0
      %1516 = vmatprep.subr.mxu0 0.0
      %1517 = vmatpush1.msra.mxu0 0.0
      %1518 = vmatprep.subr.mxu0 0.0
      %1519 = vmatpush1.msra.mxu0 0.0
      %1520 = vmatprep.subr.mxu0 0.0
      %1521 = vmatpush1.msra.mxu0 0.0
      %1522 = vmatprep.subr.mxu0 0.0
      %1523 = vmatpush1.msra.mxu0 0.0
      %1524 = vmatprep.subr.mxu0 0.0
      %1525 = vmatpush1.msra.mxu0 0.0
      %1526 = vmatprep.mubr.f32.mxu0 0.0
      %1527 = vmatmul.mubr.f32.gmra.mrb[0].mxu0 %v1456
      %v1528 = vpop.f32.mrb[0].mxu0
      %v1529 = vadd.f32 0.0, %v1528
      %v1530 = vpop.f32.mrb[0].mxu0
      %v1531 = vadd.f32 0.0, %v1530
      %1532 = vdwg.mxu0
      %v1533 = vadd.f32 %v1435, %v1529
      %v1534 = vadd.f32 %v1437, %v1531
      %v1535 = vld [vmem:[#allocation2] sm:$0xff]
      %v1536 = vld [vmem:[#allocation2 + $0x8] sm:$0xf]
      %v1537 = vmul.f32 %v1535, %v598
      %v1538 = vmul.f32 %v1536, %v596
      %v1539 = vld [vmem:[%s1 + $0x30] sm:$0xf]
      %v1542 = vcombine.high %v1537, %v1537
      %1543 = vrot.lane.b32.xlu0 %v1537, 112
      %v1544 = vpop.permute.xlu0 %1543
      %1545 = vrot.lane.b32.xlu0 %v1542, 112
      %v1546 = vpop.permute.xlu0 %1545
      %1547 = vrot.lane.b32.xlu0 %v1538, 112
      %v1548 = vpop.permute.xlu0 %1547
      %v1549 = vsel %vm613, %v1544, %v1546
      %v1550 = vsel %vm613, %v1546, %v1548
      %v1552 = vsel %vm308, %v1539, 0
      %v1554 = vsel %vm312, %v1549, 0
      %v1556 = vsel %vm312, %v1550, 0
      %1558 = vmatprep.subr.mxu0 %v1556
      %1559 = vmatpush1.msra.mxu0 %v1554
      %1560 = vmatprep.subr.mxu0 0.0
      %1561 = vmatpush1.msra.mxu0 0.0
      %1562 = vmatprep.subr.mxu0 0.0
      %1563 = vmatpush1.msra.mxu0 0.0
      %1564 = vmatprep.subr.mxu0 0.0
      %1565 = vmatpush1.msra.mxu0 0.0
      %1566 = vmatprep.subr.mxu0 0.0
      %1567 = vmatpush1.msra.mxu0 0.0
      %1568 = vmatprep.subr.mxu0 0.0
      %1569 = vmatpush1.msra.mxu0 0.0
      %1570 = vmatprep.subr.mxu0 0.0
      %1571 = vmatpush1.msra.mxu0 0.0
      %1572 = vmatprep.subr.mxu0 0.0
      %1573 = vmatpush1.msra.mxu0 0.0
      %1574 = vmatprep.subr.mxu0 0.0
      %1575 = vmatpush1.msra.mxu0 0.0
      %1576 = vmatprep.subr.mxu0 0.0
      %1577 = vmatpush1.msra.mxu0 0.0
      %1578 = vmatprep.subr.mxu0 0.0
      %1579 = vmatpush1.msra.mxu0 0.0
      %1580 = vmatprep.subr.mxu0 0.0
      %1581 = vmatpush1.msra.mxu0 0.0
      %1582 = vmatprep.subr.mxu0 0.0
      %1583 = vmatpush1.msra.mxu0 0.0
      %1584 = vmatprep.subr.mxu0 0.0
      %1585 = vmatpush1.msra.mxu0 0.0
      %1586 = vmatprep.subr.mxu0 0.0
      %1587 = vmatpush1.msra.mxu0 0.0
      %1588 = vmatprep.subr.mxu0 0.0
      %1589 = vmatpush1.msra.mxu0 0.0
      %1590 = vmatprep.subr.mxu0 0.0
      %1591 = vmatpush1.msra.mxu0 0.0
      %1592 = vmatprep.subr.mxu0 0.0
      %1593 = vmatpush1.msra.mxu0 0.0
      %1594 = vmatprep.subr.mxu0 0.0
      %1595 = vmatpush1.msra.mxu0 0.0
      %1596 = vmatprep.subr.mxu0 0.0
      %1597 = vmatpush1.msra.mxu0 0.0
      %1598 = vmatprep.subr.mxu0 0.0
      %1599 = vmatpush1.msra.mxu0 0.0
      %1600 = vmatprep.subr.mxu0 0.0
      %1601 = vmatpush1.msra.mxu0 0.0
      %1602 = vmatprep.subr.mxu0 0.0
      %1603 = vmatpush1.msra.mxu0 0.0
      %1604 = vmatprep.subr.mxu0 0.0
      %1605 = vmatpush1.msra.mxu0 0.0
      %1606 = vmatprep.subr.mxu0 0.0
      %1607 = vmatpush1.msra.mxu0 0.0
      %1608 = vmatprep.subr.mxu0 0.0
      %1609 = vmatpush1.msra.mxu0 0.0
      %1610 = vmatprep.subr.mxu0 0.0
      %1611 = vmatpush1.msra.mxu0 0.0
      %1612 = vmatprep.subr.mxu0 0.0
      %1613 = vmatpush1.msra.mxu0 0.0
      %1614 = vmatprep.subr.mxu0 0.0
      %1615 = vmatpush1.msra.mxu0 0.0
      %1616 = vmatprep.subr.mxu0 0.0
      %1617 = vmatpush1.msra.mxu0 0.0
      %1618 = vmatprep.subr.mxu0 0.0
      %1619 = vmatpush1.msra.mxu0 0.0
      %1620 = vmatprep.subr.mxu0 0.0
      %1621 = vmatpush1.msra.mxu0 0.0
      %1622 = vmatprep.mubr.f32.mxu0 0.0
      %1623 = vmatmul.mubr.f32.gmra.mrb[0].mxu0 %v1552
      %v1624 = vpop.f32.mrb[0].mxu0
      %v1625 = vadd.f32 0.0, %v1624
      %v1626 = vpop.f32.mrb[0].mxu0
      %v1627 = vadd.f32 0.0, %v1626
      %1628 = vdwg.mxu0
      %v1629 = vadd.f32 %v1533, %v1625
      %v1630 = vadd.f32 %v1534, %v1627
      %v1631 = vld [vmem:[%s1 + $0x34] sm:$0xf]
      %v1633 = vsel %vm308, %v1631, 0
      %v1635 = vsel %vm312, %v1250, 0
      %v1637 = vsel %vm312, %v1251, 0
      %1639 = vmatprep.subr.mxu0 %v1637
      %1640 = vmatpush1.msra.mxu0 %v1635
      %1641 = vmatprep.subr.mxu0 0.0
      %1642 = vmatpush1.msra.mxu0 0.0
      %1643 = vmatprep.subr.mxu0 0.0
      %1644 = vmatpush1.msra.mxu0 0.0
      %1645 = vmatprep.subr.mxu0 0.0
      %1646 = vmatpush1.msra.mxu0 0.0
      %1647 = vmatprep.subr.mxu0 0.0
      %1648 = vmatpush1.msra.mxu0 0.0
      %1649 = vmatprep.subr.mxu0 0.0
      %1650 = vmatpush1.msra.mxu0 0.0
      %1651 = vmatprep.subr.mxu0 0.0
      %1652 = vmatpush1.msra.mxu0 0.0
      %1653 = vmatprep.subr.mxu0 0.0
      %1654 = vmatpush1.msra.mxu0 0.0
      %1655 = vmatprep.subr.mxu0 0.0
      %1656 = vmatpush1.msra.mxu0 0.0
      %1657 = vmatprep.subr.mxu0 0.0
      %1658 = vmatpush1.msra.mxu0 0.0
      %1659 = vmatprep.subr.mxu0 0.0
      %1660 = vmatpush1.msra.mxu0 0.0
      %1661 = vmatprep.subr.mxu0 0.0
      %1662 = vmatpush1.msra.mxu0 0.0
      %1663 = vmatprep.subr.mxu0 0.0
      %1664 = vmatpush1.msra.mxu0 0.0
      %1665 = vmatprep.subr.mxu0 0.0
      %1666 = vmatpush1.msra.mxu0 0.0
      %1667 = vmatprep.subr.mxu0 0.0
      %1668 = vmatpush1.msra.mxu0 0.0
      %1669 = vmatprep.subr.mxu0 0.0
      %1670 = vmatpush1.msra.mxu0 0.0
      %1671 = vmatprep.subr.mxu0 0.0
      %1672 = vmatpush1.msra.mxu0 0.0
      %1673 = vmatprep.subr.mxu0 0.0
      %1674 = vmatpush1.msra.mxu0 0.0
      %1675 = vmatprep.subr.mxu0 0.0
      %1676 = vmatpush1.msra.mxu0 0.0
      %1677 = vmatprep.subr.mxu0 0.0
      %1678 = vmatpush1.msra.mxu0 0.0
      %1679 = vmatprep.subr.mxu0 0.0
      %1680 = vmatpush1.msra.mxu0 0.0
      %1681 = vmatprep.subr.mxu0 0.0
      %1682 = vmatpush1.msra.mxu0 0.0
      %1683 = vmatprep.subr.mxu0 0.0
      %1684 = vmatpush1.msra.mxu0 0.0
      %1685 = vmatprep.subr.mxu0 0.0
      %1686 = vmatpush1.msra.mxu0 0.0
      %1687 = vmatprep.subr.mxu0 0.0
      %1688 = vmatpush1.msra.mxu0 0.0
      %1689 = vmatprep.subr.mxu0 0.0
      %1690 = vmatpush1.msra.mxu0 0.0
      %1691 = vmatprep.subr.mxu0 0.0
      %1692 = vmatpush1.msra.mxu0 0.0
      %1693 = vmatprep.subr.mxu0 0.0
      %1694 = vmatpush1.msra.mxu0 0.0
      %1695 = vmatprep.subr.mxu0 0.0
      %1696 = vmatpush1.msra.mxu0 0.0
      %1697 = vmatprep.subr.mxu0 0.0
      %1698 = vmatpush1.msra.mxu0 0.0
      %1699 = vmatprep.subr.mxu0 0.0
      %1700 = vmatpush1.msra.mxu0 0.0
      %1701 = vmatprep.subr.mxu0 0.0
      %1702 = vmatpush1.msra.mxu0 0.0
      %1703 = vmatprep.mubr.f32.mxu0 0.0
      %1704 = vmatmul.mubr.f32.gmra.mrb[0].mxu0 %v1633
      %v1705 = vpop.f32.mrb[0].mxu0
      %v1706 = vadd.f32 0.0, %v1705
      %v1707 = vpop.f32.mrb[0].mxu0
      %v1708 = vadd.f32 0.0, %v1707
      %1709 = vdwg.mxu0
      %v1710 = vadd.f32 %v1629, %v1706
      %v1711 = vadd.f32 %v1630, %v1708
      %v1712 = vld [vmem:[#allocation2] sm:$0xff]
      %v1713 = vld [vmem:[#allocation2 + $0x8] sm:$0xf]
      %v1714 = vmul.f32 %v1712, %v794
      %v1715 = vmul.f32 %v1713, %v792
      %v1716 = vld [vmem:[%s1 + $0x38] sm:$0xf]
      %v1719 = vcombine.high %v1714, %v1714
      %1720 = vrot.lane.b32.xlu0 %v1714, 110
      %v1721 = vpop.permute.xlu0 %1720
      %1722 = vrot.lane.b32.xlu0 %v1719, 110
      %v1723 = vpop.permute.xlu0 %1722
      %1724 = vrot.lane.b32.xlu0 %v1715, 110
      %v1725 = vpop.permute.xlu0 %1724
      %v1726 = vsel %vm809, %v1721, %v1723
      %v1727 = vsel %vm809, %v1723, %v1725
      %v1729 = vsel %vm308, %v1716, 0
      %v1731 = vsel %vm312, %v1726, 0
      %v1733 = vsel %vm312, %v1727, 0
      %1735 = vmatprep.subr.mxu0 %v1733
      %1736 = vmatpush1.msra.mxu0 %v1731
      %1737 = vmatprep.subr.mxu0 0.0
      %1738 = vmatpush1.msra.mxu0 0.0
      %1739 = vmatprep.subr.mxu0 0.0
      %1740 = vmatpush1.msra.mxu0 0.0
      %1741 = vmatprep.subr.mxu0 0.0
      %1742 = vmatpush1.msra.mxu0 0.0
      %1743 = vmatprep.subr.mxu0 0.0
      %1744 = vmatpush1.msra.mxu0 0.0
      %1745 = vmatprep.subr.mxu0 0.0
      %1746 = vmatpush1.msra.mxu0 0.0
      %1747 = vmatprep.subr.mxu0 0.0
      %1748 = vmatpush1.msra.mxu0 0.0
      %1749 = vmatprep.subr.mxu0 0.0
      %1750 = vmatpush1.msra.mxu0 0.0
      %1751 = vmatprep.subr.mxu0 0.0
      %1752 = vmatpush1.msra.mxu0 0.0
      %1753 = vmatprep.subr.mxu0 0.0
      %1754 = vmatpush1.msra.mxu0 0.0
      %1755 = vmatprep.subr.mxu0 0.0
      %1756 = vmatpush1.msra.mxu0 0.0
      %1757 = vmatprep.subr.mxu0 0.0
      %1758 = vmatpush1.msra.mxu0 0.0
      %1759 = vmatprep.subr.mxu0 0.0
      %1760 = vmatpush1.msra.mxu0 0.0
      %1761 = vmatprep.subr.mxu0 0.0
      %1762 = vmatpush1.msra.mxu0 0.0
      %1763 = vmatprep.subr.mxu0 0.0
      %1764 = vmatpush1.msra.mxu0 0.0
      %1765 = vmatprep.subr.mxu0 0.0
      %1766 = vmatpush1.msra.mxu0 0.0
      %1767 = vmatprep.subr.mxu0 0.0
      %1768 = vmatpush1.msra.mxu0 0.0
      %1769 = vmatprep.subr.mxu0 0.0
      %1770 = vmatpush1.msra.mxu0 0.0
      %1771 = vmatprep.subr.mxu0 0.0
      %1772 = vmatpush1.msra.mxu0 0.0
      %1773 = vmatprep.subr.mxu0 0.0
      %1774 = vmatpush1.msra.mxu0 0.0
      %1775 = vmatprep.subr.mxu0 0.0
      %1776 = vmatpush1.msra.mxu0 0.0
      %1777 = vmatprep.subr.mxu0 0.0
      %1778 = vmatpush1.msra.mxu0 0.0
      %1779 = vmatprep.subr.mxu0 0.0
      %1780 = vmatpush1.msra.mxu0 0.0
      %1781 = vmatprep.subr.mxu0 0.0
      %1782 = vmatpush1.msra.mxu0 0.0
      %1783 = vmatprep.subr.mxu0 0.0
      %1784 = vmatpush1.msra.mxu0 0.0
      %1785 = vmatprep.subr.mxu0 0.0
      %1786 = vmatpush1.msra.mxu0 0.0
      %1787 = vmatprep.subr.mxu0 0.0
      %1788 = vmatpush1.msra.mxu0 0.0
      %1789 = vmatprep.subr.mxu0 0.0
      %1790 = vmatpush1.msra.mxu0 0.0
      %1791 = vmatprep.subr.mxu0 0.0
      %1792 = vmatpush1.msra.mxu0 0.0
      %1793 = vmatprep.subr.mxu0 0.0
      %1794 = vmatpush1.msra.mxu0 0.0
      %1795 = vmatprep.subr.mxu0 0.0
      %1796 = vmatpush1.msra.mxu0 0.0
      %1797 = vmatprep.subr.mxu0 0.0
      %1798 = vmatpush1.msra.mxu0 0.0
      %1799 = vmatprep.mubr.f32.mxu0 0.0
      %1800 = vmatmul.mubr.f32.gmra.mrb[0].mxu0 %v1729
      %v1801 = vpop.f32.mrb[0].mxu0
      %v1802 = vadd.f32 0.0, %v1801
      %v1803 = vpop.f32.mrb[0].mxu0
      %v1804 = vadd.f32 0.0, %v1803
      %1805 = vdwg.mxu0
      %v1806 = vadd.f32 %v1710, %v1802
      %v1807 = vadd.f32 %v1711, %v1804
      %v1808 = vld [vmem:[#allocation2] sm:$0xff]
      %v1809 = vld [vmem:[#allocation2 + $0x8] sm:$0xf]
      %v1810 = vmul.f32 %v1808, %v908
      %v1811 = vmul.f32 %v1809, %v906
      %v1812 = vld [vmem:[%s1 + $0x3c] sm:$0xf]
      %v1815 = vcombine.high %v1810, %v1810
      %1816 = vrot.lane.b32.xlu0 %v1810, 96
      %v1817 = vpop.permute.xlu0 %1816
      %1818 = vrot.lane.b32.xlu0 %v1815, 96
      %v1819 = vpop.permute.xlu0 %1818
      %1820 = vrot.lane.b32.xlu0 %v1811, 96
      %v1821 = vpop.permute.xlu0 %1820
      %v1822 = vsel %vm923, %v1817, %v1819
      %v1823 = vsel %vm923, %v1819, %v1821
      %v1825 = vsel %vm308, %v1812, 0
      %v1827 = vsel %vm312, %v1822, 0
      %v1829 = vsel %vm312, %v1823, 0
      %1831 = vmatprep.subr.mxu0 %v1829
      %1832 = vmatpush1.msra.mxu0 %v1827
      %1833 = vmatprep.subr.mxu0 0.0
      %1834 = vmatpush1.msra.mxu0 0.0
      %1835 = vmatprep.subr.mxu0 0.0
      %1836 = vmatpush1.msra.mxu0 0.0
      %1837 = vmatprep.subr.mxu0 0.0
      %1838 = vmatpush1.msra.mxu0 0.0
      %1839 = vmatprep.subr.mxu0 0.0
      %1840 = vmatpush1.msra.mxu0 0.0
      %1841 = vmatprep.subr.mxu0 0.0
      %1842 = vmatpush1.msra.mxu0 0.0
      %1843 = vmatprep.subr.mxu0 0.0
      %1844 = vmatpush1.msra.mxu0 0.0
      %1845 = vmatprep.subr.mxu0 0.0
      %1846 = vmatpush1.msra.mxu0 0.0
      %1847 = vmatprep.subr.mxu0 0.0
      %1848 = vmatpush1.msra.mxu0 0.0
      %1849 = vmatprep.subr.mxu0 0.0
      %1850 = vmatpush1.msra.mxu0 0.0
      %1851 = vmatprep.subr.mxu0 0.0
      %1852 = vmatpush1.msra.mxu0 0.0
      %1853 = vmatprep.subr.mxu0 0.0
      %1854 = vmatpush1.msra.mxu0 0.0
      %1855 = vmatprep.subr.mxu0 0.0
      %1856 = vmatpush1.msra.mxu0 0.0
      %1857 = vmatprep.subr.mxu0 0.0
      %1858 = vmatpush1.msra.mxu0 0.0
      %1859 = vmatprep.subr.mxu0 0.0
      %1860 = vmatpush1.msra.mxu0 0.0
      %1861 = vmatprep.subr.mxu0 0.0
      %1862 = vmatpush1.msra.mxu0 0.0
      %1863 = vmatprep.subr.mxu0 0.0
      %1864 = vmatpush1.msra.mxu0 0.0
      %1865 = vmatprep.subr.mxu0 0.0
      %1866 = vmatpush1.msra.mxu0 0.0
      %1867 = vmatprep.subr.mxu0 0.0
      %1868 = vmatpush1.msra.mxu0 0.0
      %1869 = vmatprep.subr.mxu0 0.0
      %1870 = vmatpush1.msra.mxu0 0.0
      %1871 = vmatprep.subr.mxu0 0.0
      %1872 = vmatpush1.msra.mxu0 0.0
      %1873 = vmatprep.subr.mxu0 0.0
      %1874 = vmatpush1.msra.mxu0 0.0
      %1875 = vmatprep.subr.mxu0 0.0
      %1876 = vmatpush1.msra.mxu0 0.0
      %1877 = vmatprep.subr.mxu0 0.0
      %1878 = vmatpush1.msra.mxu0 0.0
      %1879 = vmatprep.subr.mxu0 0.0
      %1880 = vmatpush1.msra.mxu0 0.0
      %1881 = vmatprep.subr.mxu0 0.0
      %1882 = vmatpush1.msra.mxu0 0.0
      %1883 = vmatprep.subr.mxu0 0.0
      %1884 = vmatpush1.msra.mxu0 0.0
      %1885 = vmatprep.subr.mxu0 0.0
      %1886 = vmatpush1.msra.mxu0 0.0
      %1887 = vmatprep.subr.mxu0 0.0
      %1888 = vmatpush1.msra.mxu0 0.0
      %1889 = vmatprep.subr.mxu0 0.0
      %1890 = vmatpush1.msra.mxu0 0.0
      %1891 = vmatprep.subr.mxu0 0.0
      %1892 = vmatpush1.msra.mxu0 0.0
      %1893 = vmatprep.subr.mxu0 0.0
      %1894 = vmatpush1.msra.mxu0 0.0
      %1895 = vmatprep.mubr.f32.mxu0 0.0
      %1896 = vmatmul.mubr.f32.gmra.mrb[0].mxu0 %v1825
      %v1897 = vpop.f32.mrb[0].mxu0
      %v1898 = vadd.f32 0.0, %v1897
      %v1899 = vpop.f32.mrb[0].mxu0
      %v1900 = vadd.f32 0.0, %v1899
      %1901 = vdwg.mxu0
      %v1902 = vadd.f32 %v1806, %v1898
      %v1903 = vadd.f32 %v1807, %v1900
      %v1904 = vld [vmem:[#allocation2] sm:$0xff]
      %v1905 = vld [vmem:[#allocation2 + $0x8] sm:$0xf]
      %v1906 = vmul.f32 %v1904, %v1022
      %v1907 = vmul.f32 %v1905, %v1020
      %v1908 = vld [vmem:[%s1 + $0x40] sm:$0xf]
      %v1911 = vcombine.high %v1906, %v1906
      %1912 = vrot.lane.b32.xlu0 %v1906, 95
      %v1913 = vpop.permute.xlu0 %1912
      %1914 = vrot.lane.b32.xlu0 %v1911, 95
      %v1915 = vpop.permute.xlu0 %1914
      %1916 = vrot.lane.b32.xlu0 %v1907, 95
      %v1917 = vpop.permute.xlu0 %1916
      %v1918 = vsel %vm1037, %v1913, %v1915
      %v1919 = vsel %vm1037, %v1915, %v1917
      %v1921 = vsel %vm308, %v1908, 0
      %v1923 = vsel %vm312, %v1918, 0
      %v1925 = vsel %vm312, %v1919, 0
      %1927 = vmatprep.subr.mxu0 %v1925
      %1928 = vmatpush1.msra.mxu0 %v1923
      %1929 = vmatprep.subr.mxu0 0.0
      %1930 = vmatpush1.msra.mxu0 0.0
      %1931 = vmatprep.subr.mxu0 0.0
      %1932 = vmatpush1.msra.mxu0 0.0
      %1933 = vmatprep.subr.mxu0 0.0
      %1934 = vmatpush1.msra.mxu0 0.0
      %1935 = vmatprep.subr.mxu0 0.0
      %1936 = vmatpush1.msra.mxu0 0.0
      %1937 = vmatprep.subr.mxu0 0.0
      %1938 = vmatpush1.msra.mxu0 0.0
      %1939 = vmatprep.subr.mxu0 0.0
      %1940 = vmatpush1.msra.mxu0 0.0
      %1941 = vmatprep.subr.mxu0 0.0
      %1942 = vmatpush1.msra.mxu0 0.0
      %1943 = vmatprep.subr.mxu0 0.0
      %1944 = vmatpush1.msra.mxu0 0.0
      %1945 = vmatprep.subr.mxu0 0.0
      %1946 = vmatpush1.msra.mxu0 0.0
      %1947 = vmatprep.subr.mxu0 0.0
      %1948 = vmatpush1.msra.mxu0 0.0
      %1949 = vmatprep.subr.mxu0 0.0
      %1950 = vmatpush1.msra.mxu0 0.0
      %1951 = vmatprep.subr.mxu0 0.0
      %1952 = vmatpush1.msra.mxu0 0.0
      %1953 = vmatprep.subr.mxu0 0.0
      %1954 = vmatpush1.msra.mxu0 0.0
      %1955 = vmatprep.subr.mxu0 0.0
      %1956 = vmatpush1.msra.mxu0 0.0
      %1957 = vmatprep.subr.mxu0 0.0
      %1958 = vmatpush1.msra.mxu0 0.0
      %1959 = vmatprep.subr.mxu0 0.0
      %1960 = vmatpush1.msra.mxu0 0.0
      %1961 = vmatprep.subr.mxu0 0.0
      %1962 = vmatpush1.msra.mxu0 0.0
      %1963 = vmatprep.subr.mxu0 0.0
      %1964 = vmatpush1.msra.mxu0 0.0
      %1965 = vmatprep.subr.mxu0 0.0
      %1966 = vmatpush1.msra.mxu0 0.0
      %1967 = vmatprep.subr.mxu0 0.0
      %1968 = vmatpush1.msra.mxu0 0.0
      %1969 = vmatprep.subr.mxu0 0.0
      %1970 = vmatpush1.msra.mxu0 0.0
      %1971 = vmatprep.subr.mxu0 0.0
      %1972 = vmatpush1.msra.mxu0 0.0
      %1973 = vmatprep.subr.mxu0 0.0
      %1974 = vmatpush1.msra.mxu0 0.0
      %1975 = vmatprep.subr.mxu0 0.0
      %1976 = vmatpush1.msra.mxu0 0.0
      %1977 = vmatprep.subr.mxu0 0.0
      %1978 = vmatpush1.msra.mxu0 0.0
      %1979 = vmatprep.subr.mxu0 0.0
      %1980 = vmatpush1.msra.mxu0 0.0
      %1981 = vmatprep.subr.mxu0 0.0
      %1982 = vmatpush1.msra.mxu0 0.0
      %1983 = vmatprep.subr.mxu0 0.0
      %1984 = vmatpush1.msra.mxu0 0.0
      %1985 = vmatprep.subr.mxu0 0.0
      %1986 = vmatpush1.msra.mxu0 0.0
      %1987 = vmatprep.subr.mxu0 0.0
      %1988 = vmatpush1.msra.mxu0 0.0
      %1989 = vmatprep.subr.mxu0 0.0
      %1990 = vmatpush1.msra.mxu0 0.0
      %1991 = vmatprep.mubr.f32.mxu0 0.0
      %1992 = vmatmul.mubr.f32.gmra.mrb[0].mxu0 %v1921
      %v1993 = vpop.f32.mrb[0].mxu0
      %v1994 = vadd.f32 0.0, %v1993
      %v1995 = vpop.f32.mrb[0].mxu0
      %v1996 = vadd.f32 0.0, %v1995
      %1997 = vdwg.mxu0
      %v1998 = vadd.f32 %v1902, %v1994
      %v1999 = vadd.f32 %v1903, %v1996
      %v2000 = vld [vmem:[#allocation2] sm:$0xff]
      %v2001 = vld [vmem:[#allocation2 + $0x8] sm:$0xf]
      %v2002 = vmul.f32 %v2000, %v1136
      %v2003 = vmul.f32 %v2001, %v1134
      %v2004 = vld [vmem:[%s1 + $0x44] sm:$0xf]
      %v2007 = vcombine.high %v2002, %v2002
      %2008 = vrot.lane.b32.xlu0 %v2002, 94
      %v2009 = vpop.permute.xlu0 %2008
      %2010 = vrot.lane.b32.xlu0 %v2007, 94
      %v2011 = vpop.permute.xlu0 %2010
      %2012 = vrot.lane.b32.xlu0 %v2003, 94
      %v2013 = vpop.permute.xlu0 %2012
      %v2014 = vsel %vm1151, %v2009, %v2011
      %v2015 = vsel %vm1151, %v2011, %v2013
      %v2017 = vsel %vm308, %v2004, 0
      %v2019 = vsel %vm312, %v2014, 0
      %v2021 = vsel %vm312, %v2015, 0
      %2023 = vmatprep.subr.mxu0 %v2021
      %2024 = vmatpush1.msra.mxu0 %v2019
      %2025 = vmatprep.subr.mxu0 0.0
      %2026 = vmatpush1.msra.mxu0 0.0
      %2027 = vmatprep.subr.mxu0 0.0
      %2028 = vmatpush1.msra.mxu0 0.0
      %2029 = vmatprep.subr.mxu0 0.0
      %2030 = vmatpush1.msra.mxu0 0.0
      %2031 = vmatprep.subr.mxu0 0.0
      %2032 = vmatpush1.msra.mxu0 0.0
      %2033 = vmatprep.subr.mxu0 0.0
      %2034 = vmatpush1.msra.mxu0 0.0
      %2035 = vmatprep.subr.mxu0 0.0
      %2036 = vmatpush1.msra.mxu0 0.0
      %2037 = vmatprep.subr.mxu0 0.0
      %2038 = vmatpush1.msra.mxu0 0.0
      %2039 = vmatprep.subr.mxu0 0.0
      %2040 = vmatpush1.msra.mxu0 0.0
      %2041 = vmatprep.subr.mxu0 0.0
      %2042 = vmatpush1.msra.mxu0 0.0
      %2043 = vmatprep.subr.mxu0 0.0
      %2044 = vmatpush1.msra.mxu0 0.0
      %2045 = vmatprep.subr.mxu0 0.0
      %2046 = vmatpush1.msra.mxu0 0.0
      %2047 = vmatprep.subr.mxu0 0.0
      %2048 = vmatpush1.msra.mxu0 0.0
      %2049 = vmatprep.subr.mxu0 0.0
      %2050 = vmatpush1.msra.mxu0 0.0
      %2051 = vmatprep.subr.mxu0 0.0
      %2052 = vmatpush1.msra.mxu0 0.0
      %2053 = vmatprep.subr.mxu0 0.0
      %2054 = vmatpush1.msra.mxu0 0.0
      %2055 = vmatprep.subr.mxu0 0.0
      %2056 = vmatpush1.msra.mxu0 0.0
      %2057 = vmatprep.subr.mxu0 0.0
      %2058 = vmatpush1.msra.mxu0 0.0
      %2059 = vmatprep.subr.mxu0 0.0
      %2060 = vmatpush1.msra.mxu0 0.0
      %2061 = vmatprep.subr.mxu0 0.0
      %2062 = vmatpush1.msra.mxu0 0.0
      %2063 = vmatprep.subr.mxu0 0.0
      %2064 = vmatpush1.msra.mxu0 0.0
      %2065 = vmatprep.subr.mxu0 0.0
      %2066 = vmatpush1.msra.mxu0 0.0
      %2067 = vmatprep.subr.mxu0 0.0
      %2068 = vmatpush1.msra.mxu0 0.0
      %2069 = vmatprep.subr.mxu0 0.0
      %2070 = vmatpush1.msra.mxu0 0.0
      %2071 = vmatprep.subr.mxu0 0.0
      %2072 = vmatpush1.msra.mxu0 0.0
      %2073 = vmatprep.subr.mxu0 0.0
      %2074 = vmatpush1.msra.mxu0 0.0
      %2075 = vmatprep.subr.mxu0 0.0
      %2076 = vmatpush1.msra.mxu0 0.0
      %2077 = vmatprep.subr.mxu0 0.0
      %2078 = vmatpush1.msra.mxu0 0.0
      %2079 = vmatprep.subr.mxu0 0.0
      %2080 = vmatpush1.msra.mxu0 0.0
      %2081 = vmatprep.subr.mxu0 0.0
      %2082 = vmatpush1.msra.mxu0 0.0
      %2083 = vmatprep.subr.mxu0 0.0
      %2084 = vmatpush1.msra.mxu0 0.0
      %2085 = vmatprep.subr.mxu0 0.0
      %2086 = vmatpush1.msra.mxu0 0.0
      %2087 = vmatprep.mubr.f32.mxu0 0.0
      %2088 = vmatmul.mubr.f32.gmra.mrb[0].mxu0 %v2017
      %v2089 = vpop.f32.mrb[0].mxu0
      %v2090 = vadd.f32 0.0, %v2089
      %v2091 = vpop.f32.mrb[0].mxu0
      %v2092 = vadd.f32 0.0, %v2091
      %2093 = vdwg.mxu0
      %v2094 = vadd.f32 %v1998, %v2090
      %v2095 = vadd.f32 %v1999, %v2092
      %v2096 = vld [vmem:[%s2 + $0x4] sm:$0xf]
      %2098 = vset.pattern.permute.xlu0 0
      %2099 = vperm.xlu0 %2098, %v2096
      %v2100 = vpop.permute.xlu0 %2099
      %v2102 = vmul.f32 %v2094, %v2100
      %v2103 = vmul.f32 %v2095, %v2100
      %v2104 = vld [vmem:[%s3 + $0x4] sm:$0xf]
      %2106 = vset.pattern.permute.xlu0 0
      %2107 = vperm.xlu0 %2106, %v2104
      %v2108 = vpop.permute.xlu0 %2107
      %v2110 = vadd.f32 %v2102, %v2108
      %v2111 = vadd.f32 %v2103, %v2108
      %v2113 = vadd.f32 %v2110, %v246
      %v2114 = vadd.f32 %v2111, %v697
      %v2115 = vmax.f32 %v2113, 0.0
      %v2116 = vmax.f32 %v2114, 0.0
      %v2119 = vcombine.low %v2115, %v2116
      %2120 = vrot.lane.b32.xlu0 %v2119, 17
      %v2121 = vpop.permute.xlu0 %2120
      %v2122 = vrot.slane %v2121, 4
      %v2123 = vsel %vm251, %v2122, %v2121
      %2126 = vst.msk [vmem:[#allocation2] sm:$0xff] %vm257, %v2123
      %2127 = vst.msk [vmem:[#allocation2 + $0x8] sm:$0xf] %vm259, %v2122
      %v2128 = vld [vmem:[#allocation2] sm:$0xff]
      %v2129 = vmul.f32 %v2128, %v271
      %v2130 = vld [vmem:[%s1 + $0x48] sm:$0xf]
      %v2131 = vld [vmem:[#allocation2 + $0x8] sm:$0xf]
      %v2132 = vmul.f32 %v2128, %v290
      %v2133 = vmul.f32 %v2131, %v288
      %v2134 = vld [vmem:[%s1 + $0x4c] sm:$0xf]
      %v2137 = vcombine.high %v2132, %v2132
      %2138 = vrot.lane.b32.xlu0 %v2132, 127
      %v2139 = vpop.permute.xlu0 %2138
      %2140 = vrot.lane.b32.xlu0 %v2137, 127
      %v2141 = vpop.permute.xlu0 %2140
      %2142 = vrot.lane.b32.xlu0 %v2133, 127
      %v2143 = vpop.permute.xlu0 %2142
      %v2144 = vsel %vm305, %v2139, %v2141
      %v2145 = vsel %vm305, %v2141, %v2143
      %v2147 = vsel %vm308, %v2134, 0
      %v2149 = vsel %vm312, %v2144, 0
      %v2151 = vsel %vm312, %v2145, 0
      %2153 = vmatprep.subr.mxu0 %v2151
      %2154 = vmatpush1.msra.mxu0 %v2149
      %2155 = vmatprep.subr.mxu0 0.0
      %2156 = vmatpush1.msra.mxu0 0.0
      %2157 = vmatprep.subr.mxu0 0.0
      %2158 = vmatpush1.msra.mxu0 0.0
      %2159 = vmatprep.subr.mxu0 0.0
      %2160 = vmatpush1.msra.mxu0 0.0
      %2161 = vmatprep.subr.mxu0 0.0
      %2162 = vmatpush1.msra.mxu0 0.0
      %2163 = vmatprep.subr.mxu0 0.0
      %2164 = vmatpush1.msra.mxu0 0.0
      %2165 = vmatprep.subr.mxu0 0.0
      %2166 = vmatpush1.msra.mxu0 0.0
      %2167 = vmatprep.subr.mxu0 0.0
      %2168 = vmatpush1.msra.mxu0 0.0
      %2169 = vmatprep.subr.mxu0 0.0
      %2170 = vmatpush1.msra.mxu0 0.0
      %2171 = vmatprep.subr.mxu0 0.0
      %2172 = vmatpush1.msra.mxu0 0.0
      %2173 = vmatprep.subr.mxu0 0.0
      %2174 = vmatpush1.msra.mxu0 0.0
      %2175 = vmatprep.subr.mxu0 0.0
      %2176 = vmatpush1.msra.mxu0 0.0
      %2177 = vmatprep.subr.mxu0 0.0
      %2178 = vmatpush1.msra.mxu0 0.0
      %2179 = vmatprep.subr.mxu0 0.0
      %2180 = vmatpush1.msra.mxu0 0.0
      %2181 = vmatprep.subr.mxu0 0.0
      %2182 = vmatpush1.msra.mxu0 0.0
      %2183 = vmatprep.subr.mxu0 0.0
      %2184 = vmatpush1.msra.mxu0 0.0
      %2185 = vmatprep.subr.mxu0 0.0
      %2186 = vmatpush1.msra.mxu0 0.0
      %2187 = vmatprep.subr.mxu0 0.0
      %2188 = vmatpush1.msra.mxu0 0.0
      %2189 = vmatprep.subr.mxu0 0.0
      %2190 = vmatpush1.msra.mxu0 0.0
      %2191 = vmatprep.subr.mxu0 0.0
      %2192 = vmatpush1.msra.mxu0 0.0
      %2193 = vmatprep.subr.mxu0 0.0
      %2194 = vmatpush1.msra.mxu0 0.0
      %2195 = vmatprep.subr.mxu0 0.0
      %2196 = vmatpush1.msra.mxu0 0.0
      %2197 = vmatprep.subr.mxu0 0.0
      %2198 = vmatpush1.msra.mxu0 0.0
      %2199 = vmatprep.subr.mxu0 0.0
      %2200 = vmatpush1.msra.mxu0 0.0
      %2201 = vmatprep.subr.mxu0 0.0
      %2202 = vmatpush1.msra.mxu0 0.0
      %2203 = vmatprep.subr.mxu0 0.0
      %2204 = vmatpush1.msra.mxu0 0.0
      %2205 = vmatprep.subr.mxu0 0.0
      %2206 = vmatpush1.msra.mxu0 0.0
      %2207 = vmatprep.subr.mxu0 0.0
      %2208 = vmatpush1.msra.mxu0 0.0
      %2209 = vmatprep.subr.mxu0 0.0
      %2210 = vmatpush1.msra.mxu0 0.0
      %2211 = vmatprep.subr.mxu0 0.0
      %2212 = vmatpush1.msra.mxu0 0.0
      %2213 = vmatprep.subr.mxu0 0.0
      %2214 = vmatpush1.msra.mxu0 0.0
      %2215 = vmatprep.subr.mxu0 0.0
      %2216 = vmatpush1.msra.mxu0 0.0
      %2217 = vmatprep.mubr.f32.mxu0 0.0
      %2218 = vmatmul.mubr.f32.gmra.mrb[0].mxu0 %v2147
      %v2219 = vpop.f32.mrb[0].mxu0
      %v2220 = vadd.f32 0.0, %v2219
      %v2221 = vpop.f32.mrb[0].mxu0
      %v2222 = vadd.f32 0.0, %v2221
      %2223 = vdwg.mxu0
      %v2225 = vcombine.high %v2129, %v2129
      %v2227 = vsel %vm308, %v2130, 0
      %v2229 = vsel %vm312, %v2129, 0
      %v2231 = vsel %vm312, %v2225, 0
      %2233 = vmatprep.subr.mxu0 %v2231
      %2234 = vmatpush1.msra.mxu0 %v2229
      %2235 = vmatprep.subr.mxu0 0.0
      %2236 = vmatpush1.msra.mxu0 0.0
      %2237 = vmatprep.subr.mxu0 0.0
      %2238 = vmatpush1.msra.mxu0 0.0
      %2239 = vmatprep.subr.mxu0 0.0
      %2240 = vmatpush1.msra.mxu0 0.0
      %2241 = vmatprep.subr.mxu0 0.0
      %2242 = vmatpush1.msra.mxu0 0.0
      %2243 = vmatprep.subr.mxu0 0.0
      %2244 = vmatpush1.msra.mxu0 0.0
      %2245 = vmatprep.subr.mxu0 0.0
      %2246 = vmatpush1.msra.mxu0 0.0
      %2247 = vmatprep.subr.mxu0 0.0
      %2248 = vmatpush1.msra.mxu0 0.0
      %2249 = vmatprep.subr.mxu0 0.0
      %2250 = vmatpush1.msra.mxu0 0.0
      %2251 = vmatprep.subr.mxu0 0.0
      %2252 = vmatpush1.msra.mxu0 0.0
      %2253 = vmatprep.subr.mxu0 0.0
      %2254 = vmatpush1.msra.mxu0 0.0
      %2255 = vmatprep.subr.mxu0 0.0
      %2256 = vmatpush1.msra.mxu0 0.0
      %2257 = vmatprep.subr.mxu0 0.0
      %2258 = vmatpush1.msra.mxu0 0.0
      %2259 = vmatprep.subr.mxu0 0.0
      %2260 = vmatpush1.msra.mxu0 0.0
      %2261 = vmatprep.subr.mxu0 0.0
      %2262 = vmatpush1.msra.mxu0 0.0
      %2263 = vmatprep.subr.mxu0 0.0
      %2264 = vmatpush1.msra.mxu0 0.0
      %2265 = vmatprep.subr.mxu0 0.0
      %2266 = vmatpush1.msra.mxu0 0.0
      %2267 = vmatprep.subr.mxu0 0.0
      %2268 = vmatpush1.msra.mxu0 0.0
      %2269 = vmatprep.subr.mxu0 0.0
      %2270 = vmatpush1.msra.mxu0 0.0
      %2271 = vmatprep.subr.mxu0 0.0
      %2272 = vmatpush1.msra.mxu0 0.0
      %2273 = vmatprep.subr.mxu0 0.0
      %2274 = vmatpush1.msra.mxu0 0.0
      %2275 = vmatprep.subr.mxu0 0.0
      %2276 = vmatpush1.msra.mxu0 0.0
      %2277 = vmatprep.subr.mxu0 0.0
      %2278 = vmatpush1.msra.mxu0 0.0
      %2279 = vmatprep.subr.mxu0 0.0
      %2280 = vmatpush1.msra.mxu0 0.0
      %2281 = vmatprep.subr.mxu0 0.0
      %2282 = vmatpush1.msra.mxu0 0.0
      %2283 = vmatprep.subr.mxu0 0.0
      %2284 = vmatpush1.msra.mxu0 0.0
      %2285 = vmatprep.subr.mxu0 0.0
      %2286 = vmatpush1.msra.mxu0 0.0
      %2287 = vmatprep.subr.mxu0 0.0
      %2288 = vmatpush1.msra.mxu0 0.0
      %2289 = vmatprep.subr.mxu0 0.0
      %2290 = vmatpush1.msra.mxu0 0.0
      %2291 = vmatprep.subr.mxu0 0.0
      %2292 = vmatpush1.msra.mxu0 0.0
      %2293 = vmatprep.subr.mxu0 0.0
      %2294 = vmatpush1.msra.mxu0 0.0
      %2295 = vmatprep.subr.mxu0 0.0
      %2296 = vmatpush1.msra.mxu0 0.0
      %2297 = vmatprep.mubr.f32.mxu0 0.0
      %2298 = vmatmul.mubr.f32.gmra.mrb[0].mxu0 %v2227
      %v2299 = vpop.f32.mrb[0].mxu0
      %v2300 = vadd.f32 %v2220, %v2299
      %v2301 = vpop.f32.mrb[0].mxu0
      %v2302 = vadd.f32 %v2222, %v2301
      %2303 = vdwg.mxu0
      %v2304 = vld [vmem:[#allocation2] sm:$0xff]
      %v2305 = vld [vmem:[#allocation2 + $0x8] sm:$0xf]
      %v2306 = vmul.f32 %v2304, %v484
      %v2307 = vmul.f32 %v2305, %v482
      %v2308 = vld [vmem:[%s1 + $0x50] sm:$0xf]
      %v2311 = vcombine.high %v2306, %v2306
      %2312 = vrot.lane.b32.xlu0 %v2306, 126
      %v2313 = vpop.permute.xlu0 %2312
      %2314 = vrot.lane.b32.xlu0 %v2311, 126
      %v2315 = vpop.permute.xlu0 %2314
      %2316 = vrot.lane.b32.xlu0 %v2307, 126
      %v2317 = vpop.permute.xlu0 %2316
      %v2318 = vsel %vm499, %v2313, %v2315
      %v2319 = vsel %vm499, %v2315, %v2317
      %v2321 = vsel %vm308, %v2308, 0
      %v2323 = vsel %vm312, %v2318, 0
      %v2325 = vsel %vm312, %v2319, 0
      %2327 = vmatprep.subr.mxu0 %v2325
      %2328 = vmatpush1.msra.mxu0 %v2323
      %2329 = vmatprep.subr.mxu0 0.0
      %2330 = vmatpush1.msra.mxu0 0.0
      %2331 = vmatprep.subr.mxu0 0.0
      %2332 = vmatpush1.msra.mxu0 0.0
      %2333 = vmatprep.subr.mxu0 0.0
      %2334 = vmatpush1.msra.mxu0 0.0
      %2335 = vmatprep.subr.mxu0 0.0
      %2336 = vmatpush1.msra.mxu0 0.0
      %2337 = vmatprep.subr.mxu0 0.0
      %2338 = vmatpush1.msra.mxu0 0.0
      %2339 = vmatprep.subr.mxu0 0.0
      %2340 = vmatpush1.msra.mxu0 0.0
      %2341 = vmatprep.subr.mxu0 0.0
      %2342 = vmatpush1.msra.mxu0 0.0
      %2343 = vmatprep.subr.mxu0 0.0
      %2344 = vmatpush1.msra.mxu0 0.0
      %2345 = vmatprep.subr.mxu0 0.0
      %2346 = vmatpush1.msra.mxu0 0.0
      %2347 = vmatprep.subr.mxu0 0.0
      %2348 = vmatpush1.msra.mxu0 0.0
      %2349 = vmatprep.subr.mxu0 0.0
      %2350 = vmatpush1.msra.mxu0 0.0
      %2351 = vmatprep.subr.mxu0 0.0
      %2352 = vmatpush1.msra.mxu0 0.0
      %2353 = vmatprep.subr.mxu0 0.0
      %2354 = vmatpush1.msra.mxu0 0.0
      %2355 = vmatprep.subr.mxu0 0.0
      %2356 = vmatpush1.msra.mxu0 0.0
      %2357 = vmatprep.subr.mxu0 0.0
      %2358 = vmatpush1.msra.mxu0 0.0
      %2359 = vmatprep.subr.mxu0 0.0
      %2360 = vmatpush1.msra.mxu0 0.0
      %2361 = vmatprep.subr.mxu0 0.0
      %2362 = vmatpush1.msra.mxu0 0.0
      %2363 = vmatprep.subr.mxu0 0.0
      %2364 = vmatpush1.msra.mxu0 0.0
      %2365 = vmatprep.subr.mxu0 0.0
      %2366 = vmatpush1.msra.mxu0 0.0
      %2367 = vmatprep.subr.mxu0 0.0
      %2368 = vmatpush1.msra.mxu0 0.0
      %2369 = vmatprep.subr.mxu0 0.0
      %2370 = vmatpush1.msra.mxu0 0.0
      %2371 = vmatprep.subr.mxu0 0.0
      %2372 = vmatpush1.msra.mxu0 0.0
      %2373 = vmatprep.subr.mxu0 0.0
      %2374 = vmatpush1.msra.mxu0 0.0
      %2375 = vmatprep.subr.mxu0 0.0
      %2376 = vmatpush1.msra.mxu0 0.0
      %2377 = vmatprep.subr.mxu0 0.0
      %2378 = vmatpush1.msra.mxu0 0.0
      %2379 = vmatprep.subr.mxu0 0.0
      %2380 = vmatpush1.msra.mxu0 0.0
      %2381 = vmatprep.subr.mxu0 0.0
      %2382 = vmatpush1.msra.mxu0 0.0
      %2383 = vmatprep.subr.mxu0 0.0
      %2384 = vmatpush1.msra.mxu0 0.0
      %2385 = vmatprep.subr.mxu0 0.0
      %2386 = vmatpush1.msra.mxu0 0.0
      %2387 = vmatprep.subr.mxu0 0.0
      %2388 = vmatpush1.msra.mxu0 0.0
      %2389 = vmatprep.subr.mxu0 0.0
      %2390 = vmatpush1.msra.mxu0 0.0
      %2391 = vmatprep.mubr.f32.mxu0 0.0
      %2392 = vmatmul.mubr.f32.gmra.mrb[0].mxu0 %v2321
      %v2393 = vpop.f32.mrb[0].mxu0
      %v2394 = vadd.f32 0.0, %v2393
      %v2395 = vpop.f32.mrb[0].mxu0
      %v2396 = vadd.f32 0.0, %v2395
      %2397 = vdwg.mxu0
      %v2398 = vadd.f32 %v2300, %v2394
      %v2399 = vadd.f32 %v2302, %v2396
      %v2400 = vld [vmem:[#allocation2] sm:$0xff]
      %v2401 = vld [vmem:[#allocation2 + $0x8] sm:$0xf]
      %v2402 = vmul.f32 %v2400, %v598
      %v2403 = vmul.f32 %v2401, %v596
      %v2404 = vld [vmem:[%s1 + $0x54] sm:$0xf]
      %v2407 = vcombine.high %v2402, %v2402
      %2408 = vrot.lane.b32.xlu0 %v2402, 112
      %v2409 = vpop.permute.xlu0 %2408
      %2410 = vrot.lane.b32.xlu0 %v2407, 112
      %v2411 = vpop.permute.xlu0 %2410
      %2412 = vrot.lane.b32.xlu0 %v2403, 112
      %v2413 = vpop.permute.xlu0 %2412
      %v2414 = vsel %vm613, %v2409, %v2411
      %v2415 = vsel %vm613, %v2411, %v2413
      %v2417 = vsel %vm308, %v2404, 0
      %v2419 = vsel %vm312, %v2414, 0
      %v2421 = vsel %vm312, %v2415, 0
      %2423 = vmatprep.subr.mxu0 %v2421
      %2424 = vmatpush1.msra.mxu0 %v2419
      %2425 = vmatprep.subr.mxu0 0.0
      %2426 = vmatpush1.msra.mxu0 0.0
      %2427 = vmatprep.subr.mxu0 0.0
      %2428 = vmatpush1.msra.mxu0 0.0
      %2429 = vmatprep.subr.mxu0 0.0
      %2430 = vmatpush1.msra.mxu0 0.0
      %2431 = vmatprep.subr.mxu0 0.0
      %2432 = vmatpush1.msra.mxu0 0.0
      %2433 = vmatprep.subr.mxu0 0.0
      %2434 = vmatpush1.msra.mxu0 0.0
      %2435 = vmatprep.subr.mxu0 0.0
      %2436 = vmatpush1.msra.mxu0 0.0
      %2437 = vmatprep.subr.mxu0 0.0
      %2438 = vmatpush1.msra.mxu0 0.0
      %2439 = vmatprep.subr.mxu0 0.0
      %2440 = vmatpush1.msra.mxu0 0.0
      %2441 = vmatprep.subr.mxu0 0.0
      %2442 = vmatpush1.msra.mxu0 0.0
      %2443 = vmatprep.subr.mxu0 0.0
      %2444 = vmatpush1.msra.mxu0 0.0
      %2445 = vmatprep.subr.mxu0 0.0
      %2446 = vmatpush1.msra.mxu0 0.0
      %2447 = vmatprep.subr.mxu0 0.0
      %2448 = vmatpush1.msra.mxu0 0.0
      %2449 = vmatprep.subr.mxu0 0.0
      %2450 = vmatpush1.msra.mxu0 0.0
      %2451 = vmatprep.subr.mxu0 0.0
      %2452 = vmatpush1.msra.mxu0 0.0
      %2453 = vmatprep.subr.mxu0 0.0
      %2454 = vmatpush1.msra.mxu0 0.0
      %2455 = vmatprep.subr.mxu0 0.0
      %2456 = vmatpush1.msra.mxu0 0.0
      %2457 = vmatprep.subr.mxu0 0.0
      %2458 = vmatpush1.msra.mxu0 0.0
      %2459 = vmatprep.subr.mxu0 0.0
      %2460 = vmatpush1.msra.mxu0 0.0
      %2461 = vmatprep.subr.mxu0 0.0
      %2462 = vmatpush1.msra.mxu0 0.0
      %2463 = vmatprep.subr.mxu0 0.0
      %2464 = vmatpush1.msra.mxu0 0.0
      %2465 = vmatprep.subr.mxu0 0.0
      %2466 = vmatpush1.msra.mxu0 0.0
      %2467 = vmatprep.subr.mxu0 0.0
      %2468 = vmatpush1.msra.mxu0 0.0
      %2469 = vmatprep.subr.mxu0 0.0
      %2470 = vmatpush1.msra.mxu0 0.0
      %2471 = vmatprep.subr.mxu0 0.0
      %2472 = vmatpush1.msra.mxu0 0.0
      %2473 = vmatprep.subr.mxu0 0.0
      %2474 = vmatpush1.msra.mxu0 0.0
      %2475 = vmatprep.subr.mxu0 0.0
      %2476 = vmatpush1.msra.mxu0 0.0
      %2477 = vmatprep.subr.mxu0 0.0
      %2478 = vmatpush1.msra.mxu0 0.0
      %2479 = vmatprep.subr.mxu0 0.0
      %2480 = vmatpush1.msra.mxu0 0.0
      %2481 = vmatprep.subr.mxu0 0.0
      %2482 = vmatpush1.msra.mxu0 0.0
      %2483 = vmatprep.subr.mxu0 0.0
      %2484 = vmatpush1.msra.mxu0 0.0
      %2485 = vmatprep.subr.mxu0 0.0
      %2486 = vmatpush1.msra.mxu0 0.0
      %2487 = vmatprep.mubr.f32.mxu0 0.0
      %2488 = vmatmul.mubr.f32.gmra.mrb[0].mxu0 %v2417
      %v2489 = vpop.f32.mrb[0].mxu0
      %v2490 = vadd.f32 0.0, %v2489
      %v2491 = vpop.f32.mrb[0].mxu0
      %v2492 = vadd.f32 0.0, %v2491
      %2493 = vdwg.mxu0
      %v2494 = vadd.f32 %v2398, %v2490
      %v2495 = vadd.f32 %v2399, %v2492
      %v2496 = vld [vmem:[%s1 + $0x58] sm:$0xf]
      %v2498 = vsel %vm308, %v2496, 0
      %v2500 = vsel %vm312, %v2115, 0
      %v2502 = vsel %vm312, %v2116, 0
      %2504 = vmatprep.subr.mxu0 %v2502
      %2505 = vmatpush1.msra.mxu0 %v2500
      %2506 = vmatprep.subr.mxu0 0.0
      %2507 = vmatpush1.msra.mxu0 0.0
      %2508 = vmatprep.subr.mxu0 0.0
      %2509 = vmatpush1.msra.mxu0 0.0
      %2510 = vmatprep.subr.mxu0 0.0
      %2511 = vmatpush1.msra.mxu0 0.0
      %2512 = vmatprep.subr.mxu0 0.0
      %2513 = vmatpush1.msra.mxu0 0.0
      %2514 = vmatprep.subr.mxu0 0.0
      %2515 = vmatpush1.msra.mxu0 0.0
      %2516 = vmatprep.subr.mxu0 0.0
      %2517 = vmatpush1.msra.mxu0 0.0
      %2518 = vmatprep.subr.mxu0 0.0
      %2519 = vmatpush1.msra.mxu0 0.0
      %2520 = vmatprep.subr.mxu0 0.0
      %2521 = vmatpush1.msra.mxu0 0.0
      %2522 = vmatprep.subr.mxu0 0.0
      %2523 = vmatpush1.msra.mxu0 0.0
      %2524 = vmatprep.subr.mxu0 0.0
      %2525 = vmatpush1.msra.mxu0 0.0
      %2526 = vmatprep.subr.mxu0 0.0
      %2527 = vmatpush1.msra.mxu0 0.0
      %2528 = vmatprep.subr.mxu0 0.0
      %2529 = vmatpush1.msra.mxu0 0.0
      %2530 = vmatprep.subr.mxu0 0.0
      %2531 = vmatpush1.msra.mxu0 0.0
      %2532 = vmatprep.subr.mxu0 0.0
      %2533 = vmatpush1.msra.mxu0 0.0
      %2534 = vmatprep.subr.mxu0 0.0
      %2535 = vmatpush1.msra.mxu0 0.0
      %2536 = vmatprep.subr.mxu0 0.0
      %2537 = vmatpush1.msra.mxu0 0.0
      %2538 = vmatprep.subr.mxu0 0.0
      %2539 = vmatpush1.msra.mxu0 0.0
      %2540 = vmatprep.subr.mxu0 0.0
      %2541 = vmatpush1.msra.mxu0 0.0
      %2542 = vmatprep.subr.mxu0 0.0
      %2543 = vmatpush1.msra.mxu0 0.0
      %2544 = vmatprep.subr.mxu0 0.0
      %2545 = vmatpush1.msra.mxu0 0.0
      %2546 = vmatprep.subr.mxu0 0.0
      %2547 = vmatpush1.msra.mxu0 0.0
      %2548 = vmatprep.subr.mxu0 0.0
      %2549 = vmatpush1.msra.mxu0 0.0
      %2550 = vmatprep.subr.mxu0 0.0
      %2551 = vmatpush1.msra.mxu0 0.0
      %2552 = vmatprep.subr.mxu0 0.0
      %2553 = vmatpush1.msra.mxu0 0.0
      %2554 = vmatprep.subr.mxu0 0.0
      %2555 = vmatpush1.msra.mxu0 0.0
      %2556 = vmatprep.subr.mxu0 0.0
      %2557 = vmatpush1.msra.mxu0 0.0
      %2558 = vmatprep.subr.mxu0 0.0
      %2559 = vmatpush1.msra.mxu0 0.0
      %2560 = vmatprep.subr.mxu0 0.0
      %2561 = vmatpush1.msra.mxu0 0.0
      %2562 = vmatprep.subr.mxu0 0.0
      %2563 = vmatpush1.msra.mxu0 0.0
      %2564 = vmatprep.subr.mxu0 0.0
      %2565 = vmatpush1.msra.mxu0 0.0
      %2566 = vmatprep.subr.mxu0 0.0
      %2567 = vmatpush1.msra.mxu0 0.0
      %2568 = vmatprep.mubr.f32.mxu0 0.0
      %2569 = vmatmul.mubr.f32.gmra.mrb[0].mxu0 %v2498
      %v2570 = vpop.f32.mrb[0].mxu0
      %v2571 = vadd.f32 0.0, %v2570
      %v2572 = vpop.f32.mrb[0].mxu0
      %v2573 = vadd.f32 0.0, %v2572
      %2574 = vdwg.mxu0
      %v2575 = vadd.f32 %v2494, %v2571
      %v2576 = vadd.f32 %v2495, %v2573
      %v2577 = vld [vmem:[#allocation2] sm:$0xff]
      %v2578 = vld [vmem:[#allocation2 + $0x8] sm:$0xf]
      %v2579 = vmul.f32 %v2577, %v794
      %v2580 = vmul.f32 %v2578, %v792
      %v2581 = vld [vmem:[%s1 + $0x5c] sm:$0xf]
      %v2584 = vcombine.high %v2579, %v2579
      %2585 = vrot.lane.b32.xlu0 %v2579, 110
      %v2586 = vpop.permute.xlu0 %2585
      %2587 = vrot.lane.b32.xlu0 %v2584, 110
      %v2588 = vpop.permute.xlu0 %2587
      %2589 = vrot.lane.b32.xlu0 %v2580, 110
      %v2590 = vpop.permute.xlu0 %2589
      %v2591 = vsel %vm809, %v2586, %v2588
      %v2592 = vsel %vm809, %v2588, %v2590
      %v2594 = vsel %vm308, %v2581, 0
      %v2596 = vsel %vm312, %v2591, 0
      %v2598 = vsel %vm312, %v2592, 0
      %2600 = vmatprep.subr.mxu0 %v2598
      %2601 = vmatpush1.msra.mxu0 %v2596
      %2602 = vmatprep.subr.mxu0 0.0
      %2603 = vmatpush1.msra.mxu0 0.0
      %2604 = vmatprep.subr.mxu0 0.0
      %2605 = vmatpush1.msra.mxu0 0.0
      %2606 = vmatprep.subr.mxu0 0.0
      %2607 = vmatpush1.msra.mxu0 0.0
      %2608 = vmatprep.subr.mxu0 0.0
      %2609 = vmatpush1.msra.mxu0 0.0
      %2610 = vmatprep.subr.mxu0 0.0
      %2611 = vmatpush1.msra.mxu0 0.0
      %2612 = vmatprep.subr.mxu0 0.0
      %2613 = vmatpush1.msra.mxu0 0.0
      %2614 = vmatprep.subr.mxu0 0.0
      %2615 = vmatpush1.msra.mxu0 0.0
      %2616 = vmatprep.subr.mxu0 0.0
      %2617 = vmatpush1.msra.mxu0 0.0
      %2618 = vmatprep.subr.mxu0 0.0
      %2619 = vmatpush1.msra.mxu0 0.0
      %2620 = vmatprep.subr.mxu0 0.0
      %2621 = vmatpush1.msra.mxu0 0.0
      %2622 = vmatprep.subr.mxu0 0.0
      %2623 = vmatpush1.msra.mxu0 0.0
      %2624 = vmatprep.subr.mxu0 0.0
      %2625 = vmatpush1.msra.mxu0 0.0
      %2626 = vmatprep.subr.mxu0 0.0
      %2627 = vmatpush1.msra.mxu0 0.0
      %2628 = vmatprep.subr.mxu0 0.0
      %2629 = vmatpush1.msra.mxu0 0.0
      %2630 = vmatprep.subr.mxu0 0.0
      %2631 = vmatpush1.msra.mxu0 0.0
      %2632 = vmatprep.subr.mxu0 0.0
      %2633 = vmatpush1.msra.mxu0 0.0
      %2634 = vmatprep.subr.mxu0 0.0
      %2635 = vmatpush1.msra.mxu0 0.0
      %2636 = vmatprep.subr.mxu0 0.0
      %2637 = vmatpush1.msra.mxu0 0.0
      %2638 = vmatprep.subr.mxu0 0.0
      %2639 = vmatpush1.msra.mxu0 0.0
      %2640 = vmatprep.subr.mxu0 0.0
      %2641 = vmatpush1.msra.mxu0 0.0
      %2642 = vmatprep.subr.mxu0 0.0
      %2643 = vmatpush1.msra.mxu0 0.0
      %2644 = vmatprep.subr.mxu0 0.0
      %2645 = vmatpush1.msra.mxu0 0.0
      %2646 = vmatprep.subr.mxu0 0.0
      %2647 = vmatpush1.msra.mxu0 0.0
      %2648 = vmatprep.subr.mxu0 0.0
      %2649 = vmatpush1.msra.mxu0 0.0
      %2650 = vmatprep.subr.mxu0 0.0
      %2651 = vmatpush1.msra.mxu0 0.0
      %2652 = vmatprep.subr.mxu0 0.0
      %2653 = vmatpush1.msra.mxu0 0.0
      %2654 = vmatprep.subr.mxu0 0.0
      %2655 = vmatpush1.msra.mxu0 0.0
      %2656 = vmatprep.subr.mxu0 0.0
      %2657 = vmatpush1.msra.mxu0 0.0
      %2658 = vmatprep.subr.mxu0 0.0
      %2659 = vmatpush1.msra.mxu0 0.0
      %2660 = vmatprep.subr.mxu0 0.0
      %2661 = vmatpush1.msra.mxu0 0.0
      %2662 = vmatprep.subr.mxu0 0.0
      %2663 = vmatpush1.msra.mxu0 0.0
      %2664 = vmatprep.mubr.f32.mxu0 0.0
      %2665 = vmatmul.mubr.f32.gmra.mrb[0].mxu0 %v2594
      %v2666 = vpop.f32.mrb[0].mxu0
      %v2667 = vadd.f32 0.0, %v2666
      %v2668 = vpop.f32.mrb[0].mxu0
      %v2669 = vadd.f32 0.0, %v2668
      %2670 = vdwg.mxu0
      %v2671 = vadd.f32 %v2575, %v2667
      %v2672 = vadd.f32 %v2576, %v2669
      %v2673 = vld [vmem:[#allocation2] sm:$0xff]
      %v2674 = vld [vmem:[#allocation2 + $0x8] sm:$0xf]
      %v2675 = vmul.f32 %v2673, %v908
      %v2676 = vmul.f32 %v2674, %v906
      %v2677 = vld [vmem:[%s1 + $0x60] sm:$0xf]
      %v2680 = vcombine.high %v2675, %v2675
      %2681 = vrot.lane.b32.xlu0 %v2675, 96
      %v2682 = vpop.permute.xlu0 %2681
      %2683 = vrot.lane.b32.xlu0 %v2680, 96
      %v2684 = vpop.permute.xlu0 %2683
      %2685 = vrot.lane.b32.xlu0 %v2676, 96
      %v2686 = vpop.permute.xlu0 %2685
      %v2687 = vsel %vm923, %v2682, %v2684
      %v2688 = vsel %vm923, %v2684, %v2686
      %v2690 = vsel %vm308, %v2677, 0
      %v2692 = vsel %vm312, %v2687, 0
      %v2694 = vsel %vm312, %v2688, 0
      %2696 = vmatprep.subr.mxu0 %v2694
      %2697 = vmatpush1.msra.mxu0 %v2692
      %2698 = vmatprep.subr.mxu0 0.0
      %2699 = vmatpush1.msra.mxu0 0.0
      %2700 = vmatprep.subr.mxu0 0.0
      %2701 = vmatpush1.msra.mxu0 0.0
      %2702 = vmatprep.subr.mxu0 0.0
      %2703 = vmatpush1.msra.mxu0 0.0
      %2704 = vmatprep.subr.mxu0 0.0
      %2705 = vmatpush1.msra.mxu0 0.0
      %2706 = vmatprep.subr.mxu0 0.0
      %2707 = vmatpush1.msra.mxu0 0.0
      %2708 = vmatprep.subr.mxu0 0.0
      %2709 = vmatpush1.msra.mxu0 0.0
      %2710 = vmatprep.subr.mxu0 0.0
      %2711 = vmatpush1.msra.mxu0 0.0
      %2712 = vmatprep.subr.mxu0 0.0
      %2713 = vmatpush1.msra.mxu0 0.0
      %2714 = vmatprep.subr.mxu0 0.0
      %2715 = vmatpush1.msra.mxu0 0.0
      %2716 = vmatprep.subr.mxu0 0.0
      %2717 = vmatpush1.msra.mxu0 0.0
      %2718 = vmatprep.subr.mxu0 0.0
      %2719 = vmatpush1.msra.mxu0 0.0
      %2720 = vmatprep.subr.mxu0 0.0
      %2721 = vmatpush1.msra.mxu0 0.0
      %2722 = vmatprep.subr.mxu0 0.0
      %2723 = vmatpush1.msra.mxu0 0.0
      %2724 = vmatprep.subr.mxu0 0.0
      %2725 = vmatpush1.msra.mxu0 0.0
      %2726 = vmatprep.subr.mxu0 0.0
      %2727 = vmatpush1.msra.mxu0 0.0
      %2728 = vmatprep.subr.mxu0 0.0
      %2729 = vmatpush1.msra.mxu0 0.0
      %2730 = vmatprep.subr.mxu0 0.0
      %2731 = vmatpush1.msra.mxu0 0.0
      %2732 = vmatprep.subr.mxu0 0.0
      %2733 = vmatpush1.msra.mxu0 0.0
      %2734 = vmatprep.subr.mxu0 0.0
      %2735 = vmatpush1.msra.mxu0 0.0
      %2736 = vmatprep.subr.mxu0 0.0
      %2737 = vmatpush1.msra.mxu0 0.0
      %2738 = vmatprep.subr.mxu0 0.0
      %2739 = vmatpush1.msra.mxu0 0.0
      %2740 = vmatprep.subr.mxu0 0.0
      %2741 = vmatpush1.msra.mxu0 0.0
      %2742 = vmatprep.subr.mxu0 0.0
      %2743 = vmatpush1.msra.mxu0 0.0
      %2744 = vmatprep.subr.mxu0 0.0
      %2745 = vmatpush1.msra.mxu0 0.0
      %2746 = vmatprep.subr.mxu0 0.0
      %2747 = vmatpush1.msra.mxu0 0.0
      %2748 = vmatprep.subr.mxu0 0.0
      %2749 = vmatpush1.msra.mxu0 0.0
      %2750 = vmatprep.subr.mxu0 0.0
      %2751 = vmatpush1.msra.mxu0 0.0
      %2752 = vmatprep.subr.mxu0 0.0
      %2753 = vmatpush1.msra.mxu0 0.0
      %2754 = vmatprep.subr.mxu0 0.0
      %2755 = vmatpush1.msra.mxu0 0.0
      %2756 = vmatprep.subr.mxu0 0.0
      %2757 = vmatpush1.msra.mxu0 0.0
      %2758 = vmatprep.subr.mxu0 0.0
      %2759 = vmatpush1.msra.mxu0 0.0
      %2760 = vmatprep.mubr.f32.mxu0 0.0
      %2761 = vmatmul.mubr.f32.gmra.mrb[0].mxu0 %v2690
      %v2762 = vpop.f32.mrb[0].mxu0
      %v2763 = vadd.f32 0.0, %v2762
      %v2764 = vpop.f32.mrb[0].mxu0
      %v2765 = vadd.f32 0.0, %v2764
      %2766 = vdwg.mxu0
      %v2767 = vadd.f32 %v2671, %v2763
      %v2768 = vadd.f32 %v2672, %v2765
      %v2769 = vld [vmem:[#allocation2] sm:$0xff]
      %v2770 = vld [vmem:[#allocation2 + $0x8] sm:$0xf]
      %v2771 = vmul.f32 %v2769, %v1022
      %v2772 = vmul.f32 %v2770, %v1020
      %v2773 = vld [vmem:[%s1 + $0x64] sm:$0xf]
      %v2776 = vcombine.high %v2771, %v2771
      %2777 = vrot.lane.b32.xlu0 %v2771, 95
      %v2778 = vpop.permute.xlu0 %2777
      %2779 = vrot.lane.b32.xlu0 %v2776, 95
      %v2780 = vpop.permute.xlu0 %2779
      %2781 = vrot.lane.b32.xlu0 %v2772, 95
      %v2782 = vpop.permute.xlu0 %2781
      %v2783 = vsel %vm1037, %v2778, %v2780
      %v2784 = vsel %vm1037, %v2780, %v2782
      %v2786 = vsel %vm308, %v2773, 0
      %v2788 = vsel %vm312, %v2783, 0
      %v2790 = vsel %vm312, %v2784, 0
      %2792 = vmatprep.subr.mxu0 %v2790
      %2793 = vmatpush1.msra.mxu0 %v2788
      %2794 = vmatprep.subr.mxu0 0.0
      %2795 = vmatpush1.msra.mxu0 0.0
      %2796 = vmatprep.subr.mxu0 0.0
      %2797 = vmatpush1.msra.mxu0 0.0
      %2798 = vmatprep.subr.mxu0 0.0
      %2799 = vmatpush1.msra.mxu0 0.0
      %2800 = vmatprep.subr.mxu0 0.0
      %2801 = vmatpush1.msra.mxu0 0.0
      %2802 = vmatprep.subr.mxu0 0.0
      %2803 = vmatpush1.msra.mxu0 0.0
      %2804 = vmatprep.subr.mxu0 0.0
      %2805 = vmatpush1.msra.mxu0 0.0
      %2806 = vmatprep.subr.mxu0 0.0
      %2807 = vmatpush1.msra.mxu0 0.0
      %2808 = vmatprep.subr.mxu0 0.0
      %2809 = vmatpush1.msra.mxu0 0.0
      %2810 = vmatprep.subr.mxu0 0.0
      %2811 = vmatpush1.msra.mxu0 0.0
      %2812 = vmatprep.subr.mxu0 0.0
      %2813 = vmatpush1.msra.mxu0 0.0
      %2814 = vmatprep.subr.mxu0 0.0
      %2815 = vmatpush1.msra.mxu0 0.0
      %2816 = vmatprep.subr.mxu0 0.0
      %2817 = vmatpush1.msra.mxu0 0.0
      %2818 = vmatprep.subr.mxu0 0.0
      %2819 = vmatpush1.msra.mxu0 0.0
      %2820 = vmatprep.subr.mxu0 0.0
      %2821 = vmatpush1.msra.mxu0 0.0
      %2822 = vmatprep.subr.mxu0 0.0
      %2823 = vmatpush1.msra.mxu0 0.0
      %2824 = vmatprep.subr.mxu0 0.0
      %2825 = vmatpush1.msra.mxu0 0.0
      %2826 = vmatprep.subr.mxu0 0.0
      %2827 = vmatpush1.msra.mxu0 0.0
      %2828 = vmatprep.subr.mxu0 0.0
      %2829 = vmatpush1.msra.mxu0 0.0
      %2830 = vmatprep.subr.mxu0 0.0
      %2831 = vmatpush1.msra.mxu0 0.0
      %2832 = vmatprep.subr.mxu0 0.0
      %2833 = vmatpush1.msra.mxu0 0.0
      %2834 = vmatprep.subr.mxu0 0.0
      %2835 = vmatpush1.msra.mxu0 0.0
      %2836 = vmatprep.subr.mxu0 0.0
      %2837 = vmatpush1.msra.mxu0 0.0
      %2838 = vmatprep.subr.mxu0 0.0
      %2839 = vmatpush1.msra.mxu0 0.0
      %2840 = vmatprep.subr.mxu0 0.0
      %2841 = vmatpush1.msra.mxu0 0.0
      %2842 = vmatprep.subr.mxu0 0.0
      %2843 = vmatpush1.msra.mxu0 0.0
      %2844 = vmatprep.subr.mxu0 0.0
      %2845 = vmatpush1.msra.mxu0 0.0
      %2846 = vmatprep.subr.mxu0 0.0
      %2847 = vmatpush1.msra.mxu0 0.0
      %2848 = vmatprep.subr.mxu0 0.0
      %2849 = vmatpush1.msra.mxu0 0.0
      %2850 = vmatprep.subr.mxu0 0.0
      %2851 = vmatpush1.msra.mxu0 0.0
      %2852 = vmatprep.subr.mxu0 0.0
      %2853 = vmatpush1.msra.mxu0 0.0
      %2854 = vmatprep.subr.mxu0 0.0
      %2855 = vmatpush1.msra.mxu0 0.0
      %2856 = vmatprep.mubr.f32.mxu0 0.0
      %2857 = vmatmul.mubr.f32.gmra.mrb[0].mxu0 %v2786
      %v2858 = vpop.f32.mrb[0].mxu0
      %v2859 = vadd.f32 0.0, %v2858
      %v2860 = vpop.f32.mrb[0].mxu0
      %v2861 = vadd.f32 0.0, %v2860
      %2862 = vdwg.mxu0
      %v2863 = vadd.f32 %v2767, %v2859
      %v2864 = vadd.f32 %v2768, %v2861
      %v2865 = vld [vmem:[#allocation2] sm:$0xff]
      %v2866 = vld [vmem:[#allocation2 + $0x8] sm:$0xf]
      %v2867 = vmul.f32 %v2865, %v1136
      %v2868 = vmul.f32 %v2866, %v1134
      %v2869 = vld [vmem:[%s1 + $0x68] sm:$0xf]
      %v2872 = vcombine.high %v2867, %v2867
      %2873 = vrot.lane.b32.xlu0 %v2867, 94
      %v2874 = vpop.permute.xlu0 %2873
      %2875 = vrot.lane.b32.xlu0 %v2872, 94
      %v2876 = vpop.permute.xlu0 %2875
      %2877 = vrot.lane.b32.xlu0 %v2868, 94
      %v2878 = vpop.permute.xlu0 %2877
      %v2879 = vsel %vm1151, %v2874, %v2876
      %v2880 = vsel %vm1151, %v2876, %v2878
      %v2882 = vsel %vm308, %v2869, 0
      %v2884 = vsel %vm312, %v2879, 0
      %v2886 = vsel %vm312, %v2880, 0
      %2888 = vmatprep.subr.mxu0 %v2886
      %2889 = vmatpush1.msra.mxu0 %v2884
      %2890 = vmatprep.subr.mxu0 0.0
      %2891 = vmatpush1.msra.mxu0 0.0
      %2892 = vmatprep.subr.mxu0 0.0
      %2893 = vmatpush1.msra.mxu0 0.0
      %2894 = vmatprep.subr.mxu0 0.0
      %2895 = vmatpush1.msra.mxu0 0.0
      %2896 = vmatprep.subr.mxu0 0.0
      %2897 = vmatpush1.msra.mxu0 0.0
      %2898 = vmatprep.subr.mxu0 0.0
      %2899 = vmatpush1.msra.mxu0 0.0
      %2900 = vmatprep.subr.mxu0 0.0
      %2901 = vmatpush1.msra.mxu0 0.0
      %2902 = vmatprep.subr.mxu0 0.0
      %2903 = vmatpush1.msra.mxu0 0.0
      %2904 = vmatprep.subr.mxu0 0.0
      %2905 = vmatpush1.msra.mxu0 0.0
      %2906 = vmatprep.subr.mxu0 0.0
      %2907 = vmatpush1.msra.mxu0 0.0
      %2908 = vmatprep.subr.mxu0 0.0
      %2909 = vmatpush1.msra.mxu0 0.0
      %2910 = vmatprep.subr.mxu0 0.0
      %2911 = vmatpush1.msra.mxu0 0.0
      %2912 = vmatprep.subr.mxu0 0.0
      %2913 = vmatpush1.msra.mxu0 0.0
      %2914 = vmatprep.subr.mxu0 0.0
      %2915 = vmatpush1.msra.mxu0 0.0
      %2916 = vmatprep.subr.mxu0 0.0
      %2917 = vmatpush1.msra.mxu0 0.0
      %2918 = vmatprep.subr.mxu0 0.0
      %2919 = vmatpush1.msra.mxu0 0.0
      %2920 = vmatprep.subr.mxu0 0.0
      %2921 = vmatpush1.msra.mxu0 0.0
      %2922 = vmatprep.subr.mxu0 0.0
      %2923 = vmatpush1.msra.mxu0 0.0
      %2924 = vmatprep.subr.mxu0 0.0
      %2925 = vmatpush1.msra.mxu0 0.0
      %2926 = vmatprep.subr.mxu0 0.0
      %2927 = vmatpush1.msra.mxu0 0.0
      %2928 = vmatprep.subr.mxu0 0.0
      %2929 = vmatpush1.msra.mxu0 0.0
      %2930 = vmatprep.subr.mxu0 0.0
      %2931 = vmatpush1.msra.mxu0 0.0
      %2932 = vmatprep.subr.mxu0 0.0
      %2933 = vmatpush1.msra.mxu0 0.0
      %2934 = vmatprep.subr.mxu0 0.0
      %2935 = vmatpush1.msra.mxu0 0.0
      %2936 = vmatprep.subr.mxu0 0.0
      %2937 = vmatpush1.msra.mxu0 0.0
      %2938 = vmatprep.subr.mxu0 0.0
      %2939 = vmatpush1.msra.mxu0 0.0
      %2940 = vmatprep.subr.mxu0 0.0
      %2941 = vmatpush1.msra.mxu0 0.0
      %2942 = vmatprep.subr.mxu0 0.0
      %2943 = vmatpush1.msra.mxu0 0.0
      %2944 = vmatprep.subr.mxu0 0.0
      %2945 = vmatpush1.msra.mxu0 0.0
      %2946 = vmatprep.subr.mxu0 0.0
      %2947 = vmatpush1.msra.mxu0 0.0
      %2948 = vmatprep.subr.mxu0 0.0
      %2949 = vmatpush1.msra.mxu0 0.0
      %2950 = vmatprep.subr.mxu0 0.0
      %2951 = vmatpush1.msra.mxu0 0.0
      %2952 = vmatprep.mubr.f32.mxu0 0.0
      %2953 = vmatmul.mubr.f32.gmra.mrb[0].mxu0 %v2882
      %v2954 = vpop.f32.mrb[0].mxu0
      %v2955 = vadd.f32 0.0, %v2954
      %v2956 = vpop.f32.mrb[0].mxu0
      %v2957 = vadd.f32 0.0, %v2956
      %2958 = vdwg.mxu0
      %v2959 = vadd.f32 %v2863, %v2955
      %v2960 = vadd.f32 %v2864, %v2957
      %v2961 = vld [vmem:[%s2 + $0x8] sm:$0xf]
      %2963 = vset.pattern.permute.xlu0 0
      %2964 = vperm.xlu0 %2963, %v2961
      %v2965 = vpop.permute.xlu0 %2964
      %v2967 = vmul.f32 %v2959, %v2965
      %v2968 = vmul.f32 %v2960, %v2965
      %v2969 = vld [vmem:[%s3 + $0x8] sm:$0xf]
      %2971 = vset.pattern.permute.xlu0 0
      %2972 = vperm.xlu0 %2971, %v2969
      %v2973 = vpop.permute.xlu0 %2972
      %v2975 = vadd.f32 %v2967, %v2973
      %v2976 = vadd.f32 %v2968, %v2973
      %v2977 = vmax.f32 %v2975, 0.0
      %v2978 = vmax.f32 %v2976, 0.0
      %v2981 = vcombine.low %v2977, %v2978
      %2982 = vrot.lane.b32.xlu0 %v2981, 17
      %v2983 = vpop.permute.xlu0 %2982
      %v2984 = vrot.slane %v2983, 4
      %v2985 = vsel %vm251, %v2984, %v2983
      %2988 = vst.msk [vmem:[#allocation2] sm:$0xff] %vm257, %v2985
      %2989 = vst.msk [vmem:[#allocation2 + $0x8] sm:$0xf] %vm259, %v2984
      %v2990 = vld [vmem:[#allocation2] sm:$0xff]
      %v2991 = vmul.f32 %v2990, %v271
      %v2992 = vld [vmem:[%s1 + $0x6c] sm:$0xf]
      %v2993 = vld [vmem:[#allocation2 + $0x8] sm:$0xf]
      %v2994 = vmul.f32 %v2990, %v290
      %v2995 = vmul.f32 %v2993, %v288
      %v2996 = vld [vmem:[%s1 + $0x70] sm:$0xf]
      %v2999 = vcombine.high %v2994, %v2994
      %3000 = vrot.lane.b32.xlu0 %v2994, 127
      %v3001 = vpop.permute.xlu0 %3000
      %3002 = vrot.lane.b32.xlu0 %v2999, 127
      %v3003 = vpop.permute.xlu0 %3002
      %3004 = vrot.lane.b32.xlu0 %v2995, 127
      %v3005 = vpop.permute.xlu0 %3004
      %v3006 = vsel %vm305, %v3001, %v3003
      %v3007 = vsel %vm305, %v3003, %v3005
      %v3009 = vsel %vm308, %v2996, 0
      %v3011 = vsel %vm312, %v3006, 0
      %v3013 = vsel %vm312, %v3007, 0
      %3015 = vmatprep.subr.mxu0 %v3013
      %3016 = vmatpush1.msra.mxu0 %v3011
      %3017 = vmatprep.subr.mxu0 0.0
      %3018 = vmatpush1.msra.mxu0 0.0
      %3019 = vmatprep.subr.mxu0 0.0
      %3020 = vmatpush1.msra.mxu0 0.0
      %3021 = vmatprep.subr.mxu0 0.0
      %3022 = vmatpush1.msra.mxu0 0.0
      %3023 = vmatprep.subr.mxu0 0.0
      %3024 = vmatpush1.msra.mxu0 0.0
      %3025 = vmatprep.subr.mxu0 0.0
      %3026 = vmatpush1.msra.mxu0 0.0
      %3027 = vmatprep.subr.mxu0 0.0
      %3028 = vmatpush1.msra.mxu0 0.0
      %3029 = vmatprep.subr.mxu0 0.0
      %3030 = vmatpush1.msra.mxu0 0.0
      %3031 = vmatprep.subr.mxu0 0.0
      %3032 = vmatpush1.msra.mxu0 0.0
      %3033 = vmatprep.subr.mxu0 0.0
      %3034 = vmatpush1.msra.mxu0 0.0
      %3035 = vmatprep.subr.mxu0 0.0
      %3036 = vmatpush1.msra.mxu0 0.0
      %3037 = vmatprep.subr.mxu0 0.0
      %3038 = vmatpush1.msra.mxu0 0.0
      %3039 = vmatprep.subr.mxu0 0.0
      %3040 = vmatpush1.msra.mxu0 0.0
      %3041 = vmatprep.subr.mxu0 0.0
      %3042 = vmatpush1.msra.mxu0 0.0
      %3043 = vmatprep.subr.mxu0 0.0
      %3044 = vmatpush1.msra.mxu0 0.0
      %3045 = vmatprep.subr.mxu0 0.0
      %3046 = vmatpush1.msra.mxu0 0.0
      %3047 = vmatprep.subr.mxu0 0.0
      %3048 = vmatpush1.msra.mxu0 0.0
      %3049 = vmatprep.subr.mxu0 0.0
      %3050 = vmatpush1.msra.mxu0 0.0
      %3051 = vmatprep.subr.mxu0 0.0
      %3052 = vmatpush1.msra.mxu0 0.0
      %3053 = vmatprep.subr.mxu0 0.0
      %3054 = vmatpush1.msra.mxu0 0.0
      %3055 = vmatprep.subr.mxu0 0.0
      %3056 = vmatpush1.msra.mxu0 0.0
      %3057 = vmatprep.subr.mxu0 0.0
      %3058 = vmatpush1.msra.mxu0 0.0
      %3059 = vmatprep.subr.mxu0 0.0
      %3060 = vmatpush1.msra.mxu0 0.0
      %3061 = vmatprep.subr.mxu0 0.0
      %3062 = vmatpush1.msra.mxu0 0.0
      %3063 = vmatprep.subr.mxu0 0.0
      %3064 = vmatpush1.msra.mxu0 0.0
      %3065 = vmatprep.subr.mxu0 0.0
      %3066 = vmatpush1.msra.mxu0 0.0
      %3067 = vmatprep.subr.mxu0 0.0
      %3068 = vmatpush1.msra.mxu0 0.0
      %3069 = vmatprep.subr.mxu0 0.0
      %3070 = vmatpush1.msra.mxu0 0.0
      %3071 = vmatprep.subr.mxu0 0.0
      %3072 = vmatpush1.msra.mxu0 0.0
      %3073 = vmatprep.subr.mxu0 0.0
      %3074 = vmatpush1.msra.mxu0 0.0
      %3075 = vmatprep.subr.mxu0 0.0
      %3076 = vmatpush1.msra.mxu0 0.0
      %3077 = vmatprep.subr.mxu0 0.0
      %3078 = vmatpush1.msra.mxu0 0.0
      %3079 = vmatprep.mubr.f32.mxu0 0.0
      %3080 = vmatmul.mubr.f32.gmra.mrb[0].mxu0 %v3009
      %v3081 = vpop.f32.mrb[0].mxu0
      %v3082 = vadd.f32 0.0, %v3081
      %v3083 = vpop.f32.mrb[0].mxu0
      %v3084 = vadd.f32 0.0, %v3083
      %3085 = vdwg.mxu0
      %v3087 = vcombine.high %v2991, %v2991
      %v3089 = vsel %vm308, %v2992, 0
      %v3091 = vsel %vm312, %v2991, 0
      %v3093 = vsel %vm312, %v3087, 0
      %3095 = vmatprep.subr.mxu0 %v3093
      %3096 = vmatpush1.msra.mxu0 %v3091
      %3097 = vmatprep.subr.mxu0 0.0
      %3098 = vmatpush1.msra.mxu0 0.0
      %3099 = vmatprep.subr.mxu0 0.0
      %3100 = vmatpush1.msra.mxu0 0.0
      %3101 = vmatprep.subr.mxu0 0.0
      %3102 = vmatpush1.msra.mxu0 0.0
      %3103 = vmatprep.subr.mxu0 0.0
      %3104 = vmatpush1.msra.mxu0 0.0
      %3105 = vmatprep.subr.mxu0 0.0
      %3106 = vmatpush1.msra.mxu0 0.0
      %3107 = vmatprep.subr.mxu0 0.0
      %3108 = vmatpush1.msra.mxu0 0.0
      %3109 = vmatprep.subr.mxu0 0.0
      %3110 = vmatpush1.msra.mxu0 0.0
      %3111 = vmatprep.subr.mxu0 0.0
      %3112 = vmatpush1.msra.mxu0 0.0
      %3113 = vmatprep.subr.mxu0 0.0
      %3114 = vmatpush1.msra.mxu0 0.0
      %3115 = vmatprep.subr.mxu0 0.0
      %3116 = vmatpush1.msra.mxu0 0.0
      %3117 = vmatprep.subr.mxu0 0.0
      %3118 = vmatpush1.msra.mxu0 0.0
      %3119 = vmatprep.subr.mxu0 0.0
      %3120 = vmatpush1.msra.mxu0 0.0
      %3121 = vmatprep.subr.mxu0 0.0
      %3122 = vmatpush1.msra.mxu0 0.0
      %3123 = vmatprep.subr.mxu0 0.0
      %3124 = vmatpush1.msra.mxu0 0.0
      %3125 = vmatprep.subr.mxu0 0.0
      %3126 = vmatpush1.msra.mxu0 0.0
      %3127 = vmatprep.subr.mxu0 0.0
      %3128 = vmatpush1.msra.mxu0 0.0
      %3129 = vmatprep.subr.mxu0 0.0
      %3130 = vmatpush1.msra.mxu0 0.0
      %3131 = vmatprep.subr.mxu0 0.0
      %3132 = vmatpush1.msra.mxu0 0.0
      %3133 = vmatprep.subr.mxu0 0.0
      %3134 = vmatpush1.msra.mxu0 0.0
      %3135 = vmatprep.subr.mxu0 0.0
      %3136 = vmatpush1.msra.mxu0 0.0
      %3137 = vmatprep.subr.mxu0 0.0
      %3138 = vmatpush1.msra.mxu0 0.0
      %3139 = vmatprep.subr.mxu0 0.0
      %3140 = vmatpush1.msra.mxu0 0.0
      %3141 = vmatprep.subr.mxu0 0.0
      %3142 = vmatpush1.msra.mxu0 0.0
      %3143 = vmatprep.subr.mxu0 0.0
      %3144 = vmatpush1.msra.mxu0 0.0
      %3145 = vmatprep.subr.mxu0 0.0
      %3146 = vmatpush1.msra.mxu0 0.0
      %3147 = vmatprep.subr.mxu0 0.0
      %3148 = vmatpush1.msra.mxu0 0.0
      %3149 = vmatprep.subr.mxu0 0.0
      %3150 = vmatpush1.msra.mxu0 0.0
      %3151 = vmatprep.subr.mxu0 0.0
      %3152 = vmatpush1.msra.mxu0 0.0
      %3153 = vmatprep.subr.mxu0 0.0
      %3154 = vmatpush1.msra.mxu0 0.0
      %3155 = vmatprep.subr.mxu0 0.0
      %3156 = vmatpush1.msra.mxu0 0.0
      %3157 = vmatprep.subr.mxu0 0.0
      %3158 = vmatpush1.msra.mxu0 0.0
      %3159 = vmatprep.mubr.f32.mxu0 0.0
      %3160 = vmatmul.mubr.f32.gmra.mrb[0].mxu0 %v3089
      %v3161 = vpop.f32.mrb[0].mxu0
      %v3162 = vadd.f32 %v3082, %v3161
      %v3163 = vpop.f32.mrb[0].mxu0
      %v3164 = vadd.f32 %v3084, %v3163
      %3165 = vdwg.mxu0
      %v3166 = vld [vmem:[#allocation2] sm:$0xff]
      %v3167 = vld [vmem:[#allocation2 + $0x8] sm:$0xf]
      %v3168 = vmul.f32 %v3166, %v484
      %v3169 = vmul.f32 %v3167, %v482
      %v3170 = vld [vmem:[%s1 + $0x74] sm:$0xf]
      %v3173 = vcombine.high %v3168, %v3168
      %3174 = vrot.lane.b32.xlu0 %v3168, 126
      %v3175 = vpop.permute.xlu0 %3174
      %3176 = vrot.lane.b32.xlu0 %v3173, 126
      %v3177 = vpop.permute.xlu0 %3176
      %3178 = vrot.lane.b32.xlu0 %v3169, 126
      %v3179 = vpop.permute.xlu0 %3178
      %v3180 = vsel %vm499, %v3175, %v3177
      %v3181 = vsel %vm499, %v3177, %v3179
      %v3183 = vsel %vm308, %v3170, 0
      %v3185 = vsel %vm312, %v3180, 0
      %v3187 = vsel %vm312, %v3181, 0
      %3189 = vmatprep.subr.mxu0 %v3187
      %3190 = vmatpush1.msra.mxu0 %v3185
      %3191 = vmatprep.subr.mxu0 0.0
      %3192 = vmatpush1.msra.mxu0 0.0
      %3193 = vmatprep.subr.mxu0 0.0
      %3194 = vmatpush1.msra.mxu0 0.0
      %3195 = vmatprep.subr.mxu0 0.0
      %3196 = vmatpush1.msra.mxu0 0.0
      %3197 = vmatprep.subr.mxu0 0.0
      %3198 = vmatpush1.msra.mxu0 0.0
      %3199 = vmatprep.subr.mxu0 0.0
      %3200 = vmatpush1.msra.mxu0 0.0
      %3201 = vmatprep.subr.mxu0 0.0
      %3202 = vmatpush1.msra.mxu0 0.0
      %3203 = vmatprep.subr.mxu0 0.0
      %3204 = vmatpush1.msra.mxu0 0.0
      %3205 = vmatprep.subr.mxu0 0.0
      %3206 = vmatpush1.msra.mxu0 0.0
      %3207 = vmatprep.subr.mxu0 0.0
      %3208 = vmatpush1.msra.mxu0 0.0
      %3209 = vmatprep.subr.mxu0 0.0
      %3210 = vmatpush1.msra.mxu0 0.0
      %3211 = vmatprep.subr.mxu0 0.0
      %3212 = vmatpush1.msra.mxu0 0.0
      %3213 = vmatprep.subr.mxu0 0.0
      %3214 = vmatpush1.msra.mxu0 0.0
      %3215 = vmatprep.subr.mxu0 0.0
      %3216 = vmatpush1.msra.mxu0 0.0
      %3217 = vmatprep.subr.mxu0 0.0
      %3218 = vmatpush1.msra.mxu0 0.0
      %3219 = vmatprep.subr.mxu0 0.0
      %3220 = vmatpush1.msra.mxu0 0.0
      %3221 = vmatprep.subr.mxu0 0.0
      %3222 = vmatpush1.msra.mxu0 0.0
      %3223 = vmatprep.subr.mxu0 0.0
      %3224 = vmatpush1.msra.mxu0 0.0
      %3225 = vmatprep.subr.mxu0 0.0
      %3226 = vmatpush1.msra.mxu0 0.0
      %3227 = vmatprep.subr.mxu0 0.0
      %3228 = vmatpush1.msra.mxu0 0.0
      %3229 = vmatprep.subr.mxu0 0.0
      %3230 = vmatpush1.msra.mxu0 0.0
      %3231 = vmatprep.subr.mxu0 0.0
      %3232 = vmatpush1.msra.mxu0 0.0
      %3233 = vmatprep.subr.mxu0 0.0
      %3234 = vmatpush1.msra.mxu0 0.0
      %3235 = vmatprep.subr.mxu0 0.0
      %3236 = vmatpush1.msra.mxu0 0.0
      %3237 = vmatprep.subr.mxu0 0.0
      %3238 = vmatpush1.msra.mxu0 0.0
      %3239 = vmatprep.subr.mxu0 0.0
      %3240 = vmatpush1.msra.mxu0 0.0
      %3241 = vmatprep.subr.mxu0 0.0
      %3242 = vmatpush1.msra.mxu0 0.0
      %3243 = vmatprep.subr.mxu0 0.0
      %3244 = vmatpush1.msra.mxu0 0.0
      %3245 = vmatprep.subr.mxu0 0.0
      %3246 = vmatpush1.msra.mxu0 0.0
      %3247 = vmatprep.subr.mxu0 0.0
      %3248 = vmatpush1.msra.mxu0 0.0
      %3249 = vmatprep.subr.mxu0 0.0
      %3250 = vmatpush1.msra.mxu0 0.0
      %3251 = vmatprep.subr.mxu0 0.0
      %3252 = vmatpush1.msra.mxu0 0.0
      %3253 = vmatprep.mubr.f32.mxu0 0.0
      %3254 = vmatmul.mubr.f32.gmra.mrb[0].mxu0 %v3183
      %v3255 = vpop.f32.mrb[0].mxu0
      %v3256 = vadd.f32 0.0, %v3255
      %v3257 = vpop.f32.mrb[0].mxu0
      %v3258 = vadd.f32 0.0, %v3257
      %3259 = vdwg.mxu0
      %v3260 = vadd.f32 %v3162, %v3256
      %v3261 = vadd.f32 %v3164, %v3258
      %v3262 = vld [vmem:[#allocation2] sm:$0xff]
      %v3263 = vld [vmem:[#allocation2 + $0x8] sm:$0xf]
      %v3264 = vmul.f32 %v3262, %v598
      %v3265 = vmul.f32 %v3263, %v596
      %v3266 = vld [vmem:[%s1 + $0x78] sm:$0xf]
      %v3269 = vcombine.high %v3264, %v3264
      %3270 = vrot.lane.b32.xlu0 %v3264, 112
      %v3271 = vpop.permute.xlu0 %3270
      %3272 = vrot.lane.b32.xlu0 %v3269, 112
      %v3273 = vpop.permute.xlu0 %3272
      %3274 = vrot.lane.b32.xlu0 %v3265, 112
      %v3275 = vpop.permute.xlu0 %3274
      %v3276 = vsel %vm613, %v3271, %v3273
      %v3277 = vsel %vm613, %v3273, %v3275
      %v3279 = vsel %vm308, %v3266, 0
      %v3281 = vsel %vm312, %v3276, 0
      %v3283 = vsel %vm312, %v3277, 0
      %3285 = vmatprep.subr.mxu0 %v3283
      %3286 = vmatpush1.msra.mxu0 %v3281
      %3287 = vmatprep.subr.mxu0 0.0
      %3288 = vmatpush1.msra.mxu0 0.0
      %3289 = vmatprep.subr.mxu0 0.0
      %3290 = vmatpush1.msra.mxu0 0.0
      %3291 = vmatprep.subr.mxu0 0.0
      %3292 = vmatpush1.msra.mxu0 0.0
      %3293 = vmatprep.subr.mxu0 0.0
      %3294 = vmatpush1.msra.mxu0 0.0
      %3295 = vmatprep.subr.mxu0 0.0
      %3296 = vmatpush1.msra.mxu0 0.0
      %3297 = vmatprep.subr.mxu0 0.0
      %3298 = vmatpush1.msra.mxu0 0.0
      %3299 = vmatprep.subr.mxu0 0.0
      %3300 = vmatpush1.msra.mxu0 0.0
      %3301 = vmatprep.subr.mxu0 0.0
      %3302 = vmatpush1.msra.mxu0 0.0
      %3303 = vmatprep.subr.mxu0 0.0
      %3304 = vmatpush1.msra.mxu0 0.0
      %3305 = vmatprep.subr.mxu0 0.0
      %3306 = vmatpush1.msra.mxu0 0.0
      %3307 = vmatprep.subr.mxu0 0.0
      %3308 = vmatpush1.msra.mxu0 0.0
      %3309 = vmatprep.subr.mxu0 0.0
      %3310 = vmatpush1.msra.mxu0 0.0
      %3311 = vmatprep.subr.mxu0 0.0
      %3312 = vmatpush1.msra.mxu0 0.0
      %3313 = vmatprep.subr.mxu0 0.0
      %3314 = vmatpush1.msra.mxu0 0.0
      %3315 = vmatprep.subr.mxu0 0.0
      %3316 = vmatpush1.msra.mxu0 0.0
      %3317 = vmatprep.subr.mxu0 0.0
      %3318 = vmatpush1.msra.mxu0 0.0
      %3319 = vmatprep.subr.mxu0 0.0
      %3320 = vmatpush1.msra.mxu0 0.0
      %3321 = vmatprep.subr.mxu0 0.0
      %3322 = vmatpush1.msra.mxu0 0.0
      %3323 = vmatprep.subr.mxu0 0.0
      %3324 = vmatpush1.msra.mxu0 0.0
      %3325 = vmatprep.subr.mxu0 0.0
      %3326 = vmatpush1.msra.mxu0 0.0
      %3327 = vmatprep.subr.mxu0 0.0
      %3328 = vmatpush1.msra.mxu0 0.0
      %3329 = vmatprep.subr.mxu0 0.0
      %3330 = vmatpush1.msra.mxu0 0.0
      %3331 = vmatprep.subr.mxu0 0.0
      %3332 = vmatpush1.msra.mxu0 0.0
      %3333 = vmatprep.subr.mxu0 0.0
      %3334 = vmatpush1.msra.mxu0 0.0
      %3335 = vmatprep.subr.mxu0 0.0
      %3336 = vmatpush1.msra.mxu0 0.0
      %3337 = vmatprep.subr.mxu0 0.0
      %3338 = vmatpush1.msra.mxu0 0.0
      %3339 = vmatprep.subr.mxu0 0.0
      %3340 = vmatpush1.msra.mxu0 0.0
      %3341 = vmatprep.subr.mxu0 0.0
      %3342 = vmatpush1.msra.mxu0 0.0
      %3343 = vmatprep.subr.mxu0 0.0
      %3344 = vmatpush1.msra.mxu0 0.0
      %3345 = vmatprep.subr.mxu0 0.0
      %3346 = vmatpush1.msra.mxu0 0.0
      %3347 = vmatprep.subr.mxu0 0.0
      %3348 = vmatpush1.msra.mxu0 0.0
      %3349 = vmatprep.mubr.f32.mxu0 0.0
      %3350 = vmatmul.mubr.f32.gmra.mrb[0].mxu0 %v3279
      %v3351 = vpop.f32.mrb[0].mxu0
      %v3352 = vadd.f32 0.0, %v3351
      %v3353 = vpop.f32.mrb[0].mxu0
      %v3354 = vadd.f32 0.0, %v3353
      %3355 = vdwg.mxu0
      %v3356 = vadd.f32 %v3260, %v3352
      %v3357 = vadd.f32 %v3261, %v3354
      %v3358 = vld [vmem:[%s1 + $0x7c] sm:$0xf]
      %v3360 = vsel %vm308, %v3358, 0
      %v3362 = vsel %vm312, %v2977, 0
      %v3364 = vsel %vm312, %v2978, 0
      %3366 = vmatprep.subr.mxu0 %v3364
      %3367 = vmatpush1.msra.mxu0 %v3362
      %3368 = vmatprep.subr.mxu0 0.0
      %3369 = vmatpush1.msra.mxu0 0.0
      %3370 = vmatprep.subr.mxu0 0.0
      %3371 = vmatpush1.msra.mxu0 0.0
      %3372 = vmatprep.subr.mxu0 0.0
      %3373 = vmatpush1.msra.mxu0 0.0
      %3374 = vmatprep.subr.mxu0 0.0
      %3375 = vmatpush1.msra.mxu0 0.0
      %3376 = vmatprep.subr.mxu0 0.0
      %3377 = vmatpush1.msra.mxu0 0.0
      %3378 = vmatprep.subr.mxu0 0.0
      %3379 = vmatpush1.msra.mxu0 0.0
      %3380 = vmatprep.subr.mxu0 0.0
      %3381 = vmatpush1.msra.mxu0 0.0
      %3382 = vmatprep.subr.mxu0 0.0
      %3383 = vmatpush1.msra.mxu0 0.0
      %3384 = vmatprep.subr.mxu0 0.0
      %3385 = vmatpush1.msra.mxu0 0.0
      %3386 = vmatprep.subr.mxu0 0.0
      %3387 = vmatpush1.msra.mxu0 0.0
      %3388 = vmatprep.subr.mxu0 0.0
      %3389 = vmatpush1.msra.mxu0 0.0
      %3390 = vmatprep.subr.mxu0 0.0
      %3391 = vmatpush1.msra.mxu0 0.0
      %3392 = vmatprep.subr.mxu0 0.0
      %3393 = vmatpush1.msra.mxu0 0.0
      %3394 = vmatprep.subr.mxu0 0.0
      %3395 = vmatpush1.msra.mxu0 0.0
      %3396 = vmatprep.subr.mxu0 0.0
      %3397 = vmatpush1.msra.mxu0 0.0
      %3398 = vmatprep.subr.mxu0 0.0
      %3399 = vmatpush1.msra.mxu0 0.0
      %3400 = vmatprep.subr.mxu0 0.0
      %3401 = vmatpush1.msra.mxu0 0.0
      %3402 = vmatprep.subr.mxu0 0.0
      %3403 = vmatpush1.msra.mxu0 0.0
      %3404 = vmatprep.subr.mxu0 0.0
      %3405 = vmatpush1.msra.mxu0 0.0
      %3406 = vmatprep.subr.mxu0 0.0
      %3407 = vmatpush1.msra.mxu0 0.0
      %3408 = vmatprep.subr.mxu0 0.0
      %3409 = vmatpush1.msra.mxu0 0.0
      %3410 = vmatprep.subr.mxu0 0.0
      %3411 = vmatpush1.msra.mxu0 0.0
      %3412 = vmatprep.subr.mxu0 0.0
      %3413 = vmatpush1.msra.mxu0 0.0
      %3414 = vmatprep.subr.mxu0 0.0
      %3415 = vmatpush1.msra.mxu0 0.0
      %3416 = vmatprep.subr.mxu0 0.0
      %3417 = vmatpush1.msra.mxu0 0.0
      %3418 = vmatprep.subr.mxu0 0.0
      %3419 = vmatpush1.msra.mxu0 0.0
      %3420 = vmatprep.subr.mxu0 0.0
      %3421 = vmatpush1.msra.mxu0 0.0
      %3422 = vmatprep.subr.mxu0 0.0
      %3423 = vmatpush1.msra.mxu0 0.0
      %3424 = vmatprep.subr.mxu0 0.0
      %3425 = vmatpush1.msra.mxu0 0.0
      %3426 = vmatprep.subr.mxu0 0.0
      %3427 = vmatpush1.msra.mxu0 0.0
      %3428 = vmatprep.subr.mxu0 0.0
      %3429 = vmatpush1.msra.mxu0 0.0
      %3430 = vmatprep.mubr.f32.mxu0 0.0
      %3431 = vmatmul.mubr.f32.gmra.mrb[0].mxu0 %v3360
      %v3432 = vpop.f32.mrb[0].mxu0
      %v3433 = vadd.f32 0.0, %v3432
      %v3434 = vpop.f32.mrb[0].mxu0
      %v3435 = vadd.f32 0.0, %v3434
      %3436 = vdwg.mxu0
      %v3437 = vadd.f32 %v3356, %v3433
      %v3438 = vadd.f32 %v3357, %v3435
      %v3439 = vld [vmem:[#allocation2] sm:$0xff]
      %v3440 = vld [vmem:[#allocation2 + $0x8] sm:$0xf]
      %v3441 = vmul.f32 %v3439, %v794
      %v3442 = vmul.f32 %v3440, %v792
      %v3443 = vld [vmem:[%s1 + $0x80] sm:$0xf]
      %v3446 = vcombine.high %v3441, %v3441
      %3447 = vrot.lane.b32.xlu0 %v3441, 110
      %v3448 = vpop.permute.xlu0 %3447
      %3449 = vrot.lane.b32.xlu0 %v3446, 110
      %v3450 = vpop.permute.xlu0 %3449
      %3451 = vrot.lane.b32.xlu0 %v3442, 110
      %v3452 = vpop.permute.xlu0 %3451
      %v3453 = vsel %vm809, %v3448, %v3450
      %v3454 = vsel %vm809, %v3450, %v3452
      %v3456 = vsel %vm308, %v3443, 0
      %v3458 = vsel %vm312, %v3453, 0
      %v3460 = vsel %vm312, %v3454, 0
      %3462 = vmatprep.subr.mxu0 %v3460
      %3463 = vmatpush1.msra.mxu0 %v3458
      %3464 = vmatprep.subr.mxu0 0.0
      %3465 = vmatpush1.msra.mxu0 0.0
      %3466 = vmatprep.subr.mxu0 0.0
      %3467 = vmatpush1.msra.mxu0 0.0
      %3468 = vmatprep.subr.mxu0 0.0
      %3469 = vmatpush1.msra.mxu0 0.0
      %3470 = vmatprep.subr.mxu0 0.0
      %3471 = vmatpush1.msra.mxu0 0.0
      %3472 = vmatprep.subr.mxu0 0.0
      %3473 = vmatpush1.msra.mxu0 0.0
      %3474 = vmatprep.subr.mxu0 0.0
      %3475 = vmatpush1.msra.mxu0 0.0
      %3476 = vmatprep.subr.mxu0 0.0
      %3477 = vmatpush1.msra.mxu0 0.0
      %3478 = vmatprep.subr.mxu0 0.0
      %3479 = vmatpush1.msra.mxu0 0.0
      %3480 = vmatprep.subr.mxu0 0.0
      %3481 = vmatpush1.msra.mxu0 0.0
      %3482 = vmatprep.subr.mxu0 0.0
      %3483 = vmatpush1.msra.mxu0 0.0
      %3484 = vmatprep.subr.mxu0 0.0
      %3485 = vmatpush1.msra.mxu0 0.0
      %3486 = vmatprep.subr.mxu0 0.0
      %3487 = vmatpush1.msra.mxu0 0.0
      %3488 = vmatprep.subr.mxu0 0.0
      %3489 = vmatpush1.msra.mxu0 0.0
      %3490 = vmatprep.subr.mxu0 0.0
      %3491 = vmatpush1.msra.mxu0 0.0
      %3492 = vmatprep.subr.mxu0 0.0
      %3493 = vmatpush1.msra.mxu0 0.0
      %3494 = vmatprep.subr.mxu0 0.0
      %3495 = vmatpush1.msra.mxu0 0.0
      %3496 = vmatprep.subr.mxu0 0.0
      %3497 = vmatpush1.msra.mxu0 0.0
      %3498 = vmatprep.subr.mxu0 0.0
      %3499 = vmatpush1.msra.mxu0 0.0
      %3500 = vmatprep.subr.mxu0 0.0
      %3501 = vmatpush1.msra.mxu0 0.0
      %3502 = vmatprep.subr.mxu0 0.0
      %3503 = vmatpush1.msra.mxu0 0.0
      %3504 = vmatprep.subr.mxu0 0.0
      %3505 = vmatpush1.msra.mxu0 0.0
      %3506 = vmatprep.subr.mxu0 0.0
      %3507 = vmatpush1.msra.mxu0 0.0
      %3508 = vmatprep.subr.mxu0 0.0
      %3509 = vmatpush1.msra.mxu0 0.0
      %3510 = vmatprep.subr.mxu0 0.0
      %3511 = vmatpush1.msra.mxu0 0.0
      %3512 = vmatprep.subr.mxu0 0.0
      %3513 = vmatpush1.msra.mxu0 0.0
      %3514 = vmatprep.subr.mxu0 0.0
      %3515 = vmatpush1.msra.mxu0 0.0
      %3516 = vmatprep.subr.mxu0 0.0
      %3517 = vmatpush1.msra.mxu0 0.0
      %3518 = vmatprep.subr.mxu0 0.0
      %3519 = vmatpush1.msra.mxu0 0.0
      %3520 = vmatprep.subr.mxu0 0.0
      %3521 = vmatpush1.msra.mxu0 0.0
      %3522 = vmatprep.subr.mxu0 0.0
      %3523 = vmatpush1.msra.mxu0 0.0
      %3524 = vmatprep.subr.mxu0 0.0
      %3525 = vmatpush1.msra.mxu0 0.0
      %3526 = vmatprep.mubr.f32.mxu0 0.0
      %3527 = vmatmul.mubr.f32.gmra.mrb[0].mxu0 %v3456
      %v3528 = vpop.f32.mrb[0].mxu0
      %v3529 = vadd.f32 0.0, %v3528
      %v3530 = vpop.f32.mrb[0].mxu0
      %v3531 = vadd.f32 0.0, %v3530
      %3532 = vdwg.mxu0
      %v3533 = vadd.f32 %v3437, %v3529
      %v3534 = vadd.f32 %v3438, %v3531
      %v3535 = vld [vmem:[#allocation2] sm:$0xff]
      %v3536 = vld [vmem:[#allocation2 + $0x8] sm:$0xf]
      %v3537 = vmul.f32 %v3535, %v908
      %v3538 = vmul.f32 %v3536, %v906
      %v3539 = vld [vmem:[%s1 + $0x84] sm:$0xf]
      %v3542 = vcombine.high %v3537, %v3537
      %3543 = vrot.lane.b32.xlu0 %v3537, 96
      %v3544 = vpop.permute.xlu0 %3543
      %3545 = vrot.lane.b32.xlu0 %v3542, 96
      %v3546 = vpop.permute.xlu0 %3545
      %3547 = vrot.lane.b32.xlu0 %v3538, 96
      %v3548 = vpop.permute.xlu0 %3547
      %v3549 = vsel %vm923, %v3544, %v3546
      %v3550 = vsel %vm923, %v3546, %v3548
      %v3552 = vsel %vm308, %v3539, 0
      %v3554 = vsel %vm312, %v3549, 0
      %v3556 = vsel %vm312, %v3550, 0
      %3558 = vmatprep.subr.mxu0 %v3556
      %3559 = vmatpush1.msra.mxu0 %v3554
      %3560 = vmatprep.subr.mxu0 0.0
      %3561 = vmatpush1.msra.mxu0 0.0
      %3562 = vmatprep.subr.mxu0 0.0
      %3563 = vmatpush1.msra.mxu0 0.0
      %3564 = vmatprep.subr.mxu0 0.0
      %3565 = vmatpush1.msra.mxu0 0.0
      %3566 = vmatprep.subr.mxu0 0.0
      %3567 = vmatpush1.msra.mxu0 0.0
      %3568 = vmatprep.subr.mxu0 0.0
      %3569 = vmatpush1.msra.mxu0 0.0
      %3570 = vmatprep.subr.mxu0 0.0
      %3571 = vmatpush1.msra.mxu0 0.0
      %3572 = vmatprep.subr.mxu0 0.0
      %3573 = vmatpush1.msra.mxu0 0.0
      %3574 = vmatprep.subr.mxu0 0.0
      %3575 = vmatpush1.msra.mxu0 0.0
      %3576 = vmatprep.subr.mxu0 0.0
      %3577 = vmatpush1.msra.mxu0 0.0
      %3578 = vmatprep.subr.mxu0 0.0
      %3579 = vmatpush1.msra.mxu0 0.0
      %3580 = vmatprep.subr.mxu0 0.0
      %3581 = vmatpush1.msra.mxu0 0.0
      %3582 = vmatprep.subr.mxu0 0.0
      %3583 = vmatpush1.msra.mxu0 0.0
      %3584 = vmatprep.subr.mxu0 0.0
      %3585 = vmatpush1.msra.mxu0 0.0
      %3586 = vmatprep.subr.mxu0 0.0
      %3587 = vmatpush1.msra.mxu0 0.0
      %3588 = vmatprep.subr.mxu0 0.0
      %3589 = vmatpush1.msra.mxu0 0.0
      %3590 = vmatprep.subr.mxu0 0.0
      %3591 = vmatpush1.msra.mxu0 0.0
      %3592 = vmatprep.subr.mxu0 0.0
      %3593 = vmatpush1.msra.mxu0 0.0
      %3594 = vmatprep.subr.mxu0 0.0
      %3595 = vmatpush1.msra.mxu0 0.0
      %3596 = vmatprep.subr.mxu0 0.0
      %3597 = vmatpush1.msra.mxu0 0.0
      %3598 = vmatprep.subr.mxu0 0.0
      %3599 = vmatpush1.msra.mxu0 0.0
      %3600 = vmatprep.subr.mxu0 0.0
      %3601 = vmatpush1.msra.mxu0 0.0
      %3602 = vmatprep.subr.mxu0 0.0
      %3603 = vmatpush1.msra.mxu0 0.0
      %3604 = vmatprep.subr.mxu0 0.0
      %3605 = vmatpush1.msra.mxu0 0.0
      %3606 = vmatprep.subr.mxu0 0.0
      %3607 = vmatpush1.msra.mxu0 0.0
      %3608 = vmatprep.subr.mxu0 0.0
      %3609 = vmatpush1.msra.mxu0 0.0
      %3610 = vmatprep.subr.mxu0 0.0
      %3611 = vmatpush1.msra.mxu0 0.0
      %3612 = vmatprep.subr.mxu0 0.0
      %3613 = vmatpush1.msra.mxu0 0.0
      %3614 = vmatprep.subr.mxu0 0.0
      %3615 = vmatpush1.msra.mxu0 0.0
      %3616 = vmatprep.subr.mxu0 0.0
      %3617 = vmatpush1.msra.mxu0 0.0
      %3618 = vmatprep.subr.mxu0 0.0
      %3619 = vmatpush1.msra.mxu0 0.0
      %3620 = vmatprep.subr.mxu0 0.0
      %3621 = vmatpush1.msra.mxu0 0.0
      %3622 = vmatprep.mubr.f32.mxu0 0.0
      %3623 = vmatmul.mubr.f32.gmra.mrb[0].mxu0 %v3552
      %v3624 = vpop.f32.mrb[0].mxu0
      %v3625 = vadd.f32 0.0, %v3624
      %v3626 = vpop.f32.mrb[0].mxu0
      %v3627 = vadd.f32 0.0, %v3626
      %3628 = vdwg.mxu0
      %v3629 = vadd.f32 %v3533, %v3625
      %v3630 = vadd.f32 %v3534, %v3627
      %v3631 = vld [vmem:[#allocation2] sm:$0xff]
      %v3632 = vld [vmem:[#allocation2 + $0x8] sm:$0xf]
      %v3633 = vmul.f32 %v3631, %v1022
      %v3634 = vmul.f32 %v3632, %v1020
      %v3635 = vld [vmem:[%s1 + $0x88] sm:$0xf]
      %v3638 = vcombine.high %v3633, %v3633
      %3639 = vrot.lane.b32.xlu0 %v3633, 95
      %v3640 = vpop.permute.xlu0 %3639
      %3641 = vrot.lane.b32.xlu0 %v3638, 95
      %v3642 = vpop.permute.xlu0 %3641
      %3643 = vrot.lane.b32.xlu0 %v3634, 95
      %v3644 = vpop.permute.xlu0 %3643
      %v3645 = vsel %vm1037, %v3640, %v3642
      %v3646 = vsel %vm1037, %v3642, %v3644
      %v3648 = vsel %vm308, %v3635, 0
      %v3650 = vsel %vm312, %v3645, 0
      %v3652 = vsel %vm312, %v3646, 0
      %3654 = vmatprep.subr.mxu0 %v3652
      %3655 = vmatpush1.msra.mxu0 %v3650
      %3656 = vmatprep.subr.mxu0 0.0
      %3657 = vmatpush1.msra.mxu0 0.0
      %3658 = vmatprep.subr.mxu0 0.0
      %3659 = vmatpush1.msra.mxu0 0.0
      %3660 = vmatprep.subr.mxu0 0.0
      %3661 = vmatpush1.msra.mxu0 0.0
      %3662 = vmatprep.subr.mxu0 0.0
      %3663 = vmatpush1.msra.mxu0 0.0
      %3664 = vmatprep.subr.mxu0 0.0
      %3665 = vmatpush1.msra.mxu0 0.0
      %3666 = vmatprep.subr.mxu0 0.0
      %3667 = vmatpush1.msra.mxu0 0.0
      %3668 = vmatprep.subr.mxu0 0.0
      %3669 = vmatpush1.msra.mxu0 0.0
      %3670 = vmatprep.subr.mxu0 0.0
      %3671 = vmatpush1.msra.mxu0 0.0
      %3672 = vmatprep.subr.mxu0 0.0
      %3673 = vmatpush1.msra.mxu0 0.0
      %3674 = vmatprep.subr.mxu0 0.0
      %3675 = vmatpush1.msra.mxu0 0.0
      %3676 = vmatprep.subr.mxu0 0.0
      %3677 = vmatpush1.msra.mxu0 0.0
      %3678 = vmatprep.subr.mxu0 0.0
      %3679 = vmatpush1.msra.mxu0 0.0
      %3680 = vmatprep.subr.mxu0 0.0
      %3681 = vmatpush1.msra.mxu0 0.0
      %3682 = vmatprep.subr.mxu0 0.0
      %3683 = vmatpush1.msra.mxu0 0.0
      %3684 = vmatprep.subr.mxu0 0.0
      %3685 = vmatpush1.msra.mxu0 0.0
      %3686 = vmatprep.subr.mxu0 0.0
      %3687 = vmatpush1.msra.mxu0 0.0
      %3688 = vmatprep.subr.mxu0 0.0
      %3689 = vmatpush1.msra.mxu0 0.0
      %3690 = vmatprep.subr.mxu0 0.0
      %3691 = vmatpush1.msra.mxu0 0.0
      %3692 = vmatprep.subr.mxu0 0.0
      %3693 = vmatpush1.msra.mxu0 0.0
      %3694 = vmatprep.subr.mxu0 0.0
      %3695 = vmatpush1.msra.mxu0 0.0
      %3696 = vmatprep.subr.mxu0 0.0
      %3697 = vmatpush1.msra.mxu0 0.0
      %3698 = vmatprep.subr.mxu0 0.0
      %3699 = vmatpush1.msra.mxu0 0.0
      %3700 = vmatprep.subr.mxu0 0.0
      %3701 = vmatpush1.msra.mxu0 0.0
      %3702 = vmatprep.subr.mxu0 0.0
      %3703 = vmatpush1.msra.mxu0 0.0
      %3704 = vmatprep.subr.mxu0 0.0
      %3705 = vmatpush1.msra.mxu0 0.0
      %3706 = vmatprep.subr.mxu0 0.0
      %3707 = vmatpush1.msra.mxu0 0.0
      %3708 = vmatprep.subr.mxu0 0.0
      %3709 = vmatpush1.msra.mxu0 0.0
      %3710 = vmatprep.subr.mxu0 0.0
      %3711 = vmatpush1.msra.mxu0 0.0
      %3712 = vmatprep.subr.mxu0 0.0
      %3713 = vmatpush1.msra.mxu0 0.0
      %3714 = vmatprep.subr.mxu0 0.0
      %3715 = vmatpush1.msra.mxu0 0.0
      %3716 = vmatprep.subr.mxu0 0.0
      %3717 = vmatpush1.msra.mxu0 0.0
      %3718 = vmatprep.mubr.f32.mxu0 0.0
      %3719 = vmatmul.mubr.f32.gmra.mrb[0].mxu0 %v3648
      %v3720 = vpop.f32.mrb[0].mxu0
      %v3721 = vadd.f32 0.0, %v3720
      %v3722 = vpop.f32.mrb[0].mxu0
      %v3723 = vadd.f32 0.0, %v3722
      %3724 = vdwg.mxu0
      %v3725 = vadd.f32 %v3629, %v3721
      %v3726 = vadd.f32 %v3630, %v3723
      %v3727 = vld [vmem:[#allocation2] sm:$0xff]
      %v3728 = vld [vmem:[#allocation2 + $0x8] sm:$0xf]
      %v3729 = vmul.f32 %v3727, %v1136
      %v3730 = vmul.f32 %v3728, %v1134
      %v3731 = vld [vmem:[%s1 + $0x8c] sm:$0xf]
      %v3734 = vcombine.high %v3729, %v3729
      %3735 = vrot.lane.b32.xlu0 %v3729, 94
      %v3736 = vpop.permute.xlu0 %3735
      %3737 = vrot.lane.b32.xlu0 %v3734, 94
      %v3738 = vpop.permute.xlu0 %3737
      %3739 = vrot.lane.b32.xlu0 %v3730, 94
      %v3740 = vpop.permute.xlu0 %3739
      %v3741 = vsel %vm1151, %v3736, %v3738
      %v3742 = vsel %vm1151, %v3738, %v3740
      %v3744 = vsel %vm308, %v3731, 0
      %v3746 = vsel %vm312, %v3741, 0
      %v3748 = vsel %vm312, %v3742, 0
      %3750 = vmatprep.subr.mxu0 %v3748
      %3751 = vmatpush1.msra.mxu0 %v3746
      %3752 = vmatprep.subr.mxu0 0.0
      %3753 = vmatpush1.msra.mxu0 0.0
      %3754 = vmatprep.subr.mxu0 0.0
      %3755 = vmatpush1.msra.mxu0 0.0
      %3756 = vmatprep.subr.mxu0 0.0
      %3757 = vmatpush1.msra.mxu0 0.0
      %3758 = vmatprep.subr.mxu0 0.0
      %3759 = vmatpush1.msra.mxu0 0.0
      %3760 = vmatprep.subr.mxu0 0.0
      %3761 = vmatpush1.msra.mxu0 0.0
      %3762 = vmatprep.subr.mxu0 0.0
      %3763 = vmatpush1.msra.mxu0 0.0
      %3764 = vmatprep.subr.mxu0 0.0
      %3765 = vmatpush1.msra.mxu0 0.0
      %3766 = vmatprep.subr.mxu0 0.0
      %3767 = vmatpush1.msra.mxu0 0.0
      %3768 = vmatprep.subr.mxu0 0.0
      %3769 = vmatpush1.msra.mxu0 0.0
      %3770 = vmatprep.subr.mxu0 0.0
      %3771 = vmatpush1.msra.mxu0 0.0
      %3772 = vmatprep.subr.mxu0 0.0
      %3773 = vmatpush1.msra.mxu0 0.0
      %3774 = vmatprep.subr.mxu0 0.0
      %3775 = vmatpush1.msra.mxu0 0.0
      %3776 = vmatprep.subr.mxu0 0.0
      %3777 = vmatpush1.msra.mxu0 0.0
      %3778 = vmatprep.subr.mxu0 0.0
      %3779 = vmatpush1.msra.mxu0 0.0
      %3780 = vmatprep.subr.mxu0 0.0
      %3781 = vmatpush1.msra.mxu0 0.0
      %3782 = vmatprep.subr.mxu0 0.0
      %3783 = vmatpush1.msra.mxu0 0.0
      %3784 = vmatprep.subr.mxu0 0.0
      %3785 = vmatpush1.msra.mxu0 0.0
      %3786 = vmatprep.subr.mxu0 0.0
      %3787 = vmatpush1.msra.mxu0 0.0
      %3788 = vmatprep.subr.mxu0 0.0
      %3789 = vmatpush1.msra.mxu0 0.0
      %3790 = vmatprep.subr.mxu0 0.0
      %3791 = vmatpush1.msra.mxu0 0.0
      %3792 = vmatprep.subr.mxu0 0.0
      %3793 = vmatpush1.msra.mxu0 0.0
      %3794 = vmatprep.subr.mxu0 0.0
      %3795 = vmatpush1.msra.mxu0 0.0
      %3796 = vmatprep.subr.mxu0 0.0
      %3797 = vmatpush1.msra.mxu0 0.0
      %3798 = vmatprep.subr.mxu0 0.0
      %3799 = vmatpush1.msra.mxu0 0.0
      %3800 = vmatprep.subr.mxu0 0.0
      %3801 = vmatpush1.msra.mxu0 0.0
      %3802 = vmatprep.subr.mxu0 0.0
      %3803 = vmatpush1.msra.mxu0 0.0
      %3804 = vmatprep.subr.mxu0 0.0
      %3805 = vmatpush1.msra.mxu0 0.0
      %3806 = vmatprep.subr.mxu0 0.0
      %3807 = vmatpush1.msra.mxu0 0.0
      %3808 = vmatprep.subr.mxu0 0.0
      %3809 = vmatpush1.msra.mxu0 0.0
      %3810 = vmatprep.subr.mxu0 0.0
      %3811 = vmatpush1.msra.mxu0 0.0
      %3812 = vmatprep.subr.mxu0 0.0
      %3813 = vmatpush1.msra.mxu0 0.0
      %3814 = vmatprep.mubr.f32.mxu0 0.0
      %3815 = vmatmul.mubr.f32.gmra.mrb[0].mxu0 %v3744
      %v3816 = vpop.f32.mrb[0].mxu0
      %v3817 = vadd.f32 0.0, %v3816
      %v3818 = vpop.f32.mrb[0].mxu0
      %v3819 = vadd.f32 0.0, %v3818
      %3820 = vdwg.mxu0
      %v3821 = vadd.f32 %v3725, %v3817
      %v3822 = vadd.f32 %v3726, %v3819
      %v3823 = vld [vmem:[%s2 + $0xc] sm:$0xf]
      %3825 = vset.pattern.permute.xlu0 0
      %3826 = vperm.xlu0 %3825, %v3823
      %v3827 = vpop.permute.xlu0 %3826
      %v3829 = vmul.f32 %v3821, %v3827
      %v3830 = vmul.f32 %v3822, %v3827
      %v3831 = vld [vmem:[%s3 + $0xc] sm:$0xf]
      %3833 = vset.pattern.permute.xlu0 0
      %3834 = vperm.xlu0 %3833, %v3831
      %v3835 = vpop.permute.xlu0 %3834
      %v3837 = vadd.f32 %v3829, %v3835
      %v3838 = vadd.f32 %v3830, %v3835
      %v3839 = vadd.f32 %v3837, %v2115
      %v3840 = vadd.f32 %v3838, %v2116
      %v3841 = vmax.f32 %v3839, 0.0
      %v3842 = vmax.f32 %v3840, 0.0
      %v3845 = vcombine.low %v3841, %v3842
      %3847 = vst [vmem:[%s226] sm:$0xff] %v3845
      %s3848 = smul.u32 2, %s16
      %p3849 = scmp.lt.s32.totalorder %s3848, 3
      %s3850 = scalar_select %p3849, %s3848, 3
      %s3851 = smul.addr %s3850, 4
      %s3852 = scalar_lea.vmem %s5, %s3851
      // Predicated region
      $region41: #{hr_module_forward.4} parent=39 // pred_check
        %p3853 = pneg %p144
      $region42: #{hr_module_forward.4} parent=39 // pred_check_branch
        %3855 = sbr.rel (%p3853) target = $region44
      $region43: #{hr_module_forward.4} parent=39 // pred_region
        %s3856 = smul.u32 2, %s16
      $region44: #{hr_module_forward.4} parent=39 // pred_fallthru
        _
    $region40: #{hr_module_forward.4} parent=5 // pred_fallthru
      _
    %p3857 = scmp.le.s32.totalorder 2, %s11
    // Predicated region
    $region45: #{hr_module_forward.4} parent=5 // pred_check
      %p3858 = pneg %p3857
    $region46: #{hr_module_forward.4} parent=5 // pred_check_branch
      %3860 = sbr.rel (%p3858) target = $region48
    $region47: #{hr_module_forward.4} parent=5 // pred_region
      %s3861 = ssub.s32 %s11, 2
      // Predicated region
      $region49: #{hr_module_forward.4} parent=47 // pred_check
        %p3862 = pneg %p150
      $region50: #{hr_module_forward.4} parent=47 // pred_check_branch
        %3864 = sbr.rel (%p3862) target = $region52
      $region51: #{hr_module_forward.4} parent=47 // pred_region
        %s3865 = smul.u32 2, %s17
        %p3866 = scmp.lt.s32.totalorder %s3865, 3
        %s3867 = scalar_select %p3866, %s3865, 3
        %s3868 = smul.addr %s3867, 4
        %s3869 = scalar_lea.vmem %s5, %s3868
      $region52: #{hr_module_forward.4} parent=47 // pred_fallthru
        _
    $region48: #{hr_module_forward.4} parent=5 // pred_fallthru
      _
  $region6: #{hr_module_forward.4} parent=0 // loop_footer
    %s15 = sadd.s32 1, %s11
  $region7: #{hr_module_forward.4} parent=0 // loop_footer_branch
    %10 = sbr.rel target = $region3
  $region8: #{hr_module_forward.4} parent=0 // loop_exit
    _

// kernel: hr_module_forward.7
$region0: #{hr_module_forward.7}
  #allocation0 [shape = 'u32[]', space=smem, size = 0x4, offset = 0x4, fixed_abs, tag = 'smem constant byte address 0x4 - core index']
  #allocation1 [shape = 'u32[144,128]{1,0:T(1,128)}', space=vmem, size = 0x12000, scoped, tag = 'internal scratch']
  %s0 = inlined_call_operand.vmem [shape: f32[8,36], index: 0, kind: input, shape index: {}]
  %s1 = inlined_call_operand.vmem [shape: f32[36,128], index: 1, kind: input, shape index: {}]
  %s2 = inlined_call_operand.vmem [shape: f32[8,1], index: 2, kind: input, shape index: {}]
  %s3 = inlined_call_operand.vmem [shape: f32[8,1], index: 3, kind: input, shape index: {}]
  %s4 = inlined_call_operand.vmem [shape: f32[8,128], index: 4, kind: input, shape index: {}]
  %s5 = inlined_call_operand.vmem [shape: f32[8,128], index: 5, kind: output, shape index: {}]
  %s6 = sld [smem:[#allocation0]]
  $region30: #{hr_module_forward.7} parent=0
    _
  %s8 = ssub.s32 1, %s6
  %s9 = scalar_select 0, %s8, %s6
  // Predicated region
  $region2: #{hr_module_forward.7} parent=0 // pred_check
    _
  $region3: #{hr_module_forward.7} parent=0 // pred_check_branch
    %11 = sbr.rel (0) target = $region5
  $region4: #{hr_module_forward.7} parent=0 // pred_region
    _
  $region5: #{hr_module_forward.7} parent=0 // pred_fallthru
    _
  // Predicated region
  $region6: #{hr_module_forward.7} parent=0 // pred_check
    _
  $region7: #{hr_module_forward.7} parent=0 // pred_check_branch
    %13 = sbr.rel (0) target = $region9
  $region8: #{hr_module_forward.7} parent=0 // pred_region
    _
  $region9: #{hr_module_forward.7} parent=0 // pred_fallthru
    _
  // Predicated region
  $region10: #{hr_module_forward.7} parent=0 // pred_check
    _
  $region11: #{hr_module_forward.7} parent=0 // pred_check_branch
    %15 = sbr.rel (0) target = $region13
  $region12: #{hr_module_forward.7} parent=0 // pred_region
    _
  $region13: #{hr_module_forward.7} parent=0 // pred_fallthru
    _
  // Predicated region
  $region14: #{hr_module_forward.7} parent=0 // pred_check
    _
  $region15: #{hr_module_forward.7} parent=0 // pred_check_branch
    %17 = sbr.rel (0) target = $region17
  $region16: #{hr_module_forward.7} parent=0 // pred_region
    _
  $region17: #{hr_module_forward.7} parent=0 // pred_fallthru
    _
  // Predicated region
  $region18: #{hr_module_forward.7} parent=0 // pred_check
    _
  $region19: #{hr_module_forward.7} parent=0 // pred_check_branch
    %19 = sbr.rel (0) target = $region21
  $region20: #{hr_module_forward.7} parent=0 // pred_region
    _
  $region21: #{hr_module_forward.7} parent=0 // pred_fallthru
    _
  %v20 = vld [vmem:[%s0] sm:$0xff]
  %v21 = vld [vmem:[%s1] sm:$0xff]
  %v22 = vld [vmem:[%s1 + $0x8] sm:$0xff]
  %v23 = vld [vmem:[%s1 + $0x10] sm:$0xff]
  %v24 = vld [vmem:[%s1 + $0x18] sm:$0xff]
  %v25 = vld [vmem:[%s1 + $0x20] sm:$0xf]
  %vm26 = vcmask 293888
  %v28 = vsel %vm26, %v20, 0
  %vm30 = vcmask 1043456
  %v32 = vsel %vm30, %v25, 0
  %34 = vmatprep.subr.mxu0 0.0
  %35 = vmatpush1.msra.mxu0 %v21
  %36 = vmatprep.subr.mxu0 0.0
  %37 = vmatpush1.msra.mxu0 %v22
  %38 = vmatprep.subr.mxu0 0.0
  %39 = vmatpush1.msra.mxu0 %v23
  %40 = vmatprep.subr.mxu0 0.0
  %41 = vmatpush1.msra.mxu0 %v24
  %42 = vmatprep.subr.mxu0 0.0
  %43 = vmatpush1.msra.mxu0 %v32
  %44 = vmatprep.subr.mxu0 0.0
  %45 = vmatpush1.msra.mxu0 0.0
  %46 = vmatprep.subr.mxu0 0.0
  %47 = vmatpush1.msra.mxu0 0.0
  %48 = vmatprep.subr.mxu0 0.0
  %49 = vmatpush1.msra.mxu0 0.0
  %50 = vmatprep.subr.mxu0 0.0
  %51 = vmatpush1.msra.mxu0 0.0
  %52 = vmatprep.subr.mxu0 0.0
  %53 = vmatpush1.msra.mxu0 0.0
  %54 = vmatprep.subr.mxu0 0.0
  %55 = vmatpush1.msra.mxu0 0.0
  %56 = vmatprep.subr.mxu0 0.0
  %57 = vmatpush1.msra.mxu0 0.0
  %58 = vmatprep.subr.mxu0 0.0
  %59 = vmatpush1.msra.mxu0 0.0
  %60 = vmatprep.subr.mxu0 0.0
  %61 = vmatpush1.msra.mxu0 0.0
  %62 = vmatprep.subr.mxu0 0.0
  %63 = vmatpush1.msra.mxu0 0.0
  %64 = vmatprep.subr.mxu0 0.0
  %65 = vmatpush1.msra.mxu0 0.0
  %66 = vmatprep.subr.mxu0 0.0
  %67 = vmatpush1.msra.mxu0 0.0
  %68 = vmatprep.subr.mxu0 0.0
  %69 = vmatpush1.msra.mxu0 0.0
  %70 = vmatprep.subr.mxu0 0.0
  %71 = vmatpush1.msra.mxu0 0.0
  %72 = vmatprep.subr.mxu0 0.0
  %73 = vmatpush1.msra.mxu0 0.0
  %74 = vmatprep.subr.mxu0 0.0
  %75 = vmatpush1.msra.mxu0 0.0
  %76 = vmatprep.subr.mxu0 0.0
  %77 = vmatpush1.msra.mxu0 0.0
  %78 = vmatprep.subr.mxu0 0.0
  %79 = vmatpush1.msra.mxu0 0.0
  %80 = vmatprep.subr.mxu0 0.0
  %81 = vmatpush1.msra.mxu0 0.0
  %82 = vmatprep.subr.mxu0 0.0
  %83 = vmatpush1.msra.mxu0 0.0
  %84 = vmatprep.subr.mxu0 0.0
  %85 = vmatpush1.msra.mxu0 0.0
  %86 = vmatprep.subr.mxu0 0.0
  %87 = vmatpush1.msra.mxu0 0.0
  %88 = vmatprep.subr.mxu0 0.0
  %89 = vmatpush1.msra.mxu0 0.0
  %90 = vmatprep.subr.mxu0 0.0
  %91 = vmatpush1.msra.mxu0 0.0
  %92 = vmatprep.subr.mxu0 0.0
  %93 = vmatpush1.msra.mxu0 0.0
  %94 = vmatprep.subr.mxu0 0.0
  %95 = vmatpush1.msra.mxu0 0.0
  %96 = vmatprep.subr.mxu0 0.0
  %97 = vmatpush1.msra.mxu0 0.0
  %98 = vmatprep.mubr.f32.mxu0 0.0
  %99 = vmatmul.mubr.f32.gmra.mrb[0].mxu0 %v28
  %v100 = vpop.f32.mrb[0].mxu0
  %v101 = vadd.f32 0.0, %v100
  %v102 = vpop.f32.mrb[0].mxu0
  %103 = vdwg.mxu0
  %v104 = vld [vmem:[%s2] sm:$0xff]
  %106 = vset.pattern.permute.xlu0 0
  %107 = vperm.xlu0 %106, %v104
  %v108 = vpop.permute.xlu0 %107
  %v110 = vmul.f32 %v101, %v108
  %v111 = vld [vmem:[%s3] sm:$0xff]
  %113 = vset.pattern.permute.xlu0 0
  %114 = vperm.xlu0 %113, %v111
  %v115 = vpop.permute.xlu0 %114
  %v117 = vadd.f32 %v110, %v115
  %v118 = vld [vmem:[%s4] sm:$0xff]
  %v119 = vadd.f32 %v117, %v118
  %v120 = vmax.f32 %v119, 0.0
  %121 = vst [vmem:[%s5] sm:$0xff] %v120
  // Predicated region
  $region22: #{hr_module_forward.7} parent=0 // pred_check
    _
  $region23: #{hr_module_forward.7} parent=0 // pred_check_branch
    %123 = sbr.rel (0) target = $region25
  $region24: #{hr_module_forward.7} parent=0 // pred_region
    _
  $region25: #{hr_module_forward.7} parent=0 // pred_fallthru
    _
  // Predicated region
  $region26: #{hr_module_forward.7} parent=0 // pred_check
    _
  $region27: #{hr_module_forward.7} parent=0 // pred_check_branch
    %125 = sbr.rel (0) target = $region29
  $region28: #{hr_module_forward.7} parent=0 // pred_region
    _
  $region29: #{hr_module_forward.7} parent=0 // pred_fallthru
    _

</llo_original>
